<compile_context>
chip_gen: v5e
topology: v5e:2x2
jax: 0.10.0
libtpu: 0.0.40
codegen_flags: <defaults>
</compile_context>

<pallas_src>
import functools

import jax
import jax.numpy as jnp
from jax import lax
from jax.experimental import pallas as pl
from jax.experimental.pallas import tpu as pltpu

NEG = -1e30        # additive stand-in for -inf (avoids NaN on fully-masked rows)
LN_EPS = 1e-5      # nn.LayerNorm default
LANE = 128
BF = jnp.bfloat16


# --------------------------------------------------------------------- slab packing

def _pack_slab(entries, dtype, row_align):
    """Pack a list of (name, 2-D array) into one lane-dense slab.

    Returns (slab[R, lanes], offsets{name: (row0, rows, cols)}).  Row offsets are
    aligned to `row_align` so static in-kernel slices never straddle packed
    sublane tiles (16 for bf16, 8 for f32)."""
    max_cols = max(int(a.shape[1]) for _, a in entries)
    lanes = LANE * max(1, -(-max_cols // LANE))
    parts, offsets, r = [], {}, 0
    for name, a in entries:
        rows, cols = int(a.shape[0]), int(a.shape[1])
        rpad = -(-rows // row_align) * row_align
        blk = jnp.zeros((rpad, lanes), dtype).at[:rows, :cols].set(a.astype(dtype))
        parts.append(blk)
        offsets[name] = (r, rows, cols)
        r += rpad
    return jnp.concatenate(parts, axis=0), offsets


# --------------------------------------------------------------------- fused kernel

def _build_kernel(cfg, T, P, Bblk, use_encoder, w_off, p_off, m_off):
    D = cfg['d_model']
    H = cfg['nhead']
    Le = cfg['num_encoder_layers']
    Ld = cfg['num_decoder_layers']
    PT = P * T

    def kernel(present_ref, prim_ref, *rest):
        if use_encoder:
            oth_ref, w_ref, p_ref, m_ref, out_ref = rest
        else:
            w_ref, p_ref, m_ref, out_ref = rest
        ib = pl.program_id(0)

        # static ref-view slices into the packed slabs (zero-cost views)
        def Wt(name):                                    # bf16 matmul weight
            r0, rr, cc = w_off[name]
            return w_ref[r0:r0 + rr, :cc]

        def Pv(name, rows=None):                         # f32 bias / LN / pe
            r0, rr, cc = p_off[name]
            return p_ref[r0:r0 + (rr if rows is None else rows), :cc]

        def Mk(name):                                    # f32 structural mask
            r0, rr, cc = m_off[name]
            return m_ref[r0:r0 + rr, :cc]

        def mm(x, w):                                    # bf16 MXU, f32 accumulate
            return jnp.dot(x.astype(BF), w, preferred_element_type=jnp.float32)

        def ln(x, g, b):
            mu = jnp.mean(x, axis=-1, keepdims=True)
            xc = x - mu
            var = jnp.mean(xc * xc, axis=-1, keepdims=True)
            return xc * lax.rsqrt(var + LN_EPS) * g + b

        def attn(q, k, v, mask):
            """Multi-head attention core (no output projection -- the caller applies
            Wo once, batched over the whole batch-block).  Heads live in lane
            slices of D; their scores are stacked along sublanes so the softmax
            reductions run once on a (H*Tq, Tk) tile."""
            Tq = q.shape[0]
            dh = D // H
            qb, kb, vb = q.astype(BF), k.astype(BF), v.astype(BF)
            parts = []
            for h in range(H):
                sl = slice(h * dh, (h + 1) * dh)
                s = lax.dot_general(qb[:, sl], kb[:, sl], (((1,), (1,)), ((), ())),
                                    preferred_element_type=jnp.float32)
                parts.append(s + mask)
            s = jnp.concatenate(parts, axis=0)                       # (H*Tq, Tk)
            s = s - jnp.max(s, axis=-1, keepdims=True)
            p = jnp.exp(s)
            p = p / jnp.sum(p, axis=-1, keepdims=True)               # exact softmax
            pb = p.astype(BF)
            heads = [jnp.dot(pb[h * Tq:(h + 1) * Tq], vb[:, h * dh:(h + 1) * dh],
                             preferred_element_type=jnp.float32) for h in range(H)]
            return jnp.concatenate(heads, axis=-1)                   # (Tq, D)

        pe = Pv('pe', rows=T)                                        # (T, D)
        tgt_mask = Mk('tgt_mask')                                    # (T, T)

        # ---- decoder input: map_primary + positional encoding (dropout = identity)
        xb = [mm(prim_ref[b], Wt('map_primary_w')) + Pv('map_primary_b') + pe
              for b in range(Bblk)]
        x = jnp.concatenate(xb, axis=0) if Bblk > 1 else xb[0]       # (Bblk*T, D)

        # ---- encoder over "others" ---------------------------------------------------
        if use_encoder:
            col = lax.broadcasted_iota(jnp.int32, (1, PT), 1)
            kpm, anyp = [], []
            for b in range(Bblk):
                m = jnp.zeros((1, PT), jnp.float32)
                any_b = jnp.int32(0)
                for p in range(P):
                    pres = present_ref[ib * Bblk + b, p]
                    any_b = jnp.maximum(any_b, pres)
                    in_p = (col >= p * T) & (col < (p + 1) * T)
                    m = m + jnp.where(in_p & (pres == 0), NEG, 0.0)
                any_b = any_b > 0
                # PyTorch: padding mask is dropped entirely when no others are present
                kpm.append(jnp.where(any_b, m, 0.0))
                anyp.append(any_b)

            mem_b = [mm(oth_ref[b], Wt('map_others_w')) + Pv('map_others_b')
                     for b in range(Bblk)]
            mem = jnp.concatenate(mem_b, axis=0) if Bblk > 1 else mem_b[0]  # (Bblk*PT, D)

            enc_struct = Mk('enc_struct')                            # (PT, PT)
            # TODO(synk): add flash-style Tk blocking of the (PT,PT) encoder scores
            # before P*T scales up (v7x 64 MiB VMEM / 32 MiB scoped default).
            for l in range(Le):
                g = Pv('enc_ln_g_%d' % l)
                gb = Pv('enc_ln_b_%d' % l)
                qkv = mm(mem, Wt('enc_qkv_w_%d' % l)) + Pv('enc_qkv_b_%d' % l)
                a_b = [attn(qkv[b * PT:(b + 1) * PT, :D],
                            qkv[b * PT:(b + 1) * PT, D:2 * D],
                            qkv[b * PT:(b + 1) * PT, 2 * D:],
                            enc_struct + kpm[b]) for b in range(Bblk)]
                a = jnp.concatenate(a_b, axis=0) if Bblk > 1 else a_b[0]
                a = mm(a, Wt('enc_o_w_%d' % l)) + Pv('enc_o_b_%d' % l)
                mem = ln(mem + a, g[0:1], gb[0:1])
                hdn = jnp.maximum(mm(mem, Wt('enc_ff1_w_%d' % l))
                                  + Pv('enc_ff1_b_%d' % l), 0.0)
                f = mm(hdn, Wt('enc_ff2_w_%d' % l)) + Pv('enc_ff2_b_%d' % l)
                mem = ln(mem + f, g[1:2], gb[1:2])
            mem = ln(mem, Pv('enc_norm_g'), Pv('enc_norm_b'))
            # zero the memory of batch rows with no others present (torch.where)
            if Bblk > 1:
                mem = jnp.concatenate(
                    [jnp.where(anyp[b], mem[b * PT:(b + 1) * PT], 0.0)
                     for b in range(Bblk)], axis=0)
            else:
                mem = jnp.where(anyp[0], mem, 0.0)
            cross_struct = Mk('cross_struct')                        # (T, PT)
            cross_masks = [cross_struct + kpm[b] for b in range(Bblk)]
        else:
            # remove_others / others is None: decoder cross-attends to ONE all-zero
            # memory token with no masks -- exactly what the PyTorch module does.
            mem = jnp.zeros((1, D), jnp.float32)
            cross_masks = [jnp.zeros((T, 1), jnp.float32)] * Bblk

        # ---- decoder stack -----------------------------------------------------------
        for l in range(Ld):
            g = Pv('dec_ln_g_%d' % l)
            gb = Pv('dec_ln_b_%d' % l)
            qkv = mm(x, Wt('dec_sa_qkv_w_%d' % l)) + Pv('dec_sa_qkv_b_%d' % l)
            a_b = [attn(qkv[b * T:(b + 1) * T, :D],
                        qkv[b * T:(b + 1) * T, D:2 * D],
                        qkv[b * T:(b + 1) * T, 2 * D:], tgt_mask) for b in range(Bblk)]
            a = jnp.concatenate(a_b, axis=0) if Bblk > 1 else a_b[0]
            a = mm(a, Wt('dec_sa_o_w_%d' % l)) + Pv('dec_sa_o_b_%d' % l)
            x = ln(x + a, g[0:1], gb[0:1])

            q = mm(x, Wt('dec_ca_q_w_%d' % l)) + Pv('dec_ca_q_b_%d' % l)
            kv = mm(mem, Wt('dec_ca_kv_w_%d' % l)) + Pv('dec_ca_kv_b_%d' % l)
            a_b = []
            for b in range(Bblk):
                if use_encoder:
                    ks = kv[b * PT:(b + 1) * PT, :D]
                    vs = kv[b * PT:(b + 1) * PT, D:]
                else:
                    ks, vs = kv[:, :D], kv[:, D:]
                a_b.append(attn(q[b * T:(b + 1) * T], ks, vs, cross_masks[b]))
            a = jnp.concatenate(a_b, axis=0) if Bblk > 1 else a_b[0]
            a = mm(a, Wt('dec_ca_o_w_%d' % l)) + Pv('dec_ca_o_b_%d' % l)
            x = ln(x + a, g[1:2], gb[1:2])

            hdn = jnp.maximum(mm(x, Wt('dec_ff1_w_%d' % l)) + Pv('dec_ff1_b_%d' % l), 0.0)
            f = mm(hdn, Wt('dec_ff2_w_%d' % l)) + Pv('dec_ff2_b_%d' % l)
            x = ln(x + f, g[2:3], gb[2:3])

        x = ln(x, Pv('dec_norm_g'), Pv('dec_norm_b'))
        out = mm(x, Wt('inv_w')) + Pv('inv_b')           # (Bblk*T, 128)  lane-dense store
        for b in range(Bblk):
            out_ref[b] = out[b * T:(b + 1) * T]

    return kernel


# --------------------------------------------------------------------- wrapper

def person_transformer_forward(params, primary, others, others_present, *,
                               cfg, layout, is_causal=True, remove_others=False):
    """primary (b c t), others (b p c t) or None, others_present (b p) bool -> (b c t)."""
    B, Cp, T = primary.shape
    Cpad = LANE * (-(-Cp // LANE))
    assert layout['p_off']['pe'][1] >= T, 'max_seq_len < sequence length'

    use_encoder = not (remove_others or others is None)

    primary_btc = jnp.transpose(primary, (0, 2, 1)).astype(jnp.float32)     # (B, T, Cp)

    if use_encoder:
        P, Co = others.shape[1], others.shape[2]
        others_flat = jnp.transpose(others, (0, 1, 3, 2)).reshape(B, P * T, Co)
        others_flat = others_flat.astype(jnp.float32)                       # (B, P*T, Co)
        present_i32 = others_present.astype(jnp.int32)
    else:
        P = 1
        present_i32 = jnp.zeros((B, 1), jnp.int32)        # never read in-kernel

    # structural masks are data-independent: build host-side, stay VMEM-resident
    t = jnp.arange(T, dtype=jnp.int32)
    tgt = (jnp.where(t[None, :] > t[:, None], NEG, 0.0) if is_causal
           else jnp.zeros((T, T), jnp.float32))
    m_entries = [('tgt_mask', tgt)]
    if use_encoder:
        tm = jnp.arange(P * T, dtype=jnp.int32) % T
        m_entries.append(('enc_struct', jnp.where(tm[:, None] == tm[None, :], 0.0, NEG)))
        m_entries.append(('cross_struct', jnp.where(t[:, None] == tm[None, :], 0.0, NEG)))
    mslab, m_off = _pack_slab(m_entries, jnp.float32, 8)

    # batch blocking: 2 grid steps for even B (keeps both v7x TCs busy; costs only
    # one extra ~600-cycle step on single-TC v5e/v6e); otherwise a single step.
    Bblk = B // 2 if (B >= 2 and B % 2 == 0) else B
    grid = (B // Bblk,)

    kernel = _build_kernel(cfg, T, P, Bblk, use_encoder,
                           layout['w_off'], layout['p_off'], m_off)

    def _const(shape):
        nd = len(shape)
        return pl.BlockSpec(shape, lambda i, *_: (0,) * nd)

    in_specs = [pl.BlockSpec((Bblk, T, Cp), lambda i, *_: (i, 0, 0))]
    args = [present_i32, primary_btc]
    if use_encoder:
        in_specs.append(pl.BlockSpec((Bblk, P * T, Co), lambda i, *_: (i, 0, 0)))
        args.append(others_flat)
    in_specs += [_const(params['wslab'].shape), _const(params['pslab'].shape),
                 _const(mslab.shape)]
    args += [params['wslab'], params['pslab'], mslab]

    out = pl.pallas_call(
        kernel,
        out_shape=jax.ShapeDtypeStruct((B, T, Cpad), jnp.float32),
        grid_spec=pltpu.PrefetchScalarGridSpec(
            num_scalar_prefetch=1,                 # others_present flags -> SMEM
            grid=grid,
            in_specs=in_specs,
            out_specs=pl.BlockSpec((Bblk, T, Cpad), lambda i, *_: (i, 0, 0)),
        ),
        compiler_params=pltpu.CompilerParams(dimension_semantics=("parallel",)),
    )(*args)

    return jnp.transpose(out[:, :, :Cp], (0, 2, 1))                         # (b, c, t)


# --------------------------------------------------------------------- params

def init_params(key, cfg, n_ch_primary, n_ch_others, max_seq_len):
    """Synthetic weights packed into two lane-dense slabs:
       * wslab (bf16): every matmul weight (Q/K/V concatenated, 1/sqrt(dh) folded
         into Q, inv_map zero-padded to 128 output lanes)
       * pslab (f32): every bias, LayerNorm gamma/beta, positional-encoding table.
       Returns (params={'wslab','pslab'}, layout of static row offsets)."""
    D = cfg['d_model']
    H = cfg['nhead']
    FF = cfg['dim_feedforward']
    Le = cfg['num_encoder_layers']
    Ld = cfg['num_decoder_layers']
    dh = D // H
    q_scale = 1.0 / (dh ** 0.5)
    Cpad = LANE * (-(-n_ch_primary // LANE))
    keys = iter(jax.random.split(key, 4096))

    def w(i, o):
        return jax.random.normal(next(keys), (i, o), jnp.float32) / jnp.sqrt(float(i))

    def bvec(o):
        return 0.01 * jax.random.normal(next(keys), (1, o), jnp.float32)

    def qkv_w():
        return jnp.concatenate([w(D, D) * q_scale, w(D, D), w(D, D)], axis=1)

    def qkv_b():
        return jnp.concatenate([bvec(D) * q_scale, bvec(D), bvec(D)], axis=1)

    w_entries = [
        ('map_primary_w', w(n_ch_primary, D)),
        ('map_others_w', w(n_ch_others, D)),
        ('inv_w', jnp.zeros((D, Cpad), jnp.float32)
                     .at[:, :n_ch_primary].set(w(D, n_ch_primary))),
    ]
    p_entries = [
        ('map_primary_b', bvec(D)),
        ('map_others_b', bvec(D)),
        ('inv_b', jnp.zeros((1, Cpad), jnp.float32)
                     .at[:, :n_ch_primary].set(bvec(n_ch_primary))),
    ]

    for l in range(Le):
        w_entries += [('enc_qkv_w_%d' % l, qkv_w()), ('enc_o_w_%d' % l, w(D, D)),
                      ('enc_ff1_w_%d' % l, w(D, FF)), ('enc_ff2_w_%d' % l, w(FF, D))]
        p_entries += [('enc_qkv_b_%d' % l, qkv_b()), ('enc_o_b_%d' % l, bvec(D)),
                      ('enc_ff1_b_%d' % l, bvec(FF)), ('enc_ff2_b_%d' % l, bvec(D)),
                      ('enc_ln_g_%d' % l, jnp.ones((2, D), jnp.float32)),
                      ('enc_ln_b_%d' % l, jnp.zeros((2, D), jnp.float32))]
    p_entries += [('enc_norm_g', jnp.ones((1, D), jnp.float32)),
                  ('enc_norm_b', jnp.zeros((1, D), jnp.float32))]

    for l in range(Ld):
        w_entries += [('dec_sa_qkv_w_%d' % l, qkv_w()), ('dec_sa_o_w_%d' % l, w(D, D)),
                      ('dec_ca_q_w_%d' % l, w(D, D) * q_scale),
                      ('dec_ca_kv_w_%d' % l, jnp.concatenate([w(D, D), w(D, D)], axis=1)),
                      ('dec_ca_o_w_%d' % l, w(D, D)),
                      ('dec_ff1_w_%d' % l, w(D, FF)), ('dec_ff2_w_%d' % l, w(FF, D))]
        p_entries += [('dec_sa_qkv_b_%d' % l, qkv_b()), ('dec_sa_o_b_%d' % l, bvec(D)),
                      ('dec_ca_q_b_%d' % l, bvec(D) * q_scale),
                      ('dec_ca_kv_b_%d' % l, jnp.concatenate([bvec(D), bvec(D)], axis=1)),
                      ('dec_ca_o_b_%d' % l, bvec(D)),
                      ('dec_ff1_b_%d' % l, bvec(FF)), ('dec_ff2_b_%d' % l, bvec(D)),
                      ('dec_ln_g_%d' % l, jnp.ones((3, D), jnp.float32)),
                      ('dec_ln_b_%d' % l, jnp.zeros((3, D), jnp.float32))]
    p_entries += [('dec_norm_g', jnp.ones((1, D), jnp.float32)),
                  ('dec_norm_b', jnp.zeros((1, D), jnp.float32))]

    # sinusoidal positional encoding (max_seq_len, D)
    pos = jnp.arange(max_seq_len, dtype=jnp.float32)[:, None]
    div = jnp.exp(jnp.arange(0, D, 2, dtype=jnp.float32) * (-jnp.log(10000.0) / D))
    pe = jnp.zeros((max_seq_len, D), jnp.float32)
    pe = pe.at[:, 0::2].set(jnp.sin(pos * div))
    pe = pe.at[:, 1::2].set(jnp.cos(pos * div))
    p_entries.append(('pe', pe))

    wslab, w_off = _pack_slab(w_entries, jnp.bfloat16, 16)   # bf16 -> (16,128) tiles
    pslab, p_off = _pack_slab(p_entries, jnp.float32, 8)     # f32  -> (8,128) tiles
    params = {'wslab': wslab, 'pslab': pslab}
    layout = {'w_off': w_off, 'p_off': p_off}
    return params, layout


# --------------------------------------------------------------------- main

if __name__ == "__main__":
    key = jax.random.PRNGKey(0)
    cfg = dict(d_model=32, nhead=4, num_encoder_layers=2, num_decoder_layers=2,
               dim_feedforward=64, dropout=0.0)
    n_ch_primary, n_ch_others = 6, 5
    B, P, T = 4, 2, 8
    max_seq_len = 16

    kparam, kp, ko = jax.random.split(key, 3)
    params, layout = init_params(kparam, cfg, n_ch_primary, n_ch_others, max_seq_len)

    primary = jax.random.normal(kp, (B, n_ch_primary, T), jnp.float32)      # (b c t)
    others = jax.random.normal(ko, (B, P, n_ch_others, T), jnp.float32)     # (b p c t)
    # exercise partially-present, fully-absent and fully-present special cases
    others_present = jnp.array([[True, False], [False, False],
                                [True, True], [False, True]])               # (b p)

    fwd = jax.jit(functools.partial(person_transformer_forward, cfg=cfg, layout=layout,
                                    is_causal=True, remove_others=False))
    out = jax.block_until_ready(fwd(params, primary, others, others_present))

    assert out.shape == (B, n_ch_primary, T), out.shape
    assert bool(jnp.all(jnp.isfinite(out)))
    print("KERNEL_OK")
</pallas_src>

<mosaic_0001>
module attributes {stable_mosaic.version = 11 : i64} {
  func.func @kernel(%arg0: i32, %arg1: memref<4x2xi32, #tpu.memory_space<smem>>, %arg2: memref<2x8x6xf32, #tpu.memory_space<vmem>>, %arg3: memref<2x16x5xf32, #tpu.memory_space<vmem>>, %arg4: memref<896x128xbf16, #tpu.memory_space<vmem>>, %arg5: memref<312x128xf32, #tpu.memory_space<vmem>>, %arg6: memref<32x128xf32, #tpu.memory_space<vmem>>, %arg7: memref<2x8x128xf32, #tpu.memory_space<vmem>>) attributes {dimension_semantics = [#tpu.dimension_semantics<parallel>], iteration_bounds = array<i64: 2>, scalar_prefetch = 1 : i64, scratch_operands = 0 : i64, tpu.core_type = #tpu.core_type<tc>, window_params = [{transform_indices = @transform_0, window_bounds = array<i64: 2, 8, 6>}, {transform_indices = @transform_1, window_bounds = array<i64: 2, 16, 5>}, {pipeline_mode = #tpu.pipeline_mode<synchronous>, transform_indices = @transform_2, window_bounds = array<i64: 896, 128>}, {pipeline_mode = #tpu.pipeline_mode<synchronous>, transform_indices = @transform_3, window_bounds = array<i64: 312, 128>}, {pipeline_mode = #tpu.pipeline_mode<synchronous>, transform_indices = @transform_4, window_bounds = array<i64: 32, 128>}, {transform_indices = @transform_5, window_bounds = array<i64: 2, 8, 128>}]} {
    %c296 = arith.constant 296 : index
    %c0 = arith.constant 0 : index
    %0 = vector.load %arg5[%c296, %c0] : memref<312x128xf32, #tpu.memory_space<vmem>>, vector<8x32xf32>
    %c0_0 = arith.constant 0 : index
    %c0_1 = arith.constant 0 : index
    %1 = vector.load %arg6[%c0_0, %c0_1] : memref<32x128xf32, #tpu.memory_space<vmem>>, vector<8x8xf32>
    %c0_2 = arith.constant 0 : index
    %c0_3 = arith.constant 0 : index
    %c0_4 = arith.constant 0 : index
    %2 = vector.load %arg2[%c0_2, %c0_3, %c0_4] : memref<2x8x6xf32, #tpu.memory_space<vmem>>, vector<1x8x6xf32>
    %3 = vector.shape_cast %2 : vector<1x8x6xf32> to vector<8x6xf32>
    %c0_5 = arith.constant 0 : index
    %c0_6 = arith.constant 0 : index
    %4 = vector.load %arg4[%c0_5, %c0_6] : memref<896x128xbf16, #tpu.memory_space<vmem>>, vector<6x32xbf16>
    %5 = arith.truncf %3 : vector<8x6xf32> to vector<8x6xbf16>
    %cst = arith.constant dense<0.000000e+00> : vector<8x32xf32>
    %6 = tpu.matmul %5, %4, %cst {dimension_numbers = #tpu.dot_dimension_numbers<[1], [0], [0], [1], [0, 0, 1, 1], [], []>} : vector<8x6xbf16>, vector<6x32xbf16>, vector<8x32xf32> -> vector<8x32xf32>
    %c0_7 = arith.constant 0 : index
    %c0_8 = arith.constant 0 : index
    %7 = vector.load %arg5[%c0_7, %c0_8] : memref<312x128xf32, #tpu.memory_space<vmem>>, vector<1x32xf32>
    %8 = vector.broadcast %7 : vector<1x32xf32> to vector<8x32xf32>
    %9 = arith.addf %6, %8 : vector<8x32xf32>
    %10 = arith.addf %9, %0 : vector<8x32xf32>
    %c1 = arith.constant 1 : index
    %c0_9 = arith.constant 0 : index
    %c0_10 = arith.constant 0 : index
    %11 = vector.load %arg2[%c1, %c0_9, %c0_10] : memref<2x8x6xf32, #tpu.memory_space<vmem>>, vector<1x8x6xf32>
    %12 = vector.shape_cast %11 : vector<1x8x6xf32> to vector<8x6xf32>
    %c0_11 = arith.constant 0 : index
    %c0_12 = arith.constant 0 : index
    %13 = vector.load %arg4[%c0_11, %c0_12] : memref<896x128xbf16, #tpu.memory_space<vmem>>, vector<6x32xbf16>
    %14 = arith.truncf %12 : vector<8x6xf32> to vector<8x6xbf16>
    %cst_13 = arith.constant dense<0.000000e+00> : vector<8x32xf32>
    %15 = tpu.matmul %14, %13, %cst_13 {dimension_numbers = #tpu.dot_dimension_numbers<[1], [0], [0], [1], [0, 0, 1, 1], [], []>} : vector<8x6xbf16>, vector<6x32xbf16>, vector<8x32xf32> -> vector<8x32xf32>
    %c0_14 = arith.constant 0 : index
    %c0_15 = arith.constant 0 : index
    %16 = vector.load %arg5[%c0_14, %c0_15] : memref<312x128xf32, #tpu.memory_space<vmem>>, vector<1x32xf32>
    %17 = vector.broadcast %16 : vector<1x32xf32> to vector<8x32xf32>
    %18 = arith.addf %15, %17 : vector<8x32xf32>
    %19 = arith.addf %18, %0 : vector<8x32xf32>
    %20 = tpu.concatenate %10, %19 in 0 : vector<8x32xf32>, vector<8x32xf32> -> vector<16x32xf32>
    %21 = tpu.iota {dimensions = array<i32: 1>} : vector<1x16xi32>
    %cst_16 = arith.constant 0.000000e+00 : f32
    %22 = vector.broadcast %cst_16 : f32 to vector<1x16xf32>
    %c2_i32 = arith.constant 2 : i32
    %23 = arith.muli %arg0, %c2_i32 : i32
    %c0_i32 = arith.constant 0 : i32
    %24 = arith.addi %23, %c0_i32 : i32
    %25 = arith.index_cast %24 : i32 to index
    %c0_17 = arith.constant 0 : index
    %26 = memref.load %arg1[%25, %c0_17] : memref<4x2xi32, #tpu.memory_space<smem>>
    %c0_i32_18 = arith.constant 0 : i32
    %27 = arith.maxsi %c0_i32_18, %26 : i32
    %c0_i32_19 = arith.constant 0 : i32
    %28 = vector.broadcast %c0_i32_19 : i32 to vector<1x16xi32>
    %29 = arith.cmpi sge, %21, %28 : vector<1x16xi32>
    %c8_i32 = arith.constant 8 : i32
    %30 = vector.broadcast %c8_i32 : i32 to vector<1x16xi32>
    %31 = arith.cmpi slt, %21, %30 : vector<1x16xi32>
    %32 = arith.andi %29, %31 : vector<1x16xi1>
    %c0_i32_20 = arith.constant 0 : i32
    %33 = arith.cmpi eq, %26, %c0_i32_20 : i32
    %34 = vector.broadcast %33 : i1 to vector<1x16xi1>
    %35 = arith.andi %32, %34 : vector<1x16xi1>
    %cst_21 = arith.constant -1.000000e+30 : f32
    %cst_22 = arith.constant 0.000000e+00 : f32
    %36 = vector.broadcast %cst_21 : f32 to vector<1x16xf32>
    %37 = vector.broadcast %cst_22 : f32 to vector<1x16xf32>
    %38 = arith.select %35, %36, %37 : vector<1x16xi1>, vector<1x16xf32>
    %39 = arith.addf %22, %38 : vector<1x16xf32>
    %c2_i32_23 = arith.constant 2 : i32
    %40 = arith.muli %arg0, %c2_i32_23 : i32
    %c0_i32_24 = arith.constant 0 : i32
    %41 = arith.addi %40, %c0_i32_24 : i32
    %42 = arith.index_cast %41 : i32 to index
    %c1_25 = arith.constant 1 : index
    %43 = memref.load %arg1[%42, %c1_25] : memref<4x2xi32, #tpu.memory_space<smem>>
    %44 = arith.maxsi %27, %43 : i32
    %c8_i32_26 = arith.constant 8 : i32
    %45 = vector.broadcast %c8_i32_26 : i32 to vector<1x16xi32>
    %46 = arith.cmpi sge, %21, %45 : vector<1x16xi32>
    %c16_i32 = arith.constant 16 : i32
    %47 = vector.broadcast %c16_i32 : i32 to vector<1x16xi32>
    %48 = arith.cmpi slt, %21, %47 : vector<1x16xi32>
    %49 = arith.andi %46, %48 : vector<1x16xi1>
    %c0_i32_27 = arith.constant 0 : i32
    %50 = arith.cmpi eq, %43, %c0_i32_27 : i32
    %51 = vector.broadcast %50 : i1 to vector<1x16xi1>
    %52 = arith.andi %49, %51 : vector<1x16xi1>
    %cst_28 = arith.constant -1.000000e+30 : f32
    %cst_29 = arith.constant 0.000000e+00 : f32
    %53 = vector.broadcast %cst_28 : f32 to vector<1x16xf32>
    %54 = vector.broadcast %cst_29 : f32 to vector<1x16xf32>
    %55 = arith.select %52, %53, %54 : vector<1x16xi1>, vector<1x16xf32>
    %56 = arith.addf %39, %55 : vector<1x16xf32>
    %c0_i32_30 = arith.constant 0 : i32
    %57 = arith.cmpi sgt, %44, %c0_i32_30 : i32
    %cst_31 = arith.constant 0.000000e+00 : f32
    %58 = vector.broadcast %cst_31 : f32 to vector<1x16xf32>
    %59 = arith.select %57, %56, %58 : vector<1x16xf32>
    %cst_32 = arith.constant 0.000000e+00 : f32
    %60 = vector.broadcast %cst_32 : f32 to vector<1x16xf32>
    %c2_i32_33 = arith.constant 2 : i32
    %61 = arith.muli %arg0, %c2_i32_33 : i32
    %c1_i32 = arith.constant 1 : i32
    %62 = arith.addi %61, %c1_i32 : i32
    %63 = arith.index_cast %62 : i32 to index
    %c0_34 = arith.constant 0 : index
    %64 = memref.load %arg1[%63, %c0_34] : memref<4x2xi32, #tpu.memory_space<smem>>
    %c0_i32_35 = arith.constant 0 : i32
    %65 = arith.maxsi %c0_i32_35, %64 : i32
    %c0_i32_36 = arith.constant 0 : i32
    %66 = vector.broadcast %c0_i32_36 : i32 to vector<1x16xi32>
    %67 = arith.cmpi sge, %21, %66 : vector<1x16xi32>
    %c8_i32_37 = arith.constant 8 : i32
    %68 = vector.broadcast %c8_i32_37 : i32 to vector<1x16xi32>
    %69 = arith.cmpi slt, %21, %68 : vector<1x16xi32>
    %70 = arith.andi %67, %69 : vector<1x16xi1>
    %c0_i32_38 = arith.constant 0 : i32
    %71 = arith.cmpi eq, %64, %c0_i32_38 : i32
    %72 = vector.broadcast %71 : i1 to vector<1x16xi1>
    %73 = arith.andi %70, %72 : vector<1x16xi1>
    %cst_39 = arith.constant -1.000000e+30 : f32
    %cst_40 = arith.constant 0.000000e+00 : f32
    %74 = vector.broadcast %cst_39 : f32 to vector<1x16xf32>
    %75 = vector.broadcast %cst_40 : f32 to vector<1x16xf32>
    %76 = arith.select %73, %74, %75 : vector<1x16xi1>, vector<1x16xf32>
    %77 = arith.addf %60, %76 : vector<1x16xf32>
    %c2_i32_41 = arith.constant 2 : i32
    %78 = arith.muli %arg0, %c2_i32_41 : i32
    %c1_i32_42 = arith.constant 1 : i32
    %79 = arith.addi %78, %c1_i32_42 : i32
    %80 = arith.index_cast %79 : i32 to index
    %c1_43 = arith.constant 1 : index
    %81 = memref.load %arg1[%80, %c1_43] : memref<4x2xi32, #tpu.memory_space<smem>>
    %82 = arith.maxsi %65, %81 : i32
    %c8_i32_44 = arith.constant 8 : i32
    %83 = vector.broadcast %c8_i32_44 : i32 to vector<1x16xi32>
    %84 = arith.cmpi sge, %21, %83 : vector<1x16xi32>
    %c16_i32_45 = arith.constant 16 : i32
    %85 = vector.broadcast %c16_i32_45 : i32 to vector<1x16xi32>
    %86 = arith.cmpi slt, %21, %85 : vector<1x16xi32>
    %87 = arith.andi %84, %86 : vector<1x16xi1>
    %c0_i32_46 = arith.constant 0 : i32
    %88 = arith.cmpi eq, %81, %c0_i32_46 : i32
    %89 = vector.broadcast %88 : i1 to vector<1x16xi1>
    %90 = arith.andi %87, %89 : vector<1x16xi1>
    %cst_47 = arith.constant -1.000000e+30 : f32
    %cst_48 = arith.constant 0.000000e+00 : f32
    %91 = vector.broadcast %cst_47 : f32 to vector<1x16xf32>
    %92 = vector.broadcast %cst_48 : f32 to vector<1x16xf32>
    %93 = arith.select %90, %91, %92 : vector<1x16xi1>, vector<1x16xf32>
    %94 = arith.addf %77, %93 : vector<1x16xf32>
    %c0_i32_49 = arith.constant 0 : i32
    %95 = arith.cmpi sgt, %82, %c0_i32_49 : i32
    %cst_50 = arith.constant 0.000000e+00 : f32
    %96 = vector.broadcast %cst_50 : f32 to vector<1x16xf32>
    %97 = arith.select %95, %94, %96 : vector<1x16xf32>
    %c0_51 = arith.constant 0 : index
    %c0_52 = arith.constant 0 : index
    %c0_53 = arith.constant 0 : index
    %98 = vector.load %arg3[%c0_51, %c0_52, %c0_53] : memref<2x16x5xf32, #tpu.memory_space<vmem>>, vector<1x16x5xf32>
    %99 = vector.shape_cast %98 : vector<1x16x5xf32> to vector<16x5xf32>
    %c16 = arith.constant 16 : index
    %c0_54 = arith.constant 0 : index
    %100 = vector.load %arg4[%c16, %c0_54] : memref<896x128xbf16, #tpu.memory_space<vmem>>, vector<5x32xbf16>
    %101 = arith.truncf %99 : vector<16x5xf32> to vector<16x5xbf16>
    %cst_55 = arith.constant dense<0.000000e+00> : vector<16x32xf32>
    %102 = tpu.matmul %101, %100, %cst_55 {dimension_numbers = #tpu.dot_dimension_numbers<[1], [0], [0], [1], [0, 0, 1, 1], [], []>} : vector<16x5xbf16>, vector<5x32xbf16>, vector<16x32xf32> -> vector<16x32xf32>
    %c8 = arith.constant 8 : index
    %c0_56 = arith.constant 0 : index
    %103 = vector.load %arg5[%c8, %c0_56] : memref<312x128xf32, #tpu.memory_space<vmem>>, vector<1x32xf32>
    %104 = vector.broadcast %103 : vector<1x32xf32> to vector<16x32xf32>
    %105 = arith.addf %102, %104 : vector<16x32xf32>
    %c1_57 = arith.constant 1 : index
    %c0_58 = arith.constant 0 : index
    %c0_59 = arith.constant 0 : index
    %106 = vector.load %arg3[%c1_57, %c0_58, %c0_59] : memref<2x16x5xf32, #tpu.memory_space<vmem>>, vector<1x16x5xf32>
    %107 = vector.shape_cast %106 : vector<1x16x5xf32> to vector<16x5xf32>
    %c16_60 = arith.constant 16 : index
    %c0_61 = arith.constant 0 : index
    %108 = vector.load %arg4[%c16_60, %c0_61] : memref<896x128xbf16, #tpu.memory_space<vmem>>, vector<5x32xbf16>
    %109 = arith.truncf %107 : vector<16x5xf32> to vector<16x5xbf16>
    %cst_62 = arith.constant dense<0.000000e+00> : vector<16x32xf32>
    %110 = tpu.matmul %109, %108, %cst_62 {dimension_numbers = #tpu.dot_dimension_numbers<[1], [0], [0], [1], [0, 0, 1, 1], [], []>} : vector<16x5xbf16>, vector<5x32xbf16>, vector<16x32xf32> -> vector<16x32xf32>
    %c8_63 = arith.constant 8 : index
    %c0_64 = arith.constant 0 : index
    %111 = vector.load %arg5[%c8_63, %c0_64] : memref<312x128xf32, #tpu.memory_space<vmem>>, vector<1x32xf32>
    %112 = vector.broadcast %111 : vector<1x32xf32> to vector<16x32xf32>
    %113 = arith.addf %110, %112 : vector<16x32xf32>
    %114 = tpu.concatenate %105, %113 in 0 : vector<16x32xf32>, vector<16x32xf32> -> vector<32x32xf32>
    %c8_65 = arith.constant 8 : index
    %c0_66 = arith.constant 0 : index
    %115 = vector.load %arg6[%c8_65, %c0_66] : memref<32x128xf32, #tpu.memory_space<vmem>>, vector<16x16xf32>
    %c56 = arith.constant 56 : index
    %c0_67 = arith.constant 0 : index
    %116 = vector.load %arg5[%c56, %c0_67] : memref<312x128xf32, #tpu.memory_space<vmem>>, vector<2x32xf32>
    %c64 = arith.constant 64 : index
    %c0_68 = arith.constant 0 : index
    %117 = vector.load %arg5[%c64, %c0_68] : memref<312x128xf32, #tpu.memory_space<vmem>>, vector<2x32xf32>
    %c64_69 = arith.constant 64 : index
    %c0_70 = arith.constant 0 : index
    %118 = vector.load %arg4[%c64_69, %c0_70] : memref<896x128xbf16, #tpu.memory_space<vmem>>, vector<32x96xbf16>
    %119 = arith.truncf %114 : vector<32x32xf32> to vector<32x32xbf16>
    %cst_71 = arith.constant dense<0.000000e+00> : vector<32x96xf32>
    %120 = tpu.matmul %119, %118, %cst_71 {dimension_numbers = #tpu.dot_dimension_numbers<[1], [0], [0], [1], [0, 0, 1, 1], [], []>} : vector<32x32xbf16>, vector<32x96xbf16>, vector<32x96xf32> -> vector<32x96xf32>
    %c24 = arith.constant 24 : index
    %c0_72 = arith.constant 0 : index
    %121 = vector.load %arg5[%c24, %c0_72] : memref<312x128xf32, #tpu.memory_space<vmem>>, vector<1x96xf32>
    %122 = vector.broadcast %121 : vector<1x96xf32> to vector<32x96xf32>
    %123 = arith.addf %120, %122 : vector<32x96xf32>
    %124 = vector.extract_strided_slice %123 {offsets = [0, 0], sizes = [16, 32], strides = [1, 1]} : vector<32x96xf32> to vector<16x32xf32>
    %125 = vector.extract_strided_slice %123 {offsets = [0, 32], sizes = [16, 32], strides = [1, 1]} : vector<32x96xf32> to vector<16x32xf32>
    %126 = vector.extract_strided_slice %123 {offsets = [0, 64], sizes = [16, 32], strides = [1, 1]} : vector<32x96xf32> to vector<16x32xf32>
    %127 = vector.broadcast %59 : vector<1x16xf32> to vector<16x16xf32>
    %128 = arith.addf %115, %127 : vector<16x16xf32>
    %129 = arith.truncf %124 : vector<16x32xf32> to vector<16x32xbf16>
    %130 = arith.truncf %125 : vector<16x32xf32> to vector<16x32xbf16>
    %131 = arith.truncf %126 : vector<16x32xf32> to vector<16x32xbf16>
    %132 = vector.extract_strided_slice %129 {offsets = [0, 0], sizes = [16, 8], strides = [1, 1]} : vector<16x32xbf16> to vector<16x8xbf16>
    %133 = vector.extract_strided_slice %130 {offsets = [0, 0], sizes = [16, 8], strides = [1, 1]} : vector<16x32xbf16> to vector<16x8xbf16>
    %cst_73 = arith.constant dense<0.000000e+00> : vector<16x16xf32>
    %134 = tpu.matmul %132, %133, %cst_73 {dimension_numbers = #tpu.dot_dimension_numbers<[1], [1], [0], [0], [0, 0, 1, 0], [], []>} : vector<16x8xbf16>, vector<16x8xbf16>, vector<16x16xf32> -> vector<16x16xf32>
    %135 = arith.addf %134, %128 : vector<16x16xf32>
    %136 = vector.extract_strided_slice %129 {offsets = [0, 8], sizes = [16, 8], strides = [1, 1]} : vector<16x32xbf16> to vector<16x8xbf16>
    %137 = vector.extract_strided_slice %130 {offsets = [0, 8], sizes = [16, 8], strides = [1, 1]} : vector<16x32xbf16> to vector<16x8xbf16>
    %cst_74 = arith.constant dense<0.000000e+00> : vector<16x16xf32>
    %138 = tpu.matmul %136, %137, %cst_74 {dimension_numbers = #tpu.dot_dimension_numbers<[1], [1], [0], [0], [0, 0, 1, 0], [], []>} : vector<16x8xbf16>, vector<16x8xbf16>, vector<16x16xf32> -> vector<16x16xf32>
    %139 = arith.addf %138, %128 : vector<16x16xf32>
    %140 = vector.extract_strided_slice %129 {offsets = [0, 16], sizes = [16, 8], strides = [1, 1]} : vector<16x32xbf16> to vector<16x8xbf16>
    %141 = vector.extract_strided_slice %130 {offsets = [0, 16], sizes = [16, 8], strides = [1, 1]} : vector<16x32xbf16> to vector<16x8xbf16>
    %cst_75 = arith.constant dense<0.000000e+00> : vector<16x16xf32>
    %142 = tpu.matmul %140, %141, %cst_75 {dimension_numbers = #tpu.dot_dimension_numbers<[1], [1], [0], [0], [0, 0, 1, 0], [], []>} : vector<16x8xbf16>, vector<16x8xbf16>, vector<16x16xf32> -> vector<16x16xf32>
    %143 = arith.addf %142, %128 : vector<16x16xf32>
    %144 = vector.extract_strided_slice %129 {offsets = [0, 24], sizes = [16, 8], strides = [1, 1]} : vector<16x32xbf16> to vector<16x8xbf16>
    %145 = vector.extract_strided_slice %130 {offsets = [0, 24], sizes = [16, 8], strides = [1, 1]} : vector<16x32xbf16> to vector<16x8xbf16>
    %cst_76 = arith.constant dense<0.000000e+00> : vector<16x16xf32>
    %146 = tpu.matmul %144, %145, %cst_76 {dimension_numbers = #tpu.dot_dimension_numbers<[1], [1], [0], [0], [0, 0, 1, 0], [], []>} : vector<16x8xbf16>, vector<16x8xbf16>, vector<16x16xf32> -> vector<16x16xf32>
    %147 = arith.addf %146, %128 : vector<16x16xf32>
    %148 = tpu.concatenate %135, %139, %143, %147 in 0 : vector<16x16xf32>, vector<16x16xf32>, vector<16x16xf32>, vector<16x16xf32> -> vector<64x16xf32>
    %cst_77 = arith.constant dense<0xFF800000> : vector<64xf32>
    %149 = vector.multi_reduction <maximumf>, %148, %cst_77 [1] : vector<64x16xf32> to vector<64xf32>
    %150 = vector.shape_cast %149 : vector<64xf32> to vector<64x1xf32>
    %151 = vector.broadcast %150 : vector<64x1xf32> to vector<64x16xf32>
    %152 = arith.subf %148, %151 : vector<64x16xf32>
    %153 = math.exp %152 : vector<64x16xf32>
    %cst_78 = arith.constant dense<0.000000e+00> : vector<64xf32>
    %154 = vector.multi_reduction <add>, %153, %cst_78 [1] : vector<64x16xf32> to vector<64xf32>
    %155 = vector.shape_cast %154 : vector<64xf32> to vector<64x1xf32>
    %156 = vector.broadcast %155 : vector<64x1xf32> to vector<64x16xf32>
    %157 = arith.divf %153, %156 : vector<64x16xf32>
    %158 = arith.truncf %157 : vector<64x16xf32> to vector<64x16xbf16>
    %159 = vector.extract_strided_slice %158 {offsets = [0, 0], sizes = [16, 16], strides = [1, 1]} : vector<64x16xbf16> to vector<16x16xbf16>
    %160 = vector.extract_strided_slice %131 {offsets = [0, 0], sizes = [16, 8], strides = [1, 1]} : vector<16x32xbf16> to vector<16x8xbf16>
    %cst_79 = arith.constant dense<0.000000e+00> : vector<16x8xf32>
    %161 = tpu.matmul %159, %160, %cst_79 {dimension_numbers = #tpu.dot_dimension_numbers<[1], [0], [0], [1], [0, 0, 1, 1], [], []>} : vector<16x16xbf16>, vector<16x8xbf16>, vector<16x8xf32> -> vector<16x8xf32>
    %162 = vector.extract_strided_slice %158 {offsets = [16, 0], sizes = [16, 16], strides = [1, 1]} : vector<64x16xbf16> to vector<16x16xbf16>
    %163 = vector.extract_strided_slice %131 {offsets = [0, 8], sizes = [16, 8], strides = [1, 1]} : vector<16x32xbf16> to vector<16x8xbf16>
    %cst_80 = arith.constant dense<0.000000e+00> : vector<16x8xf32>
    %164 = tpu.matmul %162, %163, %cst_80 {dimension_numbers = #tpu.dot_dimension_numbers<[1], [0], [0], [1], [0, 0, 1, 1], [], []>} : vector<16x16xbf16>, vector<16x8xbf16>, vector<16x8xf32> -> vector<16x8xf32>
    %165 = vector.extract_strided_slice %158 {offsets = [32, 0], sizes = [16, 16], strides = [1, 1]} : vector<64x16xbf16> to vector<16x16xbf16>
    %166 = vector.extract_strided_slice %131 {offsets = [0, 16], sizes = [16, 8], strides = [1, 1]} : vector<16x32xbf16> to vector<16x8xbf16>
    %cst_81 = arith.constant dense<0.000000e+00> : vector<16x8xf32>
    %167 = tpu.matmul %165, %166, %cst_81 {dimension_numbers = #tpu.dot_dimension_numbers<[1], [0], [0], [1], [0, 0, 1, 1], [], []>} : vector<16x16xbf16>, vector<16x8xbf16>, vector<16x8xf32> -> vector<16x8xf32>
    %168 = vector.extract_strided_slice %158 {offsets = [48, 0], sizes = [16, 16], strides = [1, 1]} : vector<64x16xbf16> to vector<16x16xbf16>
    %169 = vector.extract_strided_slice %131 {offsets = [0, 24], sizes = [16, 8], strides = [1, 1]} : vector<16x32xbf16> to vector<16x8xbf16>
    %cst_82 = arith.constant dense<0.000000e+00> : vector<16x8xf32>
    %170 = tpu.matmul %168, %169, %cst_82 {dimension_numbers = #tpu.dot_dimension_numbers<[1], [0], [0], [1], [0, 0, 1, 1], [], []>} : vector<16x16xbf16>, vector<16x8xbf16>, vector<16x8xf32> -> vector<16x8xf32>
    %171 = tpu.concatenate %161, %164, %167, %170 in 1 : vector<16x8xf32>, vector<16x8xf32>, vector<16x8xf32>, vector<16x8xf32> -> vector<16x32xf32>
    %172 = vector.extract_strided_slice %123 {offsets = [16, 0], sizes = [16, 32], strides = [1, 1]} : vector<32x96xf32> to vector<16x32xf32>
    %173 = vector.extract_strided_slice %123 {offsets = [16, 32], sizes = [16, 32], strides = [1, 1]} : vector<32x96xf32> to vector<16x32xf32>
    %174 = vector.extract_strided_slice %123 {offsets = [16, 64], sizes = [16, 32], strides = [1, 1]} : vector<32x96xf32> to vector<16x32xf32>
    %175 = vector.broadcast %97 : vector<1x16xf32> to vector<16x16xf32>
    %176 = arith.addf %115, %175 : vector<16x16xf32>
    %177 = arith.truncf %172 : vector<16x32xf32> to vector<16x32xbf16>
    %178 = arith.truncf %173 : vector<16x32xf32> to vector<16x32xbf16>
    %179 = arith.truncf %174 : vector<16x32xf32> to vector<16x32xbf16>
    %180 = vector.extract_strided_slice %177 {offsets = [0, 0], sizes = [16, 8], strides = [1, 1]} : vector<16x32xbf16> to vector<16x8xbf16>
    %181 = vector.extract_strided_slice %178 {offsets = [0, 0], sizes = [16, 8], strides = [1, 1]} : vector<16x32xbf16> to vector<16x8xbf16>
    %cst_83 = arith.constant dense<0.000000e+00> : vector<16x16xf32>
    %182 = tpu.matmul %180, %181, %cst_83 {dimension_numbers = #tpu.dot_dimension_numbers<[1], [1], [0], [0], [0, 0, 1, 0], [], []>} : vector<16x8xbf16>, vector<16x8xbf16>, vector<16x16xf32> -> vector<16x16xf32>
    %183 = arith.addf %182, %176 : vector<16x16xf32>
    %184 = vector.extract_strided_slice %177 {offsets = [0, 8], sizes = [16, 8], strides = [1, 1]} : vector<16x32xbf16> to vector<16x8xbf16>
    %185 = vector.extract_strided_slice %178 {offsets = [0, 8], sizes = [16, 8], strides = [1, 1]} : vector<16x32xbf16> to vector<16x8xbf16>
    %cst_84 = arith.constant dense<0.000000e+00> : vector<16x16xf32>
    %186 = tpu.matmul %184, %185, %cst_84 {dimension_numbers = #tpu.dot_dimension_numbers<[1], [1], [0], [0], [0, 0, 1, 0], [], []>} : vector<16x8xbf16>, vector<16x8xbf16>, vector<16x16xf32> -> vector<16x16xf32>
    %187 = arith.addf %186, %176 : vector<16x16xf32>
    %188 = vector.extract_strided_slice %177 {offsets = [0, 16], sizes = [16, 8], strides = [1, 1]} : vector<16x32xbf16> to vector<16x8xbf16>
    %189 = vector.extract_strided_slice %178 {offsets = [0, 16], sizes = [16, 8], strides = [1, 1]} : vector<16x32xbf16> to vector<16x8xbf16>
    %cst_85 = arith.constant dense<0.000000e+00> : vector<16x16xf32>
    %190 = tpu.matmul %188, %189, %cst_85 {dimension_numbers = #tpu.dot_dimension_numbers<[1], [1], [0], [0], [0, 0, 1, 0], [], []>} : vector<16x8xbf16>, vector<16x8xbf16>, vector<16x16xf32> -> vector<16x16xf32>
    %191 = arith.addf %190, %176 : vector<16x16xf32>
    %192 = vector.extract_strided_slice %177 {offsets = [0, 24], sizes = [16, 8], strides = [1, 1]} : vector<16x32xbf16> to vector<16x8xbf16>
    %193 = vector.extract_strided_slice %178 {offsets = [0, 24], sizes = [16, 8], strides = [1, 1]} : vector<16x32xbf16> to vector<16x8xbf16>
    %cst_86 = arith.constant dense<0.000000e+00> : vector<16x16xf32>
    %194 = tpu.matmul %192, %193, %cst_86 {dimension_numbers = #tpu.dot_dimension_numbers<[1], [1], [0], [0], [0, 0, 1, 0], [], []>} : vector<16x8xbf16>, vector<16x8xbf16>, vector<16x16xf32> -> vector<16x16xf32>
    %195 = arith.addf %194, %176 : vector<16x16xf32>
    %196 = tpu.concatenate %183, %187, %191, %195 in 0 : vector<16x16xf32>, vector<16x16xf32>, vector<16x16xf32>, vector<16x16xf32> -> vector<64x16xf32>
    %cst_87 = arith.constant dense<0xFF800000> : vector<64xf32>
    %197 = vector.multi_reduction <maximumf>, %196, %cst_87 [1] : vector<64x16xf32> to vector<64xf32>
    %198 = vector.shape_cast %197 : vector<64xf32> to vector<64x1xf32>
    %199 = vector.broadcast %198 : vector<64x1xf32> to vector<64x16xf32>
    %200 = arith.subf %196, %199 : vector<64x16xf32>
    %201 = math.exp %200 : vector<64x16xf32>
    %cst_88 = arith.constant dense<0.000000e+00> : vector<64xf32>
    %202 = vector.multi_reduction <add>, %201, %cst_88 [1] : vector<64x16xf32> to vector<64xf32>
    %203 = vector.shape_cast %202 : vector<64xf32> to vector<64x1xf32>
    %204 = vector.broadcast %203 : vector<64x1xf32> to vector<64x16xf32>
    %205 = arith.divf %201, %204 : vector<64x16xf32>
    %206 = arith.truncf %205 : vector<64x16xf32> to vector<64x16xbf16>
    %207 = vector.extract_strided_slice %206 {offsets = [0, 0], sizes = [16, 16], strides = [1, 1]} : vector<64x16xbf16> to vector<16x16xbf16>
    %208 = vector.extract_strided_slice %179 {offsets = [0, 0], sizes = [16, 8], strides = [1, 1]} : vector<16x32xbf16> to vector<16x8xbf16>
    %cst_89 = arith.constant dense<0.000000e+00> : vector<16x8xf32>
    %209 = tpu.matmul %207, %208, %cst_89 {dimension_numbers = #tpu.dot_dimension_numbers<[1], [0], [0], [1], [0, 0, 1, 1], [], []>} : vector<16x16xbf16>, vector<16x8xbf16>, vector<16x8xf32> -> vector<16x8xf32>
    %210 = vector.extract_strided_slice %206 {offsets = [16, 0], sizes = [16, 16], strides = [1, 1]} : vector<64x16xbf16> to vector<16x16xbf16>
    %211 = vector.extract_strided_slice %179 {offsets = [0, 8], sizes = [16, 8], strides = [1, 1]} : vector<16x32xbf16> to vector<16x8xbf16>
    %cst_90 = arith.constant dense<0.000000e+00> : vector<16x8xf32>
    %212 = tpu.matmul %210, %211, %cst_90 {dimension_numbers = #tpu.dot_dimension_numbers<[1], [0], [0], [1], [0, 0, 1, 1], [], []>} : vector<16x16xbf16>, vector<16x8xbf16>, vector<16x8xf32> -> vector<16x8xf32>
    %213 = vector.extract_strided_slice %206 {offsets = [32, 0], sizes = [16, 16], strides = [1, 1]} : vector<64x16xbf16> to vector<16x16xbf16>
    %214 = vector.extract_strided_slice %179 {offsets = [0, 16], sizes = [16, 8], strides = [1, 1]} : vector<16x32xbf16> to vector<16x8xbf16>
    %cst_91 = arith.constant dense<0.000000e+00> : vector<16x8xf32>
    %215 = tpu.matmul %213, %214, %cst_91 {dimension_numbers = #tpu.dot_dimension_numbers<[1], [0], [0], [1], [0, 0, 1, 1], [], []>} : vector<16x16xbf16>, vector<16x8xbf16>, vector<16x8xf32> -> vector<16x8xf32>
    %216 = vector.extract_strided_slice %206 {offsets = [48, 0], sizes = [16, 16], strides = [1, 1]} : vector<64x16xbf16> to vector<16x16xbf16>
    %217 = vector.extract_strided_slice %179 {offsets = [0, 24], sizes = [16, 8], strides = [1, 1]} : vector<16x32xbf16> to vector<16x8xbf16>
    %cst_92 = arith.constant dense<0.000000e+00> : vector<16x8xf32>
    %218 = tpu.matmul %216, %217, %cst_92 {dimension_numbers = #tpu.dot_dimension_numbers<[1], [0], [0], [1], [0, 0, 1, 1], [], []>} : vector<16x16xbf16>, vector<16x8xbf16>, vector<16x8xf32> -> vector<16x8xf32>
    %219 = tpu.concatenate %209, %212, %215, %218 in 1 : vector<16x8xf32>, vector<16x8xf32>, vector<16x8xf32>, vector<16x8xf32> -> vector<16x32xf32>
    %220 = tpu.concatenate %171, %219 in 0 : vector<16x32xf32>, vector<16x32xf32> -> vector<32x32xf32>
    %c96 = arith.constant 96 : index
    %c0_93 = arith.constant 0 : index
    %221 = vector.load %arg4[%c96, %c0_93] : memref<896x128xbf16, #tpu.memory_space<vmem>>, vector<32x32xbf16>
    %222 = arith.truncf %220 : vector<32x32xf32> to vector<32x32xbf16>
    %cst_94 = arith.constant dense<0.000000e+00> : vector<32x32xf32>
    %223 = tpu.matmul %222, %221, %cst_94 {dimension_numbers = #tpu.dot_dimension_numbers<[1], [0], [0], [1], [0, 0, 1, 1], [], []>} : vector<32x32xbf16>, vector<32x32xbf16>, vector<32x32xf32> -> vector<32x32xf32>
    %c32 = arith.constant 32 : index
    %c0_95 = arith.constant 0 : index
    %224 = vector.load %arg5[%c32, %c0_95] : memref<312x128xf32, #tpu.memory_space<vmem>>, vector<1x32xf32>
    %225 = vector.broadcast %224 : vector<1x32xf32> to vector<32x32xf32>
    %226 = arith.addf %223, %225 : vector<32x32xf32>
    %227 = arith.addf %114, %226 : vector<32x32xf32>
    %228 = vector.extract_strided_slice %116 {offsets = [0, 0], sizes = [1, 32], strides = [1, 1]} : vector<2x32xf32> to vector<1x32xf32>
    %229 = vector.extract_strided_slice %117 {offsets = [0, 0], sizes = [1, 32], strides = [1, 1]} : vector<2x32xf32> to vector<1x32xf32>
    %cst_96 = arith.constant dense<0.000000e+00> : vector<32xf32>
    %230 = vector.multi_reduction <add>, %227, %cst_96 [1] : vector<32x32xf32> to vector<32xf32>
    %231 = vector.shape_cast %230 : vector<32xf32> to vector<32x1xf32>
    %cst_97 = arith.constant 3.200000e+01 : f32
    %232 = vector.broadcast %cst_97 : f32 to vector<32x1xf32>
    %233 = arith.divf %231, %232 : vector<32x1xf32>
    %234 = vector.broadcast %233 : vector<32x1xf32> to vector<32x32xf32>
    %235 = arith.subf %227, %234 : vector<32x32xf32>
    %236 = arith.mulf %235, %235 : vector<32x32xf32>
    %cst_98 = arith.constant dense<0.000000e+00> : vector<32xf32>
    %237 = vector.multi_reduction <add>, %236, %cst_98 [1] : vector<32x32xf32> to vector<32xf32>
    %238 = vector.shape_cast %237 : vector<32xf32> to vector<32x1xf32>
    %cst_99 = arith.constant 3.200000e+01 : f32
    %239 = vector.broadcast %cst_99 : f32 to vector<32x1xf32>
    %240 = arith.divf %238, %239 : vector<32x1xf32>
    %cst_100 = arith.constant 9.99999974E-6 : f32
    %241 = vector.broadcast %cst_100 : f32 to vector<32x1xf32>
    %242 = arith.addf %240, %241 : vector<32x1xf32>
    %243 = math.rsqrt %242 : vector<32x1xf32>
    %244 = vector.broadcast %243 : vector<32x1xf32> to vector<32x32xf32>
    %245 = arith.mulf %235, %244 : vector<32x32xf32>
    %246 = vector.broadcast %228 : vector<1x32xf32> to vector<32x32xf32>
    %247 = arith.mulf %245, %246 : vector<32x32xf32>
    %248 = vector.broadcast %229 : vector<1x32xf32> to vector<32x32xf32>
    %249 = arith.addf %247, %248 : vector<32x32xf32>
    %c128 = arith.constant 128 : index
    %c0_101 = arith.constant 0 : index
    %250 = vector.load %arg4[%c128, %c0_101] : memref<896x128xbf16, #tpu.memory_space<vmem>>, vector<32x64xbf16>
    %251 = arith.truncf %249 : vector<32x32xf32> to vector<32x32xbf16>
    %cst_102 = arith.constant dense<0.000000e+00> : vector<32x64xf32>
    %252 = tpu.matmul %251, %250, %cst_102 {dimension_numbers = #tpu.dot_dimension_numbers<[1], [0], [0], [1], [0, 0, 1, 1], [], []>} : vector<32x32xbf16>, vector<32x64xbf16>, vector<32x64xf32> -> vector<32x64xf32>
    %c40 = arith.constant 40 : index
    %c0_103 = arith.constant 0 : index
    %253 = vector.load %arg5[%c40, %c0_103] : memref<312x128xf32, #tpu.memory_space<vmem>>, vector<1x64xf32>
    %254 = vector.broadcast %253 : vector<1x64xf32> to vector<32x64xf32>
    %255 = arith.addf %252, %254 : vector<32x64xf32>
    %cst_104 = arith.constant 0.000000e+00 : f32
    %256 = vector.broadcast %cst_104 : f32 to vector<32x64xf32>
    %257 = arith.maximumf %255, %256 : vector<32x64xf32>
    %c160 = arith.constant 160 : index
    %c0_105 = arith.constant 0 : index
    %258 = vector.load %arg4[%c160, %c0_105] : memref<896x128xbf16, #tpu.memory_space<vmem>>, vector<64x32xbf16>
    %259 = arith.truncf %257 : vector<32x64xf32> to vector<32x64xbf16>
    %cst_106 = arith.constant dense<0.000000e+00> : vector<32x32xf32>
    %260 = tpu.matmul %259, %258, %cst_106 {dimension_numbers = #tpu.dot_dimension_numbers<[1], [0], [0], [1], [0, 0, 1, 1], [], []>} : vector<32x64xbf16>, vector<64x32xbf16>, vector<32x32xf32> -> vector<32x32xf32>
    %c48 = arith.constant 48 : index
    %c0_107 = arith.constant 0 : index
    %261 = vector.load %arg5[%c48, %c0_107] : memref<312x128xf32, #tpu.memory_space<vmem>>, vector<1x32xf32>
    %262 = vector.broadcast %261 : vector<1x32xf32> to vector<32x32xf32>
    %263 = arith.addf %260, %262 : vector<32x32xf32>
    %264 = arith.addf %249, %263 : vector<32x32xf32>
    %265 = vector.extract_strided_slice %116 {offsets = [1, 0], sizes = [1, 32], strides = [1, 1]} : vector<2x32xf32> to vector<1x32xf32>
    %266 = vector.extract_strided_slice %117 {offsets = [1, 0], sizes = [1, 32], strides = [1, 1]} : vector<2x32xf32> to vector<1x32xf32>
    %cst_108 = arith.constant dense<0.000000e+00> : vector<32xf32>
    %267 = vector.multi_reduction <add>, %264, %cst_108 [1] : vector<32x32xf32> to vector<32xf32>
    %268 = vector.shape_cast %267 : vector<32xf32> to vector<32x1xf32>
    %cst_109 = arith.constant 3.200000e+01 : f32
    %269 = vector.broadcast %cst_109 : f32 to vector<32x1xf32>
    %270 = arith.divf %268, %269 : vector<32x1xf32>
    %271 = vector.broadcast %270 : vector<32x1xf32> to vector<32x32xf32>
    %272 = arith.subf %264, %271 : vector<32x32xf32>
    %273 = arith.mulf %272, %272 : vector<32x32xf32>
    %cst_110 = arith.constant dense<0.000000e+00> : vector<32xf32>
    %274 = vector.multi_reduction <add>, %273, %cst_110 [1] : vector<32x32xf32> to vector<32xf32>
    %275 = vector.shape_cast %274 : vector<32xf32> to vector<32x1xf32>
    %cst_111 = arith.constant 3.200000e+01 : f32
    %276 = vector.broadcast %cst_111 : f32 to vector<32x1xf32>
    %277 = arith.divf %275, %276 : vector<32x1xf32>
    %cst_112 = arith.constant 9.99999974E-6 : f32
    %278 = vector.broadcast %cst_112 : f32 to vector<32x1xf32>
    %279 = arith.addf %277, %278 : vector<32x1xf32>
    %280 = math.rsqrt %279 : vector<32x1xf32>
    %281 = vector.broadcast %280 : vector<32x1xf32> to vector<32x32xf32>
    %282 = arith.mulf %272, %281 : vector<32x32xf32>
    %283 = vector.broadcast %265 : vector<1x32xf32> to vector<32x32xf32>
    %284 = arith.mulf %282, %283 : vector<32x32xf32>
    %285 = vector.broadcast %266 : vector<1x32xf32> to vector<32x32xf32>
    %286 = arith.addf %284, %285 : vector<32x32xf32>
    %c104 = arith.constant 104 : index
    %c0_113 = arith.constant 0 : index
    %287 = vector.load %arg5[%c104, %c0_113] : memref<312x128xf32, #tpu.memory_space<vmem>>, vector<2x32xf32>
    %c112 = arith.constant 112 : index
    %c0_114 = arith.constant 0 : index
    %288 = vector.load %arg5[%c112, %c0_114] : memref<312x128xf32, #tpu.memory_space<vmem>>, vector<2x32xf32>
    %c224 = arith.constant 224 : index
    %c0_115 = arith.constant 0 : index
    %289 = vector.load %arg4[%c224, %c0_115] : memref<896x128xbf16, #tpu.memory_space<vmem>>, vector<32x96xbf16>
    %290 = arith.truncf %286 : vector<32x32xf32> to vector<32x32xbf16>
    %cst_116 = arith.constant dense<0.000000e+00> : vector<32x96xf32>
    %291 = tpu.matmul %290, %289, %cst_116 {dimension_numbers = #tpu.dot_dimension_numbers<[1], [0], [0], [1], [0, 0, 1, 1], [], []>} : vector<32x32xbf16>, vector<32x96xbf16>, vector<32x96xf32> -> vector<32x96xf32>
    %c72 = arith.constant 72 : index
    %c0_117 = arith.constant 0 : index
    %292 = vector.load %arg5[%c72, %c0_117] : memref<312x128xf32, #tpu.memory_space<vmem>>, vector<1x96xf32>
    %293 = vector.broadcast %292 : vector<1x96xf32> to vector<32x96xf32>
    %294 = arith.addf %291, %293 : vector<32x96xf32>
    %295 = vector.extract_strided_slice %294 {offsets = [0, 0], sizes = [16, 32], strides = [1, 1]} : vector<32x96xf32> to vector<16x32xf32>
    %296 = vector.extract_strided_slice %294 {offsets = [0, 32], sizes = [16, 32], strides = [1, 1]} : vector<32x96xf32> to vector<16x32xf32>
    %297 = vector.extract_strided_slice %294 {offsets = [0, 64], sizes = [16, 32], strides = [1, 1]} : vector<32x96xf32> to vector<16x32xf32>
    %298 = vector.broadcast %59 : vector<1x16xf32> to vector<16x16xf32>
    %299 = arith.addf %115, %298 : vector<16x16xf32>
    %300 = arith.truncf %295 : vector<16x32xf32> to vector<16x32xbf16>
    %301 = arith.truncf %296 : vector<16x32xf32> to vector<16x32xbf16>
    %302 = arith.truncf %297 : vector<16x32xf32> to vector<16x32xbf16>
    %303 = vector.extract_strided_slice %300 {offsets = [0, 0], sizes = [16, 8], strides = [1, 1]} : vector<16x32xbf16> to vector<16x8xbf16>
    %304 = vector.extract_strided_slice %301 {offsets = [0, 0], sizes = [16, 8], strides = [1, 1]} : vector<16x32xbf16> to vector<16x8xbf16>
    %cst_118 = arith.constant dense<0.000000e+00> : vector<16x16xf32>
    %305 = tpu.matmul %303, %304, %cst_118 {dimension_numbers = #tpu.dot_dimension_numbers<[1], [1], [0], [0], [0, 0, 1, 0], [], []>} : vector<16x8xbf16>, vector<16x8xbf16>, vector<16x16xf32> -> vector<16x16xf32>
    %306 = arith.addf %305, %299 : vector<16x16xf32>
    %307 = vector.extract_strided_slice %300 {offsets = [0, 8], sizes = [16, 8], strides = [1, 1]} : vector<16x32xbf16> to vector<16x8xbf16>
    %308 = vector.extract_strided_slice %301 {offsets = [0, 8], sizes = [16, 8], strides = [1, 1]} : vector<16x32xbf16> to vector<16x8xbf16>
    %cst_119 = arith.constant dense<0.000000e+00> : vector<16x16xf32>
    %309 = tpu.matmul %307, %308, %cst_119 {dimension_numbers = #tpu.dot_dimension_numbers<[1], [1], [0], [0], [0, 0, 1, 0], [], []>} : vector<16x8xbf16>, vector<16x8xbf16>, vector<16x16xf32> -> vector<16x16xf32>
    %310 = arith.addf %309, %299 : vector<16x16xf32>
    %311 = vector.extract_strided_slice %300 {offsets = [0, 16], sizes = [16, 8], strides = [1, 1]} : vector<16x32xbf16> to vector<16x8xbf16>
    %312 = vector.extract_strided_slice %301 {offsets = [0, 16], sizes = [16, 8], strides = [1, 1]} : vector<16x32xbf16> to vector<16x8xbf16>
    %cst_120 = arith.constant dense<0.000000e+00> : vector<16x16xf32>
    %313 = tpu.matmul %311, %312, %cst_120 {dimension_numbers = #tpu.dot_dimension_numbers<[1], [1], [0], [0], [0, 0, 1, 0], [], []>} : vector<16x8xbf16>, vector<16x8xbf16>, vector<16x16xf32> -> vector<16x16xf32>
    %314 = arith.addf %313, %299 : vector<16x16xf32>
    %315 = vector.extract_strided_slice %300 {offsets = [0, 24], sizes = [16, 8], strides = [1, 1]} : vector<16x32xbf16> to vector<16x8xbf16>
    %316 = vector.extract_strided_slice %301 {offsets = [0, 24], sizes = [16, 8], strides = [1, 1]} : vector<16x32xbf16> to vector<16x8xbf16>
    %cst_121 = arith.constant dense<0.000000e+00> : vector<16x16xf32>
    %317 = tpu.matmul %315, %316, %cst_121 {dimension_numbers = #tpu.dot_dimension_numbers<[1], [1], [0], [0], [0, 0, 1, 0], [], []>} : vector<16x8xbf16>, vector<16x8xbf16>, vector<16x16xf32> -> vector<16x16xf32>
    %318 = arith.addf %317, %299 : vector<16x16xf32>
    %319 = tpu.concatenate %306, %310, %314, %318 in 0 : vector<16x16xf32>, vector<16x16xf32>, vector<16x16xf32>, vector<16x16xf32> -> vector<64x16xf32>
    %cst_122 = arith.constant dense<0xFF800000> : vector<64xf32>
    %320 = vector.multi_reduction <maximumf>, %319, %cst_122 [1] : vector<64x16xf32> to vector<64xf32>
    %321 = vector.shape_cast %320 : vector<64xf32> to vector<64x1xf32>
    %322 = vector.broadcast %321 : vector<64x1xf32> to vector<64x16xf32>
    %323 = arith.subf %319, %322 : vector<64x16xf32>
    %324 = math.exp %323 : vector<64x16xf32>
    %cst_123 = arith.constant dense<0.000000e+00> : vector<64xf32>
    %325 = vector.multi_reduction <add>, %324, %cst_123 [1] : vector<64x16xf32> to vector<64xf32>
    %326 = vector.shape_cast %325 : vector<64xf32> to vector<64x1xf32>
    %327 = vector.broadcast %326 : vector<64x1xf32> to vector<64x16xf32>
    %328 = arith.divf %324, %327 : vector<64x16xf32>
    %329 = arith.truncf %328 : vector<64x16xf32> to vector<64x16xbf16>
    %330 = vector.extract_strided_slice %329 {offsets = [0, 0], sizes = [16, 16], strides = [1, 1]} : vector<64x16xbf16> to vector<16x16xbf16>
    %331 = vector.extract_strided_slice %302 {offsets = [0, 0], sizes = [16, 8], strides = [1, 1]} : vector<16x32xbf16> to vector<16x8xbf16>
    %cst_124 = arith.constant dense<0.000000e+00> : vector<16x8xf32>
    %332 = tpu.matmul %330, %331, %cst_124 {dimension_numbers = #tpu.dot_dimension_numbers<[1], [0], [0], [1], [0, 0, 1, 1], [], []>} : vector<16x16xbf16>, vector<16x8xbf16>, vector<16x8xf32> -> vector<16x8xf32>
    %333 = vector.extract_strided_slice %329 {offsets = [16, 0], sizes = [16, 16], strides = [1, 1]} : vector<64x16xbf16> to vector<16x16xbf16>
    %334 = vector.extract_strided_slice %302 {offsets = [0, 8], sizes = [16, 8], strides = [1, 1]} : vector<16x32xbf16> to vector<16x8xbf16>
    %cst_125 = arith.constant dense<0.000000e+00> : vector<16x8xf32>
    %335 = tpu.matmul %333, %334, %cst_125 {dimension_numbers = #tpu.dot_dimension_numbers<[1], [0], [0], [1], [0, 0, 1, 1], [], []>} : vector<16x16xbf16>, vector<16x8xbf16>, vector<16x8xf32> -> vector<16x8xf32>
    %336 = vector.extract_strided_slice %329 {offsets = [32, 0], sizes = [16, 16], strides = [1, 1]} : vector<64x16xbf16> to vector<16x16xbf16>
    %337 = vector.extract_strided_slice %302 {offsets = [0, 16], sizes = [16, 8], strides = [1, 1]} : vector<16x32xbf16> to vector<16x8xbf16>
    %cst_126 = arith.constant dense<0.000000e+00> : vector<16x8xf32>
    %338 = tpu.matmul %336, %337, %cst_126 {dimension_numbers = #tpu.dot_dimension_numbers<[1], [0], [0], [1], [0, 0, 1, 1], [], []>} : vector<16x16xbf16>, vector<16x8xbf16>, vector<16x8xf32> -> vector<16x8xf32>
    %339 = vector.extract_strided_slice %329 {offsets = [48, 0], sizes = [16, 16], strides = [1, 1]} : vector<64x16xbf16> to vector<16x16xbf16>
    %340 = vector.extract_strided_slice %302 {offsets = [0, 24], sizes = [16, 8], strides = [1, 1]} : vector<16x32xbf16> to vector<16x8xbf16>
    %cst_127 = arith.constant dense<0.000000e+00> : vector<16x8xf32>
    %341 = tpu.matmul %339, %340, %cst_127 {dimension_numbers = #tpu.dot_dimension_numbers<[1], [0], [0], [1], [0, 0, 1, 1], [], []>} : vector<16x16xbf16>, vector<16x8xbf16>, vector<16x8xf32> -> vector<16x8xf32>
    %342 = tpu.concatenate %332, %335, %338, %341 in 1 : vector<16x8xf32>, vector<16x8xf32>, vector<16x8xf32>, vector<16x8xf32> -> vector<16x32xf32>
    %343 = vector.extract_strided_slice %294 {offsets = [16, 0], sizes = [16, 32], strides = [1, 1]} : vector<32x96xf32> to vector<16x32xf32>
    %344 = vector.extract_strided_slice %294 {offsets = [16, 32], sizes = [16, 32], strides = [1, 1]} : vector<32x96xf32> to vector<16x32xf32>
    %345 = vector.extract_strided_slice %294 {offsets = [16, 64], sizes = [16, 32], strides = [1, 1]} : vector<32x96xf32> to vector<16x32xf32>
    %346 = vector.broadcast %97 : vector<1x16xf32> to vector<16x16xf32>
    %347 = arith.addf %115, %346 : vector<16x16xf32>
    %348 = arith.truncf %343 : vector<16x32xf32> to vector<16x32xbf16>
    %349 = arith.truncf %344 : vector<16x32xf32> to vector<16x32xbf16>
    %350 = arith.truncf %345 : vector<16x32xf32> to vector<16x32xbf16>
    %351 = vector.extract_strided_slice %348 {offsets = [0, 0], sizes = [16, 8], strides = [1, 1]} : vector<16x32xbf16> to vector<16x8xbf16>
    %352 = vector.extract_strided_slice %349 {offsets = [0, 0], sizes = [16, 8], strides = [1, 1]} : vector<16x32xbf16> to vector<16x8xbf16>
    %cst_128 = arith.constant dense<0.000000e+00> : vector<16x16xf32>
    %353 = tpu.matmul %351, %352, %cst_128 {dimension_numbers = #tpu.dot_dimension_numbers<[1], [1], [0], [0], [0, 0, 1, 0], [], []>} : vector<16x8xbf16>, vector<16x8xbf16>, vector<16x16xf32> -> vector<16x16xf32>
    %354 = arith.addf %353, %347 : vector<16x16xf32>
    %355 = vector.extract_strided_slice %348 {offsets = [0, 8], sizes = [16, 8], strides = [1, 1]} : vector<16x32xbf16> to vector<16x8xbf16>
    %356 = vector.extract_strided_slice %349 {offsets = [0, 8], sizes = [16, 8], strides = [1, 1]} : vector<16x32xbf16> to vector<16x8xbf16>
    %cst_129 = arith.constant dense<0.000000e+00> : vector<16x16xf32>
    %357 = tpu.matmul %355, %356, %cst_129 {dimension_numbers = #tpu.dot_dimension_numbers<[1], [1], [0], [0], [0, 0, 1, 0], [], []>} : vector<16x8xbf16>, vector<16x8xbf16>, vector<16x16xf32> -> vector<16x16xf32>
    %358 = arith.addf %357, %347 : vector<16x16xf32>
    %359 = vector.extract_strided_slice %348 {offsets = [0, 16], sizes = [16, 8], strides = [1, 1]} : vector<16x32xbf16> to vector<16x8xbf16>
    %360 = vector.extract_strided_slice %349 {offsets = [0, 16], sizes = [16, 8], strides = [1, 1]} : vector<16x32xbf16> to vector<16x8xbf16>
    %cst_130 = arith.constant dense<0.000000e+00> : vector<16x16xf32>
    %361 = tpu.matmul %359, %360, %cst_130 {dimension_numbers = #tpu.dot_dimension_numbers<[1], [1], [0], [0], [0, 0, 1, 0], [], []>} : vector<16x8xbf16>, vector<16x8xbf16>, vector<16x16xf32> -> vector<16x16xf32>
    %362 = arith.addf %361, %347 : vector<16x16xf32>
    %363 = vector.extract_strided_slice %348 {offsets = [0, 24], sizes = [16, 8], strides = [1, 1]} : vector<16x32xbf16> to vector<16x8xbf16>
    %364 = vector.extract_strided_slice %349 {offsets = [0, 24], sizes = [16, 8], strides = [1, 1]} : vector<16x32xbf16> to vector<16x8xbf16>
    %cst_131 = arith.constant dense<0.000000e+00> : vector<16x16xf32>
    %365 = tpu.matmul %363, %364, %cst_131 {dimension_numbers = #tpu.dot_dimension_numbers<[1], [1], [0], [0], [0, 0, 1, 0], [], []>} : vector<16x8xbf16>, vector<16x8xbf16>, vector<16x16xf32> -> vector<16x16xf32>
    %366 = arith.addf %365, %347 : vector<16x16xf32>
    %367 = tpu.concatenate %354, %358, %362, %366 in 0 : vector<16x16xf32>, vector<16x16xf32>, vector<16x16xf32>, vector<16x16xf32> -> vector<64x16xf32>
    %cst_132 = arith.constant dense<0xFF800000> : vector<64xf32>
    %368 = vector.multi_reduction <maximumf>, %367, %cst_132 [1] : vector<64x16xf32> to vector<64xf32>
    %369 = vector.shape_cast %368 : vector<64xf32> to vector<64x1xf32>
    %370 = vector.broadcast %369 : vector<64x1xf32> to vector<64x16xf32>
    %371 = arith.subf %367, %370 : vector<64x16xf32>
    %372 = math.exp %371 : vector<64x16xf32>
    %cst_133 = arith.constant dense<0.000000e+00> : vector<64xf32>
    %373 = vector.multi_reduction <add>, %372, %cst_133 [1] : vector<64x16xf32> to vector<64xf32>
    %374 = vector.shape_cast %373 : vector<64xf32> to vector<64x1xf32>
    %375 = vector.broadcast %374 : vector<64x1xf32> to vector<64x16xf32>
    %376 = arith.divf %372, %375 : vector<64x16xf32>
    %377 = arith.truncf %376 : vector<64x16xf32> to vector<64x16xbf16>
    %378 = vector.extract_strided_slice %377 {offsets = [0, 0], sizes = [16, 16], strides = [1, 1]} : vector<64x16xbf16> to vector<16x16xbf16>
    %379 = vector.extract_strided_slice %350 {offsets = [0, 0], sizes = [16, 8], strides = [1, 1]} : vector<16x32xbf16> to vector<16x8xbf16>
    %cst_134 = arith.constant dense<0.000000e+00> : vector<16x8xf32>
    %380 = tpu.matmul %378, %379, %cst_134 {dimension_numbers = #tpu.dot_dimension_numbers<[1], [0], [0], [1], [0, 0, 1, 1], [], []>} : vector<16x16xbf16>, vector<16x8xbf16>, vector<16x8xf32> -> vector<16x8xf32>
    %381 = vector.extract_strided_slice %377 {offsets = [16, 0], sizes = [16, 16], strides = [1, 1]} : vector<64x16xbf16> to vector<16x16xbf16>
    %382 = vector.extract_strided_slice %350 {offsets = [0, 8], sizes = [16, 8], strides = [1, 1]} : vector<16x32xbf16> to vector<16x8xbf16>
    %cst_135 = arith.constant dense<0.000000e+00> : vector<16x8xf32>
    %383 = tpu.matmul %381, %382, %cst_135 {dimension_numbers = #tpu.dot_dimension_numbers<[1], [0], [0], [1], [0, 0, 1, 1], [], []>} : vector<16x16xbf16>, vector<16x8xbf16>, vector<16x8xf32> -> vector<16x8xf32>
    %384 = vector.extract_strided_slice %377 {offsets = [32, 0], sizes = [16, 16], strides = [1, 1]} : vector<64x16xbf16> to vector<16x16xbf16>
    %385 = vector.extract_strided_slice %350 {offsets = [0, 16], sizes = [16, 8], strides = [1, 1]} : vector<16x32xbf16> to vector<16x8xbf16>
    %cst_136 = arith.constant dense<0.000000e+00> : vector<16x8xf32>
    %386 = tpu.matmul %384, %385, %cst_136 {dimension_numbers = #tpu.dot_dimension_numbers<[1], [0], [0], [1], [0, 0, 1, 1], [], []>} : vector<16x16xbf16>, vector<16x8xbf16>, vector<16x8xf32> -> vector<16x8xf32>
    %387 = vector.extract_strided_slice %377 {offsets = [48, 0], sizes = [16, 16], strides = [1, 1]} : vector<64x16xbf16> to vector<16x16xbf16>
    %388 = vector.extract_strided_slice %350 {offsets = [0, 24], sizes = [16, 8], strides = [1, 1]} : vector<16x32xbf16> to vector<16x8xbf16>
    %cst_137 = arith.constant dense<0.000000e+00> : vector<16x8xf32>
    %389 = tpu.matmul %387, %388, %cst_137 {dimension_numbers = #tpu.dot_dimension_numbers<[1], [0], [0], [1], [0, 0, 1, 1], [], []>} : vector<16x16xbf16>, vector<16x8xbf16>, vector<16x8xf32> -> vector<16x8xf32>
    %390 = tpu.concatenate %380, %383, %386, %389 in 1 : vector<16x8xf32>, vector<16x8xf32>, vector<16x8xf32>, vector<16x8xf32> -> vector<16x32xf32>
    %391 = tpu.concatenate %342, %390 in 0 : vector<16x32xf32>, vector<16x32xf32> -> vector<32x32xf32>
    %c256 = arith.constant 256 : index
    %c0_138 = arith.constant 0 : index
    %392 = vector.load %arg4[%c256, %c0_138] : memref<896x128xbf16, #tpu.memory_space<vmem>>, vector<32x32xbf16>
    %393 = arith.truncf %391 : vector<32x32xf32> to vector<32x32xbf16>
    %cst_139 = arith.constant dense<0.000000e+00> : vector<32x32xf32>
    %394 = tpu.matmul %393, %392, %cst_139 {dimension_numbers = #tpu.dot_dimension_numbers<[1], [0], [0], [1], [0, 0, 1, 1], [], []>} : vector<32x32xbf16>, vector<32x32xbf16>, vector<32x32xf32> -> vector<32x32xf32>
    %c80 = arith.constant 80 : index
    %c0_140 = arith.constant 0 : index
    %395 = vector.load %arg5[%c80, %c0_140] : memref<312x128xf32, #tpu.memory_space<vmem>>, vector<1x32xf32>
    %396 = vector.broadcast %395 : vector<1x32xf32> to vector<32x32xf32>
    %397 = arith.addf %394, %396 : vector<32x32xf32>
    %398 = arith.addf %286, %397 : vector<32x32xf32>
    %399 = vector.extract_strided_slice %287 {offsets = [0, 0], sizes = [1, 32], strides = [1, 1]} : vector<2x32xf32> to vector<1x32xf32>
    %400 = vector.extract_strided_slice %288 {offsets = [0, 0], sizes = [1, 32], strides = [1, 1]} : vector<2x32xf32> to vector<1x32xf32>
    %cst_141 = arith.constant dense<0.000000e+00> : vector<32xf32>
    %401 = vector.multi_reduction <add>, %398, %cst_141 [1] : vector<32x32xf32> to vector<32xf32>
    %402 = vector.shape_cast %401 : vector<32xf32> to vector<32x1xf32>
    %cst_142 = arith.constant 3.200000e+01 : f32
    %403 = vector.broadcast %cst_142 : f32 to vector<32x1xf32>
    %404 = arith.divf %402, %403 : vector<32x1xf32>
    %405 = vector.broadcast %404 : vector<32x1xf32> to vector<32x32xf32>
    %406 = arith.subf %398, %405 : vector<32x32xf32>
    %407 = arith.mulf %406, %406 : vector<32x32xf32>
    %cst_143 = arith.constant dense<0.000000e+00> : vector<32xf32>
    %408 = vector.multi_reduction <add>, %407, %cst_143 [1] : vector<32x32xf32> to vector<32xf32>
    %409 = vector.shape_cast %408 : vector<32xf32> to vector<32x1xf32>
    %cst_144 = arith.constant 3.200000e+01 : f32
    %410 = vector.broadcast %cst_144 : f32 to vector<32x1xf32>
    %411 = arith.divf %409, %410 : vector<32x1xf32>
    %cst_145 = arith.constant 9.99999974E-6 : f32
    %412 = vector.broadcast %cst_145 : f32 to vector<32x1xf32>
    %413 = arith.addf %411, %412 : vector<32x1xf32>
    %414 = math.rsqrt %413 : vector<32x1xf32>
    %415 = vector.broadcast %414 : vector<32x1xf32> to vector<32x32xf32>
    %416 = arith.mulf %406, %415 : vector<32x32xf32>
    %417 = vector.broadcast %399 : vector<1x32xf32> to vector<32x32xf32>
    %418 = arith.mulf %416, %417 : vector<32x32xf32>
    %419 = vector.broadcast %400 : vector<1x32xf32> to vector<32x32xf32>
    %420 = arith.addf %418, %419 : vector<32x32xf32>
    %c288 = arith.constant 288 : index
    %c0_146 = arith.constant 0 : index
    %421 = vector.load %arg4[%c288, %c0_146] : memref<896x128xbf16, #tpu.memory_space<vmem>>, vector<32x64xbf16>
    %422 = arith.truncf %420 : vector<32x32xf32> to vector<32x32xbf16>
    %cst_147 = arith.constant dense<0.000000e+00> : vector<32x64xf32>
    %423 = tpu.matmul %422, %421, %cst_147 {dimension_numbers = #tpu.dot_dimension_numbers<[1], [0], [0], [1], [0, 0, 1, 1], [], []>} : vector<32x32xbf16>, vector<32x64xbf16>, vector<32x64xf32> -> vector<32x64xf32>
    %c88 = arith.constant 88 : index
    %c0_148 = arith.constant 0 : index
    %424 = vector.load %arg5[%c88, %c0_148] : memref<312x128xf32, #tpu.memory_space<vmem>>, vector<1x64xf32>
    %425 = vector.broadcast %424 : vector<1x64xf32> to vector<32x64xf32>
    %426 = arith.addf %423, %425 : vector<32x64xf32>
    %cst_149 = arith.constant 0.000000e+00 : f32
    %427 = vector.broadcast %cst_149 : f32 to vector<32x64xf32>
    %428 = arith.maximumf %426, %427 : vector<32x64xf32>
    %c320 = arith.constant 320 : index
    %c0_150 = arith.constant 0 : index
    %429 = vector.load %arg4[%c320, %c0_150] : memref<896x128xbf16, #tpu.memory_space<vmem>>, vector<64x32xbf16>
    %430 = arith.truncf %428 : vector<32x64xf32> to vector<32x64xbf16>
    %cst_151 = arith.constant dense<0.000000e+00> : vector<32x32xf32>
    %431 = tpu.matmul %430, %429, %cst_151 {dimension_numbers = #tpu.dot_dimension_numbers<[1], [0], [0], [1], [0, 0, 1, 1], [], []>} : vector<32x64xbf16>, vector<64x32xbf16>, vector<32x32xf32> -> vector<32x32xf32>
    %c96_152 = arith.constant 96 : index
    %c0_153 = arith.constant 0 : index
    %432 = vector.load %arg5[%c96_152, %c0_153] : memref<312x128xf32, #tpu.memory_space<vmem>>, vector<1x32xf32>
    %433 = vector.broadcast %432 : vector<1x32xf32> to vector<32x32xf32>
    %434 = arith.addf %431, %433 : vector<32x32xf32>
    %435 = arith.addf %420, %434 : vector<32x32xf32>
    %436 = vector.extract_strided_slice %287 {offsets = [1, 0], sizes = [1, 32], strides = [1, 1]} : vector<2x32xf32> to vector<1x32xf32>
    %437 = vector.extract_strided_slice %288 {offsets = [1, 0], sizes = [1, 32], strides = [1, 1]} : vector<2x32xf32> to vector<1x32xf32>
    %cst_154 = arith.constant dense<0.000000e+00> : vector<32xf32>
    %438 = vector.multi_reduction <add>, %435, %cst_154 [1] : vector<32x32xf32> to vector<32xf32>
    %439 = vector.shape_cast %438 : vector<32xf32> to vector<32x1xf32>
    %cst_155 = arith.constant 3.200000e+01 : f32
    %440 = vector.broadcast %cst_155 : f32 to vector<32x1xf32>
    %441 = arith.divf %439, %440 : vector<32x1xf32>
    %442 = vector.broadcast %441 : vector<32x1xf32> to vector<32x32xf32>
    %443 = arith.subf %435, %442 : vector<32x32xf32>
    %444 = arith.mulf %443, %443 : vector<32x32xf32>
    %cst_156 = arith.constant dense<0.000000e+00> : vector<32xf32>
    %445 = vector.multi_reduction <add>, %444, %cst_156 [1] : vector<32x32xf32> to vector<32xf32>
    %446 = vector.shape_cast %445 : vector<32xf32> to vector<32x1xf32>
    %cst_157 = arith.constant 3.200000e+01 : f32
    %447 = vector.broadcast %cst_157 : f32 to vector<32x1xf32>
    %448 = arith.divf %446, %447 : vector<32x1xf32>
    %cst_158 = arith.constant 9.99999974E-6 : f32
    %449 = vector.broadcast %cst_158 : f32 to vector<32x1xf32>
    %450 = arith.addf %448, %449 : vector<32x1xf32>
    %451 = math.rsqrt %450 : vector<32x1xf32>
    %452 = vector.broadcast %451 : vector<32x1xf32> to vector<32x32xf32>
    %453 = arith.mulf %443, %452 : vector<32x32xf32>
    %454 = vector.broadcast %436 : vector<1x32xf32> to vector<32x32xf32>
    %455 = arith.mulf %453, %454 : vector<32x32xf32>
    %456 = vector.broadcast %437 : vector<1x32xf32> to vector<32x32xf32>
    %457 = arith.addf %455, %456 : vector<32x32xf32>
    %c120 = arith.constant 120 : index
    %c0_159 = arith.constant 0 : index
    %458 = vector.load %arg5[%c120, %c0_159] : memref<312x128xf32, #tpu.memory_space<vmem>>, vector<1x32xf32>
    %c128_160 = arith.constant 128 : index
    %c0_161 = arith.constant 0 : index
    %459 = vector.load %arg5[%c128_160, %c0_161] : memref<312x128xf32, #tpu.memory_space<vmem>>, vector<1x32xf32>
    %cst_162 = arith.constant dense<0.000000e+00> : vector<32xf32>
    %460 = vector.multi_reduction <add>, %457, %cst_162 [1] : vector<32x32xf32> to vector<32xf32>
    %461 = vector.shape_cast %460 : vector<32xf32> to vector<32x1xf32>
    %cst_163 = arith.constant 3.200000e+01 : f32
    %462 = vector.broadcast %cst_163 : f32 to vector<32x1xf32>
    %463 = arith.divf %461, %462 : vector<32x1xf32>
    %464 = vector.broadcast %463 : vector<32x1xf32> to vector<32x32xf32>
    %465 = arith.subf %457, %464 : vector<32x32xf32>
    %466 = arith.mulf %465, %465 : vector<32x32xf32>
    %cst_164 = arith.constant dense<0.000000e+00> : vector<32xf32>
    %467 = vector.multi_reduction <add>, %466, %cst_164 [1] : vector<32x32xf32> to vector<32xf32>
    %468 = vector.shape_cast %467 : vector<32xf32> to vector<32x1xf32>
    %cst_165 = arith.constant 3.200000e+01 : f32
    %469 = vector.broadcast %cst_165 : f32 to vector<32x1xf32>
    %470 = arith.divf %468, %469 : vector<32x1xf32>
    %cst_166 = arith.constant 9.99999974E-6 : f32
    %471 = vector.broadcast %cst_166 : f32 to vector<32x1xf32>
    %472 = arith.addf %470, %471 : vector<32x1xf32>
    %473 = math.rsqrt %472 : vector<32x1xf32>
    %474 = vector.broadcast %473 : vector<32x1xf32> to vector<32x32xf32>
    %475 = arith.mulf %465, %474 : vector<32x32xf32>
    %476 = vector.broadcast %458 : vector<1x32xf32> to vector<32x32xf32>
    %477 = arith.mulf %475, %476 : vector<32x32xf32>
    %478 = vector.broadcast %459 : vector<1x32xf32> to vector<32x32xf32>
    %479 = arith.addf %477, %478 : vector<32x32xf32>
    %480 = vector.extract_strided_slice %479 {offsets = [0, 0], sizes = [16, 32], strides = [1, 1]} : vector<32x32xf32> to vector<16x32xf32>
    %cst_167 = arith.constant 0.000000e+00 : f32
    %481 = vector.broadcast %cst_167 : f32 to vector<16x32xf32>
    %482 = arith.select %57, %480, %481 : vector<16x32xf32>
    %483 = vector.extract_strided_slice %479 {offsets = [16, 0], sizes = [16, 32], strides = [1, 1]} : vector<32x32xf32> to vector<16x32xf32>
    %cst_168 = arith.constant 0.000000e+00 : f32
    %484 = vector.broadcast %cst_168 : f32 to vector<16x32xf32>
    %485 = arith.select %95, %483, %484 : vector<16x32xf32>
    %486 = tpu.concatenate %482, %485 in 0 : vector<16x32xf32>, vector<16x32xf32> -> vector<32x32xf32>
    %c24_169 = arith.constant 24 : index
    %c0_170 = arith.constant 0 : index
    %487 = vector.load %arg6[%c24_169, %c0_170] : memref<32x128xf32, #tpu.memory_space<vmem>>, vector<8x16xf32>
    %488 = vector.broadcast %59 : vector<1x16xf32> to vector<8x16xf32>
    %489 = arith.addf %487, %488 : vector<8x16xf32>
    %490 = vector.broadcast %97 : vector<1x16xf32> to vector<8x16xf32>
    %491 = arith.addf %487, %490 : vector<8x16xf32>
    %c192 = arith.constant 192 : index
    %c0_171 = arith.constant 0 : index
    %492 = vector.load %arg5[%c192, %c0_171] : memref<312x128xf32, #tpu.memory_space<vmem>>, vector<3x32xf32>
    %c200 = arith.constant 200 : index
    %c0_172 = arith.constant 0 : index
    %493 = vector.load %arg5[%c200, %c0_172] : memref<312x128xf32, #tpu.memory_space<vmem>>, vector<3x32xf32>
    %c384 = arith.constant 384 : index
    %c0_173 = arith.constant 0 : index
    %494 = vector.load %arg4[%c384, %c0_173] : memref<896x128xbf16, #tpu.memory_space<vmem>>, vector<32x96xbf16>
    %495 = arith.truncf %20 : vector<16x32xf32> to vector<16x32xbf16>
    %cst_174 = arith.constant dense<0.000000e+00> : vector<16x96xf32>
    %496 = tpu.matmul %495, %494, %cst_174 {dimension_numbers = #tpu.dot_dimension_numbers<[1], [0], [0], [1], [0, 0, 1, 1], [], []>} : vector<16x32xbf16>, vector<32x96xbf16>, vector<16x96xf32> -> vector<16x96xf32>
    %c136 = arith.constant 136 : index
    %c0_175 = arith.constant 0 : index
    %497 = vector.load %arg5[%c136, %c0_175] : memref<312x128xf32, #tpu.memory_space<vmem>>, vector<1x96xf32>
    %498 = vector.broadcast %497 : vector<1x96xf32> to vector<16x96xf32>
    %499 = arith.addf %496, %498 : vector<16x96xf32>
    %500 = vector.extract_strided_slice %499 {offsets = [0, 0], sizes = [8, 32], strides = [1, 1]} : vector<16x96xf32> to vector<8x32xf32>
    %501 = vector.extract_strided_slice %499 {offsets = [0, 32], sizes = [8, 32], strides = [1, 1]} : vector<16x96xf32> to vector<8x32xf32>
    %502 = vector.extract_strided_slice %499 {offsets = [0, 64], sizes = [8, 32], strides = [1, 1]} : vector<16x96xf32> to vector<8x32xf32>
    %503 = arith.truncf %500 : vector<8x32xf32> to vector<8x32xbf16>
    %504 = arith.truncf %501 : vector<8x32xf32> to vector<8x32xbf16>
    %505 = arith.truncf %502 : vector<8x32xf32> to vector<8x32xbf16>
    %506 = vector.extract_strided_slice %503 {offsets = [0, 0], sizes = [8, 8], strides = [1, 1]} : vector<8x32xbf16> to vector<8x8xbf16>
    %507 = vector.extract_strided_slice %504 {offsets = [0, 0], sizes = [8, 8], strides = [1, 1]} : vector<8x32xbf16> to vector<8x8xbf16>
    %cst_176 = arith.constant dense<0.000000e+00> : vector<8x8xf32>
    %508 = tpu.matmul %506, %507, %cst_176 {dimension_numbers = #tpu.dot_dimension_numbers<[1], [1], [0], [0], [0, 0, 1, 0], [], []>} : vector<8x8xbf16>, vector<8x8xbf16>, vector<8x8xf32> -> vector<8x8xf32>
    %509 = arith.addf %508, %1 : vector<8x8xf32>
    %510 = vector.extract_strided_slice %503 {offsets = [0, 8], sizes = [8, 8], strides = [1, 1]} : vector<8x32xbf16> to vector<8x8xbf16>
    %511 = vector.extract_strided_slice %504 {offsets = [0, 8], sizes = [8, 8], strides = [1, 1]} : vector<8x32xbf16> to vector<8x8xbf16>
    %cst_177 = arith.constant dense<0.000000e+00> : vector<8x8xf32>
    %512 = tpu.matmul %510, %511, %cst_177 {dimension_numbers = #tpu.dot_dimension_numbers<[1], [1], [0], [0], [0, 0, 1, 0], [], []>} : vector<8x8xbf16>, vector<8x8xbf16>, vector<8x8xf32> -> vector<8x8xf32>
    %513 = arith.addf %512, %1 : vector<8x8xf32>
    %514 = vector.extract_strided_slice %503 {offsets = [0, 16], sizes = [8, 8], strides = [1, 1]} : vector<8x32xbf16> to vector<8x8xbf16>
    %515 = vector.extract_strided_slice %504 {offsets = [0, 16], sizes = [8, 8], strides = [1, 1]} : vector<8x32xbf16> to vector<8x8xbf16>
    %cst_178 = arith.constant dense<0.000000e+00> : vector<8x8xf32>
    %516 = tpu.matmul %514, %515, %cst_178 {dimension_numbers = #tpu.dot_dimension_numbers<[1], [1], [0], [0], [0, 0, 1, 0], [], []>} : vector<8x8xbf16>, vector<8x8xbf16>, vector<8x8xf32> -> vector<8x8xf32>
    %517 = arith.addf %516, %1 : vector<8x8xf32>
    %518 = vector.extract_strided_slice %503 {offsets = [0, 24], sizes = [8, 8], strides = [1, 1]} : vector<8x32xbf16> to vector<8x8xbf16>
    %519 = vector.extract_strided_slice %504 {offsets = [0, 24], sizes = [8, 8], strides = [1, 1]} : vector<8x32xbf16> to vector<8x8xbf16>
    %cst_179 = arith.constant dense<0.000000e+00> : vector<8x8xf32>
    %520 = tpu.matmul %518, %519, %cst_179 {dimension_numbers = #tpu.dot_dimension_numbers<[1], [1], [0], [0], [0, 0, 1, 0], [], []>} : vector<8x8xbf16>, vector<8x8xbf16>, vector<8x8xf32> -> vector<8x8xf32>
    %521 = arith.addf %520, %1 : vector<8x8xf32>
    %522 = tpu.concatenate %509, %513, %517, %521 in 0 : vector<8x8xf32>, vector<8x8xf32>, vector<8x8xf32>, vector<8x8xf32> -> vector<32x8xf32>
    %cst_180 = arith.constant dense<0xFF800000> : vector<32xf32>
    %523 = vector.multi_reduction <maximumf>, %522, %cst_180 [1] : vector<32x8xf32> to vector<32xf32>
    %524 = vector.shape_cast %523 : vector<32xf32> to vector<32x1xf32>
    %525 = vector.broadcast %524 : vector<32x1xf32> to vector<32x8xf32>
    %526 = arith.subf %522, %525 : vector<32x8xf32>
    %527 = math.exp %526 : vector<32x8xf32>
    %cst_181 = arith.constant dense<0.000000e+00> : vector<32xf32>
    %528 = vector.multi_reduction <add>, %527, %cst_181 [1] : vector<32x8xf32> to vector<32xf32>
    %529 = vector.shape_cast %528 : vector<32xf32> to vector<32x1xf32>
    %530 = vector.broadcast %529 : vector<32x1xf32> to vector<32x8xf32>
    %531 = arith.divf %527, %530 : vector<32x8xf32>
    %532 = arith.truncf %531 : vector<32x8xf32> to vector<32x8xbf16>
    %533 = vector.extract_strided_slice %532 {offsets = [0, 0], sizes = [8, 8], strides = [1, 1]} : vector<32x8xbf16> to vector<8x8xbf16>
    %534 = vector.extract_strided_slice %505 {offsets = [0, 0], sizes = [8, 8], strides = [1, 1]} : vector<8x32xbf16> to vector<8x8xbf16>
    %cst_182 = arith.constant dense<0.000000e+00> : vector<8x8xf32>
    %535 = tpu.matmul %533, %534, %cst_182 {dimension_numbers = #tpu.dot_dimension_numbers<[1], [0], [0], [1], [0, 0, 1, 1], [], []>} : vector<8x8xbf16>, vector<8x8xbf16>, vector<8x8xf32> -> vector<8x8xf32>
    %536 = vector.extract_strided_slice %532 {offsets = [8, 0], sizes = [8, 8], strides = [1, 1]} : vector<32x8xbf16> to vector<8x8xbf16>
    %537 = vector.extract_strided_slice %505 {offsets = [0, 8], sizes = [8, 8], strides = [1, 1]} : vector<8x32xbf16> to vector<8x8xbf16>
    %cst_183 = arith.constant dense<0.000000e+00> : vector<8x8xf32>
    %538 = tpu.matmul %536, %537, %cst_183 {dimension_numbers = #tpu.dot_dimension_numbers<[1], [0], [0], [1], [0, 0, 1, 1], [], []>} : vector<8x8xbf16>, vector<8x8xbf16>, vector<8x8xf32> -> vector<8x8xf32>
    %539 = vector.extract_strided_slice %532 {offsets = [16, 0], sizes = [8, 8], strides = [1, 1]} : vector<32x8xbf16> to vector<8x8xbf16>
    %540 = vector.extract_strided_slice %505 {offsets = [0, 16], sizes = [8, 8], strides = [1, 1]} : vector<8x32xbf16> to vector<8x8xbf16>
    %cst_184 = arith.constant dense<0.000000e+00> : vector<8x8xf32>
    %541 = tpu.matmul %539, %540, %cst_184 {dimension_numbers = #tpu.dot_dimension_numbers<[1], [0], [0], [1], [0, 0, 1, 1], [], []>} : vector<8x8xbf16>, vector<8x8xbf16>, vector<8x8xf32> -> vector<8x8xf32>
    %542 = vector.extract_strided_slice %532 {offsets = [24, 0], sizes = [8, 8], strides = [1, 1]} : vector<32x8xbf16> to vector<8x8xbf16>
    %543 = vector.extract_strided_slice %505 {offsets = [0, 24], sizes = [8, 8], strides = [1, 1]} : vector<8x32xbf16> to vector<8x8xbf16>
    %cst_185 = arith.constant dense<0.000000e+00> : vector<8x8xf32>
    %544 = tpu.matmul %542, %543, %cst_185 {dimension_numbers = #tpu.dot_dimension_numbers<[1], [0], [0], [1], [0, 0, 1, 1], [], []>} : vector<8x8xbf16>, vector<8x8xbf16>, vector<8x8xf32> -> vector<8x8xf32>
    %545 = tpu.concatenate %535, %538, %541, %544 in 1 : vector<8x8xf32>, vector<8x8xf32>, vector<8x8xf32>, vector<8x8xf32> -> vector<8x32xf32>
    %546 = vector.extract_strided_slice %499 {offsets = [8, 0], sizes = [8, 32], strides = [1, 1]} : vector<16x96xf32> to vector<8x32xf32>
    %547 = vector.extract_strided_slice %499 {offsets = [8, 32], sizes = [8, 32], strides = [1, 1]} : vector<16x96xf32> to vector<8x32xf32>
    %548 = vector.extract_strided_slice %499 {offsets = [8, 64], sizes = [8, 32], strides = [1, 1]} : vector<16x96xf32> to vector<8x32xf32>
    %549 = arith.truncf %546 : vector<8x32xf32> to vector<8x32xbf16>
    %550 = arith.truncf %547 : vector<8x32xf32> to vector<8x32xbf16>
    %551 = arith.truncf %548 : vector<8x32xf32> to vector<8x32xbf16>
    %552 = vector.extract_strided_slice %549 {offsets = [0, 0], sizes = [8, 8], strides = [1, 1]} : vector<8x32xbf16> to vector<8x8xbf16>
    %553 = vector.extract_strided_slice %550 {offsets = [0, 0], sizes = [8, 8], strides = [1, 1]} : vector<8x32xbf16> to vector<8x8xbf16>
    %cst_186 = arith.constant dense<0.000000e+00> : vector<8x8xf32>
    %554 = tpu.matmul %552, %553, %cst_186 {dimension_numbers = #tpu.dot_dimension_numbers<[1], [1], [0], [0], [0, 0, 1, 0], [], []>} : vector<8x8xbf16>, vector<8x8xbf16>, vector<8x8xf32> -> vector<8x8xf32>
    %555 = arith.addf %554, %1 : vector<8x8xf32>
    %556 = vector.extract_strided_slice %549 {offsets = [0, 8], sizes = [8, 8], strides = [1, 1]} : vector<8x32xbf16> to vector<8x8xbf16>
    %557 = vector.extract_strided_slice %550 {offsets = [0, 8], sizes = [8, 8], strides = [1, 1]} : vector<8x32xbf16> to vector<8x8xbf16>
    %cst_187 = arith.constant dense<0.000000e+00> : vector<8x8xf32>
    %558 = tpu.matmul %556, %557, %cst_187 {dimension_numbers = #tpu.dot_dimension_numbers<[1], [1], [0], [0], [0, 0, 1, 0], [], []>} : vector<8x8xbf16>, vector<8x8xbf16>, vector<8x8xf32> -> vector<8x8xf32>
    %559 = arith.addf %558, %1 : vector<8x8xf32>
    %560 = vector.extract_strided_slice %549 {offsets = [0, 16], sizes = [8, 8], strides = [1, 1]} : vector<8x32xbf16> to vector<8x8xbf16>
    %561 = vector.extract_strided_slice %550 {offsets = [0, 16], sizes = [8, 8], strides = [1, 1]} : vector<8x32xbf16> to vector<8x8xbf16>
    %cst_188 = arith.constant dense<0.000000e+00> : vector<8x8xf32>
    %562 = tpu.matmul %560, %561, %cst_188 {dimension_numbers = #tpu.dot_dimension_numbers<[1], [1], [0], [0], [0, 0, 1, 0], [], []>} : vector<8x8xbf16>, vector<8x8xbf16>, vector<8x8xf32> -> vector<8x8xf32>
    %563 = arith.addf %562, %1 : vector<8x8xf32>
    %564 = vector.extract_strided_slice %549 {offsets = [0, 24], sizes = [8, 8], strides = [1, 1]} : vector<8x32xbf16> to vector<8x8xbf16>
    %565 = vector.extract_strided_slice %550 {offsets = [0, 24], sizes = [8, 8], strides = [1, 1]} : vector<8x32xbf16> to vector<8x8xbf16>
    %cst_189 = arith.constant dense<0.000000e+00> : vector<8x8xf32>
    %566 = tpu.matmul %564, %565, %cst_189 {dimension_numbers = #tpu.dot_dimension_numbers<[1], [1], [0], [0], [0, 0, 1, 0], [], []>} : vector<8x8xbf16>, vector<8x8xbf16>, vector<8x8xf32> -> vector<8x8xf32>
    %567 = arith.addf %566, %1 : vector<8x8xf32>
    %568 = tpu.concatenate %555, %559, %563, %567 in 0 : vector<8x8xf32>, vector<8x8xf32>, vector<8x8xf32>, vector<8x8xf32> -> vector<32x8xf32>
    %cst_190 = arith.constant dense<0xFF800000> : vector<32xf32>
    %569 = vector.multi_reduction <maximumf>, %568, %cst_190 [1] : vector<32x8xf32> to vector<32xf32>
    %570 = vector.shape_cast %569 : vector<32xf32> to vector<32x1xf32>
    %571 = vector.broadcast %570 : vector<32x1xf32> to vector<32x8xf32>
    %572 = arith.subf %568, %571 : vector<32x8xf32>
    %573 = math.exp %572 : vector<32x8xf32>
    %cst_191 = arith.constant dense<0.000000e+00> : vector<32xf32>
    %574 = vector.multi_reduction <add>, %573, %cst_191 [1] : vector<32x8xf32> to vector<32xf32>
    %575 = vector.shape_cast %574 : vector<32xf32> to vector<32x1xf32>
    %576 = vector.broadcast %575 : vector<32x1xf32> to vector<32x8xf32>
    %577 = arith.divf %573, %576 : vector<32x8xf32>
    %578 = arith.truncf %577 : vector<32x8xf32> to vector<32x8xbf16>
    %579 = vector.extract_strided_slice %578 {offsets = [0, 0], sizes = [8, 8], strides = [1, 1]} : vector<32x8xbf16> to vector<8x8xbf16>
    %580 = vector.extract_strided_slice %551 {offsets = [0, 0], sizes = [8, 8], strides = [1, 1]} : vector<8x32xbf16> to vector<8x8xbf16>
    %cst_192 = arith.constant dense<0.000000e+00> : vector<8x8xf32>
    %581 = tpu.matmul %579, %580, %cst_192 {dimension_numbers = #tpu.dot_dimension_numbers<[1], [0], [0], [1], [0, 0, 1, 1], [], []>} : vector<8x8xbf16>, vector<8x8xbf16>, vector<8x8xf32> -> vector<8x8xf32>
    %582 = vector.extract_strided_slice %578 {offsets = [8, 0], sizes = [8, 8], strides = [1, 1]} : vector<32x8xbf16> to vector<8x8xbf16>
    %583 = vector.extract_strided_slice %551 {offsets = [0, 8], sizes = [8, 8], strides = [1, 1]} : vector<8x32xbf16> to vector<8x8xbf16>
    %cst_193 = arith.constant dense<0.000000e+00> : vector<8x8xf32>
    %584 = tpu.matmul %582, %583, %cst_193 {dimension_numbers = #tpu.dot_dimension_numbers<[1], [0], [0], [1], [0, 0, 1, 1], [], []>} : vector<8x8xbf16>, vector<8x8xbf16>, vector<8x8xf32> -> vector<8x8xf32>
    %585 = vector.extract_strided_slice %578 {offsets = [16, 0], sizes = [8, 8], strides = [1, 1]} : vector<32x8xbf16> to vector<8x8xbf16>
    %586 = vector.extract_strided_slice %551 {offsets = [0, 16], sizes = [8, 8], strides = [1, 1]} : vector<8x32xbf16> to vector<8x8xbf16>
    %cst_194 = arith.constant dense<0.000000e+00> : vector<8x8xf32>
    %587 = tpu.matmul %585, %586, %cst_194 {dimension_numbers = #tpu.dot_dimension_numbers<[1], [0], [0], [1], [0, 0, 1, 1], [], []>} : vector<8x8xbf16>, vector<8x8xbf16>, vector<8x8xf32> -> vector<8x8xf32>
    %588 = vector.extract_strided_slice %578 {offsets = [24, 0], sizes = [8, 8], strides = [1, 1]} : vector<32x8xbf16> to vector<8x8xbf16>
    %589 = vector.extract_strided_slice %551 {offsets = [0, 24], sizes = [8, 8], strides = [1, 1]} : vector<8x32xbf16> to vector<8x8xbf16>
    %cst_195 = arith.constant dense<0.000000e+00> : vector<8x8xf32>
    %590 = tpu.matmul %588, %589, %cst_195 {dimension_numbers = #tpu.dot_dimension_numbers<[1], [0], [0], [1], [0, 0, 1, 1], [], []>} : vector<8x8xbf16>, vector<8x8xbf16>, vector<8x8xf32> -> vector<8x8xf32>
    %591 = tpu.concatenate %581, %584, %587, %590 in 1 : vector<8x8xf32>, vector<8x8xf32>, vector<8x8xf32>, vector<8x8xf32> -> vector<8x32xf32>
    %592 = tpu.concatenate %545, %591 in 0 : vector<8x32xf32>, vector<8x32xf32> -> vector<16x32xf32>
    %c416 = arith.constant 416 : index
    %c0_196 = arith.constant 0 : index
    %593 = vector.load %arg4[%c416, %c0_196] : memref<896x128xbf16, #tpu.memory_space<vmem>>, vector<32x32xbf16>
    %594 = arith.truncf %592 : vector<16x32xf32> to vector<16x32xbf16>
    %cst_197 = arith.constant dense<0.000000e+00> : vector<16x32xf32>
    %595 = tpu.matmul %594, %593, %cst_197 {dimension_numbers = #tpu.dot_dimension_numbers<[1], [0], [0], [1], [0, 0, 1, 1], [], []>} : vector<16x32xbf16>, vector<32x32xbf16>, vector<16x32xf32> -> vector<16x32xf32>
    %c144 = arith.constant 144 : index
    %c0_198 = arith.constant 0 : index
    %596 = vector.load %arg5[%c144, %c0_198] : memref<312x128xf32, #tpu.memory_space<vmem>>, vector<1x32xf32>
    %597 = vector.broadcast %596 : vector<1x32xf32> to vector<16x32xf32>
    %598 = arith.addf %595, %597 : vector<16x32xf32>
    %599 = arith.addf %20, %598 : vector<16x32xf32>
    %600 = vector.extract_strided_slice %492 {offsets = [0, 0], sizes = [1, 32], strides = [1, 1]} : vector<3x32xf32> to vector<1x32xf32>
    %601 = vector.extract_strided_slice %493 {offsets = [0, 0], sizes = [1, 32], strides = [1, 1]} : vector<3x32xf32> to vector<1x32xf32>
    %cst_199 = arith.constant dense<0.000000e+00> : vector<16xf32>
    %602 = vector.multi_reduction <add>, %599, %cst_199 [1] : vector<16x32xf32> to vector<16xf32>
    %603 = vector.shape_cast %602 : vector<16xf32> to vector<16x1xf32>
    %cst_200 = arith.constant 3.200000e+01 : f32
    %604 = vector.broadcast %cst_200 : f32 to vector<16x1xf32>
    %605 = arith.divf %603, %604 : vector<16x1xf32>
    %606 = vector.broadcast %605 : vector<16x1xf32> to vector<16x32xf32>
    %607 = arith.subf %599, %606 : vector<16x32xf32>
    %608 = arith.mulf %607, %607 : vector<16x32xf32>
    %cst_201 = arith.constant dense<0.000000e+00> : vector<16xf32>
    %609 = vector.multi_reduction <add>, %608, %cst_201 [1] : vector<16x32xf32> to vector<16xf32>
    %610 = vector.shape_cast %609 : vector<16xf32> to vector<16x1xf32>
    %cst_202 = arith.constant 3.200000e+01 : f32
    %611 = vector.broadcast %cst_202 : f32 to vector<16x1xf32>
    %612 = arith.divf %610, %611 : vector<16x1xf32>
    %cst_203 = arith.constant 9.99999974E-6 : f32
    %613 = vector.broadcast %cst_203 : f32 to vector<16x1xf32>
    %614 = arith.addf %612, %613 : vector<16x1xf32>
    %615 = math.rsqrt %614 : vector<16x1xf32>
    %616 = vector.broadcast %615 : vector<16x1xf32> to vector<16x32xf32>
    %617 = arith.mulf %607, %616 : vector<16x32xf32>
    %618 = vector.broadcast %600 : vector<1x32xf32> to vector<16x32xf32>
    %619 = arith.mulf %617, %618 : vector<16x32xf32>
    %620 = vector.broadcast %601 : vector<1x32xf32> to vector<16x32xf32>
    %621 = arith.addf %619, %620 : vector<16x32xf32>
    %c448 = arith.constant 448 : index
    %c0_204 = arith.constant 0 : index
    %622 = vector.load %arg4[%c448, %c0_204] : memref<896x128xbf16, #tpu.memory_space<vmem>>, vector<32x32xbf16>
    %623 = arith.truncf %621 : vector<16x32xf32> to vector<16x32xbf16>
    %cst_205 = arith.constant dense<0.000000e+00> : vector<16x32xf32>
    %624 = tpu.matmul %623, %622, %cst_205 {dimension_numbers = #tpu.dot_dimension_numbers<[1], [0], [0], [1], [0, 0, 1, 1], [], []>} : vector<16x32xbf16>, vector<32x32xbf16>, vector<16x32xf32> -> vector<16x32xf32>
    %c152 = arith.constant 152 : index
    %c0_206 = arith.constant 0 : index
    %625 = vector.load %arg5[%c152, %c0_206] : memref<312x128xf32, #tpu.memory_space<vmem>>, vector<1x32xf32>
    %626 = vector.broadcast %625 : vector<1x32xf32> to vector<16x32xf32>
    %627 = arith.addf %624, %626 : vector<16x32xf32>
    %c480 = arith.constant 480 : index
    %c0_207 = arith.constant 0 : index
    %628 = vector.load %arg4[%c480, %c0_207] : memref<896x128xbf16, #tpu.memory_space<vmem>>, vector<32x64xbf16>
    %629 = arith.truncf %486 : vector<32x32xf32> to vector<32x32xbf16>
    %cst_208 = arith.constant dense<0.000000e+00> : vector<32x64xf32>
    %630 = tpu.matmul %629, %628, %cst_208 {dimension_numbers = #tpu.dot_dimension_numbers<[1], [0], [0], [1], [0, 0, 1, 1], [], []>} : vector<32x32xbf16>, vector<32x64xbf16>, vector<32x64xf32> -> vector<32x64xf32>
    %c160_209 = arith.constant 160 : index
    %c0_210 = arith.constant 0 : index
    %631 = vector.load %arg5[%c160_209, %c0_210] : memref<312x128xf32, #tpu.memory_space<vmem>>, vector<1x64xf32>
    %632 = vector.broadcast %631 : vector<1x64xf32> to vector<32x64xf32>
    %633 = arith.addf %630, %632 : vector<32x64xf32>
    %634 = vector.extract_strided_slice %633 {offsets = [0, 0], sizes = [16, 32], strides = [1, 1]} : vector<32x64xf32> to vector<16x32xf32>
    %635 = vector.extract_strided_slice %633 {offsets = [0, 32], sizes = [16, 32], strides = [1, 1]} : vector<32x64xf32> to vector<16x32xf32>
    %636 = vector.extract_strided_slice %627 {offsets = [0, 0], sizes = [8, 32], strides = [1, 1]} : vector<16x32xf32> to vector<8x32xf32>
    %637 = arith.truncf %636 : vector<8x32xf32> to vector<8x32xbf16>
    %638 = arith.truncf %634 : vector<16x32xf32> to vector<16x32xbf16>
    %639 = arith.truncf %635 : vector<16x32xf32> to vector<16x32xbf16>
    %640 = vector.extract_strided_slice %637 {offsets = [0, 0], sizes = [8, 8], strides = [1, 1]} : vector<8x32xbf16> to vector<8x8xbf16>
    %641 = vector.extract_strided_slice %638 {offsets = [0, 0], sizes = [16, 8], strides = [1, 1]} : vector<16x32xbf16> to vector<16x8xbf16>
    %cst_211 = arith.constant dense<0.000000e+00> : vector<8x16xf32>
    %642 = tpu.matmul %640, %641, %cst_211 {dimension_numbers = #tpu.dot_dimension_numbers<[1], [1], [0], [0], [0, 0, 1, 0], [], []>} : vector<8x8xbf16>, vector<16x8xbf16>, vector<8x16xf32> -> vector<8x16xf32>
    %643 = arith.addf %642, %489 : vector<8x16xf32>
    %644 = vector.extract_strided_slice %637 {offsets = [0, 8], sizes = [8, 8], strides = [1, 1]} : vector<8x32xbf16> to vector<8x8xbf16>
    %645 = vector.extract_strided_slice %638 {offsets = [0, 8], sizes = [16, 8], strides = [1, 1]} : vector<16x32xbf16> to vector<16x8xbf16>
    %cst_212 = arith.constant dense<0.000000e+00> : vector<8x16xf32>
    %646 = tpu.matmul %644, %645, %cst_212 {dimension_numbers = #tpu.dot_dimension_numbers<[1], [1], [0], [0], [0, 0, 1, 0], [], []>} : vector<8x8xbf16>, vector<16x8xbf16>, vector<8x16xf32> -> vector<8x16xf32>
    %647 = arith.addf %646, %489 : vector<8x16xf32>
    %648 = vector.extract_strided_slice %637 {offsets = [0, 16], sizes = [8, 8], strides = [1, 1]} : vector<8x32xbf16> to vector<8x8xbf16>
    %649 = vector.extract_strided_slice %638 {offsets = [0, 16], sizes = [16, 8], strides = [1, 1]} : vector<16x32xbf16> to vector<16x8xbf16>
    %cst_213 = arith.constant dense<0.000000e+00> : vector<8x16xf32>
    %650 = tpu.matmul %648, %649, %cst_213 {dimension_numbers = #tpu.dot_dimension_numbers<[1], [1], [0], [0], [0, 0, 1, 0], [], []>} : vector<8x8xbf16>, vector<16x8xbf16>, vector<8x16xf32> -> vector<8x16xf32>
    %651 = arith.addf %650, %489 : vector<8x16xf32>
    %652 = vector.extract_strided_slice %637 {offsets = [0, 24], sizes = [8, 8], strides = [1, 1]} : vector<8x32xbf16> to vector<8x8xbf16>
    %653 = vector.extract_strided_slice %638 {offsets = [0, 24], sizes = [16, 8], strides = [1, 1]} : vector<16x32xbf16> to vector<16x8xbf16>
    %cst_214 = arith.constant dense<0.000000e+00> : vector<8x16xf32>
    %654 = tpu.matmul %652, %653, %cst_214 {dimension_numbers = #tpu.dot_dimension_numbers<[1], [1], [0], [0], [0, 0, 1, 0], [], []>} : vector<8x8xbf16>, vector<16x8xbf16>, vector<8x16xf32> -> vector<8x16xf32>
    %655 = arith.addf %654, %489 : vector<8x16xf32>
    %656 = tpu.concatenate %643, %647, %651, %655 in 0 : vector<8x16xf32>, vector<8x16xf32>, vector<8x16xf32>, vector<8x16xf32> -> vector<32x16xf32>
    %cst_215 = arith.constant dense<0xFF800000> : vector<32xf32>
    %657 = vector.multi_reduction <maximumf>, %656, %cst_215 [1] : vector<32x16xf32> to vector<32xf32>
    %658 = vector.shape_cast %657 : vector<32xf32> to vector<32x1xf32>
    %659 = vector.broadcast %658 : vector<32x1xf32> to vector<32x16xf32>
    %660 = arith.subf %656, %659 : vector<32x16xf32>
    %661 = math.exp %660 : vector<32x16xf32>
    %cst_216 = arith.constant dense<0.000000e+00> : vector<32xf32>
    %662 = vector.multi_reduction <add>, %661, %cst_216 [1] : vector<32x16xf32> to vector<32xf32>
    %663 = vector.shape_cast %662 : vector<32xf32> to vector<32x1xf32>
    %664 = vector.broadcast %663 : vector<32x1xf32> to vector<32x16xf32>
    %665 = arith.divf %661, %664 : vector<32x16xf32>
    %666 = arith.truncf %665 : vector<32x16xf32> to vector<32x16xbf16>
    %667 = vector.extract_strided_slice %666 {offsets = [0, 0], sizes = [8, 16], strides = [1, 1]} : vector<32x16xbf16> to vector<8x16xbf16>
    %668 = vector.extract_strided_slice %639 {offsets = [0, 0], sizes = [16, 8], strides = [1, 1]} : vector<16x32xbf16> to vector<16x8xbf16>
    %cst_217 = arith.constant dense<0.000000e+00> : vector<8x8xf32>
    %669 = tpu.matmul %667, %668, %cst_217 {dimension_numbers = #tpu.dot_dimension_numbers<[1], [0], [0], [1], [0, 0, 1, 1], [], []>} : vector<8x16xbf16>, vector<16x8xbf16>, vector<8x8xf32> -> vector<8x8xf32>
    %670 = vector.extract_strided_slice %666 {offsets = [8, 0], sizes = [8, 16], strides = [1, 1]} : vector<32x16xbf16> to vector<8x16xbf16>
    %671 = vector.extract_strided_slice %639 {offsets = [0, 8], sizes = [16, 8], strides = [1, 1]} : vector<16x32xbf16> to vector<16x8xbf16>
    %cst_218 = arith.constant dense<0.000000e+00> : vector<8x8xf32>
    %672 = tpu.matmul %670, %671, %cst_218 {dimension_numbers = #tpu.dot_dimension_numbers<[1], [0], [0], [1], [0, 0, 1, 1], [], []>} : vector<8x16xbf16>, vector<16x8xbf16>, vector<8x8xf32> -> vector<8x8xf32>
    %673 = vector.extract_strided_slice %666 {offsets = [16, 0], sizes = [8, 16], strides = [1, 1]} : vector<32x16xbf16> to vector<8x16xbf16>
    %674 = vector.extract_strided_slice %639 {offsets = [0, 16], sizes = [16, 8], strides = [1, 1]} : vector<16x32xbf16> to vector<16x8xbf16>
    %cst_219 = arith.constant dense<0.000000e+00> : vector<8x8xf32>
    %675 = tpu.matmul %673, %674, %cst_219 {dimension_numbers = #tpu.dot_dimension_numbers<[1], [0], [0], [1], [0, 0, 1, 1], [], []>} : vector<8x16xbf16>, vector<16x8xbf16>, vector<8x8xf32> -> vector<8x8xf32>
    %676 = vector.extract_strided_slice %666 {offsets = [24, 0], sizes = [8, 16], strides = [1, 1]} : vector<32x16xbf16> to vector<8x16xbf16>
    %677 = vector.extract_strided_slice %639 {offsets = [0, 24], sizes = [16, 8], strides = [1, 1]} : vector<16x32xbf16> to vector<16x8xbf16>
    %cst_220 = arith.constant dense<0.000000e+00> : vector<8x8xf32>
    %678 = tpu.matmul %676, %677, %cst_220 {dimension_numbers = #tpu.dot_dimension_numbers<[1], [0], [0], [1], [0, 0, 1, 1], [], []>} : vector<8x16xbf16>, vector<16x8xbf16>, vector<8x8xf32> -> vector<8x8xf32>
    %679 = tpu.concatenate %669, %672, %675, %678 in 1 : vector<8x8xf32>, vector<8x8xf32>, vector<8x8xf32>, vector<8x8xf32> -> vector<8x32xf32>
    %680 = vector.extract_strided_slice %633 {offsets = [16, 0], sizes = [16, 32], strides = [1, 1]} : vector<32x64xf32> to vector<16x32xf32>
    %681 = vector.extract_strided_slice %633 {offsets = [16, 32], sizes = [16, 32], strides = [1, 1]} : vector<32x64xf32> to vector<16x32xf32>
    %682 = vector.extract_strided_slice %627 {offsets = [8, 0], sizes = [8, 32], strides = [1, 1]} : vector<16x32xf32> to vector<8x32xf32>
    %683 = arith.truncf %682 : vector<8x32xf32> to vector<8x32xbf16>
    %684 = arith.truncf %680 : vector<16x32xf32> to vector<16x32xbf16>
    %685 = arith.truncf %681 : vector<16x32xf32> to vector<16x32xbf16>
    %686 = vector.extract_strided_slice %683 {offsets = [0, 0], sizes = [8, 8], strides = [1, 1]} : vector<8x32xbf16> to vector<8x8xbf16>
    %687 = vector.extract_strided_slice %684 {offsets = [0, 0], sizes = [16, 8], strides = [1, 1]} : vector<16x32xbf16> to vector<16x8xbf16>
    %cst_221 = arith.constant dense<0.000000e+00> : vector<8x16xf32>
    %688 = tpu.matmul %686, %687, %cst_221 {dimension_numbers = #tpu.dot_dimension_numbers<[1], [1], [0], [0], [0, 0, 1, 0], [], []>} : vector<8x8xbf16>, vector<16x8xbf16>, vector<8x16xf32> -> vector<8x16xf32>
    %689 = arith.addf %688, %491 : vector<8x16xf32>
    %690 = vector.extract_strided_slice %683 {offsets = [0, 8], sizes = [8, 8], strides = [1, 1]} : vector<8x32xbf16> to vector<8x8xbf16>
    %691 = vector.extract_strided_slice %684 {offsets = [0, 8], sizes = [16, 8], strides = [1, 1]} : vector<16x32xbf16> to vector<16x8xbf16>
    %cst_222 = arith.constant dense<0.000000e+00> : vector<8x16xf32>
    %692 = tpu.matmul %690, %691, %cst_222 {dimension_numbers = #tpu.dot_dimension_numbers<[1], [1], [0], [0], [0, 0, 1, 0], [], []>} : vector<8x8xbf16>, vector<16x8xbf16>, vector<8x16xf32> -> vector<8x16xf32>
    %693 = arith.addf %692, %491 : vector<8x16xf32>
    %694 = vector.extract_strided_slice %683 {offsets = [0, 16], sizes = [8, 8], strides = [1, 1]} : vector<8x32xbf16> to vector<8x8xbf16>
    %695 = vector.extract_strided_slice %684 {offsets = [0, 16], sizes = [16, 8], strides = [1, 1]} : vector<16x32xbf16> to vector<16x8xbf16>
    %cst_223 = arith.constant dense<0.000000e+00> : vector<8x16xf32>
    %696 = tpu.matmul %694, %695, %cst_223 {dimension_numbers = #tpu.dot_dimension_numbers<[1], [1], [0], [0], [0, 0, 1, 0], [], []>} : vector<8x8xbf16>, vector<16x8xbf16>, vector<8x16xf32> -> vector<8x16xf32>
    %697 = arith.addf %696, %491 : vector<8x16xf32>
    %698 = vector.extract_strided_slice %683 {offsets = [0, 24], sizes = [8, 8], strides = [1, 1]} : vector<8x32xbf16> to vector<8x8xbf16>
    %699 = vector.extract_strided_slice %684 {offsets = [0, 24], sizes = [16, 8], strides = [1, 1]} : vector<16x32xbf16> to vector<16x8xbf16>
    %cst_224 = arith.constant dense<0.000000e+00> : vector<8x16xf32>
    %700 = tpu.matmul %698, %699, %cst_224 {dimension_numbers = #tpu.dot_dimension_numbers<[1], [1], [0], [0], [0, 0, 1, 0], [], []>} : vector<8x8xbf16>, vector<16x8xbf16>, vector<8x16xf32> -> vector<8x16xf32>
    %701 = arith.addf %700, %491 : vector<8x16xf32>
    %702 = tpu.concatenate %689, %693, %697, %701 in 0 : vector<8x16xf32>, vector<8x16xf32>, vector<8x16xf32>, vector<8x16xf32> -> vector<32x16xf32>
    %cst_225 = arith.constant dense<0xFF800000> : vector<32xf32>
    %703 = vector.multi_reduction <maximumf>, %702, %cst_225 [1] : vector<32x16xf32> to vector<32xf32>
    %704 = vector.shape_cast %703 : vector<32xf32> to vector<32x1xf32>
    %705 = vector.broadcast %704 : vector<32x1xf32> to vector<32x16xf32>
    %706 = arith.subf %702, %705 : vector<32x16xf32>
    %707 = math.exp %706 : vector<32x16xf32>
    %cst_226 = arith.constant dense<0.000000e+00> : vector<32xf32>
    %708 = vector.multi_reduction <add>, %707, %cst_226 [1] : vector<32x16xf32> to vector<32xf32>
    %709 = vector.shape_cast %708 : vector<32xf32> to vector<32x1xf32>
    %710 = vector.broadcast %709 : vector<32x1xf32> to vector<32x16xf32>
    %711 = arith.divf %707, %710 : vector<32x16xf32>
    %712 = arith.truncf %711 : vector<32x16xf32> to vector<32x16xbf16>
    %713 = vector.extract_strided_slice %712 {offsets = [0, 0], sizes = [8, 16], strides = [1, 1]} : vector<32x16xbf16> to vector<8x16xbf16>
    %714 = vector.extract_strided_slice %685 {offsets = [0, 0], sizes = [16, 8], strides = [1, 1]} : vector<16x32xbf16> to vector<16x8xbf16>
    %cst_227 = arith.constant dense<0.000000e+00> : vector<8x8xf32>
    %715 = tpu.matmul %713, %714, %cst_227 {dimension_numbers = #tpu.dot_dimension_numbers<[1], [0], [0], [1], [0, 0, 1, 1], [], []>} : vector<8x16xbf16>, vector<16x8xbf16>, vector<8x8xf32> -> vector<8x8xf32>
    %716 = vector.extract_strided_slice %712 {offsets = [8, 0], sizes = [8, 16], strides = [1, 1]} : vector<32x16xbf16> to vector<8x16xbf16>
    %717 = vector.extract_strided_slice %685 {offsets = [0, 8], sizes = [16, 8], strides = [1, 1]} : vector<16x32xbf16> to vector<16x8xbf16>
    %cst_228 = arith.constant dense<0.000000e+00> : vector<8x8xf32>
    %718 = tpu.matmul %716, %717, %cst_228 {dimension_numbers = #tpu.dot_dimension_numbers<[1], [0], [0], [1], [0, 0, 1, 1], [], []>} : vector<8x16xbf16>, vector<16x8xbf16>, vector<8x8xf32> -> vector<8x8xf32>
    %719 = vector.extract_strided_slice %712 {offsets = [16, 0], sizes = [8, 16], strides = [1, 1]} : vector<32x16xbf16> to vector<8x16xbf16>
    %720 = vector.extract_strided_slice %685 {offsets = [0, 16], sizes = [16, 8], strides = [1, 1]} : vector<16x32xbf16> to vector<16x8xbf16>
    %cst_229 = arith.constant dense<0.000000e+00> : vector<8x8xf32>
    %721 = tpu.matmul %719, %720, %cst_229 {dimension_numbers = #tpu.dot_dimension_numbers<[1], [0], [0], [1], [0, 0, 1, 1], [], []>} : vector<8x16xbf16>, vector<16x8xbf16>, vector<8x8xf32> -> vector<8x8xf32>
    %722 = vector.extract_strided_slice %712 {offsets = [24, 0], sizes = [8, 16], strides = [1, 1]} : vector<32x16xbf16> to vector<8x16xbf16>
    %723 = vector.extract_strided_slice %685 {offsets = [0, 24], sizes = [16, 8], strides = [1, 1]} : vector<16x32xbf16> to vector<16x8xbf16>
    %cst_230 = arith.constant dense<0.000000e+00> : vector<8x8xf32>
    %724 = tpu.matmul %722, %723, %cst_230 {dimension_numbers = #tpu.dot_dimension_numbers<[1], [0], [0], [1], [0, 0, 1, 1], [], []>} : vector<8x16xbf16>, vector<16x8xbf16>, vector<8x8xf32> -> vector<8x8xf32>
    %725 = tpu.concatenate %715, %718, %721, %724 in 1 : vector<8x8xf32>, vector<8x8xf32>, vector<8x8xf32>, vector<8x8xf32> -> vector<8x32xf32>
    %726 = tpu.concatenate %679, %725 in 0 : vector<8x32xf32>, vector<8x32xf32> -> vector<16x32xf32>
    %c512 = arith.constant 512 : index
    %c0_231 = arith.constant 0 : index
    %727 = vector.load %arg4[%c512, %c0_231] : memref<896x128xbf16, #tpu.memory_space<vmem>>, vector<32x32xbf16>
    %728 = arith.truncf %726 : vector<16x32xf32> to vector<16x32xbf16>
    %cst_232 = arith.constant dense<0.000000e+00> : vector<16x32xf32>
    %729 = tpu.matmul %728, %727, %cst_232 {dimension_numbers = #tpu.dot_dimension_numbers<[1], [0], [0], [1], [0, 0, 1, 1], [], []>} : vector<16x32xbf16>, vector<32x32xbf16>, vector<16x32xf32> -> vector<16x32xf32>
    %c168 = arith.constant 168 : index
    %c0_233 = arith.constant 0 : index
    %730 = vector.load %arg5[%c168, %c0_233] : memref<312x128xf32, #tpu.memory_space<vmem>>, vector<1x32xf32>
    %731 = vector.broadcast %730 : vector<1x32xf32> to vector<16x32xf32>
    %732 = arith.addf %729, %731 : vector<16x32xf32>
    %733 = arith.addf %621, %732 : vector<16x32xf32>
    %734 = vector.extract_strided_slice %492 {offsets = [1, 0], sizes = [1, 32], strides = [1, 1]} : vector<3x32xf32> to vector<1x32xf32>
    %735 = vector.extract_strided_slice %493 {offsets = [1, 0], sizes = [1, 32], strides = [1, 1]} : vector<3x32xf32> to vector<1x32xf32>
    %cst_234 = arith.constant dense<0.000000e+00> : vector<16xf32>
    %736 = vector.multi_reduction <add>, %733, %cst_234 [1] : vector<16x32xf32> to vector<16xf32>
    %737 = vector.shape_cast %736 : vector<16xf32> to vector<16x1xf32>
    %cst_235 = arith.constant 3.200000e+01 : f32
    %738 = vector.broadcast %cst_235 : f32 to vector<16x1xf32>
    %739 = arith.divf %737, %738 : vector<16x1xf32>
    %740 = vector.broadcast %739 : vector<16x1xf32> to vector<16x32xf32>
    %741 = arith.subf %733, %740 : vector<16x32xf32>
    %742 = arith.mulf %741, %741 : vector<16x32xf32>
    %cst_236 = arith.constant dense<0.000000e+00> : vector<16xf32>
    %743 = vector.multi_reduction <add>, %742, %cst_236 [1] : vector<16x32xf32> to vector<16xf32>
    %744 = vector.shape_cast %743 : vector<16xf32> to vector<16x1xf32>
    %cst_237 = arith.constant 3.200000e+01 : f32
    %745 = vector.broadcast %cst_237 : f32 to vector<16x1xf32>
    %746 = arith.divf %744, %745 : vector<16x1xf32>
    %cst_238 = arith.constant 9.99999974E-6 : f32
    %747 = vector.broadcast %cst_238 : f32 to vector<16x1xf32>
    %748 = arith.addf %746, %747 : vector<16x1xf32>
    %749 = math.rsqrt %748 : vector<16x1xf32>
    %750 = vector.broadcast %749 : vector<16x1xf32> to vector<16x32xf32>
    %751 = arith.mulf %741, %750 : vector<16x32xf32>
    %752 = vector.broadcast %734 : vector<1x32xf32> to vector<16x32xf32>
    %753 = arith.mulf %751, %752 : vector<16x32xf32>
    %754 = vector.broadcast %735 : vector<1x32xf32> to vector<16x32xf32>
    %755 = arith.addf %753, %754 : vector<16x32xf32>
    %c544 = arith.constant 544 : index
    %c0_239 = arith.constant 0 : index
    %756 = vector.load %arg4[%c544, %c0_239] : memref<896x128xbf16, #tpu.memory_space<vmem>>, vector<32x64xbf16>
    %757 = arith.truncf %755 : vector<16x32xf32> to vector<16x32xbf16>
    %cst_240 = arith.constant dense<0.000000e+00> : vector<16x64xf32>
    %758 = tpu.matmul %757, %756, %cst_240 {dimension_numbers = #tpu.dot_dimension_numbers<[1], [0], [0], [1], [0, 0, 1, 1], [], []>} : vector<16x32xbf16>, vector<32x64xbf16>, vector<16x64xf32> -> vector<16x64xf32>
    %c176 = arith.constant 176 : index
    %c0_241 = arith.constant 0 : index
    %759 = vector.load %arg5[%c176, %c0_241] : memref<312x128xf32, #tpu.memory_space<vmem>>, vector<1x64xf32>
    %760 = vector.broadcast %759 : vector<1x64xf32> to vector<16x64xf32>
    %761 = arith.addf %758, %760 : vector<16x64xf32>
    %cst_242 = arith.constant 0.000000e+00 : f32
    %762 = vector.broadcast %cst_242 : f32 to vector<16x64xf32>
    %763 = arith.maximumf %761, %762 : vector<16x64xf32>
    %c576 = arith.constant 576 : index
    %c0_243 = arith.constant 0 : index
    %764 = vector.load %arg4[%c576, %c0_243] : memref<896x128xbf16, #tpu.memory_space<vmem>>, vector<64x32xbf16>
    %765 = arith.truncf %763 : vector<16x64xf32> to vector<16x64xbf16>
    %cst_244 = arith.constant dense<0.000000e+00> : vector<16x32xf32>
    %766 = tpu.matmul %765, %764, %cst_244 {dimension_numbers = #tpu.dot_dimension_numbers<[1], [0], [0], [1], [0, 0, 1, 1], [], []>} : vector<16x64xbf16>, vector<64x32xbf16>, vector<16x32xf32> -> vector<16x32xf32>
    %c184 = arith.constant 184 : index
    %c0_245 = arith.constant 0 : index
    %767 = vector.load %arg5[%c184, %c0_245] : memref<312x128xf32, #tpu.memory_space<vmem>>, vector<1x32xf32>
    %768 = vector.broadcast %767 : vector<1x32xf32> to vector<16x32xf32>
    %769 = arith.addf %766, %768 : vector<16x32xf32>
    %770 = arith.addf %755, %769 : vector<16x32xf32>
    %771 = vector.extract_strided_slice %492 {offsets = [2, 0], sizes = [1, 32], strides = [1, 1]} : vector<3x32xf32> to vector<1x32xf32>
    %772 = vector.extract_strided_slice %493 {offsets = [2, 0], sizes = [1, 32], strides = [1, 1]} : vector<3x32xf32> to vector<1x32xf32>
    %cst_246 = arith.constant dense<0.000000e+00> : vector<16xf32>
    %773 = vector.multi_reduction <add>, %770, %cst_246 [1] : vector<16x32xf32> to vector<16xf32>
    %774 = vector.shape_cast %773 : vector<16xf32> to vector<16x1xf32>
    %cst_247 = arith.constant 3.200000e+01 : f32
    %775 = vector.broadcast %cst_247 : f32 to vector<16x1xf32>
    %776 = arith.divf %774, %775 : vector<16x1xf32>
    %777 = vector.broadcast %776 : vector<16x1xf32> to vector<16x32xf32>
    %778 = arith.subf %770, %777 : vector<16x32xf32>
    %779 = arith.mulf %778, %778 : vector<16x32xf32>
    %cst_248 = arith.constant dense<0.000000e+00> : vector<16xf32>
    %780 = vector.multi_reduction <add>, %779, %cst_248 [1] : vector<16x32xf32> to vector<16xf32>
    %781 = vector.shape_cast %780 : vector<16xf32> to vector<16x1xf32>
    %cst_249 = arith.constant 3.200000e+01 : f32
    %782 = vector.broadcast %cst_249 : f32 to vector<16x1xf32>
    %783 = arith.divf %781, %782 : vector<16x1xf32>
    %cst_250 = arith.constant 9.99999974E-6 : f32
    %784 = vector.broadcast %cst_250 : f32 to vector<16x1xf32>
    %785 = arith.addf %783, %784 : vector<16x1xf32>
    %786 = math.rsqrt %785 : vector<16x1xf32>
    %787 = vector.broadcast %786 : vector<16x1xf32> to vector<16x32xf32>
    %788 = arith.mulf %778, %787 : vector<16x32xf32>
    %789 = vector.broadcast %771 : vector<1x32xf32> to vector<16x32xf32>
    %790 = arith.mulf %788, %789 : vector<16x32xf32>
    %791 = vector.broadcast %772 : vector<1x32xf32> to vector<16x32xf32>
    %792 = arith.addf %790, %791 : vector<16x32xf32>
    %c264 = arith.constant 264 : index
    %c0_251 = arith.constant 0 : index
    %793 = vector.load %arg5[%c264, %c0_251] : memref<312x128xf32, #tpu.memory_space<vmem>>, vector<3x32xf32>
    %c272 = arith.constant 272 : index
    %c0_252 = arith.constant 0 : index
    %794 = vector.load %arg5[%c272, %c0_252] : memref<312x128xf32, #tpu.memory_space<vmem>>, vector<3x32xf32>
    %c640 = arith.constant 640 : index
    %c0_253 = arith.constant 0 : index
    %795 = vector.load %arg4[%c640, %c0_253] : memref<896x128xbf16, #tpu.memory_space<vmem>>, vector<32x96xbf16>
    %796 = arith.truncf %792 : vector<16x32xf32> to vector<16x32xbf16>
    %cst_254 = arith.constant dense<0.000000e+00> : vector<16x96xf32>
    %797 = tpu.matmul %796, %795, %cst_254 {dimension_numbers = #tpu.dot_dimension_numbers<[1], [0], [0], [1], [0, 0, 1, 1], [], []>} : vector<16x32xbf16>, vector<32x96xbf16>, vector<16x96xf32> -> vector<16x96xf32>
    %c208 = arith.constant 208 : index
    %c0_255 = arith.constant 0 : index
    %798 = vector.load %arg5[%c208, %c0_255] : memref<312x128xf32, #tpu.memory_space<vmem>>, vector<1x96xf32>
    %799 = vector.broadcast %798 : vector<1x96xf32> to vector<16x96xf32>
    %800 = arith.addf %797, %799 : vector<16x96xf32>
    %801 = vector.extract_strided_slice %800 {offsets = [0, 0], sizes = [8, 32], strides = [1, 1]} : vector<16x96xf32> to vector<8x32xf32>
    %802 = vector.extract_strided_slice %800 {offsets = [0, 32], sizes = [8, 32], strides = [1, 1]} : vector<16x96xf32> to vector<8x32xf32>
    %803 = vector.extract_strided_slice %800 {offsets = [0, 64], sizes = [8, 32], strides = [1, 1]} : vector<16x96xf32> to vector<8x32xf32>
    %804 = arith.truncf %801 : vector<8x32xf32> to vector<8x32xbf16>
    %805 = arith.truncf %802 : vector<8x32xf32> to vector<8x32xbf16>
    %806 = arith.truncf %803 : vector<8x32xf32> to vector<8x32xbf16>
    %807 = vector.extract_strided_slice %804 {offsets = [0, 0], sizes = [8, 8], strides = [1, 1]} : vector<8x32xbf16> to vector<8x8xbf16>
    %808 = vector.extract_strided_slice %805 {offsets = [0, 0], sizes = [8, 8], strides = [1, 1]} : vector<8x32xbf16> to vector<8x8xbf16>
    %cst_256 = arith.constant dense<0.000000e+00> : vector<8x8xf32>
    %809 = tpu.matmul %807, %808, %cst_256 {dimension_numbers = #tpu.dot_dimension_numbers<[1], [1], [0], [0], [0, 0, 1, 0], [], []>} : vector<8x8xbf16>, vector<8x8xbf16>, vector<8x8xf32> -> vector<8x8xf32>
    %810 = arith.addf %809, %1 : vector<8x8xf32>
    %811 = vector.extract_strided_slice %804 {offsets = [0, 8], sizes = [8, 8], strides = [1, 1]} : vector<8x32xbf16> to vector<8x8xbf16>
    %812 = vector.extract_strided_slice %805 {offsets = [0, 8], sizes = [8, 8], strides = [1, 1]} : vector<8x32xbf16> to vector<8x8xbf16>
    %cst_257 = arith.constant dense<0.000000e+00> : vector<8x8xf32>
    %813 = tpu.matmul %811, %812, %cst_257 {dimension_numbers = #tpu.dot_dimension_numbers<[1], [1], [0], [0], [0, 0, 1, 0], [], []>} : vector<8x8xbf16>, vector<8x8xbf16>, vector<8x8xf32> -> vector<8x8xf32>
    %814 = arith.addf %813, %1 : vector<8x8xf32>
    %815 = vector.extract_strided_slice %804 {offsets = [0, 16], sizes = [8, 8], strides = [1, 1]} : vector<8x32xbf16> to vector<8x8xbf16>
    %816 = vector.extract_strided_slice %805 {offsets = [0, 16], sizes = [8, 8], strides = [1, 1]} : vector<8x32xbf16> to vector<8x8xbf16>
    %cst_258 = arith.constant dense<0.000000e+00> : vector<8x8xf32>
    %817 = tpu.matmul %815, %816, %cst_258 {dimension_numbers = #tpu.dot_dimension_numbers<[1], [1], [0], [0], [0, 0, 1, 0], [], []>} : vector<8x8xbf16>, vector<8x8xbf16>, vector<8x8xf32> -> vector<8x8xf32>
    %818 = arith.addf %817, %1 : vector<8x8xf32>
    %819 = vector.extract_strided_slice %804 {offsets = [0, 24], sizes = [8, 8], strides = [1, 1]} : vector<8x32xbf16> to vector<8x8xbf16>
    %820 = vector.extract_strided_slice %805 {offsets = [0, 24], sizes = [8, 8], strides = [1, 1]} : vector<8x32xbf16> to vector<8x8xbf16>
    %cst_259 = arith.constant dense<0.000000e+00> : vector<8x8xf32>
    %821 = tpu.matmul %819, %820, %cst_259 {dimension_numbers = #tpu.dot_dimension_numbers<[1], [1], [0], [0], [0, 0, 1, 0], [], []>} : vector<8x8xbf16>, vector<8x8xbf16>, vector<8x8xf32> -> vector<8x8xf32>
    %822 = arith.addf %821, %1 : vector<8x8xf32>
    %823 = tpu.concatenate %810, %814, %818, %822 in 0 : vector<8x8xf32>, vector<8x8xf32>, vector<8x8xf32>, vector<8x8xf32> -> vector<32x8xf32>
    %cst_260 = arith.constant dense<0xFF800000> : vector<32xf32>
    %824 = vector.multi_reduction <maximumf>, %823, %cst_260 [1] : vector<32x8xf32> to vector<32xf32>
    %825 = vector.shape_cast %824 : vector<32xf32> to vector<32x1xf32>
    %826 = vector.broadcast %825 : vector<32x1xf32> to vector<32x8xf32>
    %827 = arith.subf %823, %826 : vector<32x8xf32>
    %828 = math.exp %827 : vector<32x8xf32>
    %cst_261 = arith.constant dense<0.000000e+00> : vector<32xf32>
    %829 = vector.multi_reduction <add>, %828, %cst_261 [1] : vector<32x8xf32> to vector<32xf32>
    %830 = vector.shape_cast %829 : vector<32xf32> to vector<32x1xf32>
    %831 = vector.broadcast %830 : vector<32x1xf32> to vector<32x8xf32>
    %832 = arith.divf %828, %831 : vector<32x8xf32>
    %833 = arith.truncf %832 : vector<32x8xf32> to vector<32x8xbf16>
    %834 = vector.extract_strided_slice %833 {offsets = [0, 0], sizes = [8, 8], strides = [1, 1]} : vector<32x8xbf16> to vector<8x8xbf16>
    %835 = vector.extract_strided_slice %806 {offsets = [0, 0], sizes = [8, 8], strides = [1, 1]} : vector<8x32xbf16> to vector<8x8xbf16>
    %cst_262 = arith.constant dense<0.000000e+00> : vector<8x8xf32>
    %836 = tpu.matmul %834, %835, %cst_262 {dimension_numbers = #tpu.dot_dimension_numbers<[1], [0], [0], [1], [0, 0, 1, 1], [], []>} : vector<8x8xbf16>, vector<8x8xbf16>, vector<8x8xf32> -> vector<8x8xf32>
    %837 = vector.extract_strided_slice %833 {offsets = [8, 0], sizes = [8, 8], strides = [1, 1]} : vector<32x8xbf16> to vector<8x8xbf16>
    %838 = vector.extract_strided_slice %806 {offsets = [0, 8], sizes = [8, 8], strides = [1, 1]} : vector<8x32xbf16> to vector<8x8xbf16>
    %cst_263 = arith.constant dense<0.000000e+00> : vector<8x8xf32>
    %839 = tpu.matmul %837, %838, %cst_263 {dimension_numbers = #tpu.dot_dimension_numbers<[1], [0], [0], [1], [0, 0, 1, 1], [], []>} : vector<8x8xbf16>, vector<8x8xbf16>, vector<8x8xf32> -> vector<8x8xf32>
    %840 = vector.extract_strided_slice %833 {offsets = [16, 0], sizes = [8, 8], strides = [1, 1]} : vector<32x8xbf16> to vector<8x8xbf16>
    %841 = vector.extract_strided_slice %806 {offsets = [0, 16], sizes = [8, 8], strides = [1, 1]} : vector<8x32xbf16> to vector<8x8xbf16>
    %cst_264 = arith.constant dense<0.000000e+00> : vector<8x8xf32>
    %842 = tpu.matmul %840, %841, %cst_264 {dimension_numbers = #tpu.dot_dimension_numbers<[1], [0], [0], [1], [0, 0, 1, 1], [], []>} : vector<8x8xbf16>, vector<8x8xbf16>, vector<8x8xf32> -> vector<8x8xf32>
    %843 = vector.extract_strided_slice %833 {offsets = [24, 0], sizes = [8, 8], strides = [1, 1]} : vector<32x8xbf16> to vector<8x8xbf16>
    %844 = vector.extract_strided_slice %806 {offsets = [0, 24], sizes = [8, 8], strides = [1, 1]} : vector<8x32xbf16> to vector<8x8xbf16>
    %cst_265 = arith.constant dense<0.000000e+00> : vector<8x8xf32>
    %845 = tpu.matmul %843, %844, %cst_265 {dimension_numbers = #tpu.dot_dimension_numbers<[1], [0], [0], [1], [0, 0, 1, 1], [], []>} : vector<8x8xbf16>, vector<8x8xbf16>, vector<8x8xf32> -> vector<8x8xf32>
    %846 = tpu.concatenate %836, %839, %842, %845 in 1 : vector<8x8xf32>, vector<8x8xf32>, vector<8x8xf32>, vector<8x8xf32> -> vector<8x32xf32>
    %847 = vector.extract_strided_slice %800 {offsets = [8, 0], sizes = [8, 32], strides = [1, 1]} : vector<16x96xf32> to vector<8x32xf32>
    %848 = vector.extract_strided_slice %800 {offsets = [8, 32], sizes = [8, 32], strides = [1, 1]} : vector<16x96xf32> to vector<8x32xf32>
    %849 = vector.extract_strided_slice %800 {offsets = [8, 64], sizes = [8, 32], strides = [1, 1]} : vector<16x96xf32> to vector<8x32xf32>
    %850 = arith.truncf %847 : vector<8x32xf32> to vector<8x32xbf16>
    %851 = arith.truncf %848 : vector<8x32xf32> to vector<8x32xbf16>
    %852 = arith.truncf %849 : vector<8x32xf32> to vector<8x32xbf16>
    %853 = vector.extract_strided_slice %850 {offsets = [0, 0], sizes = [8, 8], strides = [1, 1]} : vector<8x32xbf16> to vector<8x8xbf16>
    %854 = vector.extract_strided_slice %851 {offsets = [0, 0], sizes = [8, 8], strides = [1, 1]} : vector<8x32xbf16> to vector<8x8xbf16>
    %cst_266 = arith.constant dense<0.000000e+00> : vector<8x8xf32>
    %855 = tpu.matmul %853, %854, %cst_266 {dimension_numbers = #tpu.dot_dimension_numbers<[1], [1], [0], [0], [0, 0, 1, 0], [], []>} : vector<8x8xbf16>, vector<8x8xbf16>, vector<8x8xf32> -> vector<8x8xf32>
    %856 = arith.addf %855, %1 : vector<8x8xf32>
    %857 = vector.extract_strided_slice %850 {offsets = [0, 8], sizes = [8, 8], strides = [1, 1]} : vector<8x32xbf16> to vector<8x8xbf16>
    %858 = vector.extract_strided_slice %851 {offsets = [0, 8], sizes = [8, 8], strides = [1, 1]} : vector<8x32xbf16> to vector<8x8xbf16>
    %cst_267 = arith.constant dense<0.000000e+00> : vector<8x8xf32>
    %859 = tpu.matmul %857, %858, %cst_267 {dimension_numbers = #tpu.dot_dimension_numbers<[1], [1], [0], [0], [0, 0, 1, 0], [], []>} : vector<8x8xbf16>, vector<8x8xbf16>, vector<8x8xf32> -> vector<8x8xf32>
    %860 = arith.addf %859, %1 : vector<8x8xf32>
    %861 = vector.extract_strided_slice %850 {offsets = [0, 16], sizes = [8, 8], strides = [1, 1]} : vector<8x32xbf16> to vector<8x8xbf16>
    %862 = vector.extract_strided_slice %851 {offsets = [0, 16], sizes = [8, 8], strides = [1, 1]} : vector<8x32xbf16> to vector<8x8xbf16>
    %cst_268 = arith.constant dense<0.000000e+00> : vector<8x8xf32>
    %863 = tpu.matmul %861, %862, %cst_268 {dimension_numbers = #tpu.dot_dimension_numbers<[1], [1], [0], [0], [0, 0, 1, 0], [], []>} : vector<8x8xbf16>, vector<8x8xbf16>, vector<8x8xf32> -> vector<8x8xf32>
    %864 = arith.addf %863, %1 : vector<8x8xf32>
    %865 = vector.extract_strided_slice %850 {offsets = [0, 24], sizes = [8, 8], strides = [1, 1]} : vector<8x32xbf16> to vector<8x8xbf16>
    %866 = vector.extract_strided_slice %851 {offsets = [0, 24], sizes = [8, 8], strides = [1, 1]} : vector<8x32xbf16> to vector<8x8xbf16>
    %cst_269 = arith.constant dense<0.000000e+00> : vector<8x8xf32>
    %867 = tpu.matmul %865, %866, %cst_269 {dimension_numbers = #tpu.dot_dimension_numbers<[1], [1], [0], [0], [0, 0, 1, 0], [], []>} : vector<8x8xbf16>, vector<8x8xbf16>, vector<8x8xf32> -> vector<8x8xf32>
    %868 = arith.addf %867, %1 : vector<8x8xf32>
    %869 = tpu.concatenate %856, %860, %864, %868 in 0 : vector<8x8xf32>, vector<8x8xf32>, vector<8x8xf32>, vector<8x8xf32> -> vector<32x8xf32>
    %cst_270 = arith.constant dense<0xFF800000> : vector<32xf32>
    %870 = vector.multi_reduction <maximumf>, %869, %cst_270 [1] : vector<32x8xf32> to vector<32xf32>
    %871 = vector.shape_cast %870 : vector<32xf32> to vector<32x1xf32>
    %872 = vector.broadcast %871 : vector<32x1xf32> to vector<32x8xf32>
    %873 = arith.subf %869, %872 : vector<32x8xf32>
    %874 = math.exp %873 : vector<32x8xf32>
    %cst_271 = arith.constant dense<0.000000e+00> : vector<32xf32>
    %875 = vector.multi_reduction <add>, %874, %cst_271 [1] : vector<32x8xf32> to vector<32xf32>
    %876 = vector.shape_cast %875 : vector<32xf32> to vector<32x1xf32>
    %877 = vector.broadcast %876 : vector<32x1xf32> to vector<32x8xf32>
    %878 = arith.divf %874, %877 : vector<32x8xf32>
    %879 = arith.truncf %878 : vector<32x8xf32> to vector<32x8xbf16>
    %880 = vector.extract_strided_slice %879 {offsets = [0, 0], sizes = [8, 8], strides = [1, 1]} : vector<32x8xbf16> to vector<8x8xbf16>
    %881 = vector.extract_strided_slice %852 {offsets = [0, 0], sizes = [8, 8], strides = [1, 1]} : vector<8x32xbf16> to vector<8x8xbf16>
    %cst_272 = arith.constant dense<0.000000e+00> : vector<8x8xf32>
    %882 = tpu.matmul %880, %881, %cst_272 {dimension_numbers = #tpu.dot_dimension_numbers<[1], [0], [0], [1], [0, 0, 1, 1], [], []>} : vector<8x8xbf16>, vector<8x8xbf16>, vector<8x8xf32> -> vector<8x8xf32>
    %883 = vector.extract_strided_slice %879 {offsets = [8, 0], sizes = [8, 8], strides = [1, 1]} : vector<32x8xbf16> to vector<8x8xbf16>
    %884 = vector.extract_strided_slice %852 {offsets = [0, 8], sizes = [8, 8], strides = [1, 1]} : vector<8x32xbf16> to vector<8x8xbf16>
    %cst_273 = arith.constant dense<0.000000e+00> : vector<8x8xf32>
    %885 = tpu.matmul %883, %884, %cst_273 {dimension_numbers = #tpu.dot_dimension_numbers<[1], [0], [0], [1], [0, 0, 1, 1], [], []>} : vector<8x8xbf16>, vector<8x8xbf16>, vector<8x8xf32> -> vector<8x8xf32>
    %886 = vector.extract_strided_slice %879 {offsets = [16, 0], sizes = [8, 8], strides = [1, 1]} : vector<32x8xbf16> to vector<8x8xbf16>
    %887 = vector.extract_strided_slice %852 {offsets = [0, 16], sizes = [8, 8], strides = [1, 1]} : vector<8x32xbf16> to vector<8x8xbf16>
    %cst_274 = arith.constant dense<0.000000e+00> : vector<8x8xf32>
    %888 = tpu.matmul %886, %887, %cst_274 {dimension_numbers = #tpu.dot_dimension_numbers<[1], [0], [0], [1], [0, 0, 1, 1], [], []>} : vector<8x8xbf16>, vector<8x8xbf16>, vector<8x8xf32> -> vector<8x8xf32>
    %889 = vector.extract_strided_slice %879 {offsets = [24, 0], sizes = [8, 8], strides = [1, 1]} : vector<32x8xbf16> to vector<8x8xbf16>
    %890 = vector.extract_strided_slice %852 {offsets = [0, 24], sizes = [8, 8], strides = [1, 1]} : vector<8x32xbf16> to vector<8x8xbf16>
    %cst_275 = arith.constant dense<0.000000e+00> : vector<8x8xf32>
    %891 = tpu.matmul %889, %890, %cst_275 {dimension_numbers = #tpu.dot_dimension_numbers<[1], [0], [0], [1], [0, 0, 1, 1], [], []>} : vector<8x8xbf16>, vector<8x8xbf16>, vector<8x8xf32> -> vector<8x8xf32>
    %892 = tpu.concatenate %882, %885, %888, %891 in 1 : vector<8x8xf32>, vector<8x8xf32>, vector<8x8xf32>, vector<8x8xf32> -> vector<8x32xf32>
    %893 = tpu.concatenate %846, %892 in 0 : vector<8x32xf32>, vector<8x32xf32> -> vector<16x32xf32>
    %c672 = arith.constant 672 : index
    %c0_276 = arith.constant 0 : index
    %894 = vector.load %arg4[%c672, %c0_276] : memref<896x128xbf16, #tpu.memory_space<vmem>>, vector<32x32xbf16>
    %895 = arith.truncf %893 : vector<16x32xf32> to vector<16x32xbf16>
    %cst_277 = arith.constant dense<0.000000e+00> : vector<16x32xf32>
    %896 = tpu.matmul %895, %894, %cst_277 {dimension_numbers = #tpu.dot_dimension_numbers<[1], [0], [0], [1], [0, 0, 1, 1], [], []>} : vector<16x32xbf16>, vector<32x32xbf16>, vector<16x32xf32> -> vector<16x32xf32>
    %c216 = arith.constant 216 : index
    %c0_278 = arith.constant 0 : index
    %897 = vector.load %arg5[%c216, %c0_278] : memref<312x128xf32, #tpu.memory_space<vmem>>, vector<1x32xf32>
    %898 = vector.broadcast %897 : vector<1x32xf32> to vector<16x32xf32>
    %899 = arith.addf %896, %898 : vector<16x32xf32>
    %900 = arith.addf %792, %899 : vector<16x32xf32>
    %901 = vector.extract_strided_slice %793 {offsets = [0, 0], sizes = [1, 32], strides = [1, 1]} : vector<3x32xf32> to vector<1x32xf32>
    %902 = vector.extract_strided_slice %794 {offsets = [0, 0], sizes = [1, 32], strides = [1, 1]} : vector<3x32xf32> to vector<1x32xf32>
    %cst_279 = arith.constant dense<0.000000e+00> : vector<16xf32>
    %903 = vector.multi_reduction <add>, %900, %cst_279 [1] : vector<16x32xf32> to vector<16xf32>
    %904 = vector.shape_cast %903 : vector<16xf32> to vector<16x1xf32>
    %cst_280 = arith.constant 3.200000e+01 : f32
    %905 = vector.broadcast %cst_280 : f32 to vector<16x1xf32>
    %906 = arith.divf %904, %905 : vector<16x1xf32>
    %907 = vector.broadcast %906 : vector<16x1xf32> to vector<16x32xf32>
    %908 = arith.subf %900, %907 : vector<16x32xf32>
    %909 = arith.mulf %908, %908 : vector<16x32xf32>
    %cst_281 = arith.constant dense<0.000000e+00> : vector<16xf32>
    %910 = vector.multi_reduction <add>, %909, %cst_281 [1] : vector<16x32xf32> to vector<16xf32>
    %911 = vector.shape_cast %910 : vector<16xf32> to vector<16x1xf32>
    %cst_282 = arith.constant 3.200000e+01 : f32
    %912 = vector.broadcast %cst_282 : f32 to vector<16x1xf32>
    %913 = arith.divf %911, %912 : vector<16x1xf32>
    %cst_283 = arith.constant 9.99999974E-6 : f32
    %914 = vector.broadcast %cst_283 : f32 to vector<16x1xf32>
    %915 = arith.addf %913, %914 : vector<16x1xf32>
    %916 = math.rsqrt %915 : vector<16x1xf32>
    %917 = vector.broadcast %916 : vector<16x1xf32> to vector<16x32xf32>
    %918 = arith.mulf %908, %917 : vector<16x32xf32>
    %919 = vector.broadcast %901 : vector<1x32xf32> to vector<16x32xf32>
    %920 = arith.mulf %918, %919 : vector<16x32xf32>
    %921 = vector.broadcast %902 : vector<1x32xf32> to vector<16x32xf32>
    %922 = arith.addf %920, %921 : vector<16x32xf32>
    %c704 = arith.constant 704 : index
    %c0_284 = arith.constant 0 : index
    %923 = vector.load %arg4[%c704, %c0_284] : memref<896x128xbf16, #tpu.memory_space<vmem>>, vector<32x32xbf16>
    %924 = arith.truncf %922 : vector<16x32xf32> to vector<16x32xbf16>
    %cst_285 = arith.constant dense<0.000000e+00> : vector<16x32xf32>
    %925 = tpu.matmul %924, %923, %cst_285 {dimension_numbers = #tpu.dot_dimension_numbers<[1], [0], [0], [1], [0, 0, 1, 1], [], []>} : vector<16x32xbf16>, vector<32x32xbf16>, vector<16x32xf32> -> vector<16x32xf32>
    %c224_286 = arith.constant 224 : index
    %c0_287 = arith.constant 0 : index
    %926 = vector.load %arg5[%c224_286, %c0_287] : memref<312x128xf32, #tpu.memory_space<vmem>>, vector<1x32xf32>
    %927 = vector.broadcast %926 : vector<1x32xf32> to vector<16x32xf32>
    %928 = arith.addf %925, %927 : vector<16x32xf32>
    %c736 = arith.constant 736 : index
    %c0_288 = arith.constant 0 : index
    %929 = vector.load %arg4[%c736, %c0_288] : memref<896x128xbf16, #tpu.memory_space<vmem>>, vector<32x64xbf16>
    %930 = arith.truncf %486 : vector<32x32xf32> to vector<32x32xbf16>
    %cst_289 = arith.constant dense<0.000000e+00> : vector<32x64xf32>
    %931 = tpu.matmul %930, %929, %cst_289 {dimension_numbers = #tpu.dot_dimension_numbers<[1], [0], [0], [1], [0, 0, 1, 1], [], []>} : vector<32x32xbf16>, vector<32x64xbf16>, vector<32x64xf32> -> vector<32x64xf32>
    %c232 = arith.constant 232 : index
    %c0_290 = arith.constant 0 : index
    %932 = vector.load %arg5[%c232, %c0_290] : memref<312x128xf32, #tpu.memory_space<vmem>>, vector<1x64xf32>
    %933 = vector.broadcast %932 : vector<1x64xf32> to vector<32x64xf32>
    %934 = arith.addf %931, %933 : vector<32x64xf32>
    %935 = vector.extract_strided_slice %934 {offsets = [0, 0], sizes = [16, 32], strides = [1, 1]} : vector<32x64xf32> to vector<16x32xf32>
    %936 = vector.extract_strided_slice %934 {offsets = [0, 32], sizes = [16, 32], strides = [1, 1]} : vector<32x64xf32> to vector<16x32xf32>
    %937 = vector.extract_strided_slice %928 {offsets = [0, 0], sizes = [8, 32], strides = [1, 1]} : vector<16x32xf32> to vector<8x32xf32>
    %938 = arith.truncf %937 : vector<8x32xf32> to vector<8x32xbf16>
    %939 = arith.truncf %935 : vector<16x32xf32> to vector<16x32xbf16>
    %940 = arith.truncf %936 : vector<16x32xf32> to vector<16x32xbf16>
    %941 = vector.extract_strided_slice %938 {offsets = [0, 0], sizes = [8, 8], strides = [1, 1]} : vector<8x32xbf16> to vector<8x8xbf16>
    %942 = vector.extract_strided_slice %939 {offsets = [0, 0], sizes = [16, 8], strides = [1, 1]} : vector<16x32xbf16> to vector<16x8xbf16>
    %cst_291 = arith.constant dense<0.000000e+00> : vector<8x16xf32>
    %943 = tpu.matmul %941, %942, %cst_291 {dimension_numbers = #tpu.dot_dimension_numbers<[1], [1], [0], [0], [0, 0, 1, 0], [], []>} : vector<8x8xbf16>, vector<16x8xbf16>, vector<8x16xf32> -> vector<8x16xf32>
    %944 = arith.addf %943, %489 : vector<8x16xf32>
    %945 = vector.extract_strided_slice %938 {offsets = [0, 8], sizes = [8, 8], strides = [1, 1]} : vector<8x32xbf16> to vector<8x8xbf16>
    %946 = vector.extract_strided_slice %939 {offsets = [0, 8], sizes = [16, 8], strides = [1, 1]} : vector<16x32xbf16> to vector<16x8xbf16>
    %cst_292 = arith.constant dense<0.000000e+00> : vector<8x16xf32>
    %947 = tpu.matmul %945, %946, %cst_292 {dimension_numbers = #tpu.dot_dimension_numbers<[1], [1], [0], [0], [0, 0, 1, 0], [], []>} : vector<8x8xbf16>, vector<16x8xbf16>, vector<8x16xf32> -> vector<8x16xf32>
    %948 = arith.addf %947, %489 : vector<8x16xf32>
    %949 = vector.extract_strided_slice %938 {offsets = [0, 16], sizes = [8, 8], strides = [1, 1]} : vector<8x32xbf16> to vector<8x8xbf16>
    %950 = vector.extract_strided_slice %939 {offsets = [0, 16], sizes = [16, 8], strides = [1, 1]} : vector<16x32xbf16> to vector<16x8xbf16>
    %cst_293 = arith.constant dense<0.000000e+00> : vector<8x16xf32>
    %951 = tpu.matmul %949, %950, %cst_293 {dimension_numbers = #tpu.dot_dimension_numbers<[1], [1], [0], [0], [0, 0, 1, 0], [], []>} : vector<8x8xbf16>, vector<16x8xbf16>, vector<8x16xf32> -> vector<8x16xf32>
    %952 = arith.addf %951, %489 : vector<8x16xf32>
    %953 = vector.extract_strided_slice %938 {offsets = [0, 24], sizes = [8, 8], strides = [1, 1]} : vector<8x32xbf16> to vector<8x8xbf16>
    %954 = vector.extract_strided_slice %939 {offsets = [0, 24], sizes = [16, 8], strides = [1, 1]} : vector<16x32xbf16> to vector<16x8xbf16>
    %cst_294 = arith.constant dense<0.000000e+00> : vector<8x16xf32>
    %955 = tpu.matmul %953, %954, %cst_294 {dimension_numbers = #tpu.dot_dimension_numbers<[1], [1], [0], [0], [0, 0, 1, 0], [], []>} : vector<8x8xbf16>, vector<16x8xbf16>, vector<8x16xf32> -> vector<8x16xf32>
    %956 = arith.addf %955, %489 : vector<8x16xf32>
    %957 = tpu.concatenate %944, %948, %952, %956 in 0 : vector<8x16xf32>, vector<8x16xf32>, vector<8x16xf32>, vector<8x16xf32> -> vector<32x16xf32>
    %cst_295 = arith.constant dense<0xFF800000> : vector<32xf32>
    %958 = vector.multi_reduction <maximumf>, %957, %cst_295 [1] : vector<32x16xf32> to vector<32xf32>
    %959 = vector.shape_cast %958 : vector<32xf32> to vector<32x1xf32>
    %960 = vector.broadcast %959 : vector<32x1xf32> to vector<32x16xf32>
    %961 = arith.subf %957, %960 : vector<32x16xf32>
    %962 = math.exp %961 : vector<32x16xf32>
    %cst_296 = arith.constant dense<0.000000e+00> : vector<32xf32>
    %963 = vector.multi_reduction <add>, %962, %cst_296 [1] : vector<32x16xf32> to vector<32xf32>
    %964 = vector.shape_cast %963 : vector<32xf32> to vector<32x1xf32>
    %965 = vector.broadcast %964 : vector<32x1xf32> to vector<32x16xf32>
    %966 = arith.divf %962, %965 : vector<32x16xf32>
    %967 = arith.truncf %966 : vector<32x16xf32> to vector<32x16xbf16>
    %968 = vector.extract_strided_slice %967 {offsets = [0, 0], sizes = [8, 16], strides = [1, 1]} : vector<32x16xbf16> to vector<8x16xbf16>
    %969 = vector.extract_strided_slice %940 {offsets = [0, 0], sizes = [16, 8], strides = [1, 1]} : vector<16x32xbf16> to vector<16x8xbf16>
    %cst_297 = arith.constant dense<0.000000e+00> : vector<8x8xf32>
    %970 = tpu.matmul %968, %969, %cst_297 {dimension_numbers = #tpu.dot_dimension_numbers<[1], [0], [0], [1], [0, 0, 1, 1], [], []>} : vector<8x16xbf16>, vector<16x8xbf16>, vector<8x8xf32> -> vector<8x8xf32>
    %971 = vector.extract_strided_slice %967 {offsets = [8, 0], sizes = [8, 16], strides = [1, 1]} : vector<32x16xbf16> to vector<8x16xbf16>
    %972 = vector.extract_strided_slice %940 {offsets = [0, 8], sizes = [16, 8], strides = [1, 1]} : vector<16x32xbf16> to vector<16x8xbf16>
    %cst_298 = arith.constant dense<0.000000e+00> : vector<8x8xf32>
    %973 = tpu.matmul %971, %972, %cst_298 {dimension_numbers = #tpu.dot_dimension_numbers<[1], [0], [0], [1], [0, 0, 1, 1], [], []>} : vector<8x16xbf16>, vector<16x8xbf16>, vector<8x8xf32> -> vector<8x8xf32>
    %974 = vector.extract_strided_slice %967 {offsets = [16, 0], sizes = [8, 16], strides = [1, 1]} : vector<32x16xbf16> to vector<8x16xbf16>
    %975 = vector.extract_strided_slice %940 {offsets = [0, 16], sizes = [16, 8], strides = [1, 1]} : vector<16x32xbf16> to vector<16x8xbf16>
    %cst_299 = arith.constant dense<0.000000e+00> : vector<8x8xf32>
    %976 = tpu.matmul %974, %975, %cst_299 {dimension_numbers = #tpu.dot_dimension_numbers<[1], [0], [0], [1], [0, 0, 1, 1], [], []>} : vector<8x16xbf16>, vector<16x8xbf16>, vector<8x8xf32> -> vector<8x8xf32>
    %977 = vector.extract_strided_slice %967 {offsets = [24, 0], sizes = [8, 16], strides = [1, 1]} : vector<32x16xbf16> to vector<8x16xbf16>
    %978 = vector.extract_strided_slice %940 {offsets = [0, 24], sizes = [16, 8], strides = [1, 1]} : vector<16x32xbf16> to vector<16x8xbf16>
    %cst_300 = arith.constant dense<0.000000e+00> : vector<8x8xf32>
    %979 = tpu.matmul %977, %978, %cst_300 {dimension_numbers = #tpu.dot_dimension_numbers<[1], [0], [0], [1], [0, 0, 1, 1], [], []>} : vector<8x16xbf16>, vector<16x8xbf16>, vector<8x8xf32> -> vector<8x8xf32>
    %980 = tpu.concatenate %970, %973, %976, %979 in 1 : vector<8x8xf32>, vector<8x8xf32>, vector<8x8xf32>, vector<8x8xf32> -> vector<8x32xf32>
    %981 = vector.extract_strided_slice %934 {offsets = [16, 0], sizes = [16, 32], strides = [1, 1]} : vector<32x64xf32> to vector<16x32xf32>
    %982 = vector.extract_strided_slice %934 {offsets = [16, 32], sizes = [16, 32], strides = [1, 1]} : vector<32x64xf32> to vector<16x32xf32>
    %983 = vector.extract_strided_slice %928 {offsets = [8, 0], sizes = [8, 32], strides = [1, 1]} : vector<16x32xf32> to vector<8x32xf32>
    %984 = arith.truncf %983 : vector<8x32xf32> to vector<8x32xbf16>
    %985 = arith.truncf %981 : vector<16x32xf32> to vector<16x32xbf16>
    %986 = arith.truncf %982 : vector<16x32xf32> to vector<16x32xbf16>
    %987 = vector.extract_strided_slice %984 {offsets = [0, 0], sizes = [8, 8], strides = [1, 1]} : vector<8x32xbf16> to vector<8x8xbf16>
    %988 = vector.extract_strided_slice %985 {offsets = [0, 0], sizes = [16, 8], strides = [1, 1]} : vector<16x32xbf16> to vector<16x8xbf16>
    %cst_301 = arith.constant dense<0.000000e+00> : vector<8x16xf32>
    %989 = tpu.matmul %987, %988, %cst_301 {dimension_numbers = #tpu.dot_dimension_numbers<[1], [1], [0], [0], [0, 0, 1, 0], [], []>} : vector<8x8xbf16>, vector<16x8xbf16>, vector<8x16xf32> -> vector<8x16xf32>
    %990 = arith.addf %989, %491 : vector<8x16xf32>
    %991 = vector.extract_strided_slice %984 {offsets = [0, 8], sizes = [8, 8], strides = [1, 1]} : vector<8x32xbf16> to vector<8x8xbf16>
    %992 = vector.extract_strided_slice %985 {offsets = [0, 8], sizes = [16, 8], strides = [1, 1]} : vector<16x32xbf16> to vector<16x8xbf16>
    %cst_302 = arith.constant dense<0.000000e+00> : vector<8x16xf32>
    %993 = tpu.matmul %991, %992, %cst_302 {dimension_numbers = #tpu.dot_dimension_numbers<[1], [1], [0], [0], [0, 0, 1, 0], [], []>} : vector<8x8xbf16>, vector<16x8xbf16>, vector<8x16xf32> -> vector<8x16xf32>
    %994 = arith.addf %993, %491 : vector<8x16xf32>
    %995 = vector.extract_strided_slice %984 {offsets = [0, 16], sizes = [8, 8], strides = [1, 1]} : vector<8x32xbf16> to vector<8x8xbf16>
    %996 = vector.extract_strided_slice %985 {offsets = [0, 16], sizes = [16, 8], strides = [1, 1]} : vector<16x32xbf16> to vector<16x8xbf16>
    %cst_303 = arith.constant dense<0.000000e+00> : vector<8x16xf32>
    %997 = tpu.matmul %995, %996, %cst_303 {dimension_numbers = #tpu.dot_dimension_numbers<[1], [1], [0], [0], [0, 0, 1, 0], [], []>} : vector<8x8xbf16>, vector<16x8xbf16>, vector<8x16xf32> -> vector<8x16xf32>
    %998 = arith.addf %997, %491 : vector<8x16xf32>
    %999 = vector.extract_strided_slice %984 {offsets = [0, 24], sizes = [8, 8], strides = [1, 1]} : vector<8x32xbf16> to vector<8x8xbf16>
    %1000 = vector.extract_strided_slice %985 {offsets = [0, 24], sizes = [16, 8], strides = [1, 1]} : vector<16x32xbf16> to vector<16x8xbf16>
    %cst_304 = arith.constant dense<0.000000e+00> : vector<8x16xf32>
    %1001 = tpu.matmul %999, %1000, %cst_304 {dimension_numbers = #tpu.dot_dimension_numbers<[1], [1], [0], [0], [0, 0, 1, 0], [], []>} : vector<8x8xbf16>, vector<16x8xbf16>, vector<8x16xf32> -> vector<8x16xf32>
    %1002 = arith.addf %1001, %491 : vector<8x16xf32>
    %1003 = tpu.concatenate %990, %994, %998, %1002 in 0 : vector<8x16xf32>, vector<8x16xf32>, vector<8x16xf32>, vector<8x16xf32> -> vector<32x16xf32>
    %cst_305 = arith.constant dense<0xFF800000> : vector<32xf32>
    %1004 = vector.multi_reduction <maximumf>, %1003, %cst_305 [1] : vector<32x16xf32> to vector<32xf32>
    %1005 = vector.shape_cast %1004 : vector<32xf32> to vector<32x1xf32>
    %1006 = vector.broadcast %1005 : vector<32x1xf32> to vector<32x16xf32>
    %1007 = arith.subf %1003, %1006 : vector<32x16xf32>
    %1008 = math.exp %1007 : vector<32x16xf32>
    %cst_306 = arith.constant dense<0.000000e+00> : vector<32xf32>
    %1009 = vector.multi_reduction <add>, %1008, %cst_306 [1] : vector<32x16xf32> to vector<32xf32>
    %1010 = vector.shape_cast %1009 : vector<32xf32> to vector<32x1xf32>
    %1011 = vector.broadcast %1010 : vector<32x1xf32> to vector<32x16xf32>
    %1012 = arith.divf %1008, %1011 : vector<32x16xf32>
    %1013 = arith.truncf %1012 : vector<32x16xf32> to vector<32x16xbf16>
    %1014 = vector.extract_strided_slice %1013 {offsets = [0, 0], sizes = [8, 16], strides = [1, 1]} : vector<32x16xbf16> to vector<8x16xbf16>
    %1015 = vector.extract_strided_slice %986 {offsets = [0, 0], sizes = [16, 8], strides = [1, 1]} : vector<16x32xbf16> to vector<16x8xbf16>
    %cst_307 = arith.constant dense<0.000000e+00> : vector<8x8xf32>
    %1016 = tpu.matmul %1014, %1015, %cst_307 {dimension_numbers = #tpu.dot_dimension_numbers<[1], [0], [0], [1], [0, 0, 1, 1], [], []>} : vector<8x16xbf16>, vector<16x8xbf16>, vector<8x8xf32> -> vector<8x8xf32>
    %1017 = vector.extract_strided_slice %1013 {offsets = [8, 0], sizes = [8, 16], strides = [1, 1]} : vector<32x16xbf16> to vector<8x16xbf16>
    %1018 = vector.extract_strided_slice %986 {offsets = [0, 8], sizes = [16, 8], strides = [1, 1]} : vector<16x32xbf16> to vector<16x8xbf16>
    %cst_308 = arith.constant dense<0.000000e+00> : vector<8x8xf32>
    %1019 = tpu.matmul %1017, %1018, %cst_308 {dimension_numbers = #tpu.dot_dimension_numbers<[1], [0], [0], [1], [0, 0, 1, 1], [], []>} : vector<8x16xbf16>, vector<16x8xbf16>, vector<8x8xf32> -> vector<8x8xf32>
    %1020 = vector.extract_strided_slice %1013 {offsets = [16, 0], sizes = [8, 16], strides = [1, 1]} : vector<32x16xbf16> to vector<8x16xbf16>
    %1021 = vector.extract_strided_slice %986 {offsets = [0, 16], sizes = [16, 8], strides = [1, 1]} : vector<16x32xbf16> to vector<16x8xbf16>
    %cst_309 = arith.constant dense<0.000000e+00> : vector<8x8xf32>
    %1022 = tpu.matmul %1020, %1021, %cst_309 {dimension_numbers = #tpu.dot_dimension_numbers<[1], [0], [0], [1], [0, 0, 1, 1], [], []>} : vector<8x16xbf16>, vector<16x8xbf16>, vector<8x8xf32> -> vector<8x8xf32>
    %1023 = vector.extract_strided_slice %1013 {offsets = [24, 0], sizes = [8, 16], strides = [1, 1]} : vector<32x16xbf16> to vector<8x16xbf16>
    %1024 = vector.extract_strided_slice %986 {offsets = [0, 24], sizes = [16, 8], strides = [1, 1]} : vector<16x32xbf16> to vector<16x8xbf16>
    %cst_310 = arith.constant dense<0.000000e+00> : vector<8x8xf32>
    %1025 = tpu.matmul %1023, %1024, %cst_310 {dimension_numbers = #tpu.dot_dimension_numbers<[1], [0], [0], [1], [0, 0, 1, 1], [], []>} : vector<8x16xbf16>, vector<16x8xbf16>, vector<8x8xf32> -> vector<8x8xf32>
    %1026 = tpu.concatenate %1016, %1019, %1022, %1025 in 1 : vector<8x8xf32>, vector<8x8xf32>, vector<8x8xf32>, vector<8x8xf32> -> vector<8x32xf32>
    %1027 = tpu.concatenate %980, %1026 in 0 : vector<8x32xf32>, vector<8x32xf32> -> vector<16x32xf32>
    %c768 = arith.constant 768 : index
    %c0_311 = arith.constant 0 : index
    %1028 = vector.load %arg4[%c768, %c0_311] : memref<896x128xbf16, #tpu.memory_space<vmem>>, vector<32x32xbf16>
    %1029 = arith.truncf %1027 : vector<16x32xf32> to vector<16x32xbf16>
    %cst_312 = arith.constant dense<0.000000e+00> : vector<16x32xf32>
    %1030 = tpu.matmul %1029, %1028, %cst_312 {dimension_numbers = #tpu.dot_dimension_numbers<[1], [0], [0], [1], [0, 0, 1, 1], [], []>} : vector<16x32xbf16>, vector<32x32xbf16>, vector<16x32xf32> -> vector<16x32xf32>
    %c240 = arith.constant 240 : index
    %c0_313 = arith.constant 0 : index
    %1031 = vector.load %arg5[%c240, %c0_313] : memref<312x128xf32, #tpu.memory_space<vmem>>, vector<1x32xf32>
    %1032 = vector.broadcast %1031 : vector<1x32xf32> to vector<16x32xf32>
    %1033 = arith.addf %1030, %1032 : vector<16x32xf32>
    %1034 = arith.addf %922, %1033 : vector<16x32xf32>
    %1035 = vector.extract_strided_slice %793 {offsets = [1, 0], sizes = [1, 32], strides = [1, 1]} : vector<3x32xf32> to vector<1x32xf32>
    %1036 = vector.extract_strided_slice %794 {offsets = [1, 0], sizes = [1, 32], strides = [1, 1]} : vector<3x32xf32> to vector<1x32xf32>
    %cst_314 = arith.constant dense<0.000000e+00> : vector<16xf32>
    %1037 = vector.multi_reduction <add>, %1034, %cst_314 [1] : vector<16x32xf32> to vector<16xf32>
    %1038 = vector.shape_cast %1037 : vector<16xf32> to vector<16x1xf32>
    %cst_315 = arith.constant 3.200000e+01 : f32
    %1039 = vector.broadcast %cst_315 : f32 to vector<16x1xf32>
    %1040 = arith.divf %1038, %1039 : vector<16x1xf32>
    %1041 = vector.broadcast %1040 : vector<16x1xf32> to vector<16x32xf32>
    %1042 = arith.subf %1034, %1041 : vector<16x32xf32>
    %1043 = arith.mulf %1042, %1042 : vector<16x32xf32>
    %cst_316 = arith.constant dense<0.000000e+00> : vector<16xf32>
    %1044 = vector.multi_reduction <add>, %1043, %cst_316 [1] : vector<16x32xf32> to vector<16xf32>
    %1045 = vector.shape_cast %1044 : vector<16xf32> to vector<16x1xf32>
    %cst_317 = arith.constant 3.200000e+01 : f32
    %1046 = vector.broadcast %cst_317 : f32 to vector<16x1xf32>
    %1047 = arith.divf %1045, %1046 : vector<16x1xf32>
    %cst_318 = arith.constant 9.99999974E-6 : f32
    %1048 = vector.broadcast %cst_318 : f32 to vector<16x1xf32>
    %1049 = arith.addf %1047, %1048 : vector<16x1xf32>
    %1050 = math.rsqrt %1049 : vector<16x1xf32>
    %1051 = vector.broadcast %1050 : vector<16x1xf32> to vector<16x32xf32>
    %1052 = arith.mulf %1042, %1051 : vector<16x32xf32>
    %1053 = vector.broadcast %1035 : vector<1x32xf32> to vector<16x32xf32>
    %1054 = arith.mulf %1052, %1053 : vector<16x32xf32>
    %1055 = vector.broadcast %1036 : vector<1x32xf32> to vector<16x32xf32>
    %1056 = arith.addf %1054, %1055 : vector<16x32xf32>
    %c800 = arith.constant 800 : index
    %c0_319 = arith.constant 0 : index
    %1057 = vector.load %arg4[%c800, %c0_319] : memref<896x128xbf16, #tpu.memory_space<vmem>>, vector<32x64xbf16>
    %1058 = arith.truncf %1056 : vector<16x32xf32> to vector<16x32xbf16>
    %cst_320 = arith.constant dense<0.000000e+00> : vector<16x64xf32>
    %1059 = tpu.matmul %1058, %1057, %cst_320 {dimension_numbers = #tpu.dot_dimension_numbers<[1], [0], [0], [1], [0, 0, 1, 1], [], []>} : vector<16x32xbf16>, vector<32x64xbf16>, vector<16x64xf32> -> vector<16x64xf32>
    %c248 = arith.constant 248 : index
    %c0_321 = arith.constant 0 : index
    %1060 = vector.load %arg5[%c248, %c0_321] : memref<312x128xf32, #tpu.memory_space<vmem>>, vector<1x64xf32>
    %1061 = vector.broadcast %1060 : vector<1x64xf32> to vector<16x64xf32>
    %1062 = arith.addf %1059, %1061 : vector<16x64xf32>
    %cst_322 = arith.constant 0.000000e+00 : f32
    %1063 = vector.broadcast %cst_322 : f32 to vector<16x64xf32>
    %1064 = arith.maximumf %1062, %1063 : vector<16x64xf32>
    %c832 = arith.constant 832 : index
    %c0_323 = arith.constant 0 : index
    %1065 = vector.load %arg4[%c832, %c0_323] : memref<896x128xbf16, #tpu.memory_space<vmem>>, vector<64x32xbf16>
    %1066 = arith.truncf %1064 : vector<16x64xf32> to vector<16x64xbf16>
    %cst_324 = arith.constant dense<0.000000e+00> : vector<16x32xf32>
    %1067 = tpu.matmul %1066, %1065, %cst_324 {dimension_numbers = #tpu.dot_dimension_numbers<[1], [0], [0], [1], [0, 0, 1, 1], [], []>} : vector<16x64xbf16>, vector<64x32xbf16>, vector<16x32xf32> -> vector<16x32xf32>
    %c256_325 = arith.constant 256 : index
    %c0_326 = arith.constant 0 : index
    %1068 = vector.load %arg5[%c256_325, %c0_326] : memref<312x128xf32, #tpu.memory_space<vmem>>, vector<1x32xf32>
    %1069 = vector.broadcast %1068 : vector<1x32xf32> to vector<16x32xf32>
    %1070 = arith.addf %1067, %1069 : vector<16x32xf32>
    %1071 = arith.addf %1056, %1070 : vector<16x32xf32>
    %1072 = vector.extract_strided_slice %793 {offsets = [2, 0], sizes = [1, 32], strides = [1, 1]} : vector<3x32xf32> to vector<1x32xf32>
    %1073 = vector.extract_strided_slice %794 {offsets = [2, 0], sizes = [1, 32], strides = [1, 1]} : vector<3x32xf32> to vector<1x32xf32>
    %cst_327 = arith.constant dense<0.000000e+00> : vector<16xf32>
    %1074 = vector.multi_reduction <add>, %1071, %cst_327 [1] : vector<16x32xf32> to vector<16xf32>
    %1075 = vector.shape_cast %1074 : vector<16xf32> to vector<16x1xf32>
    %cst_328 = arith.constant 3.200000e+01 : f32
    %1076 = vector.broadcast %cst_328 : f32 to vector<16x1xf32>
    %1077 = arith.divf %1075, %1076 : vector<16x1xf32>
    %1078 = vector.broadcast %1077 : vector<16x1xf32> to vector<16x32xf32>
    %1079 = arith.subf %1071, %1078 : vector<16x32xf32>
    %1080 = arith.mulf %1079, %1079 : vector<16x32xf32>
    %cst_329 = arith.constant dense<0.000000e+00> : vector<16xf32>
    %1081 = vector.multi_reduction <add>, %1080, %cst_329 [1] : vector<16x32xf32> to vector<16xf32>
    %1082 = vector.shape_cast %1081 : vector<16xf32> to vector<16x1xf32>
    %cst_330 = arith.constant 3.200000e+01 : f32
    %1083 = vector.broadcast %cst_330 : f32 to vector<16x1xf32>
    %1084 = arith.divf %1082, %1083 : vector<16x1xf32>
    %cst_331 = arith.constant 9.99999974E-6 : f32
    %1085 = vector.broadcast %cst_331 : f32 to vector<16x1xf32>
    %1086 = arith.addf %1084, %1085 : vector<16x1xf32>
    %1087 = math.rsqrt %1086 : vector<16x1xf32>
    %1088 = vector.broadcast %1087 : vector<16x1xf32> to vector<16x32xf32>
    %1089 = arith.mulf %1079, %1088 : vector<16x32xf32>
    %1090 = vector.broadcast %1072 : vector<1x32xf32> to vector<16x32xf32>
    %1091 = arith.mulf %1089, %1090 : vector<16x32xf32>
    %1092 = vector.broadcast %1073 : vector<1x32xf32> to vector<16x32xf32>
    %1093 = arith.addf %1091, %1092 : vector<16x32xf32>
    %c280 = arith.constant 280 : index
    %c0_332 = arith.constant 0 : index
    %1094 = vector.load %arg5[%c280, %c0_332] : memref<312x128xf32, #tpu.memory_space<vmem>>, vector<1x32xf32>
    %c288_333 = arith.constant 288 : index
    %c0_334 = arith.constant 0 : index
    %1095 = vector.load %arg5[%c288_333, %c0_334] : memref<312x128xf32, #tpu.memory_space<vmem>>, vector<1x32xf32>
    %cst_335 = arith.constant dense<0.000000e+00> : vector<16xf32>
    %1096 = vector.multi_reduction <add>, %1093, %cst_335 [1] : vector<16x32xf32> to vector<16xf32>
    %1097 = vector.shape_cast %1096 : vector<16xf32> to vector<16x1xf32>
    %cst_336 = arith.constant 3.200000e+01 : f32
    %1098 = vector.broadcast %cst_336 : f32 to vector<16x1xf32>
    %1099 = arith.divf %1097, %1098 : vector<16x1xf32>
    %1100 = vector.broadcast %1099 : vector<16x1xf32> to vector<16x32xf32>
    %1101 = arith.subf %1093, %1100 : vector<16x32xf32>
    %1102 = arith.mulf %1101, %1101 : vector<16x32xf32>
    %cst_337 = arith.constant dense<0.000000e+00> : vector<16xf32>
    %1103 = vector.multi_reduction <add>, %1102, %cst_337 [1] : vector<16x32xf32> to vector<16xf32>
    %1104 = vector.shape_cast %1103 : vector<16xf32> to vector<16x1xf32>
    %cst_338 = arith.constant 3.200000e+01 : f32
    %1105 = vector.broadcast %cst_338 : f32 to vector<16x1xf32>
    %1106 = arith.divf %1104, %1105 : vector<16x1xf32>
    %cst_339 = arith.constant 9.99999974E-6 : f32
    %1107 = vector.broadcast %cst_339 : f32 to vector<16x1xf32>
    %1108 = arith.addf %1106, %1107 : vector<16x1xf32>
    %1109 = math.rsqrt %1108 : vector<16x1xf32>
    %1110 = vector.broadcast %1109 : vector<16x1xf32> to vector<16x32xf32>
    %1111 = arith.mulf %1101, %1110 : vector<16x32xf32>
    %1112 = vector.broadcast %1094 : vector<1x32xf32> to vector<16x32xf32>
    %1113 = arith.mulf %1111, %1112 : vector<16x32xf32>
    %1114 = vector.broadcast %1095 : vector<1x32xf32> to vector<16x32xf32>
    %1115 = arith.addf %1113, %1114 : vector<16x32xf32>
    %c32_340 = arith.constant 32 : index
    %c0_341 = arith.constant 0 : index
    %1116 = vector.load %arg4[%c32_340, %c0_341] : memref<896x128xbf16, #tpu.memory_space<vmem>>, vector<32x128xbf16>
    %1117 = arith.truncf %1115 : vector<16x32xf32> to vector<16x32xbf16>
    %cst_342 = arith.constant dense<0.000000e+00> : vector<16x128xf32>
    %1118 = tpu.matmul %1117, %1116, %cst_342 {dimension_numbers = #tpu.dot_dimension_numbers<[1], [0], [0], [1], [0, 0, 1, 1], [], []>} : vector<16x32xbf16>, vector<32x128xbf16>, vector<16x128xf32> -> vector<16x128xf32>
    %c16_343 = arith.constant 16 : index
    %c0_344 = arith.constant 0 : index
    %1119 = vector.load %arg5[%c16_343, %c0_344] : memref<312x128xf32, #tpu.memory_space<vmem>>, vector<1x128xf32>
    %1120 = vector.broadcast %1119 : vector<1x128xf32> to vector<16x128xf32>
    %1121 = arith.addf %1118, %1120 : vector<16x128xf32>
    %1122 = vector.extract_strided_slice %1121 {offsets = [0, 0], sizes = [8, 128], strides = [1, 1]} : vector<16x128xf32> to vector<8x128xf32>
    %c0_345 = arith.constant 0 : index
    %c0_346 = arith.constant 0 : index
    %c0_347 = arith.constant 0 : index
    %1123 = vector.load %arg7[%c0_345, %c0_346, %c0_347] : memref<2x8x128xf32, #tpu.memory_space<vmem>>, vector<1x8x128xf32>
    %1124 = vector.shape_cast %1123 : vector<1x8x128xf32> to vector<8x128xf32>
    %1125 = vector.shape_cast %1122 : vector<8x128xf32> to vector<1x8x128xf32>
    tpu.vector_store %arg7[%c0_345, %c0_346, %c0_347], %1125 {strides = array<i32>} : memref<2x8x128xf32, #tpu.memory_space<vmem>>, vector<1x8x128xf32>,
    %1126 = vector.extract_strided_slice %1121 {offsets = [8, 0], sizes = [8, 128], strides = [1, 1]} : vector<16x128xf32> to vector<8x128xf32>
    %c1_348 = arith.constant 1 : index
    %c0_349 = arith.constant 0 : index
    %c0_350 = arith.constant 0 : index
    %1127 = vector.load %arg7[%c1_348, %c0_349, %c0_350] : memref<2x8x128xf32, #tpu.memory_space<vmem>>, vector<1x8x128xf32>
    %1128 = vector.shape_cast %1127 : vector<1x8x128xf32> to vector<8x128xf32>
    %1129 = vector.shape_cast %1126 : vector<8x128xf32> to vector<1x8x128xf32>
    tpu.vector_store %arg7[%c1_348, %c0_349, %c0_350], %1129 {strides = array<i32>} : memref<2x8x128xf32, #tpu.memory_space<vmem>>, vector<1x8x128xf32>,
    return
  }
  func.func @transform_0(%arg0: i32, %arg1: memref<4x2xi32, #tpu.memory_space<smem>>) -> (i32, i32, i32) {
    %c0_i32 = arith.constant 0 : i32
    %c0_i32_0 = arith.constant 0 : i32
    %c0_i32_1 = arith.constant 0 : i32
    return %arg0, %c0_i32, %c0_i32_0 : i32, i32, i32
  }
  func.func @transform_1(%arg0: i32, %arg1: memref<4x2xi32, #tpu.memory_space<smem>>) -> (i32, i32, i32) {
    %c0_i32 = arith.constant 0 : i32
    %c0_i32_0 = arith.constant 0 : i32
    %c0_i32_1 = arith.constant 0 : i32
    return %arg0, %c0_i32, %c0_i32_0 : i32, i32, i32
  }
  func.func @transform_2(%arg0: i32, %arg1: memref<4x2xi32, #tpu.memory_space<smem>>) -> (i32, i32) {
    %c0_i32 = arith.constant 0 : i32
    %c0_i32_0 = arith.constant 0 : i32
    %c0_i32_1 = arith.constant 0 : i32
    return %c0_i32, %c0_i32_0 : i32, i32
  }
  func.func @transform_3(%arg0: i32, %arg1: memref<4x2xi32, #tpu.memory_space<smem>>) -> (i32, i32) {
    %c0_i32 = arith.constant 0 : i32
    %c0_i32_0 = arith.constant 0 : i32
    %c0_i32_1 = arith.constant 0 : i32
    return %c0_i32, %c0_i32_0 : i32, i32
  }
  func.func @transform_4(%arg0: i32, %arg1: memref<4x2xi32, #tpu.memory_space<smem>>) -> (i32, i32) {
    %c0_i32 = arith.constant 0 : i32
    %c0_i32_0 = arith.constant 0 : i32
    %c0_i32_1 = arith.constant 0 : i32
    return %c0_i32, %c0_i32_0 : i32, i32
  }
  func.func @transform_5(%arg0: i32, %arg1: memref<4x2xi32, #tpu.memory_space<smem>>) -> (i32, i32, i32) {
    %c0_i32 = arith.constant 0 : i32
    %c0_i32_0 = arith.constant 0 : i32
    %c0_i32_1 = arith.constant 0 : i32
    return %arg0, %c0_i32, %c0_i32_0 : i32, i32, i32
  }
}

</mosaic_0001>

<llo_original>
// kernel: person_transformer_forward.1
$region0: #{person_transformer_forward.1}
  #allocation0 [shape = 'u32[]', space=smem, size = 0x4, offset = 0x4, fixed_abs, tag = 'smem constant byte address 0x4 - core index']
  #allocation1 [shape = 'u32[72,128]{1,0:T(1,128)}', space=vmem, size = 0x9000, scoped, tag = 'internal scratch']
  #allocation2 [shape = 's32[1]{0}', space=sflag, size = 0x4, scoped, tag = 'scoped memory for person_transformer_forward.1']
  #allocation3 [shape = 'u8[2048]{0}', space=smem, size = 0x800, scoped, tag = 'prefetched SMEM operand 0']
  %s0 = inlined_call_operand.vmem [shape: s32[4,2], index: 0, kind: input, shape index: {}]
  %s1 = inlined_call_operand.vmem [shape: f32[4,8,6], index: 1, kind: input, shape index: {}]
  %s2 = inlined_call_operand.vmem [shape: f32[4,16,5], index: 2, kind: input, shape index: {}]
  %s3 = inlined_call_operand.hbm [shape: bf16[896,128], index: 3, kind: input, shape index: {}]
  %s4 = inlined_call_operand.hbm [shape: f32[312,128], index: 4, kind: input, shape index: {}]
  %s5 = inlined_call_operand.vmem [shape: f32[32,128], index: 5, kind: input, shape index: {}]
  %s6 = inlined_call_operand.vmem [shape: f32[4,8,128], index: 6, kind: output, shape index: {}]
  %s7 = sld [smem:[#allocation0]]
  $region61: #{person_transformer_forward.1} parent=0
    _
  %s9 = ssub.s32 1, %s7
  %s10 = scalar_select 0, %s9, %s7
  %s12 = sshll.u32 %s0, 4
  %s13 = int_to_ptr.vmem [resolvable:$true] %s12
  %15 = dma.vmem_to_smem %s13, 64, [#allocation3], [#allocation2]
  %17 = dma.done [#allocation2], 64
  %18 = sfence
  $region1: #{person_transformer_forward.1} parent=0
    #allocation4 [shape = 'u8[229376]{0}', space=vmem, size = 0x38000, scoped, tag = 'input window, operand 3, single buffered']
    #allocation5 [shape = 's32[2]{0}', space=sflag, size = 0x8, scoped, tag = 'scoped memory for person_transformer_forward.1']
    #allocation6 [shape = 'u8[159744]{0}', space=vmem, size = 0x27000, scoped, tag = 'input window, operand 4, single buffered']
    #allocation7 [shape = 's32[1]{0}', space=sflag, size = 0x4, scoped, tag = 'scoped memory for person_transformer_forward.1']
    %19 = vsyncpa [#allocation5], 0
    %20 = vsyncpa [#allocation7], 0
    loop: start=0, step=1, limit=4
    $region2: #{person_transformer_forward.1} parent=1 // loop_pre_header
      _
    $region3: #{person_transformer_forward.1} parent=1 // loop_header
      %s22 = sphi 0, %s26
      %p23 = scmp.ge.s32.totalorder %s22, 4
      %s32 = sphi 0, %s34
      %s35 = sphi 0, %s32
      %s36 = sphi 0, %s35
      %s52 = sphi 0, %s36
      %s58 = sphi 0, %s60
      %s61 = sphi 0, %s58
      %s62 = sphi 0, %s61
      %s78 = sphi 0, %s62
      %s82 = sphi 0, %s82
      %s84 = sphi 0, %s82
      %s85 = sphi 0, %s84
      %s99 = sphi 0, %s85
      %s103 = sphi 0, %s103
      %s105 = sphi 0, %s103
      %s106 = sphi 0, %s105
      %s120 = sphi 0, %s106
      %s124 = sphi 0, %s124
      %s126 = sphi 0, %s124
      %s127 = sphi 0, %s126
      %s141 = sphi 0, %s127
      %s147 = sphi 0, %s149
      %s150 = sphi 0, %s147
      %s151 = sphi 0, %s150
      %s167 = sphi 0, %s151
    $region4: #{person_transformer_forward.1} parent=1 // loop_header_branch
      %25 = sbr.rel (%p23) target = $region8
    $region5: #{person_transformer_forward.1} parent=1 // loop_body
      %s27 = ssub.s32 %s22, 1
      %s28 = ssub.s32 %s22, 2
      %s29 = sadd.s32 %s22, 1
      %s30 = ssub.s32 %s22, %s29
      %p31 = scmp.eq.s32.totalorder %s30, 0
      %s33 = sadd.s32 %s32, 1
      %s34 = scalar_select %p31, %s32, %s33
      %p37 = pneg %p31
      %p38 = scmp.eq.s32.totalorder %s22, 1
      %p39 = por %p37, %p38
      %p40 = scmp.ne.s32.totalorder %s32, %s35
      %p41 = scmp.eq.s32.totalorder %s22, 0
      %p42 = por %p40, %p41
      %p43 = scmp.ne.s32.totalorder %s32, %s35
      %p44 = scmp.eq.s32.totalorder %s27, 1
      %p45 = por %p43, %p44
      %p46 = scmp.ne.s32.totalorder %s35, %s36
      %p47 = scmp.eq.s32.totalorder %s27, 0
      %p48 = por %p46, %p47
      %p49 = scmp.ne.s32.totalorder %s35, %s36
      %p50 = scmp.eq.s32.totalorder %s28, 1
      %p51 = por %p49, %p50
      %p53 = scmp.ne.s32.totalorder %s36, %s52
      %p54 = scmp.eq.s32.totalorder %s28, 0
      %p55 = por %p53, %p54
      %s56 = ssub.s32 %s22, %s29
      %p57 = scmp.eq.s32.totalorder %s56, 0
      %s59 = sadd.s32 %s58, 1
      %s60 = scalar_select %p57, %s58, %s59
      %p63 = pneg %p57
      %p64 = scmp.eq.s32.totalorder %s22, 1
      %p65 = por %p63, %p64
      %p66 = scmp.ne.s32.totalorder %s58, %s61
      %p67 = scmp.eq.s32.totalorder %s22, 0
      %p68 = por %p66, %p67
      %p69 = scmp.ne.s32.totalorder %s58, %s61
      %p70 = scmp.eq.s32.totalorder %s27, 1
      %p71 = por %p69, %p70
      %p72 = scmp.ne.s32.totalorder %s61, %s62
      %p73 = scmp.eq.s32.totalorder %s27, 0
      %p74 = por %p72, %p73
      %p75 = scmp.ne.s32.totalorder %s61, %s62
      %p76 = scmp.eq.s32.totalorder %s28, 1
      %p77 = por %p75, %p76
      %p79 = scmp.ne.s32.totalorder %s62, %s78
      %p80 = scmp.eq.s32.totalorder %s28, 0
      %p81 = por %p79, %p80
      %s83 = sadd.s32 %s82, 1
      %p86 = scmp.eq.s32.totalorder %s22, 1
      %p87 = scmp.ne.s32.totalorder %s82, %s84
      %p88 = scmp.eq.s32.totalorder %s22, 0
      %p89 = por %p87, %p88
      %p90 = scmp.ne.s32.totalorder %s82, %s84
      %p91 = scmp.eq.s32.totalorder %s27, 1
      %p92 = por %p90, %p91
      %p93 = scmp.ne.s32.totalorder %s84, %s85
      %p94 = scmp.eq.s32.totalorder %s27, 0
      %p95 = por %p93, %p94
      %p96 = scmp.ne.s32.totalorder %s84, %s85
      %p97 = scmp.eq.s32.totalorder %s28, 1
      %p98 = por %p96, %p97
      %p100 = scmp.ne.s32.totalorder %s85, %s99
      %p101 = scmp.eq.s32.totalorder %s28, 0
      %p102 = por %p100, %p101
      %s104 = sadd.s32 %s103, 1
      %p107 = scmp.eq.s32.totalorder %s22, 1
      %p108 = scmp.ne.s32.totalorder %s103, %s105
      %p109 = scmp.eq.s32.totalorder %s22, 0
      %p110 = por %p108, %p109
      %p111 = scmp.ne.s32.totalorder %s103, %s105
      %p112 = scmp.eq.s32.totalorder %s27, 1
      %p113 = por %p111, %p112
      %p114 = scmp.ne.s32.totalorder %s105, %s106
      %p115 = scmp.eq.s32.totalorder %s27, 0
      %p116 = por %p114, %p115
      %p117 = scmp.ne.s32.totalorder %s105, %s106
      %p118 = scmp.eq.s32.totalorder %s28, 1
      %p119 = por %p117, %p118
      %p121 = scmp.ne.s32.totalorder %s106, %s120
      %p122 = scmp.eq.s32.totalorder %s28, 0
      %p123 = por %p121, %p122
      %s125 = sadd.s32 %s124, 1
      %p128 = scmp.eq.s32.totalorder %s22, 1
      %p129 = scmp.ne.s32.totalorder %s124, %s126
      %p130 = scmp.eq.s32.totalorder %s22, 0
      %p131 = por %p129, %p130
      %p132 = scmp.ne.s32.totalorder %s124, %s126
      %p133 = scmp.eq.s32.totalorder %s27, 1
      %p134 = por %p132, %p133
      %p135 = scmp.ne.s32.totalorder %s126, %s127
      %p136 = scmp.eq.s32.totalorder %s27, 0
      %p137 = por %p135, %p136
      %p138 = scmp.ne.s32.totalorder %s126, %s127
      %p139 = scmp.eq.s32.totalorder %s28, 1
      %p140 = por %p138, %p139
      %p142 = scmp.ne.s32.totalorder %s127, %s141
      %p143 = scmp.eq.s32.totalorder %s28, 0
      %p144 = por %p142, %p143
      %s145 = ssub.s32 %s22, %s29
      %p146 = scmp.eq.s32.totalorder %s145, 0
      %s148 = sadd.s32 %s147, 1
      %s149 = scalar_select %p146, %s147, %s148
      %p152 = pneg %p146
      %p153 = scmp.eq.s32.totalorder %s22, 1
      %p154 = por %p152, %p153
      %p155 = scmp.ne.s32.totalorder %s147, %s150
      %p156 = scmp.eq.s32.totalorder %s22, 0
      %p157 = por %p155, %p156
      %p158 = scmp.ne.s32.totalorder %s147, %s150
      %p159 = scmp.eq.s32.totalorder %s27, 1
      %p160 = por %p158, %p159
      %p161 = scmp.ne.s32.totalorder %s150, %s151
      %p162 = scmp.eq.s32.totalorder %s27, 0
      %p163 = por %p161, %p162
      %p164 = scmp.ne.s32.totalorder %s150, %s151
      %p165 = scmp.eq.s32.totalorder %s28, 1
      %p166 = por %p164, %p165
      %p168 = scmp.ne.s32.totalorder %s151, %s167
      %p169 = scmp.eq.s32.totalorder %s28, 0
      %p170 = por %p168, %p169
      %p171 = scmp.le.s32.totalorder 1, %s22
      %p172 = scmp.lt.s32.totalorder %s22, 3
      %p173 = pnand %p171, %p172
      %p174 = pneg %p173
      // Predicated region
      $region9: #{person_transformer_forward.1} parent=5 // pred_check
        _
      $region10: #{person_transformer_forward.1} parent=5 // pred_check_branch
        %176 = sbr.rel (%p173) target = $region12
      $region11: #{person_transformer_forward.1} parent=5 // pred_region
        %s177 = ssub.s32 %s22, 1
        // Predicated region
        $region13: #{person_transformer_forward.1} parent=11 // pred_check
          %p178 = pneg %p95
        $region14: #{person_transformer_forward.1} parent=11 // pred_check_branch
          %180 = sbr.rel (%p178) target = $region16
        $region15: #{person_transformer_forward.1} parent=11 // pred_region
          %182 = vsyncadd [#allocation5], 0
          %s183 = sshll.u32 %s3, 4
          %s184 = int_to_ptr.hbm [resolvable:$true] %s183
          %s185 = sshll.u32 [#allocation4], 4
          %s186 = int_to_ptr.vmem [resolvable:$true] %s185
          %191 = dma.hbm_to_vmem [thread:$0]  %s184, 7168, %s186, [#allocation5], 64, 64, 4
        $region16: #{person_transformer_forward.1} parent=11 // pred_fallthru
          _
        // Predicated region
        $region17: #{person_transformer_forward.1} parent=11 // pred_check
          %p192 = pneg %p116
        $region18: #{person_transformer_forward.1} parent=11 // pred_check_branch
          %194 = sbr.rel (%p192) target = $region20
        $region19: #{person_transformer_forward.1} parent=11 // pred_region
          %196 = vsyncadd [#allocation7], 0
          %s197 = sshll.u32 %s4, 4
          %s198 = int_to_ptr.hbm [resolvable:$true] %s197
          %s199 = sshll.u32 [#allocation6], 4
          %s200 = int_to_ptr.vmem [resolvable:$true] %s199
          %205 = dma.hbm_to_vmem [thread:$0]  %s198, 4992, %s200, [#allocation7], 128, 128, 8
        $region20: #{person_transformer_forward.1} parent=11 // pred_fallthru
          _
        // Predicated region
        $region21: #{person_transformer_forward.1} parent=11 // pred_check
          %p206 = pneg %p137
        $region22: #{person_transformer_forward.1} parent=11 // pred_check_branch
          %208 = sbr.rel (%p206) target = $region24
        $region23: #{person_transformer_forward.1} parent=11 // pred_region
          _
        $region24: #{person_transformer_forward.1} parent=11 // pred_fallthru
          _
      $region12: #{person_transformer_forward.1} parent=5 // pred_fallthru
        _
      %p209 = scmp.lt.s32.totalorder %s22, 2
      // Predicated region
      $region25: #{person_transformer_forward.1} parent=5 // pred_check
        %p210 = pneg %p209
      $region26: #{person_transformer_forward.1} parent=5 // pred_check_branch
        %212 = sbr.rel (%p210) target = $region28
      $region27: #{person_transformer_forward.1} parent=5 // pred_region
        // Predicated region
        $region29: #{person_transformer_forward.1} parent=27 // pred_check
          %p213 = pneg %p42
        $region30: #{person_transformer_forward.1} parent=27 // pred_check_branch
          %215 = sbr.rel (%p213) target = $region32
        $region31: #{person_transformer_forward.1} parent=27 // pred_region
          %s216 = smul.u32 2, %s22
          %p217 = scmp.lt.s32.totalorder %s216, 3
          %s218 = scalar_select %p217, %s216, 3
          %s219 = smul.addr %s218, 8
          %s220 = scalar_lea.vmem %s1, %s219
          %s221 = smul.u32 2, %s22
        $region32: #{person_transformer_forward.1} parent=27 // pred_fallthru
          _
        // Predicated region
        $region33: #{person_transformer_forward.1} parent=27 // pred_check
          %p222 = pneg %p68
        $region34: #{person_transformer_forward.1} parent=27 // pred_check_branch
          %224 = sbr.rel (%p222) target = $region36
        $region35: #{person_transformer_forward.1} parent=27 // pred_region
          %s225 = smul.u32 2, %s22
          %p226 = scmp.lt.s32.totalorder %s225, 3
          %s227 = scalar_select %p226, %s225, 3
          %s228 = smul.addr %s227, 2
          %s229 = smul.addr %s228, 8
          %s230 = scalar_lea.vmem %s2, %s229
          %s231 = smul.u32 2, %s22
        $region36: #{person_transformer_forward.1} parent=27 // pred_fallthru
          _
      $region28: #{person_transformer_forward.1} parent=5 // pred_fallthru
        _
      %p232 = scmp.le.s32.totalorder 1, %s22
      %p233 = scmp.lt.s32.totalorder %s22, 3
      %p234 = pnand %p232, %p233
      %p235 = pneg %p234
      // Predicated region
      $region37: #{person_transformer_forward.1} parent=5 // pred_check
        _
      $region38: #{person_transformer_forward.1} parent=5 // pred_check_branch
        %237 = sbr.rel (%p234) target = $region40
      $region39: #{person_transformer_forward.1} parent=5 // pred_region
        %s238 = ssub.s32 %s22, 1
        // Predicated region
        $region41: #{person_transformer_forward.1} parent=39 // pred_check
          %p239 = pneg %p95
        $region42: #{person_transformer_forward.1} parent=39 // pred_check_branch
          %241 = sbr.rel (%p239) target = $region44
        $region43: #{person_transformer_forward.1} parent=39 // pred_region
          %243 = dma.done [#allocation5], 7168
        $region44: #{person_transformer_forward.1} parent=39 // pred_fallthru
          _
        // Predicated region
        $region45: #{person_transformer_forward.1} parent=39 // pred_check
          %p244 = pneg %p116
        $region46: #{person_transformer_forward.1} parent=39 // pred_check_branch
          %246 = sbr.rel (%p244) target = $region48
        $region47: #{person_transformer_forward.1} parent=39 // pred_region
          %248 = dma.done [#allocation7], 4992
        $region48: #{person_transformer_forward.1} parent=39 // pred_fallthru
          _
        %s249 = smul.u32 2, %s27
        %p250 = scmp.lt.s32.totalorder %s249, 3
        %s251 = scalar_select %p250, %s249, 3
        %s252 = smul.addr %s251, 8
        %s253 = scalar_lea.vmem %s1, %s252
        %p254 = pneg %p48
        %p255 = pneg %p45
        %s256 = smul.u32 2, %s27
        %p257 = scmp.lt.s32.totalorder %s256, 3
        %s258 = scalar_select %p257, %s256, 3
        %s259 = smul.addr %s258, 2
        %s260 = smul.addr %s259, 8
        %s261 = scalar_lea.vmem %s2, %s260
        %p262 = pneg %p74
        %p263 = pneg %p71
        %p264 = pneg %p95
        %p265 = pneg %p92
        %p266 = pneg %p116
        %p267 = pneg %p113
        %p268 = pneg %p137
        %p269 = pneg %p134
        %p270 = pneg %p163
        %p271 = pneg %p160
        %s272 = smul.u32 2, %s27
        %p273 = scmp.lt.s32.totalorder %s272, 3
        %s274 = scalar_select %p273, %s272, 3
        %s275 = smul.addr %s274, 8
        %s276 = scalar_lea.vmem %s6, %s275
        %s277 = smul.u32 2, %s27
        %p278 = scmp.lt.s32.totalorder %s277, 3
        %s279 = scalar_select %p278, %s277, 3
        %s280 = smul.addr %s279, 8
        %s281 = scalar_lea.vmem %s1, %s280
        %s282 = smul.u32 2, %s27
        %s283 = smul.u32 2, %s27
        %p284 = scmp.lt.s32.totalorder %s283, 3
        %s285 = scalar_select %p284, %s283, 3
        %s286 = smul.addr %s285, 2
        %s287 = smul.addr %s286, 8
        %s288 = scalar_lea.vmem %s2, %s287
        %s289 = smul.u32 2, %s27
        %s290 = smul.u32 2, %s27
        %p291 = scmp.lt.s32.totalorder %s290, 3
        %s292 = scalar_select %p291, %s290, 3
        %s293 = smul.addr %s292, 8
        %s294 = scalar_lea.vmem %s6, %s293
        %s295 = smul.u32 2, %s27
        %v297 = vld [vmem:[#allocation6 + $0x128] sm:$0xff]
        %v298 = vld [vmem:[%s5] sm:$0xff]
        %v299 = vld [vmem:[%s281] sm:$0xff]
        %v300 = vld [vmem:[#allocation4] sm:$0x7]
        %v301 = vpack.c.bf16 %v299, %v299
        %v302 = vld [vmem:[#allocation6] sm:$0x1]
        %v303 = vperm.slane %v302, 0
        %vm304 = vcmask 48128
        %v306 = vsel %vm304, %v301, 0
        %vm308 = vcmask 1042432
        %v310 = vsel %vm308, %v300, 0
        %312 = vmatpush.bf16.msra.mxu0 0
        %313 = vmatpush.bf16.msra.mxu0 0
        %314 = vmatpush.bf16.msra.mxu0 0
        %315 = vmatpush.bf16.msra.mxu0 0
        %316 = vmatpush.bf16.msra.mxu0 0
        %317 = vmatpush.bf16.msra.mxu0 0
        %318 = vmatpush.bf16.msra.mxu0 0
        %319 = vmatpush.bf16.msra.mxu0 %v310
        %320 = vmatmul.bf16.gmra.mxu0 %v306
        %v321 = vpop.f32.mrf.mxu0
        %v322 = vadd.f32 %v303, %v321
        %v323 = vpop.f32.mrf.mxu0
        %324 = vdwg.mxu0
        %v325 = vadd.f32 %v322, %v297
        %s326 = scalar_lea.vmem %s281, 8
        %v327 = vld [vmem:[%s326] sm:$0xff]
        %v328 = vpack.c.bf16 %v327, %v327
        %v330 = vsel %vm304, %v328, 0
        %332 = vmatpush.bf16.msra.mxu0 0
        %333 = vmatpush.bf16.msra.mxu0 0
        %334 = vmatpush.bf16.msra.mxu0 0
        %335 = vmatpush.bf16.msra.mxu0 0
        %336 = vmatpush.bf16.msra.mxu0 0
        %337 = vmatpush.bf16.msra.mxu0 0
        %338 = vmatpush.bf16.msra.mxu0 0
        %339 = vmatpush.bf16.msra.mxu0 %v310
        %340 = vmatmul.bf16.gmra.mxu0 %v330
        %v341 = vpop.f32.mrf.mxu0
        %v342 = vadd.f32 %v303, %v341
        %v343 = vpop.f32.mrf.mxu0
        %344 = vdwg.mxu0
        %v345 = vadd.f32 %v342, %v297
        %v346 = vlaneseq
        %v347 = vand.u32 %v346, 127
        %s348 = smul.u32 %s27, 2
        %s349 = smul.u32 %s348, 128
        %s350 = sld [smem:[#allocation3 + %s349]]
        %p351 = scmp.gt.s32.totalorder %s350, 0
        %s352 = scalar_select %p351, %s350, 0
        %vm353 = vcmp.ge.s32.totalorder %v347, 0
        %vm354 = vcmp.lt.s32.totalorder %v347, 8
        %vm355 = vmand %vm353, %vm354
        %p356 = scmp.eq.s32.totalorder %s350, 0
        %s357 = scalar_select %p356, 1, 0
        %v358 = vstv %s357
        %vm359 = vcmp.eq.s32.totalorder %v358, 1
        %vm360 = vmand %vm355, %vm359
        %v361 = vsel %vm360, -1e+30, 0.0
        %v362 = vadd.f32 %v361, 0.0
        %s363 = sadd.s32 %s349, 1
        %s364 = sld [smem:[#allocation3 + %s363]]
        %p365 = scmp.gt.s32.totalorder %s352, %s364
        %s366 = scalar_select %p365, %s352, %s364
        %vm367 = vcmp.ge.s32.totalorder %v347, 8
        %vm368 = vcmp.lt.s32.totalorder %v347, 16
        %vm369 = vmand %vm367, %vm368
        %p370 = scmp.eq.s32.totalorder %s364, 0
        %s371 = scalar_select %p370, 1, 0
        %v372 = vstv %s371
        %vm373 = vcmp.eq.s32.totalorder %v372, 1
        %vm374 = vmand %vm369, %vm373
        %v375 = vsel %vm374, -1e+30, 0.0
        %v376 = vadd.f32 %v362, %v375
        %p377 = scmp.gt.s32.totalorder %s366, 0
        %s378 = scalar_select %p377, 1, 0
        %v379 = vstv %s378
        %vm380 = vcmp.eq.s32.totalorder %v379, 1
        %v381 = vsel %vm380, %v376, 0.0
        %s382 = sadd.s32 %s348, 1
        %s383 = smul.u32 %s382, 128
        %s384 = sld [smem:[#allocation3 + %s383]]
        %p385 = scmp.gt.s32.totalorder %s384, 0
        %s386 = scalar_select %p385, %s384, 0
        %p387 = scmp.eq.s32.totalorder %s384, 0
        %s388 = scalar_select %p387, 1, 0
        %v389 = vstv %s388
        %vm390 = vcmp.eq.s32.totalorder %v389, 1
        %vm391 = vmand %vm355, %vm390
        %v392 = vsel %vm391, -1e+30, 0.0
        %v393 = vadd.f32 %v392, 0.0
        %s394 = sadd.s32 %s383, 1
        %s395 = sld [smem:[#allocation3 + %s394]]
        %p396 = scmp.gt.s32.totalorder %s386, %s395
        %s397 = scalar_select %p396, %s386, %s395
        %p398 = scmp.eq.s32.totalorder %s395, 0
        %s399 = scalar_select %p398, 1, 0
        %v400 = vstv %s399
        %vm401 = vcmp.eq.s32.totalorder %v400, 1
        %vm402 = vmand %vm369, %vm401
        %v403 = vsel %vm402, -1e+30, 0.0
        %v404 = vadd.f32 %v393, %v403
        %p405 = scmp.gt.s32.totalorder %s397, 0
        %s406 = scalar_select %p405, 1, 0
        %v407 = vstv %s406
        %vm408 = vcmp.eq.s32.totalorder %v407, 1
        %v409 = vsel %vm408, %v404, 0.0
        %v410 = vld [vmem:[%s288] sm:$0xff]
        %v411 = vld [vmem:[%s288 + $0x8] sm:$0xff]
        %v412 = vld [vmem:[#allocation4 + $0x8] sm:$0x7]
        %v413 = vpack.c.bf16 %v411, %v410
        %v414 = vld [vmem:[#allocation6 + $0x8] sm:$0x1]
        %v415 = vperm.slane %v414, 0
        %vm416 = vcmask 39936
        %v418 = vsel %vm416, %v413, 0
        %vm420 = vcmask 1041408
        %v421 = vsel %vm420, 4294967295, 65535
        %v422 = vsel %vm308, %v421, 0
        %v424 = vand.u32 %v412, %v422
        %426 = vmatpush.bf16.msra.mxu0 0
        %427 = vmatpush.bf16.msra.mxu0 0
        %428 = vmatpush.bf16.msra.mxu0 0
        %429 = vmatpush.bf16.msra.mxu0 0
        %430 = vmatpush.bf16.msra.mxu0 0
        %431 = vmatpush.bf16.msra.mxu0 0
        %432 = vmatpush.bf16.msra.mxu0 0
        %433 = vmatpush.bf16.msra.mxu0 %v424
        %434 = vmatmul.bf16.gmra.mxu0 %v418
        %v435 = vpop.f32.mrf.mxu0
        %v436 = vadd.f32 %v415, %v435
        %v437 = vpop.f32.mrf.mxu0
        %v438 = vadd.f32 %v415, %v437
        %439 = vdwg.mxu0
        %s440 = scalar_lea.vmem %s288, 16
        %v441 = vld [vmem:[%s440] sm:$0xff]
        %v442 = vld [vmem:[%s440 + $0x8] sm:$0xff]
        %v443 = vpack.c.bf16 %v442, %v441
        %v445 = vsel %vm416, %v443, 0
        %447 = vmatpush.bf16.msra.mxu0 0
        %448 = vmatpush.bf16.msra.mxu0 0
        %449 = vmatpush.bf16.msra.mxu0 0
        %450 = vmatpush.bf16.msra.mxu0 0
        %451 = vmatpush.bf16.msra.mxu0 0
        %452 = vmatpush.bf16.msra.mxu0 0
        %453 = vmatpush.bf16.msra.mxu0 0
        %454 = vmatpush.bf16.msra.mxu0 %v424
        %455 = vmatmul.bf16.gmra.mxu0 %v445
        %v456 = vpop.f32.mrf.mxu0
        %v457 = vadd.f32 %v415, %v456
        %v458 = vpop.f32.mrf.mxu0
        %v459 = vadd.f32 %v415, %v458
        %460 = vdwg.mxu0
        %v461 = vld [vmem:[%s5 + $0x8] sm:$0xff]
        %v462 = vld [vmem:[%s5 + $0x10] sm:$0xff]
        %v463 = vld [vmem:[#allocation6 + $0x38] sm:$0x3]
        %v464 = vld [vmem:[#allocation6 + $0x40] sm:$0x3]
        %v465 = vld [vmem:[#allocation4 + $0x20] sm:$0xf]
        %v466 = vld [vmem:[#allocation4 + $0x24] sm:$0xf]
        %v467 = vld [vmem:[#allocation4 + $0x28] sm:$0xf]
        %v468 = vld [vmem:[#allocation4 + $0x2c] sm:$0xf]
        %v469 = vpack.c.bf16 %v438, %v436
        %v470 = vpack.c.bf16 %v459, %v457
        %v471 = vld [vmem:[#allocation6 + $0x18] sm:$0x1]
        %v472 = vperm.slane %v471, 0
        %v477 = vunpack.c.l.b16 %v465
        %v478 = vunpack.c.l.b16 %v466
        %v479 = vunpack.c.l.b16 %v467
        %v480 = vunpack.c.l.b16 %v468
        %v481 = vpack.c.b16 %v478, %v477
        %v482 = vpack.c.b16 %v480, %v479
        %vm485 = vcmask 261120
        %v487 = vsel %vm485, %v469, 0
        %v490 = vsel %vm485, %v470, 0
        %492 = vmatpush.bf16.msra.mxu0 0
        %493 = vmatpush.bf16.msra.mxu0 0
        %494 = vmatpush.bf16.msra.mxu0 0
        %495 = vmatpush.bf16.msra.mxu0 0
        %496 = vmatpush.bf16.msra.mxu0 0
        %497 = vmatpush.bf16.msra.mxu0 0
        %498 = vmatpush.bf16.msra.mxu0 %v482
        %499 = vmatpush.bf16.msra.mxu0 %v481
        %500 = vmatmul.bf16.gmra.mxu0 %v487
        %v501 = vpop.f32.mrf.mxu0
        %v502 = vadd.f32 %v472, %v501
        %v503 = vpop.f32.mrf.mxu0
        %v504 = vadd.f32 %v472, %v503
        %505 = vmatmul.bf16.gmra.mxu0 %v490
        %v506 = vpop.f32.mrf.mxu0
        %v507 = vadd.f32 %v472, %v506
        %v508 = vpop.f32.mrf.mxu0
        %v509 = vadd.f32 %v472, %v508
        %510 = vdwg.mxu0
        %v511 = vadd.f32 %v461, %v381
        %v512 = vadd.f32 %v462, %v381
        %v513 = vpack.c.bf16 %v502, %v502
        %v514 = vpack.c.bf16 %v504, %v504
        %v517 = vunpack.c.l.b16 %v513
        %v518 = vunpack.c.l.b16 %v514
        %v519 = vpack.c.b16 %v518, %v517
        %520 = vrot.lane.b32.xlu0 %v519, 96
        %v521 = vpop.permute.xlu0 %520
        %vm522 = vcmask 64512
        %v524 = vsel %vm522, %v519, 0
        %v527 = vsel %vm522, %v521, 0
        %529 = vmatpush.bf16.xpose.msra.mxu0 0
        %530 = vmatpush.bf16.xpose.msra.mxu0 0
        %531 = vmatpush.bf16.xpose.msra.mxu0 0
        %532 = vmatpush.bf16.xpose.msra.mxu0 0
        %533 = vmatpush.bf16.xpose.msra.mxu0 0
        %534 = vmatpush.bf16.xpose.msra.mxu0 0
        %535 = vmatpush.bf16.xpose.msra.mxu0 0
        %536 = vmatpush.bf16.xpose.msra.mxu0 %v527
        %537 = vmatmul.bf16.gmra.mxu0 %v524
        %v538 = vpop.f32.mrf.mxu0
        %v539 = vadd.f32 %v511, %v538
        %v540 = vpop.f32.mrf.mxu0
        %v541 = vadd.f32 %v512, %v540
        %542 = vdwg.mxu0
        %543 = vrot.lane.b32.xlu0 %v519, 120
        %v544 = vpop.permute.xlu0 %543
        %545 = vrot.lane.b32.xlu0 %v519, 88
        %v546 = vpop.permute.xlu0 %545
        %v548 = vsel %vm522, %v544, 0
        %v551 = vsel %vm522, %v546, 0
        %553 = vmatpush.bf16.xpose.msra.mxu0 0
        %554 = vmatpush.bf16.xpose.msra.mxu0 0
        %555 = vmatpush.bf16.xpose.msra.mxu0 0
        %556 = vmatpush.bf16.xpose.msra.mxu0 0
        %557 = vmatpush.bf16.xpose.msra.mxu0 0
        %558 = vmatpush.bf16.xpose.msra.mxu0 0
        %559 = vmatpush.bf16.xpose.msra.mxu0 0
        %560 = vmatpush.bf16.xpose.msra.mxu0 %v551
        %561 = vmatmul.bf16.gmra.mxu0 %v548
        %v562 = vpop.f32.mrf.mxu0
        %v563 = vadd.f32 %v511, %v562
        %v564 = vpop.f32.mrf.mxu0
        %v565 = vadd.f32 %v512, %v564
        %566 = vdwg.mxu0
        %567 = vrot.lane.b32.xlu0 %v519, 112
        %v568 = vpop.permute.xlu0 %567
        %569 = vrot.lane.b32.xlu0 %v519, 80
        %v570 = vpop.permute.xlu0 %569
        %v572 = vsel %vm522, %v568, 0
        %v575 = vsel %vm522, %v570, 0
        %577 = vmatpush.bf16.xpose.msra.mxu0 0
        %578 = vmatpush.bf16.xpose.msra.mxu0 0
        %579 = vmatpush.bf16.xpose.msra.mxu0 0
        %580 = vmatpush.bf16.xpose.msra.mxu0 0
        %581 = vmatpush.bf16.xpose.msra.mxu0 0
        %582 = vmatpush.bf16.xpose.msra.mxu0 0
        %583 = vmatpush.bf16.xpose.msra.mxu0 0
        %584 = vmatpush.bf16.xpose.msra.mxu0 %v575
        %585 = vmatmul.bf16.gmra.mxu0 %v572
        %v586 = vpop.f32.mrf.mxu0
        %v587 = vadd.f32 %v511, %v586
        %v588 = vpop.f32.mrf.mxu0
        %v589 = vadd.f32 %v512, %v588
        %590 = vdwg.mxu0
        %591 = vrot.lane.b32.xlu0 %v519, 104
        %v592 = vpop.permute.xlu0 %591
        %593 = vrot.lane.b32.xlu0 %v519, 72
        %v594 = vpop.permute.xlu0 %593
        %v596 = vsel %vm522, %v592, 0
        %v599 = vsel %vm522, %v594, 0
        %601 = vmatpush.bf16.xpose.msra.mxu0 0
        %602 = vmatpush.bf16.xpose.msra.mxu0 0
        %603 = vmatpush.bf16.xpose.msra.mxu0 0
        %604 = vmatpush.bf16.xpose.msra.mxu0 0
        %605 = vmatpush.bf16.xpose.msra.mxu0 0
        %606 = vmatpush.bf16.xpose.msra.mxu0 0
        %607 = vmatpush.bf16.xpose.msra.mxu0 0
        %608 = vmatpush.bf16.xpose.msra.mxu0 %v599
        %609 = vmatmul.bf16.gmra.mxu0 %v596
        %v610 = vpop.f32.mrf.mxu0
        %v611 = vadd.f32 %v511, %v610
        %v612 = vpop.f32.mrf.mxu0
        %v613 = vadd.f32 %v512, %v612
        %614 = vdwg.mxu0
        %vm615 = vcmask 130048
        %v616 = vsel %vm615, %v539, -inf
        %617 = vmax.xlane.f32.xlu0 %v616
        %v618 = vpop.xlane.xlu0 %617
        %v619 = vsel %vm615, %v541, -inf
        %620 = vmax.xlane.f32.xlu0 %v619
        %v621 = vpop.xlane.xlu0 %620
        %v622 = vsel %vm615, %v563, -inf
        %623 = vmax.xlane.f32.xlu0 %v622
        %v624 = vpop.xlane.xlu0 %623
        %v625 = vsel %vm615, %v565, -inf
        %626 = vmax.xlane.f32.xlu0 %v625
        %v627 = vpop.xlane.xlu0 %626
        %v628 = vsel %vm615, %v587, -inf
        %629 = vmax.xlane.f32.xlu0 %v628
        %v630 = vpop.xlane.xlu0 %629
        %v631 = vsel %vm615, %v589, -inf
        %632 = vmax.xlane.f32.xlu0 %v631
        %v633 = vpop.xlane.xlu0 %632
        %v634 = vsel %vm615, %v611, -inf
        %635 = vmax.xlane.f32.xlu0 %v634
        %v636 = vpop.xlane.xlu0 %635
        %v637 = vsel %vm615, %v613, -inf
        %638 = vmax.xlane.f32.xlu0 %v637
        %v639 = vpop.xlane.xlu0 %638
        %v640 = vsub.f32 %v539, %v618
        %v641 = vsub.f32 %v541, %v621
        %v642 = vsub.f32 %v563, %v624
        %v643 = vsub.f32 %v565, %v627
        %v644 = vsub.f32 %v587, %v630
        %v645 = vsub.f32 %v589, %v633
        %v646 = vsub.f32 %v611, %v636
        %v647 = vsub.f32 %v613, %v639
        %v648 = vmul.f32 %v640, 1.442695
        %v649 = vpow.pop %v648
        %v650 = vmul.f32 %v641, 1.442695
        %v651 = vpow.pop %v650
        %v652 = vmul.f32 %v642, 1.442695
        %v653 = vpow.pop %v652
        %v654 = vmul.f32 %v643, 1.442695
        %v655 = vpow.pop %v654
        %v656 = vmul.f32 %v644, 1.442695
        %v657 = vpow.pop %v656
        %v658 = vmul.f32 %v645, 1.442695
        %v659 = vpow.pop %v658
        %v660 = vmul.f32 %v646, 1.442695
        %v661 = vpow.pop %v660
        %v662 = vmul.f32 %v647, 1.442695
        %v663 = vpow.pop %v662
        %v664 = vsel %vm615, %v649, 0.0
        %665 = vadd.xlane.f32.xlu0 %v664
        %v666 = vpop.xlane.xlu0 %665
        %v667 = vsel %vm615, %v651, 0.0
        %668 = vadd.xlane.f32.xlu0 %v667
        %v669 = vpop.xlane.xlu0 %668
        %v670 = vsel %vm615, %v653, 0.0
        %671 = vadd.xlane.f32.xlu0 %v670
        %v672 = vpop.xlane.xlu0 %671
        %v673 = vsel %vm615, %v655, 0.0
        %674 = vadd.xlane.f32.xlu0 %v673
        %v675 = vpop.xlane.xlu0 %674
        %v676 = vsel %vm615, %v657, 0.0
        %677 = vadd.xlane.f32.xlu0 %v676
        %v678 = vpop.xlane.xlu0 %677
        %v679 = vsel %vm615, %v659, 0.0
        %680 = vadd.xlane.f32.xlu0 %v679
        %v681 = vpop.xlane.xlu0 %680
        %v682 = vsel %vm615, %v661, 0.0
        %683 = vadd.xlane.f32.xlu0 %v682
        %v684 = vpop.xlane.xlu0 %683
        %v685 = vsel %vm615, %v663, 0.0
        %686 = vadd.xlane.f32.xlu0 %v685
        %v687 = vpop.xlane.xlu0 %686
        %v688 = vrcp.pop %v666
        %v689 = vmul.f32 %v666, %v688
        %v690 = vsub.f32 1.0, %v689
        %v691 = vmul.f32 %v688, %v690
        %v692 = vadd.f32 %v688, %v691
        %vm693 = vweird.f32 %v666
        %vm694 = vweird.f32 %v688
        %vm695 = vmor %vm693, %vm694
        %v696 = vsel %vm695, %v688, %v692
        %v697 = vand.u32 2147483647, %v666
        %vm698 = vcmp.eq.f32.partialorder %v697, 8.507059e+37
        %v699 = vand.u32 %v666, 2147483648
        %v700 = vor.u32 1.1754944e-38, %v699
        %v701 = vsel %vm698, %v700, %v696
        %v702 = vmul.f32 %v649, %v701
        %v703 = vrcp.pop %v669
        %v704 = vmul.f32 %v669, %v703
        %v705 = vsub.f32 1.0, %v704
        %v706 = vmul.f32 %v703, %v705
        %v707 = vadd.f32 %v703, %v706
        %vm708 = vweird.f32 %v669
        %vm709 = vweird.f32 %v703
        %vm710 = vmor %vm708, %vm709
        %v711 = vsel %vm710, %v703, %v707
        %v712 = vand.u32 2147483647, %v669
        %vm713 = vcmp.eq.f32.partialorder %v712, 8.507059e+37
        %v714 = vand.u32 %v669, 2147483648
        %v715 = vor.u32 1.1754944e-38, %v714
        %v716 = vsel %vm713, %v715, %v711
        %v717 = vmul.f32 %v651, %v716
        %v718 = vrcp.pop %v672
        %v719 = vmul.f32 %v672, %v718
        %v720 = vsub.f32 1.0, %v719
        %v721 = vmul.f32 %v718, %v720
        %v722 = vadd.f32 %v718, %v721
        %vm723 = vweird.f32 %v672
        %vm724 = vweird.f32 %v718
        %vm725 = vmor %vm723, %vm724
        %v726 = vsel %vm725, %v718, %v722
        %v727 = vand.u32 2147483647, %v672
        %vm728 = vcmp.eq.f32.partialorder %v727, 8.507059e+37
        %v729 = vand.u32 %v672, 2147483648
        %v730 = vor.u32 1.1754944e-38, %v729
        %v731 = vsel %vm728, %v730, %v726
        %v732 = vmul.f32 %v653, %v731
        %v733 = vrcp.pop %v675
        %v734 = vmul.f32 %v675, %v733
        %v735 = vsub.f32 1.0, %v734
        %v736 = vmul.f32 %v733, %v735
        %v737 = vadd.f32 %v733, %v736
        %vm738 = vweird.f32 %v675
        %vm739 = vweird.f32 %v733
        %vm740 = vmor %vm738, %vm739
        %v741 = vsel %vm740, %v733, %v737
        %v742 = vand.u32 2147483647, %v675
        %vm743 = vcmp.eq.f32.partialorder %v742, 8.507059e+37
        %v744 = vand.u32 %v675, 2147483648
        %v745 = vor.u32 1.1754944e-38, %v744
        %v746 = vsel %vm743, %v745, %v741
        %v747 = vmul.f32 %v655, %v746
        %v748 = vrcp.pop %v678
        %v749 = vmul.f32 %v678, %v748
        %v750 = vsub.f32 1.0, %v749
        %v751 = vmul.f32 %v748, %v750
        %v752 = vadd.f32 %v748, %v751
        %vm753 = vweird.f32 %v678
        %vm754 = vweird.f32 %v748
        %vm755 = vmor %vm753, %vm754
        %v756 = vsel %vm755, %v748, %v752
        %v757 = vand.u32 2147483647, %v678
        %vm758 = vcmp.eq.f32.partialorder %v757, 8.507059e+37
        %v759 = vand.u32 %v678, 2147483648
        %v760 = vor.u32 1.1754944e-38, %v759
        %v761 = vsel %vm758, %v760, %v756
        %v762 = vmul.f32 %v657, %v761
        %v763 = vrcp.pop %v681
        %v764 = vmul.f32 %v681, %v763
        %v765 = vsub.f32 1.0, %v764
        %v766 = vmul.f32 %v763, %v765
        %v767 = vadd.f32 %v763, %v766
        %vm768 = vweird.f32 %v681
        %vm769 = vweird.f32 %v763
        %vm770 = vmor %vm768, %vm769
        %v771 = vsel %vm770, %v763, %v767
        %v772 = vand.u32 2147483647, %v681
        %vm773 = vcmp.eq.f32.partialorder %v772, 8.507059e+37
        %v774 = vand.u32 %v681, 2147483648
        %v775 = vor.u32 1.1754944e-38, %v774
        %v776 = vsel %vm773, %v775, %v771
        %v777 = vmul.f32 %v659, %v776
        %v778 = vrcp.pop %v684
        %v779 = vmul.f32 %v684, %v778
        %v780 = vsub.f32 1.0, %v779
        %v781 = vmul.f32 %v778, %v780
        %v782 = vadd.f32 %v778, %v781
        %vm783 = vweird.f32 %v684
        %vm784 = vweird.f32 %v778
        %vm785 = vmor %vm783, %vm784
        %v786 = vsel %vm785, %v778, %v782
        %v787 = vand.u32 2147483647, %v684
        %vm788 = vcmp.eq.f32.partialorder %v787, 8.507059e+37
        %v789 = vand.u32 %v684, 2147483648
        %v790 = vor.u32 1.1754944e-38, %v789
        %v791 = vsel %vm788, %v790, %v786
        %v792 = vmul.f32 %v661, %v791
        %v793 = vrcp.pop %v687
        %v794 = vmul.f32 %v687, %v793
        %v795 = vsub.f32 1.0, %v794
        %v796 = vmul.f32 %v793, %v795
        %v797 = vadd.f32 %v793, %v796
        %vm798 = vweird.f32 %v687
        %vm799 = vweird.f32 %v793
        %vm800 = vmor %vm798, %vm799
        %v801 = vsel %vm800, %v793, %v797
        %v802 = vand.u32 2147483647, %v687
        %vm803 = vcmp.eq.f32.partialorder %v802, 8.507059e+37
        %v804 = vand.u32 %v687, 2147483648
        %v805 = vor.u32 1.1754944e-38, %v804
        %v806 = vsel %vm803, %v805, %v801
        %v807 = vmul.f32 %v663, %v806
        %v808 = vpack.c.bf16 %v702, %v702
        %v809 = vpack.c.bf16 %v717, %v717
        %v810 = vpack.c.bf16 %v732, %v732
        %v811 = vpack.c.bf16 %v747, %v747
        %v812 = vpack.c.bf16 %v762, %v762
        %v813 = vpack.c.bf16 %v777, %v777
        %v814 = vpack.c.bf16 %v792, %v792
        %v815 = vpack.c.bf16 %v807, %v807
        %v818 = vunpack.c.l.b16 %v808
        %v819 = vunpack.c.l.b16 %v809
        %v820 = vpack.c.b16 %v819, %v818
        %821 = vrot.lane.b32.xlu0 %v519, 64
        %v822 = vpop.permute.xlu0 %821
        %v825 = vsel %vm615, %v820, 0
        %827 = vmatpush.bf16.msra.mxu0 0
        %828 = vmatpush.bf16.msra.mxu0 0
        %829 = vmatpush.bf16.msra.mxu0 0
        %830 = vmatpush.bf16.msra.mxu0 0
        %831 = vmatpush.bf16.msra.mxu0 0
        %832 = vmatpush.bf16.msra.mxu0 0
        %833 = vmatpush.bf16.msra.mxu0 0
        %834 = vmatpush.bf16.msra.mxu0 %v822
        %835 = vmatmul.bf16.gmra.mxu0 %v825
        %v836 = vpop.f32.mrf.mxu0
        %v837 = vadd.f32 0.0, %v836
        %v838 = vpop.f32.mrf.mxu0
        %v839 = vadd.f32 0.0, %v838
        %840 = vdwg.mxu0
        %v843 = vunpack.c.l.b16 %v810
        %v844 = vunpack.c.l.b16 %v811
        %v845 = vpack.c.b16 %v844, %v843
        %846 = vrot.lane.b32.xlu0 %v519, 56
        %v847 = vpop.permute.xlu0 %846
        %v850 = vsel %vm615, %v845, 0
        %852 = vmatpush.bf16.msra.mxu0 0
        %853 = vmatpush.bf16.msra.mxu0 0
        %854 = vmatpush.bf16.msra.mxu0 0
        %855 = vmatpush.bf16.msra.mxu0 0
        %856 = vmatpush.bf16.msra.mxu0 0
        %857 = vmatpush.bf16.msra.mxu0 0
        %858 = vmatpush.bf16.msra.mxu0 0
        %859 = vmatpush.bf16.msra.mxu0 %v847
        %860 = vmatmul.bf16.gmra.mxu0 %v850
        %v861 = vpop.f32.mrf.mxu0
        %v862 = vadd.f32 0.0, %v861
        %v863 = vpop.f32.mrf.mxu0
        %v864 = vadd.f32 0.0, %v863
        %865 = vdwg.mxu0
        %v868 = vunpack.c.l.b16 %v812
        %v869 = vunpack.c.l.b16 %v813
        %v870 = vpack.c.b16 %v869, %v868
        %871 = vrot.lane.b32.xlu0 %v519, 48
        %v872 = vpop.permute.xlu0 %871
        %v875 = vsel %vm615, %v870, 0
        %877 = vmatpush.bf16.msra.mxu0 0
        %878 = vmatpush.bf16.msra.mxu0 0
        %879 = vmatpush.bf16.msra.mxu0 0
        %880 = vmatpush.bf16.msra.mxu0 0
        %881 = vmatpush.bf16.msra.mxu0 0
        %882 = vmatpush.bf16.msra.mxu0 0
        %883 = vmatpush.bf16.msra.mxu0 0
        %884 = vmatpush.bf16.msra.mxu0 %v872
        %885 = vmatmul.bf16.gmra.mxu0 %v875
        %v886 = vpop.f32.mrf.mxu0
        %v887 = vadd.f32 0.0, %v886
        %v888 = vpop.f32.mrf.mxu0
        %v889 = vadd.f32 0.0, %v888
        %890 = vdwg.mxu0
        %v893 = vunpack.c.l.b16 %v814
        %v894 = vunpack.c.l.b16 %v815
        %v895 = vpack.c.b16 %v894, %v893
        %896 = vrot.lane.b32.xlu0 %v519, 40
        %v897 = vpop.permute.xlu0 %896
        %v900 = vsel %vm615, %v895, 0
        %902 = vmatpush.bf16.msra.mxu0 0
        %903 = vmatpush.bf16.msra.mxu0 0
        %904 = vmatpush.bf16.msra.mxu0 0
        %905 = vmatpush.bf16.msra.mxu0 0
        %906 = vmatpush.bf16.msra.mxu0 0
        %907 = vmatpush.bf16.msra.mxu0 0
        %908 = vmatpush.bf16.msra.mxu0 0
        %909 = vmatpush.bf16.msra.mxu0 %v897
        %910 = vmatmul.bf16.gmra.mxu0 %v900
        %v911 = vpop.f32.mrf.mxu0
        %v912 = vadd.f32 0.0, %v911
        %v913 = vpop.f32.mrf.mxu0
        %v914 = vadd.f32 0.0, %v913
        %915 = vdwg.mxu0
        %918 = vrot.lane.b32.xlu0 %v862, 8
        %v919 = vpop.permute.xlu0 %918
        %920 = vrot.lane.b32.xlu0 %v864, 8
        %v921 = vpop.permute.xlu0 %920
        %926 = vrot.lane.b32.xlu0 %v887, 16
        %v927 = vpop.permute.xlu0 %926
        %928 = vrot.lane.b32.xlu0 %v889, 16
        %v929 = vpop.permute.xlu0 %928
        %934 = vrot.lane.b32.xlu0 %v912, 24
        %v935 = vpop.permute.xlu0 %934
        %936 = vrot.lane.b32.xlu0 %v914, 24
        %v937 = vpop.permute.xlu0 %936
        %v940 = vsel %vm522, %v837, %v919
        %v941 = vsel %vm522, %v839, %v921
        %v942 = vsel %vm615, %v940, %v927
        %v943 = vsel %vm615, %v941, %v929
        %vm944 = vcmask 195584
        %v945 = vsel %vm944, %v942, %v935
        %v946 = vsel %vm944, %v943, %v937
        %v947 = vadd.f32 %v461, %v409
        %v948 = vadd.f32 %v462, %v409
        %v949 = vpack.c.bf16 %v507, %v507
        %v950 = vpack.c.bf16 %v509, %v509
        %v953 = vunpack.c.l.b16 %v949
        %v954 = vunpack.c.l.b16 %v950
        %v955 = vpack.c.b16 %v954, %v953
        %956 = vrot.lane.b32.xlu0 %v955, 96
        %v957 = vpop.permute.xlu0 %956
        %v959 = vsel %vm522, %v955, 0
        %v962 = vsel %vm522, %v957, 0
        %964 = vmatpush.bf16.xpose.msra.mxu0 0
        %965 = vmatpush.bf16.xpose.msra.mxu0 0
        %966 = vmatpush.bf16.xpose.msra.mxu0 0
        %967 = vmatpush.bf16.xpose.msra.mxu0 0
        %968 = vmatpush.bf16.xpose.msra.mxu0 0
        %969 = vmatpush.bf16.xpose.msra.mxu0 0
        %970 = vmatpush.bf16.xpose.msra.mxu0 0
        %971 = vmatpush.bf16.xpose.msra.mxu0 %v962
        %972 = vmatmul.bf16.gmra.mxu0 %v959
        %v973 = vpop.f32.mrf.mxu0
        %v974 = vadd.f32 %v947, %v973
        %v975 = vpop.f32.mrf.mxu0
        %v976 = vadd.f32 %v948, %v975
        %977 = vdwg.mxu0
        %978 = vrot.lane.b32.xlu0 %v955, 120
        %v979 = vpop.permute.xlu0 %978
        %980 = vrot.lane.b32.xlu0 %v955, 88
        %v981 = vpop.permute.xlu0 %980
        %v983 = vsel %vm522, %v979, 0
        %v986 = vsel %vm522, %v981, 0
        %988 = vmatpush.bf16.xpose.msra.mxu0 0
        %989 = vmatpush.bf16.xpose.msra.mxu0 0
        %990 = vmatpush.bf16.xpose.msra.mxu0 0
        %991 = vmatpush.bf16.xpose.msra.mxu0 0
        %992 = vmatpush.bf16.xpose.msra.mxu0 0
        %993 = vmatpush.bf16.xpose.msra.mxu0 0
        %994 = vmatpush.bf16.xpose.msra.mxu0 0
        %995 = vmatpush.bf16.xpose.msra.mxu0 %v986
        %996 = vmatmul.bf16.gmra.mxu0 %v983
        %v997 = vpop.f32.mrf.mxu0
        %v998 = vadd.f32 %v947, %v997
        %v999 = vpop.f32.mrf.mxu0
        %v1000 = vadd.f32 %v948, %v999
        %1001 = vdwg.mxu0
        %1002 = vrot.lane.b32.xlu0 %v955, 112
        %v1003 = vpop.permute.xlu0 %1002
        %1004 = vrot.lane.b32.xlu0 %v955, 80
        %v1005 = vpop.permute.xlu0 %1004
        %v1007 = vsel %vm522, %v1003, 0
        %v1010 = vsel %vm522, %v1005, 0
        %1012 = vmatpush.bf16.xpose.msra.mxu0 0
        %1013 = vmatpush.bf16.xpose.msra.mxu0 0
        %1014 = vmatpush.bf16.xpose.msra.mxu0 0
        %1015 = vmatpush.bf16.xpose.msra.mxu0 0
        %1016 = vmatpush.bf16.xpose.msra.mxu0 0
        %1017 = vmatpush.bf16.xpose.msra.mxu0 0
        %1018 = vmatpush.bf16.xpose.msra.mxu0 0
        %1019 = vmatpush.bf16.xpose.msra.mxu0 %v1010
        %1020 = vmatmul.bf16.gmra.mxu0 %v1007
        %v1021 = vpop.f32.mrf.mxu0
        %v1022 = vadd.f32 %v947, %v1021
        %v1023 = vpop.f32.mrf.mxu0
        %v1024 = vadd.f32 %v948, %v1023
        %1025 = vdwg.mxu0
        %1026 = vrot.lane.b32.xlu0 %v955, 104
        %v1027 = vpop.permute.xlu0 %1026
        %1028 = vrot.lane.b32.xlu0 %v955, 72
        %v1029 = vpop.permute.xlu0 %1028
        %v1031 = vsel %vm522, %v1027, 0
        %v1034 = vsel %vm522, %v1029, 0
        %1036 = vmatpush.bf16.xpose.msra.mxu0 0
        %1037 = vmatpush.bf16.xpose.msra.mxu0 0
        %1038 = vmatpush.bf16.xpose.msra.mxu0 0
        %1039 = vmatpush.bf16.xpose.msra.mxu0 0
        %1040 = vmatpush.bf16.xpose.msra.mxu0 0
        %1041 = vmatpush.bf16.xpose.msra.mxu0 0
        %1042 = vmatpush.bf16.xpose.msra.mxu0 0
        %1043 = vmatpush.bf16.xpose.msra.mxu0 %v1034
        %1044 = vmatmul.bf16.gmra.mxu0 %v1031
        %v1045 = vpop.f32.mrf.mxu0
        %v1046 = vadd.f32 %v947, %v1045
        %v1047 = vpop.f32.mrf.mxu0
        %v1048 = vadd.f32 %v948, %v1047
        %1049 = vdwg.mxu0
        %v1050 = vsel %vm615, %v974, -inf
        %1051 = vmax.xlane.f32.xlu0 %v1050
        %v1052 = vpop.xlane.xlu0 %1051
        %v1053 = vsel %vm615, %v976, -inf
        %1054 = vmax.xlane.f32.xlu0 %v1053
        %v1055 = vpop.xlane.xlu0 %1054
        %v1056 = vsel %vm615, %v998, -inf
        %1057 = vmax.xlane.f32.xlu0 %v1056
        %v1058 = vpop.xlane.xlu0 %1057
        %v1059 = vsel %vm615, %v1000, -inf
        %1060 = vmax.xlane.f32.xlu0 %v1059
        %v1061 = vpop.xlane.xlu0 %1060
        %v1062 = vsel %vm615, %v1022, -inf
        %1063 = vmax.xlane.f32.xlu0 %v1062
        %v1064 = vpop.xlane.xlu0 %1063
        %v1065 = vsel %vm615, %v1024, -inf
        %1066 = vmax.xlane.f32.xlu0 %v1065
        %v1067 = vpop.xlane.xlu0 %1066
        %v1068 = vsel %vm615, %v1046, -inf
        %1069 = vmax.xlane.f32.xlu0 %v1068
        %v1070 = vpop.xlane.xlu0 %1069
        %v1071 = vsel %vm615, %v1048, -inf
        %1072 = vmax.xlane.f32.xlu0 %v1071
        %v1073 = vpop.xlane.xlu0 %1072
        %v1074 = vsub.f32 %v974, %v1052
        %v1075 = vsub.f32 %v976, %v1055
        %v1076 = vsub.f32 %v998, %v1058
        %v1077 = vsub.f32 %v1000, %v1061
        %v1078 = vsub.f32 %v1022, %v1064
        %v1079 = vsub.f32 %v1024, %v1067
        %v1080 = vsub.f32 %v1046, %v1070
        %v1081 = vsub.f32 %v1048, %v1073
        %v1082 = vmul.f32 %v1074, 1.442695
        %v1083 = vpow.pop %v1082
        %v1084 = vmul.f32 %v1075, 1.442695
        %v1085 = vpow.pop %v1084
        %v1086 = vmul.f32 %v1076, 1.442695
        %v1087 = vpow.pop %v1086
        %v1088 = vmul.f32 %v1077, 1.442695
        %v1089 = vpow.pop %v1088
        %v1090 = vmul.f32 %v1078, 1.442695
        %v1091 = vpow.pop %v1090
        %v1092 = vmul.f32 %v1079, 1.442695
        %v1093 = vpow.pop %v1092
        %v1094 = vmul.f32 %v1080, 1.442695
        %v1095 = vpow.pop %v1094
        %v1096 = vmul.f32 %v1081, 1.442695
        %v1097 = vpow.pop %v1096
        %v1098 = vsel %vm615, %v1083, 0.0
        %1099 = vadd.xlane.f32.xlu0 %v1098
        %v1100 = vpop.xlane.xlu0 %1099
        %v1101 = vsel %vm615, %v1085, 0.0
        %1102 = vadd.xlane.f32.xlu0 %v1101
        %v1103 = vpop.xlane.xlu0 %1102
        %v1104 = vsel %vm615, %v1087, 0.0
        %1105 = vadd.xlane.f32.xlu0 %v1104
        %v1106 = vpop.xlane.xlu0 %1105
        %v1107 = vsel %vm615, %v1089, 0.0
        %1108 = vadd.xlane.f32.xlu0 %v1107
        %v1109 = vpop.xlane.xlu0 %1108
        %v1110 = vsel %vm615, %v1091, 0.0
        %1111 = vadd.xlane.f32.xlu0 %v1110
        %v1112 = vpop.xlane.xlu0 %1111
        %v1113 = vsel %vm615, %v1093, 0.0
        %1114 = vadd.xlane.f32.xlu0 %v1113
        %v1115 = vpop.xlane.xlu0 %1114
        %v1116 = vsel %vm615, %v1095, 0.0
        %1117 = vadd.xlane.f32.xlu0 %v1116
        %v1118 = vpop.xlane.xlu0 %1117
        %v1119 = vsel %vm615, %v1097, 0.0
        %1120 = vadd.xlane.f32.xlu0 %v1119
        %v1121 = vpop.xlane.xlu0 %1120
        %v1122 = vrcp.pop %v1100
        %v1123 = vmul.f32 %v1100, %v1122
        %v1124 = vsub.f32 1.0, %v1123
        %v1125 = vmul.f32 %v1122, %v1124
        %v1126 = vadd.f32 %v1122, %v1125
        %vm1127 = vweird.f32 %v1100
        %vm1128 = vweird.f32 %v1122
        %vm1129 = vmor %vm1127, %vm1128
        %v1130 = vsel %vm1129, %v1122, %v1126
        %v1131 = vand.u32 2147483647, %v1100
        %vm1132 = vcmp.eq.f32.partialorder %v1131, 8.507059e+37
        %v1133 = vand.u32 %v1100, 2147483648
        %v1134 = vor.u32 1.1754944e-38, %v1133
        %v1135 = vsel %vm1132, %v1134, %v1130
        %v1136 = vmul.f32 %v1083, %v1135
        %v1137 = vrcp.pop %v1103
        %v1138 = vmul.f32 %v1103, %v1137
        %v1139 = vsub.f32 1.0, %v1138
        %v1140 = vmul.f32 %v1137, %v1139
        %v1141 = vadd.f32 %v1137, %v1140
        %vm1142 = vweird.f32 %v1103
        %vm1143 = vweird.f32 %v1137
        %vm1144 = vmor %vm1142, %vm1143
        %v1145 = vsel %vm1144, %v1137, %v1141
        %v1146 = vand.u32 2147483647, %v1103
        %vm1147 = vcmp.eq.f32.partialorder %v1146, 8.507059e+37
        %v1148 = vand.u32 %v1103, 2147483648
        %v1149 = vor.u32 1.1754944e-38, %v1148
        %v1150 = vsel %vm1147, %v1149, %v1145
        %v1151 = vmul.f32 %v1085, %v1150
        %v1152 = vrcp.pop %v1106
        %v1153 = vmul.f32 %v1106, %v1152
        %v1154 = vsub.f32 1.0, %v1153
        %v1155 = vmul.f32 %v1152, %v1154
        %v1156 = vadd.f32 %v1152, %v1155
        %vm1157 = vweird.f32 %v1106
        %vm1158 = vweird.f32 %v1152
        %vm1159 = vmor %vm1157, %vm1158
        %v1160 = vsel %vm1159, %v1152, %v1156
        %v1161 = vand.u32 2147483647, %v1106
        %vm1162 = vcmp.eq.f32.partialorder %v1161, 8.507059e+37
        %v1163 = vand.u32 %v1106, 2147483648
        %v1164 = vor.u32 1.1754944e-38, %v1163
        %v1165 = vsel %vm1162, %v1164, %v1160
        %v1166 = vmul.f32 %v1087, %v1165
        %v1167 = vrcp.pop %v1109
        %v1168 = vmul.f32 %v1109, %v1167
        %v1169 = vsub.f32 1.0, %v1168
        %v1170 = vmul.f32 %v1167, %v1169
        %v1171 = vadd.f32 %v1167, %v1170
        %vm1172 = vweird.f32 %v1109
        %vm1173 = vweird.f32 %v1167
        %vm1174 = vmor %vm1172, %vm1173
        %v1175 = vsel %vm1174, %v1167, %v1171
        %v1176 = vand.u32 2147483647, %v1109
        %vm1177 = vcmp.eq.f32.partialorder %v1176, 8.507059e+37
        %v1178 = vand.u32 %v1109, 2147483648
        %v1179 = vor.u32 1.1754944e-38, %v1178
        %v1180 = vsel %vm1177, %v1179, %v1175
        %v1181 = vmul.f32 %v1089, %v1180
        %v1182 = vrcp.pop %v1112
        %v1183 = vmul.f32 %v1112, %v1182
        %v1184 = vsub.f32 1.0, %v1183
        %v1185 = vmul.f32 %v1182, %v1184
        %v1186 = vadd.f32 %v1182, %v1185
        %vm1187 = vweird.f32 %v1112
        %vm1188 = vweird.f32 %v1182
        %vm1189 = vmor %vm1187, %vm1188
        %v1190 = vsel %vm1189, %v1182, %v1186
        %v1191 = vand.u32 2147483647, %v1112
        %vm1192 = vcmp.eq.f32.partialorder %v1191, 8.507059e+37
        %v1193 = vand.u32 %v1112, 2147483648
        %v1194 = vor.u32 1.1754944e-38, %v1193
        %v1195 = vsel %vm1192, %v1194, %v1190
        %v1196 = vmul.f32 %v1091, %v1195
        %v1197 = vrcp.pop %v1115
        %v1198 = vmul.f32 %v1115, %v1197
        %v1199 = vsub.f32 1.0, %v1198
        %v1200 = vmul.f32 %v1197, %v1199
        %v1201 = vadd.f32 %v1197, %v1200
        %vm1202 = vweird.f32 %v1115
        %vm1203 = vweird.f32 %v1197
        %vm1204 = vmor %vm1202, %vm1203
        %v1205 = vsel %vm1204, %v1197, %v1201
        %v1206 = vand.u32 2147483647, %v1115
        %vm1207 = vcmp.eq.f32.partialorder %v1206, 8.507059e+37
        %v1208 = vand.u32 %v1115, 2147483648
        %v1209 = vor.u32 1.1754944e-38, %v1208
        %v1210 = vsel %vm1207, %v1209, %v1205
        %v1211 = vmul.f32 %v1093, %v1210
        %v1212 = vrcp.pop %v1118
        %v1213 = vmul.f32 %v1118, %v1212
        %v1214 = vsub.f32 1.0, %v1213
        %v1215 = vmul.f32 %v1212, %v1214
        %v1216 = vadd.f32 %v1212, %v1215
        %vm1217 = vweird.f32 %v1118
        %vm1218 = vweird.f32 %v1212
        %vm1219 = vmor %vm1217, %vm1218
        %v1220 = vsel %vm1219, %v1212, %v1216
        %v1221 = vand.u32 2147483647, %v1118
        %vm1222 = vcmp.eq.f32.partialorder %v1221, 8.507059e+37
        %v1223 = vand.u32 %v1118, 2147483648
        %v1224 = vor.u32 1.1754944e-38, %v1223
        %v1225 = vsel %vm1222, %v1224, %v1220
        %v1226 = vmul.f32 %v1095, %v1225
        %v1227 = vrcp.pop %v1121
        %v1228 = vmul.f32 %v1121, %v1227
        %v1229 = vsub.f32 1.0, %v1228
        %v1230 = vmul.f32 %v1227, %v1229
        %v1231 = vadd.f32 %v1227, %v1230
        %vm1232 = vweird.f32 %v1121
        %vm1233 = vweird.f32 %v1227
        %vm1234 = vmor %vm1232, %vm1233
        %v1235 = vsel %vm1234, %v1227, %v1231
        %v1236 = vand.u32 2147483647, %v1121
        %vm1237 = vcmp.eq.f32.partialorder %v1236, 8.507059e+37
        %v1238 = vand.u32 %v1121, 2147483648
        %v1239 = vor.u32 1.1754944e-38, %v1238
        %v1240 = vsel %vm1237, %v1239, %v1235
        %v1241 = vmul.f32 %v1097, %v1240
        %v1242 = vpack.c.bf16 %v1136, %v1136
        %v1243 = vpack.c.bf16 %v1151, %v1151
        %v1244 = vpack.c.bf16 %v1166, %v1166
        %v1245 = vpack.c.bf16 %v1181, %v1181
        %v1246 = vpack.c.bf16 %v1196, %v1196
        %v1247 = vpack.c.bf16 %v1211, %v1211
        %v1248 = vpack.c.bf16 %v1226, %v1226
        %v1249 = vpack.c.bf16 %v1241, %v1241
        %v1252 = vunpack.c.l.b16 %v1242
        %v1253 = vunpack.c.l.b16 %v1243
        %v1254 = vpack.c.b16 %v1253, %v1252
        %1255 = vrot.lane.b32.xlu0 %v955, 64
        %v1256 = vpop.permute.xlu0 %1255
        %v1259 = vsel %vm615, %v1254, 0
        %1261 = vmatpush.bf16.msra.mxu0 0
        %1262 = vmatpush.bf16.msra.mxu0 0
        %1263 = vmatpush.bf16.msra.mxu0 0
        %1264 = vmatpush.bf16.msra.mxu0 0
        %1265 = vmatpush.bf16.msra.mxu0 0
        %1266 = vmatpush.bf16.msra.mxu0 0
        %1267 = vmatpush.bf16.msra.mxu0 0
        %1268 = vmatpush.bf16.msra.mxu0 %v1256
        %1269 = vmatmul.bf16.gmra.mxu0 %v1259
        %v1270 = vpop.f32.mrf.mxu0
        %v1271 = vadd.f32 0.0, %v1270
        %v1272 = vpop.f32.mrf.mxu0
        %v1273 = vadd.f32 0.0, %v1272
        %1274 = vdwg.mxu0
        %v1277 = vunpack.c.l.b16 %v1244
        %v1278 = vunpack.c.l.b16 %v1245
        %v1279 = vpack.c.b16 %v1278, %v1277
        %1280 = vrot.lane.b32.xlu0 %v955, 56
        %v1281 = vpop.permute.xlu0 %1280
        %v1284 = vsel %vm615, %v1279, 0
        %1286 = vmatpush.bf16.msra.mxu0 0
        %1287 = vmatpush.bf16.msra.mxu0 0
        %1288 = vmatpush.bf16.msra.mxu0 0
        %1289 = vmatpush.bf16.msra.mxu0 0
        %1290 = vmatpush.bf16.msra.mxu0 0
        %1291 = vmatpush.bf16.msra.mxu0 0
        %1292 = vmatpush.bf16.msra.mxu0 0
        %1293 = vmatpush.bf16.msra.mxu0 %v1281
        %1294 = vmatmul.bf16.gmra.mxu0 %v1284
        %v1295 = vpop.f32.mrf.mxu0
        %v1296 = vadd.f32 0.0, %v1295
        %v1297 = vpop.f32.mrf.mxu0
        %v1298 = vadd.f32 0.0, %v1297
        %1299 = vdwg.mxu0
        %v1302 = vunpack.c.l.b16 %v1246
        %v1303 = vunpack.c.l.b16 %v1247
        %v1304 = vpack.c.b16 %v1303, %v1302
        %1305 = vrot.lane.b32.xlu0 %v955, 48
        %v1306 = vpop.permute.xlu0 %1305
        %v1309 = vsel %vm615, %v1304, 0
        %1311 = vmatpush.bf16.msra.mxu0 0
        %1312 = vmatpush.bf16.msra.mxu0 0
        %1313 = vmatpush.bf16.msra.mxu0 0
        %1314 = vmatpush.bf16.msra.mxu0 0
        %1315 = vmatpush.bf16.msra.mxu0 0
        %1316 = vmatpush.bf16.msra.mxu0 0
        %1317 = vmatpush.bf16.msra.mxu0 0
        %1318 = vmatpush.bf16.msra.mxu0 %v1306
        %1319 = vmatmul.bf16.gmra.mxu0 %v1309
        %v1320 = vpop.f32.mrf.mxu0
        %v1321 = vadd.f32 0.0, %v1320
        %v1322 = vpop.f32.mrf.mxu0
        %v1323 = vadd.f32 0.0, %v1322
        %1324 = vdwg.mxu0
        %v1327 = vunpack.c.l.b16 %v1248
        %v1328 = vunpack.c.l.b16 %v1249
        %v1329 = vpack.c.b16 %v1328, %v1327
        %1330 = vrot.lane.b32.xlu0 %v955, 40
        %v1331 = vpop.permute.xlu0 %1330
        %v1334 = vsel %vm615, %v1329, 0
        %1336 = vmatpush.bf16.msra.mxu0 0
        %1337 = vmatpush.bf16.msra.mxu0 0
        %1338 = vmatpush.bf16.msra.mxu0 0
        %1339 = vmatpush.bf16.msra.mxu0 0
        %1340 = vmatpush.bf16.msra.mxu0 0
        %1341 = vmatpush.bf16.msra.mxu0 0
        %1342 = vmatpush.bf16.msra.mxu0 0
        %1343 = vmatpush.bf16.msra.mxu0 %v1331
        %1344 = vmatmul.bf16.gmra.mxu0 %v1334
        %v1345 = vpop.f32.mrf.mxu0
        %v1346 = vadd.f32 0.0, %v1345
        %v1347 = vpop.f32.mrf.mxu0
        %v1348 = vadd.f32 0.0, %v1347
        %1349 = vdwg.mxu0
        %1352 = vrot.lane.b32.xlu0 %v1296, 8
        %v1353 = vpop.permute.xlu0 %1352
        %1354 = vrot.lane.b32.xlu0 %v1298, 8
        %v1355 = vpop.permute.xlu0 %1354
        %1360 = vrot.lane.b32.xlu0 %v1321, 16
        %v1361 = vpop.permute.xlu0 %1360
        %1362 = vrot.lane.b32.xlu0 %v1323, 16
        %v1363 = vpop.permute.xlu0 %1362
        %1368 = vrot.lane.b32.xlu0 %v1346, 24
        %v1369 = vpop.permute.xlu0 %1368
        %1370 = vrot.lane.b32.xlu0 %v1348, 24
        %v1371 = vpop.permute.xlu0 %1370
        %v1374 = vsel %vm522, %v1271, %v1353
        %v1375 = vsel %vm522, %v1273, %v1355
        %v1376 = vsel %vm615, %v1374, %v1361
        %v1377 = vsel %vm615, %v1375, %v1363
        %v1378 = vsel %vm944, %v1376, %v1369
        %v1379 = vsel %vm944, %v1377, %v1371
        %v1380 = vld [vmem:[#allocation4 + $0x30] sm:$0xf]
        %v1381 = vld [vmem:[#allocation4 + $0x34] sm:$0xf]
        %v1382 = vld [vmem:[#allocation4 + $0x38] sm:$0xf]
        %v1383 = vld [vmem:[#allocation4 + $0x3c] sm:$0xf]
        %v1384 = vpack.c.bf16 %v946, %v945
        %v1385 = vpack.c.bf16 %v1379, %v1378
        %v1386 = vld [vmem:[#allocation6 + $0x20] sm:$0x1]
        %v1387 = vperm.slane %v1386, 0
        %v1392 = vunpack.c.l.b16 %v1380
        %v1393 = vunpack.c.l.b16 %v1381
        %v1394 = vunpack.c.l.b16 %v1382
        %v1395 = vunpack.c.l.b16 %v1383
        %v1396 = vpack.c.b16 %v1393, %v1392
        %v1397 = vpack.c.b16 %v1395, %v1394
        %v1401 = vsel %vm485, %v1384, 0
        %v1404 = vsel %vm485, %v1385, 0
        %1406 = vmatpush.bf16.msra.mxu0 0
        %1407 = vmatpush.bf16.msra.mxu0 0
        %1408 = vmatpush.bf16.msra.mxu0 0
        %1409 = vmatpush.bf16.msra.mxu0 0
        %1410 = vmatpush.bf16.msra.mxu0 0
        %1411 = vmatpush.bf16.msra.mxu0 0
        %1412 = vmatpush.bf16.msra.mxu0 %v1397
        %1413 = vmatpush.bf16.msra.mxu0 %v1396
        %1414 = vmatmul.bf16.gmra.mxu0 %v1401
        %v1415 = vpop.f32.mrf.mxu0
        %v1416 = vadd.f32 %v1387, %v1415
        %v1417 = vpop.f32.mrf.mxu0
        %v1418 = vadd.f32 %v1387, %v1417
        %1419 = vmatmul.bf16.gmra.mxu0 %v1404
        %v1420 = vpop.f32.mrf.mxu0
        %v1421 = vadd.f32 %v1387, %v1420
        %v1422 = vpop.f32.mrf.mxu0
        %v1423 = vadd.f32 %v1387, %v1422
        %1424 = vdwg.mxu0
        %v1425 = vadd.f32 %v436, %v1416
        %v1426 = vadd.f32 %v438, %v1418
        %v1427 = vadd.f32 %v457, %v1421
        %v1428 = vadd.f32 %v459, %v1423
        %v1429 = vsel %vm485, %v1425, 0.0
        %1430 = vadd.xlane.f32.xlu0 %v1429
        %v1431 = vpop.xlane.xlu0 %1430
        %v1432 = vsel %vm485, %v1426, 0.0
        %1433 = vadd.xlane.f32.xlu0 %v1432
        %v1434 = vpop.xlane.xlu0 %1433
        %v1435 = vsel %vm485, %v1427, 0.0
        %1436 = vadd.xlane.f32.xlu0 %v1435
        %v1437 = vpop.xlane.xlu0 %1436
        %v1438 = vsel %vm485, %v1428, 0.0
        %1439 = vadd.xlane.f32.xlu0 %v1438
        %v1440 = vpop.xlane.xlu0 %1439
        %v1441 = vrcp.pop 32.0
        %v1442 = vmul.f32 32.0, %v1441
        %v1443 = vsub.f32 1.0, %v1442
        %v1444 = vmul.f32 %v1441, %v1443
        %v1445 = vadd.f32 %v1441, %v1444
        %vm1446 = vweird.f32 %v1441
        %v1447 = vsel %vm1446, %v1441, %v1445
        %v1448 = vmul.f32 %v1431, %v1447
        %v1449 = vmul.f32 %v1434, %v1447
        %v1450 = vmul.f32 %v1437, %v1447
        %v1451 = vmul.f32 %v1440, %v1447
        %v1452 = vsub.f32 %v1425, %v1448
        %v1453 = vsub.f32 %v1426, %v1449
        %v1454 = vsub.f32 %v1427, %v1450
        %v1455 = vsub.f32 %v1428, %v1451
        %v1456 = vmul.f32 %v1452, %v1452
        %v1457 = vmul.f32 %v1453, %v1453
        %v1458 = vmul.f32 %v1454, %v1454
        %v1459 = vmul.f32 %v1455, %v1455
        %v1460 = vsel %vm485, %v1456, 0.0
        %1461 = vadd.xlane.f32.xlu0 %v1460
        %v1462 = vpop.xlane.xlu0 %1461
        %v1463 = vsel %vm485, %v1457, 0.0
        %1464 = vadd.xlane.f32.xlu0 %v1463
        %v1465 = vpop.xlane.xlu0 %1464
        %v1466 = vsel %vm485, %v1458, 0.0
        %1467 = vadd.xlane.f32.xlu0 %v1466
        %v1468 = vpop.xlane.xlu0 %1467
        %v1469 = vsel %vm485, %v1459, 0.0
        %1470 = vadd.xlane.f32.xlu0 %v1469
        %v1471 = vpop.xlane.xlu0 %1470
        %v1472 = vmul.f32 %v1462, %v1447
        %v1473 = vmul.f32 %v1465, %v1447
        %v1474 = vmul.f32 %v1468, %v1447
        %v1475 = vmul.f32 %v1471, %v1447
        %v1476 = vadd.f32 %v1472, 1e-05
        %v1477 = vadd.f32 %v1473, 1e-05
        %v1478 = vadd.f32 %v1474, 1e-05
        %v1479 = vadd.f32 %v1475, 1e-05
        %v1480 = vrsqrt.pop %v1476
        %v1481 = vmul.f32 %v1480, %v1476
        %v1482 = vmul.f32 %v1481, %v1480
        %v1483 = vmul.f32 0.5, %v1482
        %v1484 = vsub.f32 1.5, %v1483
        %v1485 = vmul.f32 %v1480, %v1484
        %vm1486 = vweird.f32 %v1476
        %vm1487 = vweird.f32 %v1480
        %vm1488 = vmor %vm1486, %vm1487
        %v1489 = vsel %vm1488, %v1480, %v1485
        %v1490 = vrsqrt.pop %v1477
        %v1491 = vmul.f32 %v1490, %v1477
        %v1492 = vmul.f32 %v1491, %v1490
        %v1493 = vmul.f32 0.5, %v1492
        %v1494 = vsub.f32 1.5, %v1493
        %v1495 = vmul.f32 %v1490, %v1494
        %vm1496 = vweird.f32 %v1477
        %vm1497 = vweird.f32 %v1490
        %vm1498 = vmor %vm1496, %vm1497
        %v1499 = vsel %vm1498, %v1490, %v1495
        %v1500 = vrsqrt.pop %v1478
        %v1501 = vmul.f32 %v1500, %v1478
        %v1502 = vmul.f32 %v1501, %v1500
        %v1503 = vmul.f32 0.5, %v1502
        %v1504 = vsub.f32 1.5, %v1503
        %v1505 = vmul.f32 %v1500, %v1504
        %vm1506 = vweird.f32 %v1478
        %vm1507 = vweird.f32 %v1500
        %vm1508 = vmor %vm1506, %vm1507
        %v1509 = vsel %vm1508, %v1500, %v1505
        %v1510 = vrsqrt.pop %v1479
        %v1511 = vmul.f32 %v1510, %v1479
        %v1512 = vmul.f32 %v1511, %v1510
        %v1513 = vmul.f32 0.5, %v1512
        %v1514 = vsub.f32 1.5, %v1513
        %v1515 = vmul.f32 %v1510, %v1514
        %vm1516 = vweird.f32 %v1479
        %vm1517 = vweird.f32 %v1510
        %vm1518 = vmor %vm1516, %vm1517
        %v1519 = vsel %vm1518, %v1510, %v1515
        %v1520 = vmul.f32 %v1452, %v1489
        %v1521 = vmul.f32 %v1453, %v1499
        %v1522 = vmul.f32 %v1454, %v1509
        %v1523 = vmul.f32 %v1455, %v1519
        %v1524 = vperm.slane %v463, 0
        %v1525 = vmul.f32 %v1520, %v1524
        %v1526 = vmul.f32 %v1521, %v1524
        %v1527 = vmul.f32 %v1522, %v1524
        %v1528 = vmul.f32 %v1523, %v1524
        %v1529 = vperm.slane %v464, 0
        %v1530 = vadd.f32 %v1525, %v1529
        %v1531 = vadd.f32 %v1526, %v1529
        %v1532 = vadd.f32 %v1527, %v1529
        %v1533 = vadd.f32 %v1528, %v1529
        %v1534 = vld [vmem:[#allocation4 + $0x40] sm:$0xf]
        %v1535 = vld [vmem:[#allocation4 + $0x44] sm:$0xf]
        %v1536 = vld [vmem:[#allocation4 + $0x48] sm:$0xf]
        %v1537 = vld [vmem:[#allocation4 + $0x4c] sm:$0xf]
        %v1538 = vpack.c.bf16 %v1531, %v1530
        %v1539 = vpack.c.bf16 %v1533, %v1532
        %v1540 = vld [vmem:[#allocation6 + $0x28] sm:$0x1]
        %v1541 = vperm.slane %v1540, 0
        %v1546 = vunpack.c.l.b16 %v1534
        %v1547 = vunpack.c.l.b16 %v1535
        %v1548 = vunpack.c.l.b16 %v1536
        %v1549 = vunpack.c.l.b16 %v1537
        %v1550 = vpack.c.b16 %v1547, %v1546
        %v1551 = vpack.c.b16 %v1549, %v1548
        %v1555 = vsel %vm485, %v1538, 0
        %v1558 = vsel %vm485, %v1539, 0
        %1560 = vmatpush.bf16.msra.mxu0 0
        %1561 = vmatpush.bf16.msra.mxu0 0
        %1562 = vmatpush.bf16.msra.mxu0 0
        %1563 = vmatpush.bf16.msra.mxu0 0
        %1564 = vmatpush.bf16.msra.mxu0 0
        %1565 = vmatpush.bf16.msra.mxu0 0
        %1566 = vmatpush.bf16.msra.mxu0 %v1551
        %1567 = vmatpush.bf16.msra.mxu0 %v1550
        %1568 = vmatmul.bf16.gmra.mxu0 %v1555
        %v1569 = vpop.f32.mrf.mxu0
        %v1570 = vadd.f32 %v1541, %v1569
        %v1571 = vpop.f32.mrf.mxu0
        %v1572 = vadd.f32 %v1541, %v1571
        %1573 = vmatmul.bf16.gmra.mxu0 %v1558
        %v1574 = vpop.f32.mrf.mxu0
        %v1575 = vadd.f32 %v1541, %v1574
        %v1576 = vpop.f32.mrf.mxu0
        %v1577 = vadd.f32 %v1541, %v1576
        %1578 = vdwg.mxu0
        %v1579 = vmax.f32 %v1570, 0.0
        %v1580 = vmax.f32 %v1572, 0.0
        %v1581 = vmax.f32 %v1575, 0.0
        %v1582 = vmax.f32 %v1577, 0.0
        %v1583 = vld [vmem:[#allocation4 + $0x50] sm:$0xf]
        %v1584 = vld [vmem:[#allocation4 + $0x54] sm:$0xf]
        %v1585 = vld [vmem:[#allocation4 + $0x58] sm:$0xf]
        %v1586 = vld [vmem:[#allocation4 + $0x5c] sm:$0xf]
        %v1587 = vld [vmem:[#allocation4 + $0x60] sm:$0xf]
        %v1588 = vld [vmem:[#allocation4 + $0x64] sm:$0xf]
        %v1589 = vld [vmem:[#allocation4 + $0x68] sm:$0xf]
        %v1590 = vld [vmem:[#allocation4 + $0x6c] sm:$0xf]
        %v1591 = vpack.c.bf16 %v1580, %v1579
        %v1592 = vpack.c.bf16 %v1582, %v1581
        %v1593 = vld [vmem:[#allocation6 + $0x30] sm:$0x1]
        %v1594 = vperm.slane %v1593, 0
        %v1603 = vunpack.c.l.b16 %v1583
        %v1604 = vunpack.c.l.b16 %v1584
        %v1605 = vunpack.c.l.b16 %v1585
        %v1606 = vunpack.c.l.b16 %v1586
        %v1607 = vunpack.c.l.b16 %v1587
        %v1608 = vunpack.c.l.b16 %v1588
        %v1609 = vunpack.c.l.b16 %v1589
        %v1610 = vunpack.c.l.b16 %v1590
        %v1611 = vpack.c.b16 %v1604, %v1603
        %v1612 = vpack.c.b16 %v1606, %v1605
        %v1613 = vpack.c.b16 %v1608, %v1607
        %v1614 = vpack.c.b16 %v1610, %v1609
        %vm1619 = vcmask 523264
        %v1621 = vsel %vm1619, %v1591, 0
        %v1624 = vsel %vm1619, %v1592, 0
        %1626 = vmatpush.bf16.msra.mxu0 0
        %1627 = vmatpush.bf16.msra.mxu0 0
        %1628 = vmatpush.bf16.msra.mxu0 0
        %1629 = vmatpush.bf16.msra.mxu0 0
        %1630 = vmatpush.bf16.msra.mxu0 %v1614
        %1631 = vmatpush.bf16.msra.mxu0 %v1613
        %1632 = vmatpush.bf16.msra.mxu0 %v1612
        %1633 = vmatpush.bf16.msra.mxu0 %v1611
        %1634 = vmatmul.bf16.gmra.mxu0 %v1621
        %v1635 = vpop.f32.mrf.mxu0
        %v1636 = vadd.f32 %v1594, %v1635
        %v1637 = vpop.f32.mrf.mxu0
        %v1638 = vadd.f32 %v1594, %v1637
        %1639 = vmatmul.bf16.gmra.mxu0 %v1624
        %v1640 = vpop.f32.mrf.mxu0
        %v1641 = vadd.f32 %v1594, %v1640
        %v1642 = vpop.f32.mrf.mxu0
        %v1643 = vadd.f32 %v1594, %v1642
        %1644 = vdwg.mxu0
        %v1645 = vadd.f32 %v1530, %v1636
        %v1646 = vadd.f32 %v1531, %v1638
        %v1647 = vadd.f32 %v1532, %v1641
        %v1648 = vadd.f32 %v1533, %v1643
        %v1649 = vsel %vm485, %v1645, 0.0
        %1650 = vadd.xlane.f32.xlu0 %v1649
        %v1651 = vpop.xlane.xlu0 %1650
        %v1652 = vsel %vm485, %v1646, 0.0
        %1653 = vadd.xlane.f32.xlu0 %v1652
        %v1654 = vpop.xlane.xlu0 %1653
        %v1655 = vsel %vm485, %v1647, 0.0
        %1656 = vadd.xlane.f32.xlu0 %v1655
        %v1657 = vpop.xlane.xlu0 %1656
        %v1658 = vsel %vm485, %v1648, 0.0
        %1659 = vadd.xlane.f32.xlu0 %v1658
        %v1660 = vpop.xlane.xlu0 %1659
        %v1661 = vmul.f32 %v1651, %v1447
        %v1662 = vmul.f32 %v1654, %v1447
        %v1663 = vmul.f32 %v1657, %v1447
        %v1664 = vmul.f32 %v1660, %v1447
        %v1665 = vsub.f32 %v1645, %v1661
        %v1666 = vsub.f32 %v1646, %v1662
        %v1667 = vsub.f32 %v1647, %v1663
        %v1668 = vsub.f32 %v1648, %v1664
        %v1669 = vmul.f32 %v1665, %v1665
        %v1670 = vmul.f32 %v1666, %v1666
        %v1671 = vmul.f32 %v1667, %v1667
        %v1672 = vmul.f32 %v1668, %v1668
        %v1673 = vsel %vm485, %v1669, 0.0
        %1674 = vadd.xlane.f32.xlu0 %v1673
        %v1675 = vpop.xlane.xlu0 %1674
        %v1676 = vsel %vm485, %v1670, 0.0
        %1677 = vadd.xlane.f32.xlu0 %v1676
        %v1678 = vpop.xlane.xlu0 %1677
        %v1679 = vsel %vm485, %v1671, 0.0
        %1680 = vadd.xlane.f32.xlu0 %v1679
        %v1681 = vpop.xlane.xlu0 %1680
        %v1682 = vsel %vm485, %v1672, 0.0
        %1683 = vadd.xlane.f32.xlu0 %v1682
        %v1684 = vpop.xlane.xlu0 %1683
        %v1685 = vmul.f32 %v1675, %v1447
        %v1686 = vmul.f32 %v1678, %v1447
        %v1687 = vmul.f32 %v1681, %v1447
        %v1688 = vmul.f32 %v1684, %v1447
        %v1689 = vadd.f32 %v1685, 1e-05
        %v1690 = vadd.f32 %v1686, 1e-05
        %v1691 = vadd.f32 %v1687, 1e-05
        %v1692 = vadd.f32 %v1688, 1e-05
        %v1693 = vrsqrt.pop %v1689
        %v1694 = vmul.f32 %v1693, %v1689
        %v1695 = vmul.f32 %v1694, %v1693
        %v1696 = vmul.f32 0.5, %v1695
        %v1697 = vsub.f32 1.5, %v1696
        %v1698 = vmul.f32 %v1693, %v1697
        %vm1699 = vweird.f32 %v1689
        %vm1700 = vweird.f32 %v1693
        %vm1701 = vmor %vm1699, %vm1700
        %v1702 = vsel %vm1701, %v1693, %v1698
        %v1703 = vrsqrt.pop %v1690
        %v1704 = vmul.f32 %v1703, %v1690
        %v1705 = vmul.f32 %v1704, %v1703
        %v1706 = vmul.f32 0.5, %v1705
        %v1707 = vsub.f32 1.5, %v1706
        %v1708 = vmul.f32 %v1703, %v1707
        %vm1709 = vweird.f32 %v1690
        %vm1710 = vweird.f32 %v1703
        %vm1711 = vmor %vm1709, %vm1710
        %v1712 = vsel %vm1711, %v1703, %v1708
        %v1713 = vrsqrt.pop %v1691
        %v1714 = vmul.f32 %v1713, %v1691
        %v1715 = vmul.f32 %v1714, %v1713
        %v1716 = vmul.f32 0.5, %v1715
        %v1717 = vsub.f32 1.5, %v1716
        %v1718 = vmul.f32 %v1713, %v1717
        %vm1719 = vweird.f32 %v1691
        %vm1720 = vweird.f32 %v1713
        %vm1721 = vmor %vm1719, %vm1720
        %v1722 = vsel %vm1721, %v1713, %v1718
        %v1723 = vrsqrt.pop %v1692
        %v1724 = vmul.f32 %v1723, %v1692
        %v1725 = vmul.f32 %v1724, %v1723
        %v1726 = vmul.f32 0.5, %v1725
        %v1727 = vsub.f32 1.5, %v1726
        %v1728 = vmul.f32 %v1723, %v1727
        %vm1729 = vweird.f32 %v1692
        %vm1730 = vweird.f32 %v1723
        %vm1731 = vmor %vm1729, %vm1730
        %v1732 = vsel %vm1731, %v1723, %v1728
        %v1733 = vmul.f32 %v1665, %v1702
        %v1734 = vmul.f32 %v1666, %v1712
        %v1735 = vmul.f32 %v1667, %v1722
        %v1736 = vmul.f32 %v1668, %v1732
        %v1737 = vperm.slane %v463, 1
        %v1738 = vmul.f32 %v1733, %v1737
        %v1739 = vmul.f32 %v1734, %v1737
        %v1740 = vmul.f32 %v1735, %v1737
        %v1741 = vmul.f32 %v1736, %v1737
        %v1742 = vperm.slane %v464, 1
        %v1743 = vadd.f32 %v1738, %v1742
        %v1744 = vadd.f32 %v1739, %v1742
        %v1745 = vadd.f32 %v1740, %v1742
        %v1746 = vadd.f32 %v1741, %v1742
        %v1747 = vld [vmem:[#allocation6 + $0x68] sm:$0x3]
        %v1748 = vld [vmem:[#allocation6 + $0x70] sm:$0x3]
        %v1749 = vld [vmem:[#allocation4 + $0x70] sm:$0xf]
        %v1750 = vld [vmem:[#allocation4 + $0x74] sm:$0xf]
        %v1751 = vld [vmem:[#allocation4 + $0x78] sm:$0xf]
        %v1752 = vld [vmem:[#allocation4 + $0x7c] sm:$0xf]
        %v1753 = vpack.c.bf16 %v1744, %v1743
        %v1754 = vpack.c.bf16 %v1746, %v1745
        %v1755 = vld [vmem:[#allocation6 + $0x48] sm:$0x1]
        %v1756 = vperm.slane %v1755, 0
        %v1761 = vunpack.c.l.b16 %v1749
        %v1762 = vunpack.c.l.b16 %v1750
        %v1763 = vunpack.c.l.b16 %v1751
        %v1764 = vunpack.c.l.b16 %v1752
        %v1765 = vpack.c.b16 %v1762, %v1761
        %v1766 = vpack.c.b16 %v1764, %v1763
        %v1770 = vsel %vm485, %v1753, 0
        %v1773 = vsel %vm485, %v1754, 0
        %1775 = vmatpush.bf16.msra.mxu0 0
        %1776 = vmatpush.bf16.msra.mxu0 0
        %1777 = vmatpush.bf16.msra.mxu0 0
        %1778 = vmatpush.bf16.msra.mxu0 0
        %1779 = vmatpush.bf16.msra.mxu0 0
        %1780 = vmatpush.bf16.msra.mxu0 0
        %1781 = vmatpush.bf16.msra.mxu0 %v1766
        %1782 = vmatpush.bf16.msra.mxu0 %v1765
        %1783 = vmatmul.bf16.gmra.mxu0 %v1770
        %v1784 = vpop.f32.mrf.mxu0
        %v1785 = vadd.f32 %v1756, %v1784
        %v1786 = vpop.f32.mrf.mxu0
        %v1787 = vadd.f32 %v1756, %v1786
        %1788 = vmatmul.bf16.gmra.mxu0 %v1773
        %v1789 = vpop.f32.mrf.mxu0
        %v1790 = vadd.f32 %v1756, %v1789
        %v1791 = vpop.f32.mrf.mxu0
        %v1792 = vadd.f32 %v1756, %v1791
        %1793 = vdwg.mxu0
        %v1794 = vpack.c.bf16 %v1785, %v1785
        %v1795 = vpack.c.bf16 %v1787, %v1787
        %v1798 = vunpack.c.l.b16 %v1794
        %v1799 = vunpack.c.l.b16 %v1795
        %v1800 = vpack.c.b16 %v1799, %v1798
        %1801 = vrot.lane.b32.xlu0 %v1800, 96
        %v1802 = vpop.permute.xlu0 %1801
        %v1804 = vsel %vm522, %v1800, 0
        %v1807 = vsel %vm522, %v1802, 0
        %1809 = vmatpush.bf16.xpose.msra.mxu0 0
        %1810 = vmatpush.bf16.xpose.msra.mxu0 0
        %1811 = vmatpush.bf16.xpose.msra.mxu0 0
        %1812 = vmatpush.bf16.xpose.msra.mxu0 0
        %1813 = vmatpush.bf16.xpose.msra.mxu0 0
        %1814 = vmatpush.bf16.xpose.msra.mxu0 0
        %1815 = vmatpush.bf16.xpose.msra.mxu0 0
        %1816 = vmatpush.bf16.xpose.msra.mxu0 %v1807
        %1817 = vmatmul.bf16.gmra.mxu0 %v1804
        %v1818 = vpop.f32.mrf.mxu0
        %v1819 = vadd.f32 %v511, %v1818
        %v1820 = vpop.f32.mrf.mxu0
        %v1821 = vadd.f32 %v512, %v1820
        %1822 = vdwg.mxu0
        %1823 = vrot.lane.b32.xlu0 %v1800, 120
        %v1824 = vpop.permute.xlu0 %1823
        %1825 = vrot.lane.b32.xlu0 %v1800, 88
        %v1826 = vpop.permute.xlu0 %1825
        %v1828 = vsel %vm522, %v1824, 0
        %v1831 = vsel %vm522, %v1826, 0
        %1833 = vmatpush.bf16.xpose.msra.mxu0 0
        %1834 = vmatpush.bf16.xpose.msra.mxu0 0
        %1835 = vmatpush.bf16.xpose.msra.mxu0 0
        %1836 = vmatpush.bf16.xpose.msra.mxu0 0
        %1837 = vmatpush.bf16.xpose.msra.mxu0 0
        %1838 = vmatpush.bf16.xpose.msra.mxu0 0
        %1839 = vmatpush.bf16.xpose.msra.mxu0 0
        %1840 = vmatpush.bf16.xpose.msra.mxu0 %v1831
        %1841 = vmatmul.bf16.gmra.mxu0 %v1828
        %v1842 = vpop.f32.mrf.mxu0
        %v1843 = vadd.f32 %v511, %v1842
        %v1844 = vpop.f32.mrf.mxu0
        %v1845 = vadd.f32 %v512, %v1844
        %1846 = vdwg.mxu0
        %1847 = vrot.lane.b32.xlu0 %v1800, 112
        %v1848 = vpop.permute.xlu0 %1847
        %1849 = vrot.lane.b32.xlu0 %v1800, 80
        %v1850 = vpop.permute.xlu0 %1849
        %v1852 = vsel %vm522, %v1848, 0
        %v1855 = vsel %vm522, %v1850, 0
        %1857 = vmatpush.bf16.xpose.msra.mxu0 0
        %1858 = vmatpush.bf16.xpose.msra.mxu0 0
        %1859 = vmatpush.bf16.xpose.msra.mxu0 0
        %1860 = vmatpush.bf16.xpose.msra.mxu0 0
        %1861 = vmatpush.bf16.xpose.msra.mxu0 0
        %1862 = vmatpush.bf16.xpose.msra.mxu0 0
        %1863 = vmatpush.bf16.xpose.msra.mxu0 0
        %1864 = vmatpush.bf16.xpose.msra.mxu0 %v1855
        %1865 = vmatmul.bf16.gmra.mxu0 %v1852
        %v1866 = vpop.f32.mrf.mxu0
        %v1867 = vadd.f32 %v511, %v1866
        %v1868 = vpop.f32.mrf.mxu0
        %v1869 = vadd.f32 %v512, %v1868
        %1870 = vdwg.mxu0
        %1871 = vrot.lane.b32.xlu0 %v1800, 104
        %v1872 = vpop.permute.xlu0 %1871
        %1873 = vrot.lane.b32.xlu0 %v1800, 72
        %v1874 = vpop.permute.xlu0 %1873
        %v1876 = vsel %vm522, %v1872, 0
        %v1879 = vsel %vm522, %v1874, 0
        %1881 = vmatpush.bf16.xpose.msra.mxu0 0
        %1882 = vmatpush.bf16.xpose.msra.mxu0 0
        %1883 = vmatpush.bf16.xpose.msra.mxu0 0
        %1884 = vmatpush.bf16.xpose.msra.mxu0 0
        %1885 = vmatpush.bf16.xpose.msra.mxu0 0
        %1886 = vmatpush.bf16.xpose.msra.mxu0 0
        %1887 = vmatpush.bf16.xpose.msra.mxu0 0
        %1888 = vmatpush.bf16.xpose.msra.mxu0 %v1879
        %1889 = vmatmul.bf16.gmra.mxu0 %v1876
        %v1890 = vpop.f32.mrf.mxu0
        %v1891 = vadd.f32 %v511, %v1890
        %v1892 = vpop.f32.mrf.mxu0
        %v1893 = vadd.f32 %v512, %v1892
        %1894 = vdwg.mxu0
        %v1895 = vsel %vm615, %v1819, -inf
        %1896 = vmax.xlane.f32.xlu0 %v1895
        %v1897 = vpop.xlane.xlu0 %1896
        %v1898 = vsel %vm615, %v1821, -inf
        %1899 = vmax.xlane.f32.xlu0 %v1898
        %v1900 = vpop.xlane.xlu0 %1899
        %v1901 = vsel %vm615, %v1843, -inf
        %1902 = vmax.xlane.f32.xlu0 %v1901
        %v1903 = vpop.xlane.xlu0 %1902
        %v1904 = vsel %vm615, %v1845, -inf
        %1905 = vmax.xlane.f32.xlu0 %v1904
        %v1906 = vpop.xlane.xlu0 %1905
        %v1907 = vsel %vm615, %v1867, -inf
        %1908 = vmax.xlane.f32.xlu0 %v1907
        %v1909 = vpop.xlane.xlu0 %1908
        %v1910 = vsel %vm615, %v1869, -inf
        %1911 = vmax.xlane.f32.xlu0 %v1910
        %v1912 = vpop.xlane.xlu0 %1911
        %v1913 = vsel %vm615, %v1891, -inf
        %1914 = vmax.xlane.f32.xlu0 %v1913
        %v1915 = vpop.xlane.xlu0 %1914
        %v1916 = vsel %vm615, %v1893, -inf
        %1917 = vmax.xlane.f32.xlu0 %v1916
        %v1918 = vpop.xlane.xlu0 %1917
        %v1919 = vsub.f32 %v1819, %v1897
        %v1920 = vsub.f32 %v1821, %v1900
        %v1921 = vsub.f32 %v1843, %v1903
        %v1922 = vsub.f32 %v1845, %v1906
        %v1923 = vsub.f32 %v1867, %v1909
        %v1924 = vsub.f32 %v1869, %v1912
        %v1925 = vsub.f32 %v1891, %v1915
        %v1926 = vsub.f32 %v1893, %v1918
        %v1927 = vmul.f32 %v1919, 1.442695
        %v1928 = vpow.pop %v1927
        %v1929 = vmul.f32 %v1920, 1.442695
        %v1930 = vpow.pop %v1929
        %v1931 = vmul.f32 %v1921, 1.442695
        %v1932 = vpow.pop %v1931
        %v1933 = vmul.f32 %v1922, 1.442695
        %v1934 = vpow.pop %v1933
        %v1935 = vmul.f32 %v1923, 1.442695
        %v1936 = vpow.pop %v1935
        %v1937 = vmul.f32 %v1924, 1.442695
        %v1938 = vpow.pop %v1937
        %v1939 = vmul.f32 %v1925, 1.442695
        %v1940 = vpow.pop %v1939
        %v1941 = vmul.f32 %v1926, 1.442695
        %v1942 = vpow.pop %v1941
        %v1943 = vsel %vm615, %v1928, 0.0
        %1944 = vadd.xlane.f32.xlu0 %v1943
        %v1945 = vpop.xlane.xlu0 %1944
        %v1946 = vsel %vm615, %v1930, 0.0
        %1947 = vadd.xlane.f32.xlu0 %v1946
        %v1948 = vpop.xlane.xlu0 %1947
        %v1949 = vsel %vm615, %v1932, 0.0
        %1950 = vadd.xlane.f32.xlu0 %v1949
        %v1951 = vpop.xlane.xlu0 %1950
        %v1952 = vsel %vm615, %v1934, 0.0
        %1953 = vadd.xlane.f32.xlu0 %v1952
        %v1954 = vpop.xlane.xlu0 %1953
        %v1955 = vsel %vm615, %v1936, 0.0
        %1956 = vadd.xlane.f32.xlu0 %v1955
        %v1957 = vpop.xlane.xlu0 %1956
        %v1958 = vsel %vm615, %v1938, 0.0
        %1959 = vadd.xlane.f32.xlu0 %v1958
        %v1960 = vpop.xlane.xlu0 %1959
        %v1961 = vsel %vm615, %v1940, 0.0
        %1962 = vadd.xlane.f32.xlu0 %v1961
        %v1963 = vpop.xlane.xlu0 %1962
        %v1964 = vsel %vm615, %v1942, 0.0
        %1965 = vadd.xlane.f32.xlu0 %v1964
        %v1966 = vpop.xlane.xlu0 %1965
        %v1967 = vrcp.pop %v1945
        %v1968 = vmul.f32 %v1945, %v1967
        %v1969 = vsub.f32 1.0, %v1968
        %v1970 = vmul.f32 %v1967, %v1969
        %v1971 = vadd.f32 %v1967, %v1970
        %vm1972 = vweird.f32 %v1945
        %vm1973 = vweird.f32 %v1967
        %vm1974 = vmor %vm1972, %vm1973
        %v1975 = vsel %vm1974, %v1967, %v1971
        %v1976 = vand.u32 2147483647, %v1945
        %vm1977 = vcmp.eq.f32.partialorder %v1976, 8.507059e+37
        %v1978 = vand.u32 %v1945, 2147483648
        %v1979 = vor.u32 1.1754944e-38, %v1978
        %v1980 = vsel %vm1977, %v1979, %v1975
        %v1981 = vmul.f32 %v1928, %v1980
        %v1982 = vrcp.pop %v1948
        %v1983 = vmul.f32 %v1948, %v1982
        %v1984 = vsub.f32 1.0, %v1983
        %v1985 = vmul.f32 %v1982, %v1984
        %v1986 = vadd.f32 %v1982, %v1985
        %vm1987 = vweird.f32 %v1948
        %vm1988 = vweird.f32 %v1982
        %vm1989 = vmor %vm1987, %vm1988
        %v1990 = vsel %vm1989, %v1982, %v1986
        %v1991 = vand.u32 2147483647, %v1948
        %vm1992 = vcmp.eq.f32.partialorder %v1991, 8.507059e+37
        %v1993 = vand.u32 %v1948, 2147483648
        %v1994 = vor.u32 1.1754944e-38, %v1993
        %v1995 = vsel %vm1992, %v1994, %v1990
        %v1996 = vmul.f32 %v1930, %v1995
        %v1997 = vrcp.pop %v1951
        %v1998 = vmul.f32 %v1951, %v1997
        %v1999 = vsub.f32 1.0, %v1998
        %v2000 = vmul.f32 %v1997, %v1999
        %v2001 = vadd.f32 %v1997, %v2000
        %vm2002 = vweird.f32 %v1951
        %vm2003 = vweird.f32 %v1997
        %vm2004 = vmor %vm2002, %vm2003
        %v2005 = vsel %vm2004, %v1997, %v2001
        %v2006 = vand.u32 2147483647, %v1951
        %vm2007 = vcmp.eq.f32.partialorder %v2006, 8.507059e+37
        %v2008 = vand.u32 %v1951, 2147483648
        %v2009 = vor.u32 1.1754944e-38, %v2008
        %v2010 = vsel %vm2007, %v2009, %v2005
        %v2011 = vmul.f32 %v1932, %v2010
        %v2012 = vrcp.pop %v1954
        %v2013 = vmul.f32 %v1954, %v2012
        %v2014 = vsub.f32 1.0, %v2013
        %v2015 = vmul.f32 %v2012, %v2014
        %v2016 = vadd.f32 %v2012, %v2015
        %vm2017 = vweird.f32 %v1954
        %vm2018 = vweird.f32 %v2012
        %vm2019 = vmor %vm2017, %vm2018
        %v2020 = vsel %vm2019, %v2012, %v2016
        %v2021 = vand.u32 2147483647, %v1954
        %vm2022 = vcmp.eq.f32.partialorder %v2021, 8.507059e+37
        %v2023 = vand.u32 %v1954, 2147483648
        %v2024 = vor.u32 1.1754944e-38, %v2023
        %v2025 = vsel %vm2022, %v2024, %v2020
        %v2026 = vmul.f32 %v1934, %v2025
        %v2027 = vrcp.pop %v1957
        %v2028 = vmul.f32 %v1957, %v2027
        %v2029 = vsub.f32 1.0, %v2028
        %v2030 = vmul.f32 %v2027, %v2029
        %v2031 = vadd.f32 %v2027, %v2030
        %vm2032 = vweird.f32 %v1957
        %vm2033 = vweird.f32 %v2027
        %vm2034 = vmor %vm2032, %vm2033
        %v2035 = vsel %vm2034, %v2027, %v2031
        %v2036 = vand.u32 2147483647, %v1957
        %vm2037 = vcmp.eq.f32.partialorder %v2036, 8.507059e+37
        %v2038 = vand.u32 %v1957, 2147483648
        %v2039 = vor.u32 1.1754944e-38, %v2038
        %v2040 = vsel %vm2037, %v2039, %v2035
        %v2041 = vmul.f32 %v1936, %v2040
        %v2042 = vrcp.pop %v1960
        %v2043 = vmul.f32 %v1960, %v2042
        %v2044 = vsub.f32 1.0, %v2043
        %v2045 = vmul.f32 %v2042, %v2044
        %v2046 = vadd.f32 %v2042, %v2045
        %vm2047 = vweird.f32 %v1960
        %vm2048 = vweird.f32 %v2042
        %vm2049 = vmor %vm2047, %vm2048
        %v2050 = vsel %vm2049, %v2042, %v2046
        %v2051 = vand.u32 2147483647, %v1960
        %vm2052 = vcmp.eq.f32.partialorder %v2051, 8.507059e+37
        %v2053 = vand.u32 %v1960, 2147483648
        %v2054 = vor.u32 1.1754944e-38, %v2053
        %v2055 = vsel %vm2052, %v2054, %v2050
        %v2056 = vmul.f32 %v1938, %v2055
        %v2057 = vrcp.pop %v1963
        %v2058 = vmul.f32 %v1963, %v2057
        %v2059 = vsub.f32 1.0, %v2058
        %v2060 = vmul.f32 %v2057, %v2059
        %v2061 = vadd.f32 %v2057, %v2060
        %vm2062 = vweird.f32 %v1963
        %vm2063 = vweird.f32 %v2057
        %vm2064 = vmor %vm2062, %vm2063
        %v2065 = vsel %vm2064, %v2057, %v2061
        %v2066 = vand.u32 2147483647, %v1963
        %vm2067 = vcmp.eq.f32.partialorder %v2066, 8.507059e+37
        %v2068 = vand.u32 %v1963, 2147483648
        %v2069 = vor.u32 1.1754944e-38, %v2068
        %v2070 = vsel %vm2067, %v2069, %v2065
        %v2071 = vmul.f32 %v1940, %v2070
        %v2072 = vrcp.pop %v1966
        %v2073 = vmul.f32 %v1966, %v2072
        %v2074 = vsub.f32 1.0, %v2073
        %v2075 = vmul.f32 %v2072, %v2074
        %v2076 = vadd.f32 %v2072, %v2075
        %vm2077 = vweird.f32 %v1966
        %vm2078 = vweird.f32 %v2072
        %vm2079 = vmor %vm2077, %vm2078
        %v2080 = vsel %vm2079, %v2072, %v2076
        %v2081 = vand.u32 2147483647, %v1966
        %vm2082 = vcmp.eq.f32.partialorder %v2081, 8.507059e+37
        %v2083 = vand.u32 %v1966, 2147483648
        %v2084 = vor.u32 1.1754944e-38, %v2083
        %v2085 = vsel %vm2082, %v2084, %v2080
        %v2086 = vmul.f32 %v1942, %v2085
        %v2087 = vpack.c.bf16 %v1981, %v1981
        %v2088 = vpack.c.bf16 %v1996, %v1996
        %v2089 = vpack.c.bf16 %v2011, %v2011
        %v2090 = vpack.c.bf16 %v2026, %v2026
        %v2091 = vpack.c.bf16 %v2041, %v2041
        %v2092 = vpack.c.bf16 %v2056, %v2056
        %v2093 = vpack.c.bf16 %v2071, %v2071
        %v2094 = vpack.c.bf16 %v2086, %v2086
        %v2097 = vunpack.c.l.b16 %v2087
        %v2098 = vunpack.c.l.b16 %v2088
        %v2099 = vpack.c.b16 %v2098, %v2097
        %2100 = vrot.lane.b32.xlu0 %v1800, 64
        %v2101 = vpop.permute.xlu0 %2100
        %v2104 = vsel %vm615, %v2099, 0
        %2106 = vmatpush.bf16.msra.mxu0 0
        %2107 = vmatpush.bf16.msra.mxu0 0
        %2108 = vmatpush.bf16.msra.mxu0 0
        %2109 = vmatpush.bf16.msra.mxu0 0
        %2110 = vmatpush.bf16.msra.mxu0 0
        %2111 = vmatpush.bf16.msra.mxu0 0
        %2112 = vmatpush.bf16.msra.mxu0 0
        %2113 = vmatpush.bf16.msra.mxu0 %v2101
        %2114 = vmatmul.bf16.gmra.mxu0 %v2104
        %v2115 = vpop.f32.mrf.mxu0
        %v2116 = vadd.f32 0.0, %v2115
        %v2117 = vpop.f32.mrf.mxu0
        %v2118 = vadd.f32 0.0, %v2117
        %2119 = vdwg.mxu0
        %v2122 = vunpack.c.l.b16 %v2089
        %v2123 = vunpack.c.l.b16 %v2090
        %v2124 = vpack.c.b16 %v2123, %v2122
        %2125 = vrot.lane.b32.xlu0 %v1800, 56
        %v2126 = vpop.permute.xlu0 %2125
        %v2129 = vsel %vm615, %v2124, 0
        %2131 = vmatpush.bf16.msra.mxu0 0
        %2132 = vmatpush.bf16.msra.mxu0 0
        %2133 = vmatpush.bf16.msra.mxu0 0
        %2134 = vmatpush.bf16.msra.mxu0 0
        %2135 = vmatpush.bf16.msra.mxu0 0
        %2136 = vmatpush.bf16.msra.mxu0 0
        %2137 = vmatpush.bf16.msra.mxu0 0
        %2138 = vmatpush.bf16.msra.mxu0 %v2126
        %2139 = vmatmul.bf16.gmra.mxu0 %v2129
        %v2140 = vpop.f32.mrf.mxu0
        %v2141 = vadd.f32 0.0, %v2140
        %v2142 = vpop.f32.mrf.mxu0
        %v2143 = vadd.f32 0.0, %v2142
        %2144 = vdwg.mxu0
        %v2147 = vunpack.c.l.b16 %v2091
        %v2148 = vunpack.c.l.b16 %v2092
        %v2149 = vpack.c.b16 %v2148, %v2147
        %2150 = vrot.lane.b32.xlu0 %v1800, 48
        %v2151 = vpop.permute.xlu0 %2150
        %v2154 = vsel %vm615, %v2149, 0
        %2156 = vmatpush.bf16.msra.mxu0 0
        %2157 = vmatpush.bf16.msra.mxu0 0
        %2158 = vmatpush.bf16.msra.mxu0 0
        %2159 = vmatpush.bf16.msra.mxu0 0
        %2160 = vmatpush.bf16.msra.mxu0 0
        %2161 = vmatpush.bf16.msra.mxu0 0
        %2162 = vmatpush.bf16.msra.mxu0 0
        %2163 = vmatpush.bf16.msra.mxu0 %v2151
        %2164 = vmatmul.bf16.gmra.mxu0 %v2154
        %v2165 = vpop.f32.mrf.mxu0
        %v2166 = vadd.f32 0.0, %v2165
        %v2167 = vpop.f32.mrf.mxu0
        %v2168 = vadd.f32 0.0, %v2167
        %2169 = vdwg.mxu0
        %v2172 = vunpack.c.l.b16 %v2093
        %v2173 = vunpack.c.l.b16 %v2094
        %v2174 = vpack.c.b16 %v2173, %v2172
        %2175 = vrot.lane.b32.xlu0 %v1800, 40
        %v2176 = vpop.permute.xlu0 %2175
        %v2179 = vsel %vm615, %v2174, 0
        %2181 = vmatpush.bf16.msra.mxu0 0
        %2182 = vmatpush.bf16.msra.mxu0 0
        %2183 = vmatpush.bf16.msra.mxu0 0
        %2184 = vmatpush.bf16.msra.mxu0 0
        %2185 = vmatpush.bf16.msra.mxu0 0
        %2186 = vmatpush.bf16.msra.mxu0 0
        %2187 = vmatpush.bf16.msra.mxu0 0
        %2188 = vmatpush.bf16.msra.mxu0 %v2176
        %2189 = vmatmul.bf16.gmra.mxu0 %v2179
        %v2190 = vpop.f32.mrf.mxu0
        %v2191 = vadd.f32 0.0, %v2190
        %v2192 = vpop.f32.mrf.mxu0
        %v2193 = vadd.f32 0.0, %v2192
        %2194 = vdwg.mxu0
        %2197 = vrot.lane.b32.xlu0 %v2141, 8
        %v2198 = vpop.permute.xlu0 %2197
        %2199 = vrot.lane.b32.xlu0 %v2143, 8
        %v2200 = vpop.permute.xlu0 %2199
        %2205 = vrot.lane.b32.xlu0 %v2166, 16
        %v2206 = vpop.permute.xlu0 %2205
        %2207 = vrot.lane.b32.xlu0 %v2168, 16
        %v2208 = vpop.permute.xlu0 %2207
        %2213 = vrot.lane.b32.xlu0 %v2191, 24
        %v2214 = vpop.permute.xlu0 %2213
        %2215 = vrot.lane.b32.xlu0 %v2193, 24
        %v2216 = vpop.permute.xlu0 %2215
        %v2219 = vsel %vm522, %v2116, %v2198
        %v2220 = vsel %vm522, %v2118, %v2200
        %v2221 = vsel %vm615, %v2219, %v2206
        %v2222 = vsel %vm615, %v2220, %v2208
        %v2223 = vsel %vm944, %v2221, %v2214
        %v2224 = vsel %vm944, %v2222, %v2216
        %v2225 = vpack.c.bf16 %v1790, %v1790
        %v2226 = vpack.c.bf16 %v1792, %v1792
        %v2229 = vunpack.c.l.b16 %v2225
        %v2230 = vunpack.c.l.b16 %v2226
        %v2231 = vpack.c.b16 %v2230, %v2229
        %2232 = vrot.lane.b32.xlu0 %v2231, 96
        %v2233 = vpop.permute.xlu0 %2232
        %v2235 = vsel %vm522, %v2231, 0
        %v2238 = vsel %vm522, %v2233, 0
        %2240 = vmatpush.bf16.xpose.msra.mxu0 0
        %2241 = vmatpush.bf16.xpose.msra.mxu0 0
        %2242 = vmatpush.bf16.xpose.msra.mxu0 0
        %2243 = vmatpush.bf16.xpose.msra.mxu0 0
        %2244 = vmatpush.bf16.xpose.msra.mxu0 0
        %2245 = vmatpush.bf16.xpose.msra.mxu0 0
        %2246 = vmatpush.bf16.xpose.msra.mxu0 0
        %2247 = vmatpush.bf16.xpose.msra.mxu0 %v2238
        %2248 = vmatmul.bf16.gmra.mxu0 %v2235
        %v2249 = vpop.f32.mrf.mxu0
        %v2250 = vadd.f32 %v947, %v2249
        %v2251 = vpop.f32.mrf.mxu0
        %v2252 = vadd.f32 %v948, %v2251
        %2253 = vdwg.mxu0
        %2254 = vrot.lane.b32.xlu0 %v2231, 120
        %v2255 = vpop.permute.xlu0 %2254
        %2256 = vrot.lane.b32.xlu0 %v2231, 88
        %v2257 = vpop.permute.xlu0 %2256
        %v2259 = vsel %vm522, %v2255, 0
        %v2262 = vsel %vm522, %v2257, 0
        %2264 = vmatpush.bf16.xpose.msra.mxu0 0
        %2265 = vmatpush.bf16.xpose.msra.mxu0 0
        %2266 = vmatpush.bf16.xpose.msra.mxu0 0
        %2267 = vmatpush.bf16.xpose.msra.mxu0 0
        %2268 = vmatpush.bf16.xpose.msra.mxu0 0
        %2269 = vmatpush.bf16.xpose.msra.mxu0 0
        %2270 = vmatpush.bf16.xpose.msra.mxu0 0
        %2271 = vmatpush.bf16.xpose.msra.mxu0 %v2262
        %2272 = vmatmul.bf16.gmra.mxu0 %v2259
        %v2273 = vpop.f32.mrf.mxu0
        %v2274 = vadd.f32 %v947, %v2273
        %v2275 = vpop.f32.mrf.mxu0
        %v2276 = vadd.f32 %v948, %v2275
        %2277 = vdwg.mxu0
        %2278 = vrot.lane.b32.xlu0 %v2231, 112
        %v2279 = vpop.permute.xlu0 %2278
        %2280 = vrot.lane.b32.xlu0 %v2231, 80
        %v2281 = vpop.permute.xlu0 %2280
        %v2283 = vsel %vm522, %v2279, 0
        %v2286 = vsel %vm522, %v2281, 0
        %2288 = vmatpush.bf16.xpose.msra.mxu0 0
        %2289 = vmatpush.bf16.xpose.msra.mxu0 0
        %2290 = vmatpush.bf16.xpose.msra.mxu0 0
        %2291 = vmatpush.bf16.xpose.msra.mxu0 0
        %2292 = vmatpush.bf16.xpose.msra.mxu0 0
        %2293 = vmatpush.bf16.xpose.msra.mxu0 0
        %2294 = vmatpush.bf16.xpose.msra.mxu0 0
        %2295 = vmatpush.bf16.xpose.msra.mxu0 %v2286
        %2296 = vmatmul.bf16.gmra.mxu0 %v2283
        %v2297 = vpop.f32.mrf.mxu0
        %v2298 = vadd.f32 %v947, %v2297
        %v2299 = vpop.f32.mrf.mxu0
        %v2300 = vadd.f32 %v948, %v2299
        %2301 = vdwg.mxu0
        %2302 = vrot.lane.b32.xlu0 %v2231, 104
        %v2303 = vpop.permute.xlu0 %2302
        %2304 = vrot.lane.b32.xlu0 %v2231, 72
        %v2305 = vpop.permute.xlu0 %2304
        %v2307 = vsel %vm522, %v2303, 0
        %v2310 = vsel %vm522, %v2305, 0
        %2312 = vmatpush.bf16.xpose.msra.mxu0 0
        %2313 = vmatpush.bf16.xpose.msra.mxu0 0
        %2314 = vmatpush.bf16.xpose.msra.mxu0 0
        %2315 = vmatpush.bf16.xpose.msra.mxu0 0
        %2316 = vmatpush.bf16.xpose.msra.mxu0 0
        %2317 = vmatpush.bf16.xpose.msra.mxu0 0
        %2318 = vmatpush.bf16.xpose.msra.mxu0 0
        %2319 = vmatpush.bf16.xpose.msra.mxu0 %v2310
        %2320 = vmatmul.bf16.gmra.mxu0 %v2307
        %v2321 = vpop.f32.mrf.mxu0
        %v2322 = vadd.f32 %v947, %v2321
        %v2323 = vpop.f32.mrf.mxu0
        %v2324 = vadd.f32 %v948, %v2323
        %2325 = vdwg.mxu0
        %v2326 = vsel %vm615, %v2250, -inf
        %2327 = vmax.xlane.f32.xlu0 %v2326
        %v2328 = vpop.xlane.xlu0 %2327
        %v2329 = vsel %vm615, %v2252, -inf
        %2330 = vmax.xlane.f32.xlu0 %v2329
        %v2331 = vpop.xlane.xlu0 %2330
        %v2332 = vsel %vm615, %v2274, -inf
        %2333 = vmax.xlane.f32.xlu0 %v2332
        %v2334 = vpop.xlane.xlu0 %2333
        %v2335 = vsel %vm615, %v2276, -inf
        %2336 = vmax.xlane.f32.xlu0 %v2335
        %v2337 = vpop.xlane.xlu0 %2336
        %v2338 = vsel %vm615, %v2298, -inf
        %2339 = vmax.xlane.f32.xlu0 %v2338
        %v2340 = vpop.xlane.xlu0 %2339
        %v2341 = vsel %vm615, %v2300, -inf
        %2342 = vmax.xlane.f32.xlu0 %v2341
        %v2343 = vpop.xlane.xlu0 %2342
        %v2344 = vsel %vm615, %v2322, -inf
        %2345 = vmax.xlane.f32.xlu0 %v2344
        %v2346 = vpop.xlane.xlu0 %2345
        %v2347 = vsel %vm615, %v2324, -inf
        %2348 = vmax.xlane.f32.xlu0 %v2347
        %v2349 = vpop.xlane.xlu0 %2348
        %v2350 = vsub.f32 %v2250, %v2328
        %v2351 = vsub.f32 %v2252, %v2331
        %v2352 = vsub.f32 %v2274, %v2334
        %v2353 = vsub.f32 %v2276, %v2337
        %v2354 = vsub.f32 %v2298, %v2340
        %v2355 = vsub.f32 %v2300, %v2343
        %v2356 = vsub.f32 %v2322, %v2346
        %v2357 = vsub.f32 %v2324, %v2349
        %v2358 = vmul.f32 %v2350, 1.442695
        %v2359 = vpow.pop %v2358
        %v2360 = vmul.f32 %v2351, 1.442695
        %v2361 = vpow.pop %v2360
        %v2362 = vmul.f32 %v2352, 1.442695
        %v2363 = vpow.pop %v2362
        %v2364 = vmul.f32 %v2353, 1.442695
        %v2365 = vpow.pop %v2364
        %v2366 = vmul.f32 %v2354, 1.442695
        %v2367 = vpow.pop %v2366
        %v2368 = vmul.f32 %v2355, 1.442695
        %v2369 = vpow.pop %v2368
        %v2370 = vmul.f32 %v2356, 1.442695
        %v2371 = vpow.pop %v2370
        %v2372 = vmul.f32 %v2357, 1.442695
        %v2373 = vpow.pop %v2372
        %v2374 = vsel %vm615, %v2359, 0.0
        %2375 = vadd.xlane.f32.xlu0 %v2374
        %v2376 = vpop.xlane.xlu0 %2375
        %v2377 = vsel %vm615, %v2361, 0.0
        %2378 = vadd.xlane.f32.xlu0 %v2377
        %v2379 = vpop.xlane.xlu0 %2378
        %v2380 = vsel %vm615, %v2363, 0.0
        %2381 = vadd.xlane.f32.xlu0 %v2380
        %v2382 = vpop.xlane.xlu0 %2381
        %v2383 = vsel %vm615, %v2365, 0.0
        %2384 = vadd.xlane.f32.xlu0 %v2383
        %v2385 = vpop.xlane.xlu0 %2384
        %v2386 = vsel %vm615, %v2367, 0.0
        %2387 = vadd.xlane.f32.xlu0 %v2386
        %v2388 = vpop.xlane.xlu0 %2387
        %v2389 = vsel %vm615, %v2369, 0.0
        %2390 = vadd.xlane.f32.xlu0 %v2389
        %v2391 = vpop.xlane.xlu0 %2390
        %v2392 = vsel %vm615, %v2371, 0.0
        %2393 = vadd.xlane.f32.xlu0 %v2392
        %v2394 = vpop.xlane.xlu0 %2393
        %v2395 = vsel %vm615, %v2373, 0.0
        %2396 = vadd.xlane.f32.xlu0 %v2395
        %v2397 = vpop.xlane.xlu0 %2396
        %v2398 = vrcp.pop %v2376
        %v2399 = vmul.f32 %v2376, %v2398
        %v2400 = vsub.f32 1.0, %v2399
        %v2401 = vmul.f32 %v2398, %v2400
        %v2402 = vadd.f32 %v2398, %v2401
        %vm2403 = vweird.f32 %v2376
        %vm2404 = vweird.f32 %v2398
        %vm2405 = vmor %vm2403, %vm2404
        %v2406 = vsel %vm2405, %v2398, %v2402
        %v2407 = vand.u32 2147483647, %v2376
        %vm2408 = vcmp.eq.f32.partialorder %v2407, 8.507059e+37
        %v2409 = vand.u32 %v2376, 2147483648
        %v2410 = vor.u32 1.1754944e-38, %v2409
        %v2411 = vsel %vm2408, %v2410, %v2406
        %v2412 = vmul.f32 %v2359, %v2411
        %v2413 = vrcp.pop %v2379
        %v2414 = vmul.f32 %v2379, %v2413
        %v2415 = vsub.f32 1.0, %v2414
        %v2416 = vmul.f32 %v2413, %v2415
        %v2417 = vadd.f32 %v2413, %v2416
        %vm2418 = vweird.f32 %v2379
        %vm2419 = vweird.f32 %v2413
        %vm2420 = vmor %vm2418, %vm2419
        %v2421 = vsel %vm2420, %v2413, %v2417
        %v2422 = vand.u32 2147483647, %v2379
        %vm2423 = vcmp.eq.f32.partialorder %v2422, 8.507059e+37
        %v2424 = vand.u32 %v2379, 2147483648
        %v2425 = vor.u32 1.1754944e-38, %v2424
        %v2426 = vsel %vm2423, %v2425, %v2421
        %v2427 = vmul.f32 %v2361, %v2426
        %v2428 = vrcp.pop %v2382
        %v2429 = vmul.f32 %v2382, %v2428
        %v2430 = vsub.f32 1.0, %v2429
        %v2431 = vmul.f32 %v2428, %v2430
        %v2432 = vadd.f32 %v2428, %v2431
        %vm2433 = vweird.f32 %v2382
        %vm2434 = vweird.f32 %v2428
        %vm2435 = vmor %vm2433, %vm2434
        %v2436 = vsel %vm2435, %v2428, %v2432
        %v2437 = vand.u32 2147483647, %v2382
        %vm2438 = vcmp.eq.f32.partialorder %v2437, 8.507059e+37
        %v2439 = vand.u32 %v2382, 2147483648
        %v2440 = vor.u32 1.1754944e-38, %v2439
        %v2441 = vsel %vm2438, %v2440, %v2436
        %v2442 = vmul.f32 %v2363, %v2441
        %v2443 = vrcp.pop %v2385
        %v2444 = vmul.f32 %v2385, %v2443
        %v2445 = vsub.f32 1.0, %v2444
        %v2446 = vmul.f32 %v2443, %v2445
        %v2447 = vadd.f32 %v2443, %v2446
        %vm2448 = vweird.f32 %v2385
        %vm2449 = vweird.f32 %v2443
        %vm2450 = vmor %vm2448, %vm2449
        %v2451 = vsel %vm2450, %v2443, %v2447
        %v2452 = vand.u32 2147483647, %v2385
        %vm2453 = vcmp.eq.f32.partialorder %v2452, 8.507059e+37
        %v2454 = vand.u32 %v2385, 2147483648
        %v2455 = vor.u32 1.1754944e-38, %v2454
        %v2456 = vsel %vm2453, %v2455, %v2451
        %v2457 = vmul.f32 %v2365, %v2456
        %v2458 = vrcp.pop %v2388
        %v2459 = vmul.f32 %v2388, %v2458
        %v2460 = vsub.f32 1.0, %v2459
        %v2461 = vmul.f32 %v2458, %v2460
        %v2462 = vadd.f32 %v2458, %v2461
        %vm2463 = vweird.f32 %v2388
        %vm2464 = vweird.f32 %v2458
        %vm2465 = vmor %vm2463, %vm2464
        %v2466 = vsel %vm2465, %v2458, %v2462
        %v2467 = vand.u32 2147483647, %v2388
        %vm2468 = vcmp.eq.f32.partialorder %v2467, 8.507059e+37
        %v2469 = vand.u32 %v2388, 2147483648
        %v2470 = vor.u32 1.1754944e-38, %v2469
        %v2471 = vsel %vm2468, %v2470, %v2466
        %v2472 = vmul.f32 %v2367, %v2471
        %v2473 = vrcp.pop %v2391
        %v2474 = vmul.f32 %v2391, %v2473
        %v2475 = vsub.f32 1.0, %v2474
        %v2476 = vmul.f32 %v2473, %v2475
        %v2477 = vadd.f32 %v2473, %v2476
        %vm2478 = vweird.f32 %v2391
        %vm2479 = vweird.f32 %v2473
        %vm2480 = vmor %vm2478, %vm2479
        %v2481 = vsel %vm2480, %v2473, %v2477
        %v2482 = vand.u32 2147483647, %v2391
        %vm2483 = vcmp.eq.f32.partialorder %v2482, 8.507059e+37
        %v2484 = vand.u32 %v2391, 2147483648
        %v2485 = vor.u32 1.1754944e-38, %v2484
        %v2486 = vsel %vm2483, %v2485, %v2481
        %v2487 = vmul.f32 %v2369, %v2486
        %v2488 = vrcp.pop %v2394
        %v2489 = vmul.f32 %v2394, %v2488
        %v2490 = vsub.f32 1.0, %v2489
        %v2491 = vmul.f32 %v2488, %v2490
        %v2492 = vadd.f32 %v2488, %v2491
        %vm2493 = vweird.f32 %v2394
        %vm2494 = vweird.f32 %v2488
        %vm2495 = vmor %vm2493, %vm2494
        %v2496 = vsel %vm2495, %v2488, %v2492
        %v2497 = vand.u32 2147483647, %v2394
        %vm2498 = vcmp.eq.f32.partialorder %v2497, 8.507059e+37
        %v2499 = vand.u32 %v2394, 2147483648
        %v2500 = vor.u32 1.1754944e-38, %v2499
        %v2501 = vsel %vm2498, %v2500, %v2496
        %v2502 = vmul.f32 %v2371, %v2501
        %v2503 = vrcp.pop %v2397
        %v2504 = vmul.f32 %v2397, %v2503
        %v2505 = vsub.f32 1.0, %v2504
        %v2506 = vmul.f32 %v2503, %v2505
        %v2507 = vadd.f32 %v2503, %v2506
        %vm2508 = vweird.f32 %v2397
        %vm2509 = vweird.f32 %v2503
        %vm2510 = vmor %vm2508, %vm2509
        %v2511 = vsel %vm2510, %v2503, %v2507
        %v2512 = vand.u32 2147483647, %v2397
        %vm2513 = vcmp.eq.f32.partialorder %v2512, 8.507059e+37
        %v2514 = vand.u32 %v2397, 2147483648
        %v2515 = vor.u32 1.1754944e-38, %v2514
        %v2516 = vsel %vm2513, %v2515, %v2511
        %v2517 = vmul.f32 %v2373, %v2516
        %v2518 = vpack.c.bf16 %v2412, %v2412
        %v2519 = vpack.c.bf16 %v2427, %v2427
        %v2520 = vpack.c.bf16 %v2442, %v2442
        %v2521 = vpack.c.bf16 %v2457, %v2457
        %v2522 = vpack.c.bf16 %v2472, %v2472
        %v2523 = vpack.c.bf16 %v2487, %v2487
        %v2524 = vpack.c.bf16 %v2502, %v2502
        %v2525 = vpack.c.bf16 %v2517, %v2517
        %v2528 = vunpack.c.l.b16 %v2518
        %v2529 = vunpack.c.l.b16 %v2519
        %v2530 = vpack.c.b16 %v2529, %v2528
        %2531 = vrot.lane.b32.xlu0 %v2231, 64
        %v2532 = vpop.permute.xlu0 %2531
        %v2535 = vsel %vm615, %v2530, 0
        %2537 = vmatpush.bf16.msra.mxu0 0
        %2538 = vmatpush.bf16.msra.mxu0 0
        %2539 = vmatpush.bf16.msra.mxu0 0
        %2540 = vmatpush.bf16.msra.mxu0 0
        %2541 = vmatpush.bf16.msra.mxu0 0
        %2542 = vmatpush.bf16.msra.mxu0 0
        %2543 = vmatpush.bf16.msra.mxu0 0
        %2544 = vmatpush.bf16.msra.mxu0 %v2532
        %2545 = vmatmul.bf16.gmra.mxu0 %v2535
        %v2546 = vpop.f32.mrf.mxu0
        %v2547 = vadd.f32 0.0, %v2546
        %v2548 = vpop.f32.mrf.mxu0
        %v2549 = vadd.f32 0.0, %v2548
        %2550 = vdwg.mxu0
        %v2553 = vunpack.c.l.b16 %v2520
        %v2554 = vunpack.c.l.b16 %v2521
        %v2555 = vpack.c.b16 %v2554, %v2553
        %2556 = vrot.lane.b32.xlu0 %v2231, 56
        %v2557 = vpop.permute.xlu0 %2556
        %v2560 = vsel %vm615, %v2555, 0
        %2562 = vmatpush.bf16.msra.mxu0 0
        %2563 = vmatpush.bf16.msra.mxu0 0
        %2564 = vmatpush.bf16.msra.mxu0 0
        %2565 = vmatpush.bf16.msra.mxu0 0
        %2566 = vmatpush.bf16.msra.mxu0 0
        %2567 = vmatpush.bf16.msra.mxu0 0
        %2568 = vmatpush.bf16.msra.mxu0 0
        %2569 = vmatpush.bf16.msra.mxu0 %v2557
        %2570 = vmatmul.bf16.gmra.mxu0 %v2560
        %v2571 = vpop.f32.mrf.mxu0
        %v2572 = vadd.f32 0.0, %v2571
        %v2573 = vpop.f32.mrf.mxu0
        %v2574 = vadd.f32 0.0, %v2573
        %2575 = vdwg.mxu0
        %v2578 = vunpack.c.l.b16 %v2522
        %v2579 = vunpack.c.l.b16 %v2523
        %v2580 = vpack.c.b16 %v2579, %v2578
        %2581 = vrot.lane.b32.xlu0 %v2231, 48
        %v2582 = vpop.permute.xlu0 %2581
        %v2585 = vsel %vm615, %v2580, 0
        %2587 = vmatpush.bf16.msra.mxu0 0
        %2588 = vmatpush.bf16.msra.mxu0 0
        %2589 = vmatpush.bf16.msra.mxu0 0
        %2590 = vmatpush.bf16.msra.mxu0 0
        %2591 = vmatpush.bf16.msra.mxu0 0
        %2592 = vmatpush.bf16.msra.mxu0 0
        %2593 = vmatpush.bf16.msra.mxu0 0
        %2594 = vmatpush.bf16.msra.mxu0 %v2582
        %2595 = vmatmul.bf16.gmra.mxu0 %v2585
        %v2596 = vpop.f32.mrf.mxu0
        %v2597 = vadd.f32 0.0, %v2596
        %v2598 = vpop.f32.mrf.mxu0
        %v2599 = vadd.f32 0.0, %v2598
        %2600 = vdwg.mxu0
        %v2603 = vunpack.c.l.b16 %v2524
        %v2604 = vunpack.c.l.b16 %v2525
        %v2605 = vpack.c.b16 %v2604, %v2603
        %2606 = vrot.lane.b32.xlu0 %v2231, 40
        %v2607 = vpop.permute.xlu0 %2606
        %v2610 = vsel %vm615, %v2605, 0
        %2612 = vmatpush.bf16.msra.mxu0 0
        %2613 = vmatpush.bf16.msra.mxu0 0
        %2614 = vmatpush.bf16.msra.mxu0 0
        %2615 = vmatpush.bf16.msra.mxu0 0
        %2616 = vmatpush.bf16.msra.mxu0 0
        %2617 = vmatpush.bf16.msra.mxu0 0
        %2618 = vmatpush.bf16.msra.mxu0 0
        %2619 = vmatpush.bf16.msra.mxu0 %v2607
        %2620 = vmatmul.bf16.gmra.mxu0 %v2610
        %v2621 = vpop.f32.mrf.mxu0
        %v2622 = vadd.f32 0.0, %v2621
        %v2623 = vpop.f32.mrf.mxu0
        %v2624 = vadd.f32 0.0, %v2623
        %2625 = vdwg.mxu0
        %2628 = vrot.lane.b32.xlu0 %v2572, 8
        %v2629 = vpop.permute.xlu0 %2628
        %2630 = vrot.lane.b32.xlu0 %v2574, 8
        %v2631 = vpop.permute.xlu0 %2630
        %2636 = vrot.lane.b32.xlu0 %v2597, 16
        %v2637 = vpop.permute.xlu0 %2636
        %2638 = vrot.lane.b32.xlu0 %v2599, 16
        %v2639 = vpop.permute.xlu0 %2638
        %2644 = vrot.lane.b32.xlu0 %v2622, 24
        %v2645 = vpop.permute.xlu0 %2644
        %2646 = vrot.lane.b32.xlu0 %v2624, 24
        %v2647 = vpop.permute.xlu0 %2646
        %v2650 = vsel %vm522, %v2547, %v2629
        %v2651 = vsel %vm522, %v2549, %v2631
        %v2652 = vsel %vm615, %v2650, %v2637
        %v2653 = vsel %vm615, %v2651, %v2639
        %v2654 = vsel %vm944, %v2652, %v2645
        %v2655 = vsel %vm944, %v2653, %v2647
        %v2656 = vld [vmem:[#allocation4 + $0x80] sm:$0xf]
        %v2657 = vld [vmem:[#allocation4 + $0x84] sm:$0xf]
        %v2658 = vld [vmem:[#allocation4 + $0x88] sm:$0xf]
        %v2659 = vld [vmem:[#allocation4 + $0x8c] sm:$0xf]
        %v2660 = vpack.c.bf16 %v2224, %v2223
        %v2661 = vpack.c.bf16 %v2655, %v2654
        %v2662 = vld [vmem:[#allocation6 + $0x50] sm:$0x1]
        %v2663 = vperm.slane %v2662, 0
        %v2668 = vunpack.c.l.b16 %v2656
        %v2669 = vunpack.c.l.b16 %v2657
        %v2670 = vunpack.c.l.b16 %v2658
        %v2671 = vunpack.c.l.b16 %v2659
        %v2672 = vpack.c.b16 %v2669, %v2668
        %v2673 = vpack.c.b16 %v2671, %v2670
        %v2677 = vsel %vm485, %v2660, 0
        %v2680 = vsel %vm485, %v2661, 0
        %2682 = vmatpush.bf16.msra.mxu0 0
        %2683 = vmatpush.bf16.msra.mxu0 0
        %2684 = vmatpush.bf16.msra.mxu0 0
        %2685 = vmatpush.bf16.msra.mxu0 0
        %2686 = vmatpush.bf16.msra.mxu0 0
        %2687 = vmatpush.bf16.msra.mxu0 0
        %2688 = vmatpush.bf16.msra.mxu0 %v2673
        %2689 = vmatpush.bf16.msra.mxu0 %v2672
        %2690 = vmatmul.bf16.gmra.mxu0 %v2677
        %v2691 = vpop.f32.mrf.mxu0
        %v2692 = vadd.f32 %v2663, %v2691
        %v2693 = vpop.f32.mrf.mxu0
        %v2694 = vadd.f32 %v2663, %v2693
        %2695 = vmatmul.bf16.gmra.mxu0 %v2680
        %v2696 = vpop.f32.mrf.mxu0
        %v2697 = vadd.f32 %v2663, %v2696
        %v2698 = vpop.f32.mrf.mxu0
        %v2699 = vadd.f32 %v2663, %v2698
        %2700 = vdwg.mxu0
        %v2701 = vadd.f32 %v1743, %v2692
        %v2702 = vadd.f32 %v1744, %v2694
        %v2703 = vadd.f32 %v1745, %v2697
        %v2704 = vadd.f32 %v1746, %v2699
        %v2705 = vsel %vm485, %v2701, 0.0
        %2706 = vadd.xlane.f32.xlu0 %v2705
        %v2707 = vpop.xlane.xlu0 %2706
        %v2708 = vsel %vm485, %v2702, 0.0
        %2709 = vadd.xlane.f32.xlu0 %v2708
        %v2710 = vpop.xlane.xlu0 %2709
        %v2711 = vsel %vm485, %v2703, 0.0
        %2712 = vadd.xlane.f32.xlu0 %v2711
        %v2713 = vpop.xlane.xlu0 %2712
        %v2714 = vsel %vm485, %v2704, 0.0
        %2715 = vadd.xlane.f32.xlu0 %v2714
        %v2716 = vpop.xlane.xlu0 %2715
        %v2717 = vmul.f32 %v2707, %v1447
        %v2718 = vmul.f32 %v2710, %v1447
        %v2719 = vmul.f32 %v2713, %v1447
        %v2720 = vmul.f32 %v2716, %v1447
        %v2721 = vsub.f32 %v2701, %v2717
        %v2722 = vsub.f32 %v2702, %v2718
        %v2723 = vsub.f32 %v2703, %v2719
        %v2724 = vsub.f32 %v2704, %v2720
        %v2725 = vmul.f32 %v2721, %v2721
        %v2726 = vmul.f32 %v2722, %v2722
        %v2727 = vmul.f32 %v2723, %v2723
        %v2728 = vmul.f32 %v2724, %v2724
        %v2729 = vsel %vm485, %v2725, 0.0
        %2730 = vadd.xlane.f32.xlu0 %v2729
        %v2731 = vpop.xlane.xlu0 %2730
        %v2732 = vsel %vm485, %v2726, 0.0
        %2733 = vadd.xlane.f32.xlu0 %v2732
        %v2734 = vpop.xlane.xlu0 %2733
        %v2735 = vsel %vm485, %v2727, 0.0
        %2736 = vadd.xlane.f32.xlu0 %v2735
        %v2737 = vpop.xlane.xlu0 %2736
        %v2738 = vsel %vm485, %v2728, 0.0
        %2739 = vadd.xlane.f32.xlu0 %v2738
        %v2740 = vpop.xlane.xlu0 %2739
        %v2741 = vmul.f32 %v2731, %v1447
        %v2742 = vmul.f32 %v2734, %v1447
        %v2743 = vmul.f32 %v2737, %v1447
        %v2744 = vmul.f32 %v2740, %v1447
        %v2745 = vadd.f32 %v2741, 1e-05
        %v2746 = vadd.f32 %v2742, 1e-05
        %v2747 = vadd.f32 %v2743, 1e-05
        %v2748 = vadd.f32 %v2744, 1e-05
        %v2749 = vrsqrt.pop %v2745
        %v2750 = vmul.f32 %v2749, %v2745
        %v2751 = vmul.f32 %v2750, %v2749
        %v2752 = vmul.f32 0.5, %v2751
        %v2753 = vsub.f32 1.5, %v2752
        %v2754 = vmul.f32 %v2749, %v2753
        %vm2755 = vweird.f32 %v2745
        %vm2756 = vweird.f32 %v2749
        %vm2757 = vmor %vm2755, %vm2756
        %v2758 = vsel %vm2757, %v2749, %v2754
        %v2759 = vrsqrt.pop %v2746
        %v2760 = vmul.f32 %v2759, %v2746
        %v2761 = vmul.f32 %v2760, %v2759
        %v2762 = vmul.f32 0.5, %v2761
        %v2763 = vsub.f32 1.5, %v2762
        %v2764 = vmul.f32 %v2759, %v2763
        %vm2765 = vweird.f32 %v2746
        %vm2766 = vweird.f32 %v2759
        %vm2767 = vmor %vm2765, %vm2766
        %v2768 = vsel %vm2767, %v2759, %v2764
        %v2769 = vrsqrt.pop %v2747
        %v2770 = vmul.f32 %v2769, %v2747
        %v2771 = vmul.f32 %v2770, %v2769
        %v2772 = vmul.f32 0.5, %v2771
        %v2773 = vsub.f32 1.5, %v2772
        %v2774 = vmul.f32 %v2769, %v2773
        %vm2775 = vweird.f32 %v2747
        %vm2776 = vweird.f32 %v2769
        %vm2777 = vmor %vm2775, %vm2776
        %v2778 = vsel %vm2777, %v2769, %v2774
        %v2779 = vrsqrt.pop %v2748
        %v2780 = vmul.f32 %v2779, %v2748
        %v2781 = vmul.f32 %v2780, %v2779
        %v2782 = vmul.f32 0.5, %v2781
        %v2783 = vsub.f32 1.5, %v2782
        %v2784 = vmul.f32 %v2779, %v2783
        %vm2785 = vweird.f32 %v2748
        %vm2786 = vweird.f32 %v2779
        %vm2787 = vmor %vm2785, %vm2786
        %v2788 = vsel %vm2787, %v2779, %v2784
        %v2789 = vmul.f32 %v2721, %v2758
        %v2790 = vmul.f32 %v2722, %v2768
        %v2791 = vmul.f32 %v2723, %v2778
        %v2792 = vmul.f32 %v2724, %v2788
        %v2793 = vperm.slane %v1747, 0
        %v2794 = vmul.f32 %v2789, %v2793
        %v2795 = vmul.f32 %v2790, %v2793
        %v2796 = vmul.f32 %v2791, %v2793
        %v2797 = vmul.f32 %v2792, %v2793
        %v2798 = vperm.slane %v1748, 0
        %v2799 = vadd.f32 %v2794, %v2798
        %v2800 = vadd.f32 %v2795, %v2798
        %v2801 = vadd.f32 %v2796, %v2798
        %v2802 = vadd.f32 %v2797, %v2798
        %v2803 = vld [vmem:[#allocation4 + $0x90] sm:$0xf]
        %v2804 = vld [vmem:[#allocation4 + $0x94] sm:$0xf]
        %v2805 = vld [vmem:[#allocation4 + $0x98] sm:$0xf]
        %v2806 = vld [vmem:[#allocation4 + $0x9c] sm:$0xf]
        %v2807 = vpack.c.bf16 %v2800, %v2799
        %v2808 = vpack.c.bf16 %v2802, %v2801
        %v2809 = vld [vmem:[#allocation6 + $0x58] sm:$0x1]
        %v2810 = vperm.slane %v2809, 0
        %v2815 = vunpack.c.l.b16 %v2803
        %v2816 = vunpack.c.l.b16 %v2804
        %v2817 = vunpack.c.l.b16 %v2805
        %v2818 = vunpack.c.l.b16 %v2806
        %v2819 = vpack.c.b16 %v2816, %v2815
        %v2820 = vpack.c.b16 %v2818, %v2817
        %v2824 = vsel %vm485, %v2807, 0
        %v2827 = vsel %vm485, %v2808, 0
        %2829 = vmatpush.bf16.msra.mxu0 0
        %2830 = vmatpush.bf16.msra.mxu0 0
        %2831 = vmatpush.bf16.msra.mxu0 0
        %2832 = vmatpush.bf16.msra.mxu0 0
        %2833 = vmatpush.bf16.msra.mxu0 0
        %2834 = vmatpush.bf16.msra.mxu0 0
        %2835 = vmatpush.bf16.msra.mxu0 %v2820
        %2836 = vmatpush.bf16.msra.mxu0 %v2819
        %2837 = vmatmul.bf16.gmra.mxu0 %v2824
        %v2838 = vpop.f32.mrf.mxu0
        %v2839 = vadd.f32 %v2810, %v2838
        %v2840 = vpop.f32.mrf.mxu0
        %v2841 = vadd.f32 %v2810, %v2840
        %2842 = vmatmul.bf16.gmra.mxu0 %v2827
        %v2843 = vpop.f32.mrf.mxu0
        %v2844 = vadd.f32 %v2810, %v2843
        %v2845 = vpop.f32.mrf.mxu0
        %v2846 = vadd.f32 %v2810, %v2845
        %2847 = vdwg.mxu0
        %v2848 = vmax.f32 %v2839, 0.0
        %v2849 = vmax.f32 %v2841, 0.0
        %v2850 = vmax.f32 %v2844, 0.0
        %v2851 = vmax.f32 %v2846, 0.0
        %v2852 = vld [vmem:[#allocation4 + $0xa0] sm:$0xf]
        %v2853 = vld [vmem:[#allocation4 + $0xa4] sm:$0xf]
        %v2854 = vld [vmem:[#allocation4 + $0xa8] sm:$0xf]
        %v2855 = vld [vmem:[#allocation4 + $0xac] sm:$0xf]
        %v2856 = vld [vmem:[#allocation4 + $0xb0] sm:$0xf]
        %v2857 = vld [vmem:[#allocation4 + $0xb4] sm:$0xf]
        %v2858 = vld [vmem:[#allocation4 + $0xb8] sm:$0xf]
        %v2859 = vld [vmem:[#allocation4 + $0xbc] sm:$0xf]
        %v2860 = vpack.c.bf16 %v2849, %v2848
        %v2861 = vpack.c.bf16 %v2851, %v2850
        %v2862 = vld [vmem:[#allocation6 + $0x60] sm:$0x1]
        %v2863 = vperm.slane %v2862, 0
        %v2872 = vunpack.c.l.b16 %v2852
        %v2873 = vunpack.c.l.b16 %v2853
        %v2874 = vunpack.c.l.b16 %v2854
        %v2875 = vunpack.c.l.b16 %v2855
        %v2876 = vunpack.c.l.b16 %v2856
        %v2877 = vunpack.c.l.b16 %v2857
        %v2878 = vunpack.c.l.b16 %v2858
        %v2879 = vunpack.c.l.b16 %v2859
        %v2880 = vpack.c.b16 %v2873, %v2872
        %v2881 = vpack.c.b16 %v2875, %v2874
        %v2882 = vpack.c.b16 %v2877, %v2876
        %v2883 = vpack.c.b16 %v2879, %v2878
        %v2889 = vsel %vm1619, %v2860, 0
        %v2892 = vsel %vm1619, %v2861, 0
        %2894 = vmatpush.bf16.msra.mxu0 0
        %2895 = vmatpush.bf16.msra.mxu0 0
        %2896 = vmatpush.bf16.msra.mxu0 0
        %2897 = vmatpush.bf16.msra.mxu0 0
        %2898 = vmatpush.bf16.msra.mxu0 %v2883
        %2899 = vmatpush.bf16.msra.mxu0 %v2882
        %2900 = vmatpush.bf16.msra.mxu0 %v2881
        %2901 = vmatpush.bf16.msra.mxu0 %v2880
        %2902 = vmatmul.bf16.gmra.mxu0 %v2889
        %v2903 = vpop.f32.mrf.mxu0
        %v2904 = vadd.f32 %v2863, %v2903
        %v2905 = vpop.f32.mrf.mxu0
        %v2906 = vadd.f32 %v2863, %v2905
        %2907 = vmatmul.bf16.gmra.mxu0 %v2892
        %v2908 = vpop.f32.mrf.mxu0
        %v2909 = vadd.f32 %v2863, %v2908
        %v2910 = vpop.f32.mrf.mxu0
        %v2911 = vadd.f32 %v2863, %v2910
        %2912 = vdwg.mxu0
        %v2913 = vadd.f32 %v2799, %v2904
        %v2914 = vadd.f32 %v2800, %v2906
        %v2915 = vadd.f32 %v2801, %v2909
        %v2916 = vadd.f32 %v2802, %v2911
        %v2917 = vsel %vm485, %v2913, 0.0
        %2918 = vadd.xlane.f32.xlu0 %v2917
        %v2919 = vpop.xlane.xlu0 %2918
        %v2920 = vsel %vm485, %v2914, 0.0
        %2921 = vadd.xlane.f32.xlu0 %v2920
        %v2922 = vpop.xlane.xlu0 %2921
        %v2923 = vsel %vm485, %v2915, 0.0
        %2924 = vadd.xlane.f32.xlu0 %v2923
        %v2925 = vpop.xlane.xlu0 %2924
        %v2926 = vsel %vm485, %v2916, 0.0
        %2927 = vadd.xlane.f32.xlu0 %v2926
        %v2928 = vpop.xlane.xlu0 %2927
        %v2929 = vmul.f32 %v2919, %v1447
        %v2930 = vmul.f32 %v2922, %v1447
        %v2931 = vmul.f32 %v2925, %v1447
        %v2932 = vmul.f32 %v2928, %v1447
        %v2933 = vsub.f32 %v2913, %v2929
        %v2934 = vsub.f32 %v2914, %v2930
        %v2935 = vsub.f32 %v2915, %v2931
        %v2936 = vsub.f32 %v2916, %v2932
        %v2937 = vmul.f32 %v2933, %v2933
        %v2938 = vmul.f32 %v2934, %v2934
        %v2939 = vmul.f32 %v2935, %v2935
        %v2940 = vmul.f32 %v2936, %v2936
        %v2941 = vsel %vm485, %v2937, 0.0
        %2942 = vadd.xlane.f32.xlu0 %v2941
        %v2943 = vpop.xlane.xlu0 %2942
        %v2944 = vsel %vm485, %v2938, 0.0
        %2945 = vadd.xlane.f32.xlu0 %v2944
        %v2946 = vpop.xlane.xlu0 %2945
        %v2947 = vsel %vm485, %v2939, 0.0
        %2948 = vadd.xlane.f32.xlu0 %v2947
        %v2949 = vpop.xlane.xlu0 %2948
        %v2950 = vsel %vm485, %v2940, 0.0
        %2951 = vadd.xlane.f32.xlu0 %v2950
        %v2952 = vpop.xlane.xlu0 %2951
        %v2953 = vmul.f32 %v2943, %v1447
        %v2954 = vmul.f32 %v2946, %v1447
        %v2955 = vmul.f32 %v2949, %v1447
        %v2956 = vmul.f32 %v2952, %v1447
        %v2957 = vadd.f32 %v2953, 1e-05
        %v2958 = vadd.f32 %v2954, 1e-05
        %v2959 = vadd.f32 %v2955, 1e-05
        %v2960 = vadd.f32 %v2956, 1e-05
        %v2961 = vrsqrt.pop %v2957
        %v2962 = vmul.f32 %v2961, %v2957
        %v2963 = vmul.f32 %v2962, %v2961
        %v2964 = vmul.f32 0.5, %v2963
        %v2965 = vsub.f32 1.5, %v2964
        %v2966 = vmul.f32 %v2961, %v2965
        %vm2967 = vweird.f32 %v2957
        %vm2968 = vweird.f32 %v2961
        %vm2969 = vmor %vm2967, %vm2968
        %v2970 = vsel %vm2969, %v2961, %v2966
        %v2971 = vrsqrt.pop %v2958
        %v2972 = vmul.f32 %v2971, %v2958
        %v2973 = vmul.f32 %v2972, %v2971
        %v2974 = vmul.f32 0.5, %v2973
        %v2975 = vsub.f32 1.5, %v2974
        %v2976 = vmul.f32 %v2971, %v2975
        %vm2977 = vweird.f32 %v2958
        %vm2978 = vweird.f32 %v2971
        %vm2979 = vmor %vm2977, %vm2978
        %v2980 = vsel %vm2979, %v2971, %v2976
        %v2981 = vrsqrt.pop %v2959
        %v2982 = vmul.f32 %v2981, %v2959
        %v2983 = vmul.f32 %v2982, %v2981
        %v2984 = vmul.f32 0.5, %v2983
        %v2985 = vsub.f32 1.5, %v2984
        %v2986 = vmul.f32 %v2981, %v2985
        %vm2987 = vweird.f32 %v2959
        %vm2988 = vweird.f32 %v2981
        %vm2989 = vmor %vm2987, %vm2988
        %v2990 = vsel %vm2989, %v2981, %v2986
        %v2991 = vrsqrt.pop %v2960
        %v2992 = vmul.f32 %v2991, %v2960
        %v2993 = vmul.f32 %v2992, %v2991
        %v2994 = vmul.f32 0.5, %v2993
        %v2995 = vsub.f32 1.5, %v2994
        %v2996 = vmul.f32 %v2991, %v2995
        %vm2997 = vweird.f32 %v2960
        %vm2998 = vweird.f32 %v2991
        %vm2999 = vmor %vm2997, %vm2998
        %v3000 = vsel %vm2999, %v2991, %v2996
        %v3001 = vmul.f32 %v2933, %v2970
        %v3002 = vmul.f32 %v2934, %v2980
        %v3003 = vmul.f32 %v2935, %v2990
        %v3004 = vmul.f32 %v2936, %v3000
        %v3005 = vperm.slane %v1747, 1
        %v3006 = vmul.f32 %v3001, %v3005
        %v3007 = vmul.f32 %v3002, %v3005
        %v3008 = vmul.f32 %v3003, %v3005
        %v3009 = vmul.f32 %v3004, %v3005
        %v3010 = vperm.slane %v1748, 1
        %v3011 = vadd.f32 %v3006, %v3010
        %v3012 = vadd.f32 %v3007, %v3010
        %v3013 = vadd.f32 %v3008, %v3010
        %v3014 = vadd.f32 %v3009, %v3010
        %v3015 = vld [vmem:[#allocation6 + $0x78] sm:$0x1]
        %v3016 = vld [vmem:[#allocation6 + $0x80] sm:$0x1]
        %v3017 = vsel %vm485, %v3011, 0.0
        %3018 = vadd.xlane.f32.xlu0 %v3017
        %v3019 = vpop.xlane.xlu0 %3018
        %v3020 = vsel %vm485, %v3012, 0.0
        %3021 = vadd.xlane.f32.xlu0 %v3020
        %v3022 = vpop.xlane.xlu0 %3021
        %v3023 = vsel %vm485, %v3013, 0.0
        %3024 = vadd.xlane.f32.xlu0 %v3023
        %v3025 = vpop.xlane.xlu0 %3024
        %v3026 = vsel %vm485, %v3014, 0.0
        %3027 = vadd.xlane.f32.xlu0 %v3026
        %v3028 = vpop.xlane.xlu0 %3027
        %v3029 = vmul.f32 %v3019, %v1447
        %v3030 = vmul.f32 %v3022, %v1447
        %v3031 = vmul.f32 %v3025, %v1447
        %v3032 = vmul.f32 %v3028, %v1447
        %v3033 = vsub.f32 %v3011, %v3029
        %v3034 = vsub.f32 %v3012, %v3030
        %v3035 = vsub.f32 %v3013, %v3031
        %v3036 = vsub.f32 %v3014, %v3032
        %v3037 = vmul.f32 %v3033, %v3033
        %v3038 = vmul.f32 %v3034, %v3034
        %v3039 = vmul.f32 %v3035, %v3035
        %v3040 = vmul.f32 %v3036, %v3036
        %v3041 = vsel %vm485, %v3037, 0.0
        %3042 = vadd.xlane.f32.xlu0 %v3041
        %v3043 = vpop.xlane.xlu0 %3042
        %v3044 = vsel %vm485, %v3038, 0.0
        %3045 = vadd.xlane.f32.xlu0 %v3044
        %v3046 = vpop.xlane.xlu0 %3045
        %v3047 = vsel %vm485, %v3039, 0.0
        %3048 = vadd.xlane.f32.xlu0 %v3047
        %v3049 = vpop.xlane.xlu0 %3048
        %v3050 = vsel %vm485, %v3040, 0.0
        %3051 = vadd.xlane.f32.xlu0 %v3050
        %v3052 = vpop.xlane.xlu0 %3051
        %v3053 = vmul.f32 %v3043, %v1447
        %v3054 = vmul.f32 %v3046, %v1447
        %v3055 = vmul.f32 %v3049, %v1447
        %v3056 = vmul.f32 %v3052, %v1447
        %v3057 = vadd.f32 %v3053, 1e-05
        %v3058 = vadd.f32 %v3054, 1e-05
        %v3059 = vadd.f32 %v3055, 1e-05
        %v3060 = vadd.f32 %v3056, 1e-05
        %v3061 = vrsqrt.pop %v3057
        %v3062 = vmul.f32 %v3061, %v3057
        %v3063 = vmul.f32 %v3062, %v3061
        %v3064 = vmul.f32 0.5, %v3063
        %v3065 = vsub.f32 1.5, %v3064
        %v3066 = vmul.f32 %v3061, %v3065
        %vm3067 = vweird.f32 %v3057
        %vm3068 = vweird.f32 %v3061
        %vm3069 = vmor %vm3067, %vm3068
        %v3070 = vsel %vm3069, %v3061, %v3066
        %v3071 = vrsqrt.pop %v3058
        %v3072 = vmul.f32 %v3071, %v3058
        %v3073 = vmul.f32 %v3072, %v3071
        %v3074 = vmul.f32 0.5, %v3073
        %v3075 = vsub.f32 1.5, %v3074
        %v3076 = vmul.f32 %v3071, %v3075
        %vm3077 = vweird.f32 %v3058
        %vm3078 = vweird.f32 %v3071
        %vm3079 = vmor %vm3077, %vm3078
        %v3080 = vsel %vm3079, %v3071, %v3076
        %v3081 = vrsqrt.pop %v3059
        %v3082 = vmul.f32 %v3081, %v3059
        %v3083 = vmul.f32 %v3082, %v3081
        %v3084 = vmul.f32 0.5, %v3083
        %v3085 = vsub.f32 1.5, %v3084
        %v3086 = vmul.f32 %v3081, %v3085
        %vm3087 = vweird.f32 %v3059
        %vm3088 = vweird.f32 %v3081
        %vm3089 = vmor %vm3087, %vm3088
        %v3090 = vsel %vm3089, %v3081, %v3086
        %v3091 = vrsqrt.pop %v3060
        %v3092 = vmul.f32 %v3091, %v3060
        %v3093 = vmul.f32 %v3092, %v3091
        %v3094 = vmul.f32 0.5, %v3093
        %v3095 = vsub.f32 1.5, %v3094
        %v3096 = vmul.f32 %v3091, %v3095
        %vm3097 = vweird.f32 %v3060
        %vm3098 = vweird.f32 %v3091
        %vm3099 = vmor %vm3097, %vm3098
        %v3100 = vsel %vm3099, %v3091, %v3096
        %v3101 = vmul.f32 %v3033, %v3070
        %v3102 = vmul.f32 %v3034, %v3080
        %v3103 = vmul.f32 %v3035, %v3090
        %v3104 = vmul.f32 %v3036, %v3100
        %v3105 = vperm.slane %v3015, 0
        %v3106 = vmul.f32 %v3101, %v3105
        %v3107 = vmul.f32 %v3102, %v3105
        %v3108 = vmul.f32 %v3103, %v3105
        %v3109 = vmul.f32 %v3104, %v3105
        %v3110 = vperm.slane %v3016, 0
        %v3111 = vadd.f32 %v3106, %v3110
        %v3112 = vadd.f32 %v3107, %v3110
        %v3113 = vadd.f32 %v3108, %v3110
        %v3114 = vadd.f32 %v3109, %v3110
        %v3115 = vsel %vm380, %v3111, 0.0
        %v3116 = vsel %vm380, %v3112, 0.0
        %v3117 = vsel %vm408, %v3113, 0.0
        %v3118 = vsel %vm408, %v3114, 0.0
        %v3119 = vld [vmem:[%s5 + $0x18] sm:$0xff]
        %v3120 = vadd.f32 %v3119, %v381
        %v3121 = vadd.f32 %v3119, %v409
        %v3122 = vld [vmem:[#allocation6 + $0xc0] sm:$0x7]
        %v3123 = vld [vmem:[#allocation6 + $0xc8] sm:$0x7]
        %v3124 = vld [vmem:[#allocation4 + $0xc0] sm:$0xf]
        %v3125 = vld [vmem:[#allocation4 + $0xc4] sm:$0xf]
        %v3126 = vld [vmem:[#allocation4 + $0xc8] sm:$0xf]
        %v3127 = vld [vmem:[#allocation4 + $0xcc] sm:$0xf]
        %v3128 = vpack.c.bf16 %v345, %v325
        %v3129 = vld [vmem:[#allocation6 + $0x88] sm:$0x1]
        %v3130 = vperm.slane %v3129, 0
        %v3135 = vunpack.c.l.b16 %v3124
        %v3136 = vunpack.c.l.b16 %v3125
        %v3137 = vunpack.c.l.b16 %v3126
        %v3138 = vunpack.c.l.b16 %v3127
        %v3139 = vpack.c.b16 %v3136, %v3135
        %v3140 = vpack.c.b16 %v3138, %v3137
        %v3144 = vsel %vm485, %v3128, 0
        %3146 = vmatpush.bf16.msra.mxu0 0
        %3147 = vmatpush.bf16.msra.mxu0 0
        %3148 = vmatpush.bf16.msra.mxu0 0
        %3149 = vmatpush.bf16.msra.mxu0 0
        %3150 = vmatpush.bf16.msra.mxu0 0
        %3151 = vmatpush.bf16.msra.mxu0 0
        %3152 = vmatpush.bf16.msra.mxu0 %v3140
        %3153 = vmatpush.bf16.msra.mxu0 %v3139
        %3154 = vmatmul.bf16.gmra.mxu0 %v3144
        %v3155 = vpop.f32.mrf.mxu0
        %v3156 = vadd.f32 %v3130, %v3155
        %v3157 = vpop.f32.mrf.mxu0
        %v3158 = vadd.f32 %v3130, %v3157
        %3159 = vdwg.mxu0
        %v3160 = vpack.c.bf16 %v3156, %v3156
        %v3162 = vunpack.c.l.b16 %v3160
        %v3163 = vpack.c.b16 %v3162, %v3162
        %3164 = vrot.lane.b32.xlu0 %v3163, 96
        %v3165 = vpop.permute.xlu0 %3164
        %v3167 = vsel %vm522, %v3160, 0
        %v3170 = vsel %vm522, %v3165, 0
        %3172 = vmatpush.bf16.xpose.msra.mxu0 0
        %3173 = vmatpush.bf16.xpose.msra.mxu0 0
        %3174 = vmatpush.bf16.xpose.msra.mxu0 0
        %3175 = vmatpush.bf16.xpose.msra.mxu0 0
        %3176 = vmatpush.bf16.xpose.msra.mxu0 0
        %3177 = vmatpush.bf16.xpose.msra.mxu0 0
        %3178 = vmatpush.bf16.xpose.msra.mxu0 0
        %3179 = vmatpush.bf16.xpose.msra.mxu0 %v3170
        %3180 = vmatmul.bf16.gmra.mxu0 %v3167
        %v3181 = vpop.f32.mrf.mxu0
        %v3182 = vadd.f32 %v298, %v3181
        %v3183 = vpop.f32.mrf.mxu0
        %3184 = vdwg.mxu0
        %3185 = vrot.lane.b32.xlu0 %v3163, 120
        %v3186 = vpop.permute.xlu0 %3185
        %3187 = vrot.lane.b32.xlu0 %v3163, 88
        %v3188 = vpop.permute.xlu0 %3187
        %v3190 = vsel %vm522, %v3186, 0
        %v3193 = vsel %vm522, %v3188, 0
        %3195 = vmatpush.bf16.xpose.msra.mxu0 0
        %3196 = vmatpush.bf16.xpose.msra.mxu0 0
        %3197 = vmatpush.bf16.xpose.msra.mxu0 0
        %3198 = vmatpush.bf16.xpose.msra.mxu0 0
        %3199 = vmatpush.bf16.xpose.msra.mxu0 0
        %3200 = vmatpush.bf16.xpose.msra.mxu0 0
        %3201 = vmatpush.bf16.xpose.msra.mxu0 0
        %3202 = vmatpush.bf16.xpose.msra.mxu0 %v3193
        %3203 = vmatmul.bf16.gmra.mxu0 %v3190
        %v3204 = vpop.f32.mrf.mxu0
        %v3205 = vadd.f32 %v298, %v3204
        %v3206 = vpop.f32.mrf.mxu0
        %3207 = vdwg.mxu0
        %3208 = vrot.lane.b32.xlu0 %v3163, 112
        %v3209 = vpop.permute.xlu0 %3208
        %3210 = vrot.lane.b32.xlu0 %v3163, 80
        %v3211 = vpop.permute.xlu0 %3210
        %v3213 = vsel %vm522, %v3209, 0
        %v3216 = vsel %vm522, %v3211, 0
        %3218 = vmatpush.bf16.xpose.msra.mxu0 0
        %3219 = vmatpush.bf16.xpose.msra.mxu0 0
        %3220 = vmatpush.bf16.xpose.msra.mxu0 0
        %3221 = vmatpush.bf16.xpose.msra.mxu0 0
        %3222 = vmatpush.bf16.xpose.msra.mxu0 0
        %3223 = vmatpush.bf16.xpose.msra.mxu0 0
        %3224 = vmatpush.bf16.xpose.msra.mxu0 0
        %3225 = vmatpush.bf16.xpose.msra.mxu0 %v3216
        %3226 = vmatmul.bf16.gmra.mxu0 %v3213
        %v3227 = vpop.f32.mrf.mxu0
        %v3228 = vadd.f32 %v298, %v3227
        %v3229 = vpop.f32.mrf.mxu0
        %3230 = vdwg.mxu0
        %3231 = vrot.lane.b32.xlu0 %v3163, 104
        %v3232 = vpop.permute.xlu0 %3231
        %3233 = vrot.lane.b32.xlu0 %v3163, 72
        %v3234 = vpop.permute.xlu0 %3233
        %v3236 = vsel %vm522, %v3232, 0
        %v3239 = vsel %vm522, %v3234, 0
        %3241 = vmatpush.bf16.xpose.msra.mxu0 0
        %3242 = vmatpush.bf16.xpose.msra.mxu0 0
        %3243 = vmatpush.bf16.xpose.msra.mxu0 0
        %3244 = vmatpush.bf16.xpose.msra.mxu0 0
        %3245 = vmatpush.bf16.xpose.msra.mxu0 0
        %3246 = vmatpush.bf16.xpose.msra.mxu0 0
        %3247 = vmatpush.bf16.xpose.msra.mxu0 0
        %3248 = vmatpush.bf16.xpose.msra.mxu0 %v3239
        %3249 = vmatmul.bf16.gmra.mxu0 %v3236
        %v3250 = vpop.f32.mrf.mxu0
        %v3251 = vadd.f32 %v298, %v3250
        %v3252 = vpop.f32.mrf.mxu0
        %3253 = vdwg.mxu0
        %v3254 = vsel %vm522, %v3182, -inf
        %3255 = vmax.xlane.f32.xlu0 %v3254
        %v3256 = vpop.xlane.xlu0 %3255
        %v3257 = vsel %vm522, %v3205, -inf
        %3258 = vmax.xlane.f32.xlu0 %v3257
        %v3259 = vpop.xlane.xlu0 %3258
        %v3260 = vsel %vm522, %v3228, -inf
        %3261 = vmax.xlane.f32.xlu0 %v3260
        %v3262 = vpop.xlane.xlu0 %3261
        %v3263 = vsel %vm522, %v3251, -inf
        %3264 = vmax.xlane.f32.xlu0 %v3263
        %v3265 = vpop.xlane.xlu0 %3264
        %v3266 = vsub.f32 %v3182, %v3256
        %v3267 = vsub.f32 %v3205, %v3259
        %v3268 = vsub.f32 %v3228, %v3262
        %v3269 = vsub.f32 %v3251, %v3265
        %v3270 = vmul.f32 %v3266, 1.442695
        %v3271 = vpow.pop %v3270
        %v3272 = vmul.f32 %v3267, 1.442695
        %v3273 = vpow.pop %v3272
        %v3274 = vmul.f32 %v3268, 1.442695
        %v3275 = vpow.pop %v3274
        %v3276 = vmul.f32 %v3269, 1.442695
        %v3277 = vpow.pop %v3276
        %v3278 = vsel %vm522, %v3271, 0.0
        %3279 = vadd.xlane.f32.xlu0 %v3278
        %v3280 = vpop.xlane.xlu0 %3279
        %v3281 = vsel %vm522, %v3273, 0.0
        %3282 = vadd.xlane.f32.xlu0 %v3281
        %v3283 = vpop.xlane.xlu0 %3282
        %v3284 = vsel %vm522, %v3275, 0.0
        %3285 = vadd.xlane.f32.xlu0 %v3284
        %v3286 = vpop.xlane.xlu0 %3285
        %v3287 = vsel %vm522, %v3277, 0.0
        %3288 = vadd.xlane.f32.xlu0 %v3287
        %v3289 = vpop.xlane.xlu0 %3288
        %v3290 = vrcp.pop %v3280
        %v3291 = vmul.f32 %v3280, %v3290
        %v3292 = vsub.f32 1.0, %v3291
        %v3293 = vmul.f32 %v3290, %v3292
        %v3294 = vadd.f32 %v3290, %v3293
        %vm3295 = vweird.f32 %v3280
        %vm3296 = vweird.f32 %v3290
        %vm3297 = vmor %vm3295, %vm3296
        %v3298 = vsel %vm3297, %v3290, %v3294
        %v3299 = vand.u32 2147483647, %v3280
        %vm3300 = vcmp.eq.f32.partialorder %v3299, 8.507059e+37
        %v3301 = vand.u32 %v3280, 2147483648
        %v3302 = vor.u32 1.1754944e-38, %v3301
        %v3303 = vsel %vm3300, %v3302, %v3298
        %v3304 = vmul.f32 %v3271, %v3303
        %v3305 = vrcp.pop %v3283
        %v3306 = vmul.f32 %v3283, %v3305
        %v3307 = vsub.f32 1.0, %v3306
        %v3308 = vmul.f32 %v3305, %v3307
        %v3309 = vadd.f32 %v3305, %v3308
        %vm3310 = vweird.f32 %v3283
        %vm3311 = vweird.f32 %v3305
        %vm3312 = vmor %vm3310, %vm3311
        %v3313 = vsel %vm3312, %v3305, %v3309
        %v3314 = vand.u32 2147483647, %v3283
        %vm3315 = vcmp.eq.f32.partialorder %v3314, 8.507059e+37
        %v3316 = vand.u32 %v3283, 2147483648
        %v3317 = vor.u32 1.1754944e-38, %v3316
        %v3318 = vsel %vm3315, %v3317, %v3313
        %v3319 = vmul.f32 %v3273, %v3318
        %v3320 = vrcp.pop %v3286
        %v3321 = vmul.f32 %v3286, %v3320
        %v3322 = vsub.f32 1.0, %v3321
        %v3323 = vmul.f32 %v3320, %v3322
        %v3324 = vadd.f32 %v3320, %v3323
        %vm3325 = vweird.f32 %v3286
        %vm3326 = vweird.f32 %v3320
        %vm3327 = vmor %vm3325, %vm3326
        %v3328 = vsel %vm3327, %v3320, %v3324
        %v3329 = vand.u32 2147483647, %v3286
        %vm3330 = vcmp.eq.f32.partialorder %v3329, 8.507059e+37
        %v3331 = vand.u32 %v3286, 2147483648
        %v3332 = vor.u32 1.1754944e-38, %v3331
        %v3333 = vsel %vm3330, %v3332, %v3328
        %v3334 = vmul.f32 %v3275, %v3333
        %v3335 = vrcp.pop %v3289
        %v3336 = vmul.f32 %v3289, %v3335
        %v3337 = vsub.f32 1.0, %v3336
        %v3338 = vmul.f32 %v3335, %v3337
        %v3339 = vadd.f32 %v3335, %v3338
        %vm3340 = vweird.f32 %v3289
        %vm3341 = vweird.f32 %v3335
        %vm3342 = vmor %vm3340, %vm3341
        %v3343 = vsel %vm3342, %v3335, %v3339
        %v3344 = vand.u32 2147483647, %v3289
        %vm3345 = vcmp.eq.f32.partialorder %v3344, 8.507059e+37
        %v3346 = vand.u32 %v3289, 2147483648
        %v3347 = vor.u32 1.1754944e-38, %v3346
        %v3348 = vsel %vm3345, %v3347, %v3343
        %v3349 = vmul.f32 %v3277, %v3348
        %v3350 = vpack.c.bf16 %v3304, %v3304
        %v3351 = vpack.c.bf16 %v3319, %v3319
        %v3352 = vpack.c.bf16 %v3334, %v3334
        %v3353 = vpack.c.bf16 %v3349, %v3349
        %3354 = vrot.lane.b32.xlu0 %v3163, 64
        %v3355 = vpop.permute.xlu0 %3354
        %v3357 = vsel %vm522, %v3350, 0
        %vm3359 = vcmask 1043456
        %v3361 = vsel %vm3359, %v3355, 0
        %3363 = vmatpush.bf16.msra.mxu0 0
        %3364 = vmatpush.bf16.msra.mxu0 0
        %3365 = vmatpush.bf16.msra.mxu0 0
        %3366 = vmatpush.bf16.msra.mxu0 0
        %3367 = vmatpush.bf16.msra.mxu0 0
        %3368 = vmatpush.bf16.msra.mxu0 0
        %3369 = vmatpush.bf16.msra.mxu0 0
        %3370 = vmatpush.bf16.msra.mxu0 %v3361
        %3371 = vmatmul.bf16.gmra.mxu0 %v3357
        %v3372 = vpop.f32.mrf.mxu0
        %v3373 = vadd.f32 0.0, %v3372
        %v3374 = vpop.f32.mrf.mxu0
        %3375 = vdwg.mxu0
        %3376 = vrot.lane.b32.xlu0 %v3163, 56
        %v3377 = vpop.permute.xlu0 %3376
        %v3379 = vsel %vm522, %v3351, 0
        %v3382 = vsel %vm3359, %v3377, 0
        %3384 = vmatpush.bf16.msra.mxu0 0
        %3385 = vmatpush.bf16.msra.mxu0 0
        %3386 = vmatpush.bf16.msra.mxu0 0
        %3387 = vmatpush.bf16.msra.mxu0 0
        %3388 = vmatpush.bf16.msra.mxu0 0
        %3389 = vmatpush.bf16.msra.mxu0 0
        %3390 = vmatpush.bf16.msra.mxu0 0
        %3391 = vmatpush.bf16.msra.mxu0 %v3382
        %3392 = vmatmul.bf16.gmra.mxu0 %v3379
        %v3393 = vpop.f32.mrf.mxu0
        %v3394 = vadd.f32 0.0, %v3393
        %v3395 = vpop.f32.mrf.mxu0
        %3396 = vdwg.mxu0
        %3397 = vrot.lane.b32.xlu0 %v3163, 48
        %v3398 = vpop.permute.xlu0 %3397
        %v3400 = vsel %vm522, %v3352, 0
        %v3403 = vsel %vm3359, %v3398, 0
        %3405 = vmatpush.bf16.msra.mxu0 0
        %3406 = vmatpush.bf16.msra.mxu0 0
        %3407 = vmatpush.bf16.msra.mxu0 0
        %3408 = vmatpush.bf16.msra.mxu0 0
        %3409 = vmatpush.bf16.msra.mxu0 0
        %3410 = vmatpush.bf16.msra.mxu0 0
        %3411 = vmatpush.bf16.msra.mxu0 0
        %3412 = vmatpush.bf16.msra.mxu0 %v3403
        %3413 = vmatmul.bf16.gmra.mxu0 %v3400
        %v3414 = vpop.f32.mrf.mxu0
        %v3415 = vadd.f32 0.0, %v3414
        %v3416 = vpop.f32.mrf.mxu0
        %3417 = vdwg.mxu0
        %3418 = vrot.lane.b32.xlu0 %v3163, 40
        %v3419 = vpop.permute.xlu0 %3418
        %v3421 = vsel %vm522, %v3353, 0
        %v3424 = vsel %vm3359, %v3419, 0
        %3426 = vmatpush.bf16.msra.mxu0 0
        %3427 = vmatpush.bf16.msra.mxu0 0
        %3428 = vmatpush.bf16.msra.mxu0 0
        %3429 = vmatpush.bf16.msra.mxu0 0
        %3430 = vmatpush.bf16.msra.mxu0 0
        %3431 = vmatpush.bf16.msra.mxu0 0
        %3432 = vmatpush.bf16.msra.mxu0 0
        %3433 = vmatpush.bf16.msra.mxu0 %v3424
        %3434 = vmatmul.bf16.gmra.mxu0 %v3421
        %v3435 = vpop.f32.mrf.mxu0
        %v3436 = vadd.f32 0.0, %v3435
        %v3437 = vpop.f32.mrf.mxu0
        %3438 = vdwg.mxu0
        %3440 = vrot.lane.b32.xlu0 %v3394, 8
        %v3441 = vpop.permute.xlu0 %3440
        %3444 = vrot.lane.b32.xlu0 %v3415, 16
        %v3445 = vpop.permute.xlu0 %3444
        %3448 = vrot.lane.b32.xlu0 %v3436, 24
        %v3449 = vpop.permute.xlu0 %3448
        %v3451 = vsel %vm522, %v3373, %v3441
        %v3452 = vsel %vm615, %v3451, %v3445
        %v3453 = vsel %vm944, %v3452, %v3449
        %v3454 = vpack.c.bf16 %v3158, %v3158
        %v3456 = vunpack.c.l.b16 %v3454
        %v3457 = vpack.c.b16 %v3456, %v3456
        %3458 = vrot.lane.b32.xlu0 %v3457, 96
        %v3459 = vpop.permute.xlu0 %3458
        %v3461 = vsel %vm522, %v3454, 0
        %v3464 = vsel %vm522, %v3459, 0
        %3466 = vmatpush.bf16.xpose.msra.mxu0 0
        %3467 = vmatpush.bf16.xpose.msra.mxu0 0
        %3468 = vmatpush.bf16.xpose.msra.mxu0 0
        %3469 = vmatpush.bf16.xpose.msra.mxu0 0
        %3470 = vmatpush.bf16.xpose.msra.mxu0 0
        %3471 = vmatpush.bf16.xpose.msra.mxu0 0
        %3472 = vmatpush.bf16.xpose.msra.mxu0 0
        %3473 = vmatpush.bf16.xpose.msra.mxu0 %v3464
        %3474 = vmatmul.bf16.gmra.mxu0 %v3461
        %v3475 = vpop.f32.mrf.mxu0
        %v3476 = vadd.f32 %v298, %v3475
        %v3477 = vpop.f32.mrf.mxu0
        %3478 = vdwg.mxu0
        %3479 = vrot.lane.b32.xlu0 %v3457, 120
        %v3480 = vpop.permute.xlu0 %3479
        %3481 = vrot.lane.b32.xlu0 %v3457, 88
        %v3482 = vpop.permute.xlu0 %3481
        %v3484 = vsel %vm522, %v3480, 0
        %v3487 = vsel %vm522, %v3482, 0
        %3489 = vmatpush.bf16.xpose.msra.mxu0 0
        %3490 = vmatpush.bf16.xpose.msra.mxu0 0
        %3491 = vmatpush.bf16.xpose.msra.mxu0 0
        %3492 = vmatpush.bf16.xpose.msra.mxu0 0
        %3493 = vmatpush.bf16.xpose.msra.mxu0 0
        %3494 = vmatpush.bf16.xpose.msra.mxu0 0
        %3495 = vmatpush.bf16.xpose.msra.mxu0 0
        %3496 = vmatpush.bf16.xpose.msra.mxu0 %v3487
        %3497 = vmatmul.bf16.gmra.mxu0 %v3484
        %v3498 = vpop.f32.mrf.mxu0
        %v3499 = vadd.f32 %v298, %v3498
        %v3500 = vpop.f32.mrf.mxu0
        %3501 = vdwg.mxu0
        %3502 = vrot.lane.b32.xlu0 %v3457, 112
        %v3503 = vpop.permute.xlu0 %3502
        %3504 = vrot.lane.b32.xlu0 %v3457, 80
        %v3505 = vpop.permute.xlu0 %3504
        %v3507 = vsel %vm522, %v3503, 0
        %v3510 = vsel %vm522, %v3505, 0
        %3512 = vmatpush.bf16.xpose.msra.mxu0 0
        %3513 = vmatpush.bf16.xpose.msra.mxu0 0
        %3514 = vmatpush.bf16.xpose.msra.mxu0 0
        %3515 = vmatpush.bf16.xpose.msra.mxu0 0
        %3516 = vmatpush.bf16.xpose.msra.mxu0 0
        %3517 = vmatpush.bf16.xpose.msra.mxu0 0
        %3518 = vmatpush.bf16.xpose.msra.mxu0 0
        %3519 = vmatpush.bf16.xpose.msra.mxu0 %v3510
        %3520 = vmatmul.bf16.gmra.mxu0 %v3507
        %v3521 = vpop.f32.mrf.mxu0
        %v3522 = vadd.f32 %v298, %v3521
        %v3523 = vpop.f32.mrf.mxu0
        %3524 = vdwg.mxu0
        %3525 = vrot.lane.b32.xlu0 %v3457, 104
        %v3526 = vpop.permute.xlu0 %3525
        %3527 = vrot.lane.b32.xlu0 %v3457, 72
        %v3528 = vpop.permute.xlu0 %3527
        %v3530 = vsel %vm522, %v3526, 0
        %v3533 = vsel %vm522, %v3528, 0
        %3535 = vmatpush.bf16.xpose.msra.mxu0 0
        %3536 = vmatpush.bf16.xpose.msra.mxu0 0
        %3537 = vmatpush.bf16.xpose.msra.mxu0 0
        %3538 = vmatpush.bf16.xpose.msra.mxu0 0
        %3539 = vmatpush.bf16.xpose.msra.mxu0 0
        %3540 = vmatpush.bf16.xpose.msra.mxu0 0
        %3541 = vmatpush.bf16.xpose.msra.mxu0 0
        %3542 = vmatpush.bf16.xpose.msra.mxu0 %v3533
        %3543 = vmatmul.bf16.gmra.mxu0 %v3530
        %v3544 = vpop.f32.mrf.mxu0
        %v3545 = vadd.f32 %v298, %v3544
        %v3546 = vpop.f32.mrf.mxu0
        %3547 = vdwg.mxu0
        %v3548 = vsel %vm522, %v3476, -inf
        %3549 = vmax.xlane.f32.xlu0 %v3548
        %v3550 = vpop.xlane.xlu0 %3549
        %v3551 = vsel %vm522, %v3499, -inf
        %3552 = vmax.xlane.f32.xlu0 %v3551
        %v3553 = vpop.xlane.xlu0 %3552
        %v3554 = vsel %vm522, %v3522, -inf
        %3555 = vmax.xlane.f32.xlu0 %v3554
        %v3556 = vpop.xlane.xlu0 %3555
        %v3557 = vsel %vm522, %v3545, -inf
        %3558 = vmax.xlane.f32.xlu0 %v3557
        %v3559 = vpop.xlane.xlu0 %3558
        %v3560 = vsub.f32 %v3476, %v3550
        %v3561 = vsub.f32 %v3499, %v3553
        %v3562 = vsub.f32 %v3522, %v3556
        %v3563 = vsub.f32 %v3545, %v3559
        %v3564 = vmul.f32 %v3560, 1.442695
        %v3565 = vpow.pop %v3564
        %v3566 = vmul.f32 %v3561, 1.442695
        %v3567 = vpow.pop %v3566
        %v3568 = vmul.f32 %v3562, 1.442695
        %v3569 = vpow.pop %v3568
        %v3570 = vmul.f32 %v3563, 1.442695
        %v3571 = vpow.pop %v3570
        %v3572 = vsel %vm522, %v3565, 0.0
        %3573 = vadd.xlane.f32.xlu0 %v3572
        %v3574 = vpop.xlane.xlu0 %3573
        %v3575 = vsel %vm522, %v3567, 0.0
        %3576 = vadd.xlane.f32.xlu0 %v3575
        %v3577 = vpop.xlane.xlu0 %3576
        %v3578 = vsel %vm522, %v3569, 0.0
        %3579 = vadd.xlane.f32.xlu0 %v3578
        %v3580 = vpop.xlane.xlu0 %3579
        %v3581 = vsel %vm522, %v3571, 0.0
        %3582 = vadd.xlane.f32.xlu0 %v3581
        %v3583 = vpop.xlane.xlu0 %3582
        %v3584 = vrcp.pop %v3574
        %v3585 = vmul.f32 %v3574, %v3584
        %v3586 = vsub.f32 1.0, %v3585
        %v3587 = vmul.f32 %v3584, %v3586
        %v3588 = vadd.f32 %v3584, %v3587
        %vm3589 = vweird.f32 %v3574
        %vm3590 = vweird.f32 %v3584
        %vm3591 = vmor %vm3589, %vm3590
        %v3592 = vsel %vm3591, %v3584, %v3588
        %v3593 = vand.u32 2147483647, %v3574
        %vm3594 = vcmp.eq.f32.partialorder %v3593, 8.507059e+37
        %v3595 = vand.u32 %v3574, 2147483648
        %v3596 = vor.u32 1.1754944e-38, %v3595
        %v3597 = vsel %vm3594, %v3596, %v3592
        %v3598 = vmul.f32 %v3565, %v3597
        %v3599 = vrcp.pop %v3577
        %v3600 = vmul.f32 %v3577, %v3599
        %v3601 = vsub.f32 1.0, %v3600
        %v3602 = vmul.f32 %v3599, %v3601
        %v3603 = vadd.f32 %v3599, %v3602
        %vm3604 = vweird.f32 %v3577
        %vm3605 = vweird.f32 %v3599
        %vm3606 = vmor %vm3604, %vm3605
        %v3607 = vsel %vm3606, %v3599, %v3603
        %v3608 = vand.u32 2147483647, %v3577
        %vm3609 = vcmp.eq.f32.partialorder %v3608, 8.507059e+37
        %v3610 = vand.u32 %v3577, 2147483648
        %v3611 = vor.u32 1.1754944e-38, %v3610
        %v3612 = vsel %vm3609, %v3611, %v3607
        %v3613 = vmul.f32 %v3567, %v3612
        %v3614 = vrcp.pop %v3580
        %v3615 = vmul.f32 %v3580, %v3614
        %v3616 = vsub.f32 1.0, %v3615
        %v3617 = vmul.f32 %v3614, %v3616
        %v3618 = vadd.f32 %v3614, %v3617
        %vm3619 = vweird.f32 %v3580
        %vm3620 = vweird.f32 %v3614
        %vm3621 = vmor %vm3619, %vm3620
        %v3622 = vsel %vm3621, %v3614, %v3618
        %v3623 = vand.u32 2147483647, %v3580
        %vm3624 = vcmp.eq.f32.partialorder %v3623, 8.507059e+37
        %v3625 = vand.u32 %v3580, 2147483648
        %v3626 = vor.u32 1.1754944e-38, %v3625
        %v3627 = vsel %vm3624, %v3626, %v3622
        %v3628 = vmul.f32 %v3569, %v3627
        %v3629 = vrcp.pop %v3583
        %v3630 = vmul.f32 %v3583, %v3629
        %v3631 = vsub.f32 1.0, %v3630
        %v3632 = vmul.f32 %v3629, %v3631
        %v3633 = vadd.f32 %v3629, %v3632
        %vm3634 = vweird.f32 %v3583
        %vm3635 = vweird.f32 %v3629
        %vm3636 = vmor %vm3634, %vm3635
        %v3637 = vsel %vm3636, %v3629, %v3633
        %v3638 = vand.u32 2147483647, %v3583
        %vm3639 = vcmp.eq.f32.partialorder %v3638, 8.507059e+37
        %v3640 = vand.u32 %v3583, 2147483648
        %v3641 = vor.u32 1.1754944e-38, %v3640
        %v3642 = vsel %vm3639, %v3641, %v3637
        %v3643 = vmul.f32 %v3571, %v3642
        %v3644 = vpack.c.bf16 %v3598, %v3598
        %v3645 = vpack.c.bf16 %v3613, %v3613
        %v3646 = vpack.c.bf16 %v3628, %v3628
        %v3647 = vpack.c.bf16 %v3643, %v3643
        %3648 = vrot.lane.b32.xlu0 %v3457, 64
        %v3649 = vpop.permute.xlu0 %3648
        %v3651 = vsel %vm522, %v3644, 0
        %v3654 = vsel %vm3359, %v3649, 0
        %3656 = vmatpush.bf16.msra.mxu0 0
        %3657 = vmatpush.bf16.msra.mxu0 0
        %3658 = vmatpush.bf16.msra.mxu0 0
        %3659 = vmatpush.bf16.msra.mxu0 0
        %3660 = vmatpush.bf16.msra.mxu0 0
        %3661 = vmatpush.bf16.msra.mxu0 0
        %3662 = vmatpush.bf16.msra.mxu0 0
        %3663 = vmatpush.bf16.msra.mxu0 %v3654
        %3664 = vmatmul.bf16.gmra.mxu0 %v3651
        %v3665 = vpop.f32.mrf.mxu0
        %v3666 = vadd.f32 0.0, %v3665
        %v3667 = vpop.f32.mrf.mxu0
        %3668 = vdwg.mxu0
        %3669 = vrot.lane.b32.xlu0 %v3457, 56
        %v3670 = vpop.permute.xlu0 %3669
        %v3672 = vsel %vm522, %v3645, 0
        %v3675 = vsel %vm3359, %v3670, 0
        %3677 = vmatpush.bf16.msra.mxu0 0
        %3678 = vmatpush.bf16.msra.mxu0 0
        %3679 = vmatpush.bf16.msra.mxu0 0
        %3680 = vmatpush.bf16.msra.mxu0 0
        %3681 = vmatpush.bf16.msra.mxu0 0
        %3682 = vmatpush.bf16.msra.mxu0 0
        %3683 = vmatpush.bf16.msra.mxu0 0
        %3684 = vmatpush.bf16.msra.mxu0 %v3675
        %3685 = vmatmul.bf16.gmra.mxu0 %v3672
        %v3686 = vpop.f32.mrf.mxu0
        %v3687 = vadd.f32 0.0, %v3686
        %v3688 = vpop.f32.mrf.mxu0
        %3689 = vdwg.mxu0
        %3690 = vrot.lane.b32.xlu0 %v3457, 48
        %v3691 = vpop.permute.xlu0 %3690
        %v3693 = vsel %vm522, %v3646, 0
        %v3696 = vsel %vm3359, %v3691, 0
        %3698 = vmatpush.bf16.msra.mxu0 0
        %3699 = vmatpush.bf16.msra.mxu0 0
        %3700 = vmatpush.bf16.msra.mxu0 0
        %3701 = vmatpush.bf16.msra.mxu0 0
        %3702 = vmatpush.bf16.msra.mxu0 0
        %3703 = vmatpush.bf16.msra.mxu0 0
        %3704 = vmatpush.bf16.msra.mxu0 0
        %3705 = vmatpush.bf16.msra.mxu0 %v3696
        %3706 = vmatmul.bf16.gmra.mxu0 %v3693
        %v3707 = vpop.f32.mrf.mxu0
        %v3708 = vadd.f32 0.0, %v3707
        %v3709 = vpop.f32.mrf.mxu0
        %3710 = vdwg.mxu0
        %3711 = vrot.lane.b32.xlu0 %v3457, 40
        %v3712 = vpop.permute.xlu0 %3711
        %v3714 = vsel %vm522, %v3647, 0
        %v3717 = vsel %vm3359, %v3712, 0
        %3719 = vmatpush.bf16.msra.mxu0 0
        %3720 = vmatpush.bf16.msra.mxu0 0
        %3721 = vmatpush.bf16.msra.mxu0 0
        %3722 = vmatpush.bf16.msra.mxu0 0
        %3723 = vmatpush.bf16.msra.mxu0 0
        %3724 = vmatpush.bf16.msra.mxu0 0
        %3725 = vmatpush.bf16.msra.mxu0 0
        %3726 = vmatpush.bf16.msra.mxu0 %v3717
        %3727 = vmatmul.bf16.gmra.mxu0 %v3714
        %v3728 = vpop.f32.mrf.mxu0
        %v3729 = vadd.f32 0.0, %v3728
        %v3730 = vpop.f32.mrf.mxu0
        %3731 = vdwg.mxu0
        %3733 = vrot.lane.b32.xlu0 %v3687, 8
        %v3734 = vpop.permute.xlu0 %3733
        %3737 = vrot.lane.b32.xlu0 %v3708, 16
        %v3738 = vpop.permute.xlu0 %3737
        %3741 = vrot.lane.b32.xlu0 %v3729, 24
        %v3742 = vpop.permute.xlu0 %3741
        %v3744 = vsel %vm522, %v3666, %v3734
        %v3745 = vsel %vm615, %v3744, %v3738
        %v3746 = vsel %vm944, %v3745, %v3742
        %v3747 = vld [vmem:[#allocation4 + $0xd0] sm:$0xf]
        %v3748 = vld [vmem:[#allocation4 + $0xd4] sm:$0xf]
        %v3749 = vld [vmem:[#allocation4 + $0xd8] sm:$0xf]
        %v3750 = vld [vmem:[#allocation4 + $0xdc] sm:$0xf]
        %v3751 = vpack.c.bf16 %v3746, %v3453
        %v3752 = vld [vmem:[#allocation6 + $0x90] sm:$0x1]
        %v3753 = vperm.slane %v3752, 0
        %v3758 = vunpack.c.l.b16 %v3747
        %v3759 = vunpack.c.l.b16 %v3748
        %v3760 = vunpack.c.l.b16 %v3749
        %v3761 = vunpack.c.l.b16 %v3750
        %v3762 = vpack.c.b16 %v3759, %v3758
        %v3763 = vpack.c.b16 %v3761, %v3760
        %v3767 = vsel %vm485, %v3751, 0
        %3769 = vmatpush.bf16.msra.mxu0 0
        %3770 = vmatpush.bf16.msra.mxu0 0
        %3771 = vmatpush.bf16.msra.mxu0 0
        %3772 = vmatpush.bf16.msra.mxu0 0
        %3773 = vmatpush.bf16.msra.mxu0 0
        %3774 = vmatpush.bf16.msra.mxu0 0
        %3775 = vmatpush.bf16.msra.mxu0 %v3763
        %3776 = vmatpush.bf16.msra.mxu0 %v3762
        %3777 = vmatmul.bf16.gmra.mxu0 %v3767
        %v3778 = vpop.f32.mrf.mxu0
        %v3779 = vadd.f32 %v3753, %v3778
        %v3780 = vpop.f32.mrf.mxu0
        %v3781 = vadd.f32 %v3753, %v3780
        %3782 = vdwg.mxu0
        %v3783 = vadd.f32 %v325, %v3779
        %v3784 = vadd.f32 %v345, %v3781
        %v3785 = vsel %vm485, %v3783, 0.0
        %3786 = vadd.xlane.f32.xlu0 %v3785
        %v3787 = vpop.xlane.xlu0 %3786
        %v3788 = vsel %vm485, %v3784, 0.0
        %3789 = vadd.xlane.f32.xlu0 %v3788
        %v3790 = vpop.xlane.xlu0 %3789
        %v3791 = vmul.f32 %v3787, %v1447
        %v3792 = vmul.f32 %v3790, %v1447
        %v3793 = vsub.f32 %v3783, %v3791
        %v3794 = vsub.f32 %v3784, %v3792
        %v3795 = vmul.f32 %v3793, %v3793
        %v3796 = vmul.f32 %v3794, %v3794
        %v3797 = vsel %vm485, %v3795, 0.0
        %3798 = vadd.xlane.f32.xlu0 %v3797
        %v3799 = vpop.xlane.xlu0 %3798
        %v3800 = vsel %vm485, %v3796, 0.0
        %3801 = vadd.xlane.f32.xlu0 %v3800
        %v3802 = vpop.xlane.xlu0 %3801
        %v3803 = vmul.f32 %v3799, %v1447
        %v3804 = vmul.f32 %v3802, %v1447
        %v3805 = vadd.f32 %v3803, 1e-05
        %v3806 = vadd.f32 %v3804, 1e-05
        %v3807 = vrsqrt.pop %v3805
        %v3808 = vmul.f32 %v3807, %v3805
        %v3809 = vmul.f32 %v3808, %v3807
        %v3810 = vmul.f32 0.5, %v3809
        %v3811 = vsub.f32 1.5, %v3810
        %v3812 = vmul.f32 %v3807, %v3811
        %vm3813 = vweird.f32 %v3805
        %vm3814 = vweird.f32 %v3807
        %vm3815 = vmor %vm3813, %vm3814
        %v3816 = vsel %vm3815, %v3807, %v3812
        %v3817 = vrsqrt.pop %v3806
        %v3818 = vmul.f32 %v3817, %v3806
        %v3819 = vmul.f32 %v3818, %v3817
        %v3820 = vmul.f32 0.5, %v3819
        %v3821 = vsub.f32 1.5, %v3820
        %v3822 = vmul.f32 %v3817, %v3821
        %vm3823 = vweird.f32 %v3806
        %vm3824 = vweird.f32 %v3817
        %vm3825 = vmor %vm3823, %vm3824
        %v3826 = vsel %vm3825, %v3817, %v3822
        %v3827 = vmul.f32 %v3793, %v3816
        %v3828 = vmul.f32 %v3794, %v3826
        %v3829 = vperm.slane %v3122, 0
        %v3830 = vmul.f32 %v3827, %v3829
        %v3831 = vmul.f32 %v3828, %v3829
        %v3832 = vperm.slane %v3123, 0
        %v3833 = vadd.f32 %v3830, %v3832
        %v3834 = vadd.f32 %v3831, %v3832
        %v3835 = vld [vmem:[#allocation4 + $0xe0] sm:$0xf]
        %v3836 = vld [vmem:[#allocation4 + $0xe4] sm:$0xf]
        %v3837 = vld [vmem:[#allocation4 + $0xe8] sm:$0xf]
        %v3838 = vld [vmem:[#allocation4 + $0xec] sm:$0xf]
        %v3839 = vpack.c.bf16 %v3834, %v3833
        %v3840 = vld [vmem:[#allocation6 + $0x98] sm:$0x1]
        %v3841 = vperm.slane %v3840, 0
        %v3846 = vunpack.c.l.b16 %v3835
        %v3847 = vunpack.c.l.b16 %v3836
        %v3848 = vunpack.c.l.b16 %v3837
        %v3849 = vunpack.c.l.b16 %v3838
        %v3850 = vpack.c.b16 %v3847, %v3846
        %v3851 = vpack.c.b16 %v3849, %v3848
        %v3855 = vsel %vm485, %v3839, 0
        %3857 = vmatpush.bf16.msra.mxu0 0
        %3858 = vmatpush.bf16.msra.mxu0 0
        %3859 = vmatpush.bf16.msra.mxu0 0
        %3860 = vmatpush.bf16.msra.mxu0 0
        %3861 = vmatpush.bf16.msra.mxu0 0
        %3862 = vmatpush.bf16.msra.mxu0 0
        %3863 = vmatpush.bf16.msra.mxu0 %v3851
        %3864 = vmatpush.bf16.msra.mxu0 %v3850
        %3865 = vmatmul.bf16.gmra.mxu0 %v3855
        %v3866 = vpop.f32.mrf.mxu0
        %v3867 = vadd.f32 %v3841, %v3866
        %v3868 = vpop.f32.mrf.mxu0
        %v3869 = vadd.f32 %v3841, %v3868
        %3870 = vdwg.mxu0
        %v3871 = vld [vmem:[#allocation4 + $0xf0] sm:$0xf]
        %v3872 = vld [vmem:[#allocation4 + $0xf4] sm:$0xf]
        %v3873 = vld [vmem:[#allocation4 + $0xf8] sm:$0xf]
        %v3874 = vld [vmem:[#allocation4 + $0xfc] sm:$0xf]
        %v3875 = vpack.c.bf16 %v3116, %v3115
        %v3876 = vpack.c.bf16 %v3118, %v3117
        %v3877 = vld [vmem:[#allocation6 + $0xa0] sm:$0x1]
        %v3878 = vperm.slane %v3877, 0
        %v3883 = vunpack.c.l.b16 %v3871
        %v3884 = vunpack.c.l.b16 %v3872
        %v3885 = vunpack.c.l.b16 %v3873
        %v3886 = vunpack.c.l.b16 %v3874
        %v3887 = vpack.c.b16 %v3884, %v3883
        %v3888 = vpack.c.b16 %v3886, %v3885
        %v3892 = vsel %vm485, %v3875, 0
        %v3895 = vsel %vm485, %v3876, 0
        %3897 = vmatpush.bf16.msra.mxu0 0
        %3898 = vmatpush.bf16.msra.mxu0 0
        %3899 = vmatpush.bf16.msra.mxu0 0
        %3900 = vmatpush.bf16.msra.mxu0 0
        %3901 = vmatpush.bf16.msra.mxu0 0
        %3902 = vmatpush.bf16.msra.mxu0 0
        %3903 = vmatpush.bf16.msra.mxu0 %v3888
        %3904 = vmatpush.bf16.msra.mxu0 %v3887
        %3905 = vmatmul.bf16.gmra.mxu0 %v3892
        %v3906 = vpop.f32.mrf.mxu0
        %v3907 = vadd.f32 %v3878, %v3906
        %v3908 = vpop.f32.mrf.mxu0
        %v3909 = vadd.f32 %v3878, %v3908
        %3910 = vmatmul.bf16.gmra.mxu0 %v3895
        %v3911 = vpop.f32.mrf.mxu0
        %v3912 = vadd.f32 %v3878, %v3911
        %v3913 = vpop.f32.mrf.mxu0
        %v3914 = vadd.f32 %v3878, %v3913
        %3915 = vdwg.mxu0
        %v3916 = vpack.c.bf16 %v3867, %v3867
        %v3917 = vpack.c.bf16 %v3907, %v3907
        %v3918 = vpack.c.bf16 %v3909, %v3909
        %v3921 = vunpack.c.l.b16 %v3917
        %v3922 = vunpack.c.l.b16 %v3918
        %v3923 = vpack.c.b16 %v3922, %v3921
        %v3925 = vsel %vm522, %v3916, 0
        %v3928 = vsel %vm522, %v3923, 0
        %3930 = vmatpush.bf16.xpose.msra.mxu0 0
        %3931 = vmatpush.bf16.xpose.msra.mxu0 0
        %3932 = vmatpush.bf16.xpose.msra.mxu0 0
        %3933 = vmatpush.bf16.xpose.msra.mxu0 0
        %3934 = vmatpush.bf16.xpose.msra.mxu0 0
        %3935 = vmatpush.bf16.xpose.msra.mxu0 0
        %3936 = vmatpush.bf16.xpose.msra.mxu0 0
        %3937 = vmatpush.bf16.xpose.msra.mxu0 %v3928
        %3938 = vmatmul.bf16.gmra.mxu0 %v3925
        %v3939 = vpop.f32.mrf.mxu0
        %v3940 = vadd.f32 %v3120, %v3939
        %v3941 = vpop.f32.mrf.mxu0
        %3942 = vdwg.mxu0
        %v3944 = vunpack.c.l.b16 %v3916
        %v3945 = vpack.c.b16 %v3944, %v3944
        %3946 = vrot.lane.b32.xlu0 %v3945, 120
        %v3947 = vpop.permute.xlu0 %3946
        %3948 = vrot.lane.b32.xlu0 %v3923, 120
        %v3949 = vpop.permute.xlu0 %3948
        %v3951 = vsel %vm522, %v3947, 0
        %v3954 = vsel %vm522, %v3949, 0
        %3956 = vmatpush.bf16.xpose.msra.mxu0 0
        %3957 = vmatpush.bf16.xpose.msra.mxu0 0
        %3958 = vmatpush.bf16.xpose.msra.mxu0 0
        %3959 = vmatpush.bf16.xpose.msra.mxu0 0
        %3960 = vmatpush.bf16.xpose.msra.mxu0 0
        %3961 = vmatpush.bf16.xpose.msra.mxu0 0
        %3962 = vmatpush.bf16.xpose.msra.mxu0 0
        %3963 = vmatpush.bf16.xpose.msra.mxu0 %v3954
        %3964 = vmatmul.bf16.gmra.mxu0 %v3951
        %v3965 = vpop.f32.mrf.mxu0
        %v3966 = vadd.f32 %v3120, %v3965
        %v3967 = vpop.f32.mrf.mxu0
        %3968 = vdwg.mxu0
        %3969 = vrot.lane.b32.xlu0 %v3945, 112
        %v3970 = vpop.permute.xlu0 %3969
        %3971 = vrot.lane.b32.xlu0 %v3923, 112
        %v3972 = vpop.permute.xlu0 %3971
        %v3974 = vsel %vm522, %v3970, 0
        %v3977 = vsel %vm522, %v3972, 0
        %3979 = vmatpush.bf16.xpose.msra.mxu0 0
        %3980 = vmatpush.bf16.xpose.msra.mxu0 0
        %3981 = vmatpush.bf16.xpose.msra.mxu0 0
        %3982 = vmatpush.bf16.xpose.msra.mxu0 0
        %3983 = vmatpush.bf16.xpose.msra.mxu0 0
        %3984 = vmatpush.bf16.xpose.msra.mxu0 0
        %3985 = vmatpush.bf16.xpose.msra.mxu0 0
        %3986 = vmatpush.bf16.xpose.msra.mxu0 %v3977
        %3987 = vmatmul.bf16.gmra.mxu0 %v3974
        %v3988 = vpop.f32.mrf.mxu0
        %v3989 = vadd.f32 %v3120, %v3988
        %v3990 = vpop.f32.mrf.mxu0
        %3991 = vdwg.mxu0
        %3992 = vrot.lane.b32.xlu0 %v3945, 104
        %v3993 = vpop.permute.xlu0 %3992
        %3994 = vrot.lane.b32.xlu0 %v3923, 104
        %v3995 = vpop.permute.xlu0 %3994
        %v3997 = vsel %vm522, %v3993, 0
        %v4000 = vsel %vm522, %v3995, 0
        %4002 = vmatpush.bf16.xpose.msra.mxu0 0
        %4003 = vmatpush.bf16.xpose.msra.mxu0 0
        %4004 = vmatpush.bf16.xpose.msra.mxu0 0
        %4005 = vmatpush.bf16.xpose.msra.mxu0 0
        %4006 = vmatpush.bf16.xpose.msra.mxu0 0
        %4007 = vmatpush.bf16.xpose.msra.mxu0 0
        %4008 = vmatpush.bf16.xpose.msra.mxu0 0
        %4009 = vmatpush.bf16.xpose.msra.mxu0 %v4000
        %4010 = vmatmul.bf16.gmra.mxu0 %v3997
        %v4011 = vpop.f32.mrf.mxu0
        %v4012 = vadd.f32 %v3120, %v4011
        %v4013 = vpop.f32.mrf.mxu0
        %4014 = vdwg.mxu0
        %v4015 = vsel %vm615, %v3940, -inf
        %4016 = vmax.xlane.f32.xlu0 %v4015
        %v4017 = vpop.xlane.xlu0 %4016
        %v4018 = vsel %vm615, %v3966, -inf
        %4019 = vmax.xlane.f32.xlu0 %v4018
        %v4020 = vpop.xlane.xlu0 %4019
        %v4021 = vsel %vm615, %v3989, -inf
        %4022 = vmax.xlane.f32.xlu0 %v4021
        %v4023 = vpop.xlane.xlu0 %4022
        %v4024 = vsel %vm615, %v4012, -inf
        %4025 = vmax.xlane.f32.xlu0 %v4024
        %v4026 = vpop.xlane.xlu0 %4025
        %v4027 = vsub.f32 %v3940, %v4017
        %v4028 = vsub.f32 %v3966, %v4020
        %v4029 = vsub.f32 %v3989, %v4023
        %v4030 = vsub.f32 %v4012, %v4026
        %v4031 = vmul.f32 %v4027, 1.442695
        %v4032 = vpow.pop %v4031
        %v4033 = vmul.f32 %v4028, 1.442695
        %v4034 = vpow.pop %v4033
        %v4035 = vmul.f32 %v4029, 1.442695
        %v4036 = vpow.pop %v4035
        %v4037 = vmul.f32 %v4030, 1.442695
        %v4038 = vpow.pop %v4037
        %v4039 = vsel %vm615, %v4032, 0.0
        %4040 = vadd.xlane.f32.xlu0 %v4039
        %v4041 = vpop.xlane.xlu0 %4040
        %v4042 = vsel %vm615, %v4034, 0.0
        %4043 = vadd.xlane.f32.xlu0 %v4042
        %v4044 = vpop.xlane.xlu0 %4043
        %v4045 = vsel %vm615, %v4036, 0.0
        %4046 = vadd.xlane.f32.xlu0 %v4045
        %v4047 = vpop.xlane.xlu0 %4046
        %v4048 = vsel %vm615, %v4038, 0.0
        %4049 = vadd.xlane.f32.xlu0 %v4048
        %v4050 = vpop.xlane.xlu0 %4049
        %v4051 = vrcp.pop %v4041
        %v4052 = vmul.f32 %v4041, %v4051
        %v4053 = vsub.f32 1.0, %v4052
        %v4054 = vmul.f32 %v4051, %v4053
        %v4055 = vadd.f32 %v4051, %v4054
        %vm4056 = vweird.f32 %v4041
        %vm4057 = vweird.f32 %v4051
        %vm4058 = vmor %vm4056, %vm4057
        %v4059 = vsel %vm4058, %v4051, %v4055
        %v4060 = vand.u32 2147483647, %v4041
        %vm4061 = vcmp.eq.f32.partialorder %v4060, 8.507059e+37
        %v4062 = vand.u32 %v4041, 2147483648
        %v4063 = vor.u32 1.1754944e-38, %v4062
        %v4064 = vsel %vm4061, %v4063, %v4059
        %v4065 = vmul.f32 %v4032, %v4064
        %v4066 = vrcp.pop %v4044
        %v4067 = vmul.f32 %v4044, %v4066
        %v4068 = vsub.f32 1.0, %v4067
        %v4069 = vmul.f32 %v4066, %v4068
        %v4070 = vadd.f32 %v4066, %v4069
        %vm4071 = vweird.f32 %v4044
        %vm4072 = vweird.f32 %v4066
        %vm4073 = vmor %vm4071, %vm4072
        %v4074 = vsel %vm4073, %v4066, %v4070
        %v4075 = vand.u32 2147483647, %v4044
        %vm4076 = vcmp.eq.f32.partialorder %v4075, 8.507059e+37
        %v4077 = vand.u32 %v4044, 2147483648
        %v4078 = vor.u32 1.1754944e-38, %v4077
        %v4079 = vsel %vm4076, %v4078, %v4074
        %v4080 = vmul.f32 %v4034, %v4079
        %v4081 = vrcp.pop %v4047
        %v4082 = vmul.f32 %v4047, %v4081
        %v4083 = vsub.f32 1.0, %v4082
        %v4084 = vmul.f32 %v4081, %v4083
        %v4085 = vadd.f32 %v4081, %v4084
        %vm4086 = vweird.f32 %v4047
        %vm4087 = vweird.f32 %v4081
        %vm4088 = vmor %vm4086, %vm4087
        %v4089 = vsel %vm4088, %v4081, %v4085
        %v4090 = vand.u32 2147483647, %v4047
        %vm4091 = vcmp.eq.f32.partialorder %v4090, 8.507059e+37
        %v4092 = vand.u32 %v4047, 2147483648
        %v4093 = vor.u32 1.1754944e-38, %v4092
        %v4094 = vsel %vm4091, %v4093, %v4089
        %v4095 = vmul.f32 %v4036, %v4094
        %v4096 = vrcp.pop %v4050
        %v4097 = vmul.f32 %v4050, %v4096
        %v4098 = vsub.f32 1.0, %v4097
        %v4099 = vmul.f32 %v4096, %v4098
        %v4100 = vadd.f32 %v4096, %v4099
        %vm4101 = vweird.f32 %v4050
        %vm4102 = vweird.f32 %v4096
        %vm4103 = vmor %vm4101, %vm4102
        %v4104 = vsel %vm4103, %v4096, %v4100
        %v4105 = vand.u32 2147483647, %v4050
        %vm4106 = vcmp.eq.f32.partialorder %v4105, 8.507059e+37
        %v4107 = vand.u32 %v4050, 2147483648
        %v4108 = vor.u32 1.1754944e-38, %v4107
        %v4109 = vsel %vm4106, %v4108, %v4104
        %v4110 = vmul.f32 %v4038, %v4109
        %v4111 = vpack.c.bf16 %v4065, %v4065
        %v4112 = vpack.c.bf16 %v4080, %v4080
        %v4113 = vpack.c.bf16 %v4095, %v4095
        %v4114 = vpack.c.bf16 %v4110, %v4110
        %4115 = vrot.lane.b32.xlu0 %v3923, 96
        %v4116 = vpop.permute.xlu0 %4115
        %v4119 = vsel %vm615, %v4111, 0
        %4121 = vmatpush.bf16.msra.mxu0 0
        %4122 = vmatpush.bf16.msra.mxu0 0
        %4123 = vmatpush.bf16.msra.mxu0 0
        %4124 = vmatpush.bf16.msra.mxu0 0
        %4125 = vmatpush.bf16.msra.mxu0 0
        %4126 = vmatpush.bf16.msra.mxu0 0
        %4127 = vmatpush.bf16.msra.mxu0 0
        %4128 = vmatpush.bf16.msra.mxu0 %v4116
        %4129 = vmatmul.bf16.gmra.mxu0 %v4119
        %v4130 = vpop.f32.mrf.mxu0
        %v4131 = vadd.f32 0.0, %v4130
        %v4132 = vpop.f32.mrf.mxu0
        %4133 = vdwg.mxu0
        %4134 = vrot.lane.b32.xlu0 %v3923, 88
        %v4135 = vpop.permute.xlu0 %4134
        %v4138 = vsel %vm615, %v4112, 0
        %4140 = vmatpush.bf16.msra.mxu0 0
        %4141 = vmatpush.bf16.msra.mxu0 0
        %4142 = vmatpush.bf16.msra.mxu0 0
        %4143 = vmatpush.bf16.msra.mxu0 0
        %4144 = vmatpush.bf16.msra.mxu0 0
        %4145 = vmatpush.bf16.msra.mxu0 0
        %4146 = vmatpush.bf16.msra.mxu0 0
        %4147 = vmatpush.bf16.msra.mxu0 %v4135
        %4148 = vmatmul.bf16.gmra.mxu0 %v4138
        %v4149 = vpop.f32.mrf.mxu0
        %v4150 = vadd.f32 0.0, %v4149
        %v4151 = vpop.f32.mrf.mxu0
        %4152 = vdwg.mxu0
        %4153 = vrot.lane.b32.xlu0 %v3923, 80
        %v4154 = vpop.permute.xlu0 %4153
        %v4157 = vsel %vm615, %v4113, 0
        %4159 = vmatpush.bf16.msra.mxu0 0
        %4160 = vmatpush.bf16.msra.mxu0 0
        %4161 = vmatpush.bf16.msra.mxu0 0
        %4162 = vmatpush.bf16.msra.mxu0 0
        %4163 = vmatpush.bf16.msra.mxu0 0
        %4164 = vmatpush.bf16.msra.mxu0 0
        %4165 = vmatpush.bf16.msra.mxu0 0
        %4166 = vmatpush.bf16.msra.mxu0 %v4154
        %4167 = vmatmul.bf16.gmra.mxu0 %v4157
        %v4168 = vpop.f32.mrf.mxu0
        %v4169 = vadd.f32 0.0, %v4168
        %v4170 = vpop.f32.mrf.mxu0
        %4171 = vdwg.mxu0
        %4172 = vrot.lane.b32.xlu0 %v3923, 72
        %v4173 = vpop.permute.xlu0 %4172
        %v4176 = vsel %vm615, %v4114, 0
        %4178 = vmatpush.bf16.msra.mxu0 0
        %4179 = vmatpush.bf16.msra.mxu0 0
        %4180 = vmatpush.bf16.msra.mxu0 0
        %4181 = vmatpush.bf16.msra.mxu0 0
        %4182 = vmatpush.bf16.msra.mxu0 0
        %4183 = vmatpush.bf16.msra.mxu0 0
        %4184 = vmatpush.bf16.msra.mxu0 0
        %4185 = vmatpush.bf16.msra.mxu0 %v4173
        %4186 = vmatmul.bf16.gmra.mxu0 %v4176
        %v4187 = vpop.f32.mrf.mxu0
        %v4188 = vadd.f32 0.0, %v4187
        %v4189 = vpop.f32.mrf.mxu0
        %4190 = vdwg.mxu0
        %4192 = vrot.lane.b32.xlu0 %v4150, 8
        %v4193 = vpop.permute.xlu0 %4192
        %4196 = vrot.lane.b32.xlu0 %v4169, 16
        %v4197 = vpop.permute.xlu0 %4196
        %4200 = vrot.lane.b32.xlu0 %v4188, 24
        %v4201 = vpop.permute.xlu0 %4200
        %v4203 = vsel %vm522, %v4131, %v4193
        %v4204 = vsel %vm615, %v4203, %v4197
        %v4205 = vsel %vm944, %v4204, %v4201
        %v4206 = vpack.c.bf16 %v3869, %v3869
        %v4207 = vpack.c.bf16 %v3912, %v3912
        %v4208 = vpack.c.bf16 %v3914, %v3914
        %v4211 = vunpack.c.l.b16 %v4207
        %v4212 = vunpack.c.l.b16 %v4208
        %v4213 = vpack.c.b16 %v4212, %v4211
        %v4215 = vsel %vm522, %v4206, 0
        %v4218 = vsel %vm522, %v4213, 0
        %4220 = vmatpush.bf16.xpose.msra.mxu0 0
        %4221 = vmatpush.bf16.xpose.msra.mxu0 0
        %4222 = vmatpush.bf16.xpose.msra.mxu0 0
        %4223 = vmatpush.bf16.xpose.msra.mxu0 0
        %4224 = vmatpush.bf16.xpose.msra.mxu0 0
        %4225 = vmatpush.bf16.xpose.msra.mxu0 0
        %4226 = vmatpush.bf16.xpose.msra.mxu0 0
        %4227 = vmatpush.bf16.xpose.msra.mxu0 %v4218
        %4228 = vmatmul.bf16.gmra.mxu0 %v4215
        %v4229 = vpop.f32.mrf.mxu0
        %v4230 = vadd.f32 %v3121, %v4229
        %v4231 = vpop.f32.mrf.mxu0
        %4232 = vdwg.mxu0
        %v4234 = vunpack.c.l.b16 %v4206
        %v4235 = vpack.c.b16 %v4234, %v4234
        %4236 = vrot.lane.b32.xlu0 %v4235, 120
        %v4237 = vpop.permute.xlu0 %4236
        %4238 = vrot.lane.b32.xlu0 %v4213, 120
        %v4239 = vpop.permute.xlu0 %4238
        %v4241 = vsel %vm522, %v4237, 0
        %v4244 = vsel %vm522, %v4239, 0
        %4246 = vmatpush.bf16.xpose.msra.mxu0 0
        %4247 = vmatpush.bf16.xpose.msra.mxu0 0
        %4248 = vmatpush.bf16.xpose.msra.mxu0 0
        %4249 = vmatpush.bf16.xpose.msra.mxu0 0
        %4250 = vmatpush.bf16.xpose.msra.mxu0 0
        %4251 = vmatpush.bf16.xpose.msra.mxu0 0
        %4252 = vmatpush.bf16.xpose.msra.mxu0 0
        %4253 = vmatpush.bf16.xpose.msra.mxu0 %v4244
        %4254 = vmatmul.bf16.gmra.mxu0 %v4241
        %v4255 = vpop.f32.mrf.mxu0
        %v4256 = vadd.f32 %v3121, %v4255
        %v4257 = vpop.f32.mrf.mxu0
        %4258 = vdwg.mxu0
        %4259 = vrot.lane.b32.xlu0 %v4235, 112
        %v4260 = vpop.permute.xlu0 %4259
        %4261 = vrot.lane.b32.xlu0 %v4213, 112
        %v4262 = vpop.permute.xlu0 %4261
        %v4264 = vsel %vm522, %v4260, 0
        %v4267 = vsel %vm522, %v4262, 0
        %4269 = vmatpush.bf16.xpose.msra.mxu0 0
        %4270 = vmatpush.bf16.xpose.msra.mxu0 0
        %4271 = vmatpush.bf16.xpose.msra.mxu0 0
        %4272 = vmatpush.bf16.xpose.msra.mxu0 0
        %4273 = vmatpush.bf16.xpose.msra.mxu0 0
        %4274 = vmatpush.bf16.xpose.msra.mxu0 0
        %4275 = vmatpush.bf16.xpose.msra.mxu0 0
        %4276 = vmatpush.bf16.xpose.msra.mxu0 %v4267
        %4277 = vmatmul.bf16.gmra.mxu0 %v4264
        %v4278 = vpop.f32.mrf.mxu0
        %v4279 = vadd.f32 %v3121, %v4278
        %v4280 = vpop.f32.mrf.mxu0
        %4281 = vdwg.mxu0
        %4282 = vrot.lane.b32.xlu0 %v4235, 104
        %v4283 = vpop.permute.xlu0 %4282
        %4284 = vrot.lane.b32.xlu0 %v4213, 104
        %v4285 = vpop.permute.xlu0 %4284
        %v4287 = vsel %vm522, %v4283, 0
        %v4290 = vsel %vm522, %v4285, 0
        %4292 = vmatpush.bf16.xpose.msra.mxu0 0
        %4293 = vmatpush.bf16.xpose.msra.mxu0 0
        %4294 = vmatpush.bf16.xpose.msra.mxu0 0
        %4295 = vmatpush.bf16.xpose.msra.mxu0 0
        %4296 = vmatpush.bf16.xpose.msra.mxu0 0
        %4297 = vmatpush.bf16.xpose.msra.mxu0 0
        %4298 = vmatpush.bf16.xpose.msra.mxu0 0
        %4299 = vmatpush.bf16.xpose.msra.mxu0 %v4290
        %4300 = vmatmul.bf16.gmra.mxu0 %v4287
        %v4301 = vpop.f32.mrf.mxu0
        %v4302 = vadd.f32 %v3121, %v4301
        %v4303 = vpop.f32.mrf.mxu0
        %4304 = vdwg.mxu0
        %v4305 = vsel %vm615, %v4230, -inf
        %4306 = vmax.xlane.f32.xlu0 %v4305
        %v4307 = vpop.xlane.xlu0 %4306
        %v4308 = vsel %vm615, %v4256, -inf
        %4309 = vmax.xlane.f32.xlu0 %v4308
        %v4310 = vpop.xlane.xlu0 %4309
        %v4311 = vsel %vm615, %v4279, -inf
        %4312 = vmax.xlane.f32.xlu0 %v4311
        %v4313 = vpop.xlane.xlu0 %4312
        %v4314 = vsel %vm615, %v4302, -inf
        %4315 = vmax.xlane.f32.xlu0 %v4314
        %v4316 = vpop.xlane.xlu0 %4315
        %v4317 = vsub.f32 %v4230, %v4307
        %v4318 = vsub.f32 %v4256, %v4310
        %v4319 = vsub.f32 %v4279, %v4313
        %v4320 = vsub.f32 %v4302, %v4316
        %v4321 = vmul.f32 %v4317, 1.442695
        %v4322 = vpow.pop %v4321
        %v4323 = vmul.f32 %v4318, 1.442695
        %v4324 = vpow.pop %v4323
        %v4325 = vmul.f32 %v4319, 1.442695
        %v4326 = vpow.pop %v4325
        %v4327 = vmul.f32 %v4320, 1.442695
        %v4328 = vpow.pop %v4327
        %v4329 = vsel %vm615, %v4322, 0.0
        %4330 = vadd.xlane.f32.xlu0 %v4329
        %v4331 = vpop.xlane.xlu0 %4330
        %v4332 = vsel %vm615, %v4324, 0.0
        %4333 = vadd.xlane.f32.xlu0 %v4332
        %v4334 = vpop.xlane.xlu0 %4333
        %v4335 = vsel %vm615, %v4326, 0.0
        %4336 = vadd.xlane.f32.xlu0 %v4335
        %v4337 = vpop.xlane.xlu0 %4336
        %v4338 = vsel %vm615, %v4328, 0.0
        %4339 = vadd.xlane.f32.xlu0 %v4338
        %v4340 = vpop.xlane.xlu0 %4339
        %v4341 = vrcp.pop %v4331
        %v4342 = vmul.f32 %v4331, %v4341
        %v4343 = vsub.f32 1.0, %v4342
        %v4344 = vmul.f32 %v4341, %v4343
        %v4345 = vadd.f32 %v4341, %v4344
        %vm4346 = vweird.f32 %v4331
        %vm4347 = vweird.f32 %v4341
        %vm4348 = vmor %vm4346, %vm4347
        %v4349 = vsel %vm4348, %v4341, %v4345
        %v4350 = vand.u32 2147483647, %v4331
        %vm4351 = vcmp.eq.f32.partialorder %v4350, 8.507059e+37
        %v4352 = vand.u32 %v4331, 2147483648
        %v4353 = vor.u32 1.1754944e-38, %v4352
        %v4354 = vsel %vm4351, %v4353, %v4349
        %v4355 = vmul.f32 %v4322, %v4354
        %v4356 = vrcp.pop %v4334
        %v4357 = vmul.f32 %v4334, %v4356
        %v4358 = vsub.f32 1.0, %v4357
        %v4359 = vmul.f32 %v4356, %v4358
        %v4360 = vadd.f32 %v4356, %v4359
        %vm4361 = vweird.f32 %v4334
        %vm4362 = vweird.f32 %v4356
        %vm4363 = vmor %vm4361, %vm4362
        %v4364 = vsel %vm4363, %v4356, %v4360
        %v4365 = vand.u32 2147483647, %v4334
        %vm4366 = vcmp.eq.f32.partialorder %v4365, 8.507059e+37
        %v4367 = vand.u32 %v4334, 2147483648
        %v4368 = vor.u32 1.1754944e-38, %v4367
        %v4369 = vsel %vm4366, %v4368, %v4364
        %v4370 = vmul.f32 %v4324, %v4369
        %v4371 = vrcp.pop %v4337
        %v4372 = vmul.f32 %v4337, %v4371
        %v4373 = vsub.f32 1.0, %v4372
        %v4374 = vmul.f32 %v4371, %v4373
        %v4375 = vadd.f32 %v4371, %v4374
        %vm4376 = vweird.f32 %v4337
        %vm4377 = vweird.f32 %v4371
        %vm4378 = vmor %vm4376, %vm4377
        %v4379 = vsel %vm4378, %v4371, %v4375
        %v4380 = vand.u32 2147483647, %v4337
        %vm4381 = vcmp.eq.f32.partialorder %v4380, 8.507059e+37
        %v4382 = vand.u32 %v4337, 2147483648
        %v4383 = vor.u32 1.1754944e-38, %v4382
        %v4384 = vsel %vm4381, %v4383, %v4379
        %v4385 = vmul.f32 %v4326, %v4384
        %v4386 = vrcp.pop %v4340
        %v4387 = vmul.f32 %v4340, %v4386
        %v4388 = vsub.f32 1.0, %v4387
        %v4389 = vmul.f32 %v4386, %v4388
        %v4390 = vadd.f32 %v4386, %v4389
        %vm4391 = vweird.f32 %v4340
        %vm4392 = vweird.f32 %v4386
        %vm4393 = vmor %vm4391, %vm4392
        %v4394 = vsel %vm4393, %v4386, %v4390
        %v4395 = vand.u32 2147483647, %v4340
        %vm4396 = vcmp.eq.f32.partialorder %v4395, 8.507059e+37
        %v4397 = vand.u32 %v4340, 2147483648
        %v4398 = vor.u32 1.1754944e-38, %v4397
        %v4399 = vsel %vm4396, %v4398, %v4394
        %v4400 = vmul.f32 %v4328, %v4399
        %v4401 = vpack.c.bf16 %v4355, %v4355
        %v4402 = vpack.c.bf16 %v4370, %v4370
        %v4403 = vpack.c.bf16 %v4385, %v4385
        %v4404 = vpack.c.bf16 %v4400, %v4400
        %4405 = vrot.lane.b32.xlu0 %v4213, 96
        %v4406 = vpop.permute.xlu0 %4405
        %v4409 = vsel %vm615, %v4401, 0
        %4411 = vmatpush.bf16.msra.mxu0 0
        %4412 = vmatpush.bf16.msra.mxu0 0
        %4413 = vmatpush.bf16.msra.mxu0 0
        %4414 = vmatpush.bf16.msra.mxu0 0
        %4415 = vmatpush.bf16.msra.mxu0 0
        %4416 = vmatpush.bf16.msra.mxu0 0
        %4417 = vmatpush.bf16.msra.mxu0 0
        %4418 = vmatpush.bf16.msra.mxu0 %v4406
        %4419 = vmatmul.bf16.gmra.mxu0 %v4409
        %v4420 = vpop.f32.mrf.mxu0
        %v4421 = vadd.f32 0.0, %v4420
        %v4422 = vpop.f32.mrf.mxu0
        %4423 = vdwg.mxu0
        %4424 = vrot.lane.b32.xlu0 %v4213, 88
        %v4425 = vpop.permute.xlu0 %4424
        %v4428 = vsel %vm615, %v4402, 0
        %4430 = vmatpush.bf16.msra.mxu0 0
        %4431 = vmatpush.bf16.msra.mxu0 0
        %4432 = vmatpush.bf16.msra.mxu0 0
        %4433 = vmatpush.bf16.msra.mxu0 0
        %4434 = vmatpush.bf16.msra.mxu0 0
        %4435 = vmatpush.bf16.msra.mxu0 0
        %4436 = vmatpush.bf16.msra.mxu0 0
        %4437 = vmatpush.bf16.msra.mxu0 %v4425
        %4438 = vmatmul.bf16.gmra.mxu0 %v4428
        %v4439 = vpop.f32.mrf.mxu0
        %v4440 = vadd.f32 0.0, %v4439
        %v4441 = vpop.f32.mrf.mxu0
        %4442 = vdwg.mxu0
        %4443 = vrot.lane.b32.xlu0 %v4213, 80
        %v4444 = vpop.permute.xlu0 %4443
        %v4447 = vsel %vm615, %v4403, 0
        %4449 = vmatpush.bf16.msra.mxu0 0
        %4450 = vmatpush.bf16.msra.mxu0 0
        %4451 = vmatpush.bf16.msra.mxu0 0
        %4452 = vmatpush.bf16.msra.mxu0 0
        %4453 = vmatpush.bf16.msra.mxu0 0
        %4454 = vmatpush.bf16.msra.mxu0 0
        %4455 = vmatpush.bf16.msra.mxu0 0
        %4456 = vmatpush.bf16.msra.mxu0 %v4444
        %4457 = vmatmul.bf16.gmra.mxu0 %v4447
        %v4458 = vpop.f32.mrf.mxu0
        %v4459 = vadd.f32 0.0, %v4458
        %v4460 = vpop.f32.mrf.mxu0
        %4461 = vdwg.mxu0
        %4462 = vrot.lane.b32.xlu0 %v4213, 72
        %v4463 = vpop.permute.xlu0 %4462
        %v4466 = vsel %vm615, %v4404, 0
        %4468 = vmatpush.bf16.msra.mxu0 0
        %4469 = vmatpush.bf16.msra.mxu0 0
        %4470 = vmatpush.bf16.msra.mxu0 0
        %4471 = vmatpush.bf16.msra.mxu0 0
        %4472 = vmatpush.bf16.msra.mxu0 0
        %4473 = vmatpush.bf16.msra.mxu0 0
        %4474 = vmatpush.bf16.msra.mxu0 0
        %4475 = vmatpush.bf16.msra.mxu0 %v4463
        %4476 = vmatmul.bf16.gmra.mxu0 %v4466
        %v4477 = vpop.f32.mrf.mxu0
        %v4478 = vadd.f32 0.0, %v4477
        %v4479 = vpop.f32.mrf.mxu0
        %4480 = vdwg.mxu0
        %4482 = vrot.lane.b32.xlu0 %v4440, 8
        %v4483 = vpop.permute.xlu0 %4482
        %4486 = vrot.lane.b32.xlu0 %v4459, 16
        %v4487 = vpop.permute.xlu0 %4486
        %4490 = vrot.lane.b32.xlu0 %v4478, 24
        %v4491 = vpop.permute.xlu0 %4490
        %v4493 = vsel %vm522, %v4421, %v4483
        %v4494 = vsel %vm615, %v4493, %v4487
        %v4495 = vsel %vm944, %v4494, %v4491
        %v4496 = vld [vmem:[#allocation4 + $0x100] sm:$0xf]
        %v4497 = vld [vmem:[#allocation4 + $0x104] sm:$0xf]
        %v4498 = vld [vmem:[#allocation4 + $0x108] sm:$0xf]
        %v4499 = vld [vmem:[#allocation4 + $0x10c] sm:$0xf]
        %v4500 = vpack.c.bf16 %v4495, %v4205
        %v4501 = vld [vmem:[#allocation6 + $0xa8] sm:$0x1]
        %v4502 = vperm.slane %v4501, 0
        %v4507 = vunpack.c.l.b16 %v4496
        %v4508 = vunpack.c.l.b16 %v4497
        %v4509 = vunpack.c.l.b16 %v4498
        %v4510 = vunpack.c.l.b16 %v4499
        %v4511 = vpack.c.b16 %v4508, %v4507
        %v4512 = vpack.c.b16 %v4510, %v4509
        %v4516 = vsel %vm485, %v4500, 0
        %4518 = vmatpush.bf16.msra.mxu0 0
        %4519 = vmatpush.bf16.msra.mxu0 0
        %4520 = vmatpush.bf16.msra.mxu0 0
        %4521 = vmatpush.bf16.msra.mxu0 0
        %4522 = vmatpush.bf16.msra.mxu0 0
        %4523 = vmatpush.bf16.msra.mxu0 0
        %4524 = vmatpush.bf16.msra.mxu0 %v4512
        %4525 = vmatpush.bf16.msra.mxu0 %v4511
        %4526 = vmatmul.bf16.gmra.mxu0 %v4516
        %v4527 = vpop.f32.mrf.mxu0
        %v4528 = vadd.f32 %v4502, %v4527
        %v4529 = vpop.f32.mrf.mxu0
        %v4530 = vadd.f32 %v4502, %v4529
        %4531 = vdwg.mxu0
        %v4532 = vadd.f32 %v3833, %v4528
        %v4533 = vadd.f32 %v3834, %v4530
        %v4534 = vsel %vm485, %v4532, 0.0
        %4535 = vadd.xlane.f32.xlu0 %v4534
        %v4536 = vpop.xlane.xlu0 %4535
        %v4537 = vsel %vm485, %v4533, 0.0
        %4538 = vadd.xlane.f32.xlu0 %v4537
        %v4539 = vpop.xlane.xlu0 %4538
        %v4540 = vmul.f32 %v4536, %v1447
        %v4541 = vmul.f32 %v4539, %v1447
        %v4542 = vsub.f32 %v4532, %v4540
        %v4543 = vsub.f32 %v4533, %v4541
        %v4544 = vmul.f32 %v4542, %v4542
        %v4545 = vmul.f32 %v4543, %v4543
        %v4546 = vsel %vm485, %v4544, 0.0
        %4547 = vadd.xlane.f32.xlu0 %v4546
        %v4548 = vpop.xlane.xlu0 %4547
        %v4549 = vsel %vm485, %v4545, 0.0
        %4550 = vadd.xlane.f32.xlu0 %v4549
        %v4551 = vpop.xlane.xlu0 %4550
        %v4552 = vmul.f32 %v4548, %v1447
        %v4553 = vmul.f32 %v4551, %v1447
        %v4554 = vadd.f32 %v4552, 1e-05
        %v4555 = vadd.f32 %v4553, 1e-05
        %v4556 = vrsqrt.pop %v4554
        %v4557 = vmul.f32 %v4556, %v4554
        %v4558 = vmul.f32 %v4557, %v4556
        %v4559 = vmul.f32 0.5, %v4558
        %v4560 = vsub.f32 1.5, %v4559
        %v4561 = vmul.f32 %v4556, %v4560
        %vm4562 = vweird.f32 %v4554
        %vm4563 = vweird.f32 %v4556
        %vm4564 = vmor %vm4562, %vm4563
        %v4565 = vsel %vm4564, %v4556, %v4561
        %v4566 = vrsqrt.pop %v4555
        %v4567 = vmul.f32 %v4566, %v4555
        %v4568 = vmul.f32 %v4567, %v4566
        %v4569 = vmul.f32 0.5, %v4568
        %v4570 = vsub.f32 1.5, %v4569
        %v4571 = vmul.f32 %v4566, %v4570
        %vm4572 = vweird.f32 %v4555
        %vm4573 = vweird.f32 %v4566
        %vm4574 = vmor %vm4572, %vm4573
        %v4575 = vsel %vm4574, %v4566, %v4571
        %v4576 = vmul.f32 %v4542, %v4565
        %v4577 = vmul.f32 %v4543, %v4575
        %v4578 = vperm.slane %v3122, 1
        %v4579 = vmul.f32 %v4576, %v4578
        %v4580 = vmul.f32 %v4577, %v4578
        %v4581 = vperm.slane %v3123, 1
        %v4582 = vadd.f32 %v4579, %v4581
        %v4583 = vadd.f32 %v4580, %v4581
        %v4584 = vld [vmem:[#allocation4 + $0x110] sm:$0xf]
        %v4585 = vld [vmem:[#allocation4 + $0x114] sm:$0xf]
        %v4586 = vld [vmem:[#allocation4 + $0x118] sm:$0xf]
        %v4587 = vld [vmem:[#allocation4 + $0x11c] sm:$0xf]
        %v4588 = vpack.c.bf16 %v4583, %v4582
        %v4589 = vld [vmem:[#allocation6 + $0xb0] sm:$0x1]
        %v4590 = vperm.slane %v4589, 0
        %v4595 = vunpack.c.l.b16 %v4584
        %v4596 = vunpack.c.l.b16 %v4585
        %v4597 = vunpack.c.l.b16 %v4586
        %v4598 = vunpack.c.l.b16 %v4587
        %v4599 = vpack.c.b16 %v4596, %v4595
        %v4600 = vpack.c.b16 %v4598, %v4597
        %v4604 = vsel %vm485, %v4588, 0
        %4606 = vmatpush.bf16.msra.mxu0 0
        %4607 = vmatpush.bf16.msra.mxu0 0
        %4608 = vmatpush.bf16.msra.mxu0 0
        %4609 = vmatpush.bf16.msra.mxu0 0
        %4610 = vmatpush.bf16.msra.mxu0 0
        %4611 = vmatpush.bf16.msra.mxu0 0
        %4612 = vmatpush.bf16.msra.mxu0 %v4600
        %4613 = vmatpush.bf16.msra.mxu0 %v4599
        %4614 = vmatmul.bf16.gmra.mxu0 %v4604
        %v4615 = vpop.f32.mrf.mxu0
        %v4616 = vadd.f32 %v4590, %v4615
        %v4617 = vpop.f32.mrf.mxu0
        %v4618 = vadd.f32 %v4590, %v4617
        %4619 = vdwg.mxu0
        %v4620 = vmax.f32 %v4616, 0.0
        %v4621 = vmax.f32 %v4618, 0.0
        %v4622 = vld [vmem:[#allocation4 + $0x120] sm:$0xf]
        %v4623 = vld [vmem:[#allocation4 + $0x124] sm:$0xf]
        %v4624 = vld [vmem:[#allocation4 + $0x128] sm:$0xf]
        %v4625 = vld [vmem:[#allocation4 + $0x12c] sm:$0xf]
        %v4626 = vld [vmem:[#allocation4 + $0x130] sm:$0xf]
        %v4627 = vld [vmem:[#allocation4 + $0x134] sm:$0xf]
        %v4628 = vld [vmem:[#allocation4 + $0x138] sm:$0xf]
        %v4629 = vld [vmem:[#allocation4 + $0x13c] sm:$0xf]
        %v4630 = vpack.c.bf16 %v4621, %v4620
        %v4631 = vld [vmem:[#allocation6 + $0xb8] sm:$0x1]
        %v4632 = vperm.slane %v4631, 0
        %v4641 = vunpack.c.l.b16 %v4622
        %v4642 = vunpack.c.l.b16 %v4623
        %v4643 = vunpack.c.l.b16 %v4624
        %v4644 = vunpack.c.l.b16 %v4625
        %v4645 = vunpack.c.l.b16 %v4626
        %v4646 = vunpack.c.l.b16 %v4627
        %v4647 = vunpack.c.l.b16 %v4628
        %v4648 = vunpack.c.l.b16 %v4629
        %v4649 = vpack.c.b16 %v4642, %v4641
        %v4650 = vpack.c.b16 %v4644, %v4643
        %v4651 = vpack.c.b16 %v4646, %v4645
        %v4652 = vpack.c.b16 %v4648, %v4647
        %v4658 = vsel %vm1619, %v4630, 0
        %4660 = vmatpush.bf16.msra.mxu0 0
        %4661 = vmatpush.bf16.msra.mxu0 0
        %4662 = vmatpush.bf16.msra.mxu0 0
        %4663 = vmatpush.bf16.msra.mxu0 0
        %4664 = vmatpush.bf16.msra.mxu0 %v4652
        %4665 = vmatpush.bf16.msra.mxu0 %v4651
        %4666 = vmatpush.bf16.msra.mxu0 %v4650
        %4667 = vmatpush.bf16.msra.mxu0 %v4649
        %4668 = vmatmul.bf16.gmra.mxu0 %v4658
        %v4669 = vpop.f32.mrf.mxu0
        %v4670 = vadd.f32 %v4632, %v4669
        %v4671 = vpop.f32.mrf.mxu0
        %v4672 = vadd.f32 %v4632, %v4671
        %4673 = vdwg.mxu0
        %v4674 = vadd.f32 %v4582, %v4670
        %v4675 = vadd.f32 %v4583, %v4672
        %v4676 = vsel %vm485, %v4674, 0.0
        %4677 = vadd.xlane.f32.xlu0 %v4676
        %v4678 = vpop.xlane.xlu0 %4677
        %v4679 = vsel %vm485, %v4675, 0.0
        %4680 = vadd.xlane.f32.xlu0 %v4679
        %v4681 = vpop.xlane.xlu0 %4680
        %v4682 = vmul.f32 %v4678, %v1447
        %v4683 = vmul.f32 %v4681, %v1447
        %v4684 = vsub.f32 %v4674, %v4682
        %v4685 = vsub.f32 %v4675, %v4683
        %v4686 = vmul.f32 %v4684, %v4684
        %v4687 = vmul.f32 %v4685, %v4685
        %v4688 = vsel %vm485, %v4686, 0.0
        %4689 = vadd.xlane.f32.xlu0 %v4688
        %v4690 = vpop.xlane.xlu0 %4689
        %v4691 = vsel %vm485, %v4687, 0.0
        %4692 = vadd.xlane.f32.xlu0 %v4691
        %v4693 = vpop.xlane.xlu0 %4692
        %v4694 = vmul.f32 %v4690, %v1447
        %v4695 = vmul.f32 %v4693, %v1447
        %v4696 = vadd.f32 %v4694, 1e-05
        %v4697 = vadd.f32 %v4695, 1e-05
        %v4698 = vrsqrt.pop %v4696
        %v4699 = vmul.f32 %v4698, %v4696
        %v4700 = vmul.f32 %v4699, %v4698
        %v4701 = vmul.f32 0.5, %v4700
        %v4702 = vsub.f32 1.5, %v4701
        %v4703 = vmul.f32 %v4698, %v4702
        %vm4704 = vweird.f32 %v4696
        %vm4705 = vweird.f32 %v4698
        %vm4706 = vmor %vm4704, %vm4705
        %v4707 = vsel %vm4706, %v4698, %v4703
        %v4708 = vrsqrt.pop %v4697
        %v4709 = vmul.f32 %v4708, %v4697
        %v4710 = vmul.f32 %v4709, %v4708
        %v4711 = vmul.f32 0.5, %v4710
        %v4712 = vsub.f32 1.5, %v4711
        %v4713 = vmul.f32 %v4708, %v4712
        %vm4714 = vweird.f32 %v4697
        %vm4715 = vweird.f32 %v4708
        %vm4716 = vmor %vm4714, %vm4715
        %v4717 = vsel %vm4716, %v4708, %v4713
        %v4718 = vmul.f32 %v4684, %v4707
        %v4719 = vmul.f32 %v4685, %v4717
        %v4720 = vperm.slane %v3122, 2
        %v4721 = vmul.f32 %v4718, %v4720
        %v4722 = vmul.f32 %v4719, %v4720
        %v4723 = vperm.slane %v3123, 2
        %v4724 = vadd.f32 %v4721, %v4723
        %v4725 = vadd.f32 %v4722, %v4723
        %v4726 = vld [vmem:[#allocation6 + $0x108] sm:$0x7]
        %v4727 = vld [vmem:[#allocation6 + $0x110] sm:$0x7]
        %v4728 = vld [vmem:[#allocation4 + $0x140] sm:$0xf]
        %v4729 = vld [vmem:[#allocation4 + $0x144] sm:$0xf]
        %v4730 = vld [vmem:[#allocation4 + $0x148] sm:$0xf]
        %v4731 = vld [vmem:[#allocation4 + $0x14c] sm:$0xf]
        %v4732 = vpack.c.bf16 %v4725, %v4724
        %v4733 = vld [vmem:[#allocation6 + $0xd0] sm:$0x1]
        %v4734 = vperm.slane %v4733, 0
        %v4739 = vunpack.c.l.b16 %v4728
        %v4740 = vunpack.c.l.b16 %v4729
        %v4741 = vunpack.c.l.b16 %v4730
        %v4742 = vunpack.c.l.b16 %v4731
        %v4743 = vpack.c.b16 %v4740, %v4739
        %v4744 = vpack.c.b16 %v4742, %v4741
        %v4748 = vsel %vm485, %v4732, 0
        %4750 = vmatpush.bf16.msra.mxu0 0
        %4751 = vmatpush.bf16.msra.mxu0 0
        %4752 = vmatpush.bf16.msra.mxu0 0
        %4753 = vmatpush.bf16.msra.mxu0 0
        %4754 = vmatpush.bf16.msra.mxu0 0
        %4755 = vmatpush.bf16.msra.mxu0 0
        %4756 = vmatpush.bf16.msra.mxu0 %v4744
        %4757 = vmatpush.bf16.msra.mxu0 %v4743
        %4758 = vmatmul.bf16.gmra.mxu0 %v4748
        %v4759 = vpop.f32.mrf.mxu0
        %v4760 = vadd.f32 %v4734, %v4759
        %v4761 = vpop.f32.mrf.mxu0
        %v4762 = vadd.f32 %v4734, %v4761
        %4763 = vdwg.mxu0
        %v4764 = vpack.c.bf16 %v4760, %v4760
        %v4766 = vunpack.c.l.b16 %v4764
        %v4767 = vpack.c.b16 %v4766, %v4766
        %4768 = vrot.lane.b32.xlu0 %v4767, 96
        %v4769 = vpop.permute.xlu0 %4768
        %v4771 = vsel %vm522, %v4764, 0
        %v4774 = vsel %vm522, %v4769, 0
        %4776 = vmatpush.bf16.xpose.msra.mxu0 0
        %4777 = vmatpush.bf16.xpose.msra.mxu0 0
        %4778 = vmatpush.bf16.xpose.msra.mxu0 0
        %4779 = vmatpush.bf16.xpose.msra.mxu0 0
        %4780 = vmatpush.bf16.xpose.msra.mxu0 0
        %4781 = vmatpush.bf16.xpose.msra.mxu0 0
        %4782 = vmatpush.bf16.xpose.msra.mxu0 0
        %4783 = vmatpush.bf16.xpose.msra.mxu0 %v4774
        %4784 = vmatmul.bf16.gmra.mxu0 %v4771
        %v4785 = vpop.f32.mrf.mxu0
        %v4786 = vadd.f32 %v298, %v4785
        %v4787 = vpop.f32.mrf.mxu0
        %4788 = vdwg.mxu0
        %4789 = vrot.lane.b32.xlu0 %v4767, 120
        %v4790 = vpop.permute.xlu0 %4789
        %4791 = vrot.lane.b32.xlu0 %v4767, 88
        %v4792 = vpop.permute.xlu0 %4791
        %v4794 = vsel %vm522, %v4790, 0
        %v4797 = vsel %vm522, %v4792, 0
        %4799 = vmatpush.bf16.xpose.msra.mxu0 0
        %4800 = vmatpush.bf16.xpose.msra.mxu0 0
        %4801 = vmatpush.bf16.xpose.msra.mxu0 0
        %4802 = vmatpush.bf16.xpose.msra.mxu0 0
        %4803 = vmatpush.bf16.xpose.msra.mxu0 0
        %4804 = vmatpush.bf16.xpose.msra.mxu0 0
        %4805 = vmatpush.bf16.xpose.msra.mxu0 0
        %4806 = vmatpush.bf16.xpose.msra.mxu0 %v4797
        %4807 = vmatmul.bf16.gmra.mxu0 %v4794
        %v4808 = vpop.f32.mrf.mxu0
        %v4809 = vadd.f32 %v298, %v4808
        %v4810 = vpop.f32.mrf.mxu0
        %4811 = vdwg.mxu0
        %4812 = vrot.lane.b32.xlu0 %v4767, 112
        %v4813 = vpop.permute.xlu0 %4812
        %4814 = vrot.lane.b32.xlu0 %v4767, 80
        %v4815 = vpop.permute.xlu0 %4814
        %v4817 = vsel %vm522, %v4813, 0
        %v4820 = vsel %vm522, %v4815, 0
        %4822 = vmatpush.bf16.xpose.msra.mxu0 0
        %4823 = vmatpush.bf16.xpose.msra.mxu0 0
        %4824 = vmatpush.bf16.xpose.msra.mxu0 0
        %4825 = vmatpush.bf16.xpose.msra.mxu0 0
        %4826 = vmatpush.bf16.xpose.msra.mxu0 0
        %4827 = vmatpush.bf16.xpose.msra.mxu0 0
        %4828 = vmatpush.bf16.xpose.msra.mxu0 0
        %4829 = vmatpush.bf16.xpose.msra.mxu0 %v4820
        %4830 = vmatmul.bf16.gmra.mxu0 %v4817
        %v4831 = vpop.f32.mrf.mxu0
        %v4832 = vadd.f32 %v298, %v4831
        %v4833 = vpop.f32.mrf.mxu0
        %4834 = vdwg.mxu0
        %4835 = vrot.lane.b32.xlu0 %v4767, 104
        %v4836 = vpop.permute.xlu0 %4835
        %4837 = vrot.lane.b32.xlu0 %v4767, 72
        %v4838 = vpop.permute.xlu0 %4837
        %v4840 = vsel %vm522, %v4836, 0
        %v4843 = vsel %vm522, %v4838, 0
        %4845 = vmatpush.bf16.xpose.msra.mxu0 0
        %4846 = vmatpush.bf16.xpose.msra.mxu0 0
        %4847 = vmatpush.bf16.xpose.msra.mxu0 0
        %4848 = vmatpush.bf16.xpose.msra.mxu0 0
        %4849 = vmatpush.bf16.xpose.msra.mxu0 0
        %4850 = vmatpush.bf16.xpose.msra.mxu0 0
        %4851 = vmatpush.bf16.xpose.msra.mxu0 0
        %4852 = vmatpush.bf16.xpose.msra.mxu0 %v4843
        %4853 = vmatmul.bf16.gmra.mxu0 %v4840
        %v4854 = vpop.f32.mrf.mxu0
        %v4855 = vadd.f32 %v298, %v4854
        %v4856 = vpop.f32.mrf.mxu0
        %4857 = vdwg.mxu0
        %v4858 = vsel %vm522, %v4786, -inf
        %4859 = vmax.xlane.f32.xlu0 %v4858
        %v4860 = vpop.xlane.xlu0 %4859
        %v4861 = vsel %vm522, %v4809, -inf
        %4862 = vmax.xlane.f32.xlu0 %v4861
        %v4863 = vpop.xlane.xlu0 %4862
        %v4864 = vsel %vm522, %v4832, -inf
        %4865 = vmax.xlane.f32.xlu0 %v4864
        %v4866 = vpop.xlane.xlu0 %4865
        %v4867 = vsel %vm522, %v4855, -inf
        %4868 = vmax.xlane.f32.xlu0 %v4867
        %v4869 = vpop.xlane.xlu0 %4868
        %v4870 = vsub.f32 %v4786, %v4860
        %v4871 = vsub.f32 %v4809, %v4863
        %v4872 = vsub.f32 %v4832, %v4866
        %v4873 = vsub.f32 %v4855, %v4869
        %v4874 = vmul.f32 %v4870, 1.442695
        %v4875 = vpow.pop %v4874
        %v4876 = vmul.f32 %v4871, 1.442695
        %v4877 = vpow.pop %v4876
        %v4878 = vmul.f32 %v4872, 1.442695
        %v4879 = vpow.pop %v4878
        %v4880 = vmul.f32 %v4873, 1.442695
        %v4881 = vpow.pop %v4880
        %v4882 = vsel %vm522, %v4875, 0.0
        %4883 = vadd.xlane.f32.xlu0 %v4882
        %v4884 = vpop.xlane.xlu0 %4883
        %v4885 = vsel %vm522, %v4877, 0.0
        %4886 = vadd.xlane.f32.xlu0 %v4885
        %v4887 = vpop.xlane.xlu0 %4886
        %v4888 = vsel %vm522, %v4879, 0.0
        %4889 = vadd.xlane.f32.xlu0 %v4888
        %v4890 = vpop.xlane.xlu0 %4889
        %v4891 = vsel %vm522, %v4881, 0.0
        %4892 = vadd.xlane.f32.xlu0 %v4891
        %v4893 = vpop.xlane.xlu0 %4892
        %v4894 = vrcp.pop %v4884
        %v4895 = vmul.f32 %v4884, %v4894
        %v4896 = vsub.f32 1.0, %v4895
        %v4897 = vmul.f32 %v4894, %v4896
        %v4898 = vadd.f32 %v4894, %v4897
        %vm4899 = vweird.f32 %v4884
        %vm4900 = vweird.f32 %v4894
        %vm4901 = vmor %vm4899, %vm4900
        %v4902 = vsel %vm4901, %v4894, %v4898
        %v4903 = vand.u32 2147483647, %v4884
        %vm4904 = vcmp.eq.f32.partialorder %v4903, 8.507059e+37
        %v4905 = vand.u32 %v4884, 2147483648
        %v4906 = vor.u32 1.1754944e-38, %v4905
        %v4907 = vsel %vm4904, %v4906, %v4902
        %v4908 = vmul.f32 %v4875, %v4907
        %v4909 = vrcp.pop %v4887
        %v4910 = vmul.f32 %v4887, %v4909
        %v4911 = vsub.f32 1.0, %v4910
        %v4912 = vmul.f32 %v4909, %v4911
        %v4913 = vadd.f32 %v4909, %v4912
        %vm4914 = vweird.f32 %v4887
        %vm4915 = vweird.f32 %v4909
        %vm4916 = vmor %vm4914, %vm4915
        %v4917 = vsel %vm4916, %v4909, %v4913
        %v4918 = vand.u32 2147483647, %v4887
        %vm4919 = vcmp.eq.f32.partialorder %v4918, 8.507059e+37
        %v4920 = vand.u32 %v4887, 2147483648
        %v4921 = vor.u32 1.1754944e-38, %v4920
        %v4922 = vsel %vm4919, %v4921, %v4917
        %v4923 = vmul.f32 %v4877, %v4922
        %v4924 = vrcp.pop %v4890
        %v4925 = vmul.f32 %v4890, %v4924
        %v4926 = vsub.f32 1.0, %v4925
        %v4927 = vmul.f32 %v4924, %v4926
        %v4928 = vadd.f32 %v4924, %v4927
        %vm4929 = vweird.f32 %v4890
        %vm4930 = vweird.f32 %v4924
        %vm4931 = vmor %vm4929, %vm4930
        %v4932 = vsel %vm4931, %v4924, %v4928
        %v4933 = vand.u32 2147483647, %v4890
        %vm4934 = vcmp.eq.f32.partialorder %v4933, 8.507059e+37
        %v4935 = vand.u32 %v4890, 2147483648
        %v4936 = vor.u32 1.1754944e-38, %v4935
        %v4937 = vsel %vm4934, %v4936, %v4932
        %v4938 = vmul.f32 %v4879, %v4937
        %v4939 = vrcp.pop %v4893
        %v4940 = vmul.f32 %v4893, %v4939
        %v4941 = vsub.f32 1.0, %v4940
        %v4942 = vmul.f32 %v4939, %v4941
        %v4943 = vadd.f32 %v4939, %v4942
        %vm4944 = vweird.f32 %v4893
        %vm4945 = vweird.f32 %v4939
        %vm4946 = vmor %vm4944, %vm4945
        %v4947 = vsel %vm4946, %v4939, %v4943
        %v4948 = vand.u32 2147483647, %v4893
        %vm4949 = vcmp.eq.f32.partialorder %v4948, 8.507059e+37
        %v4950 = vand.u32 %v4893, 2147483648
        %v4951 = vor.u32 1.1754944e-38, %v4950
        %v4952 = vsel %vm4949, %v4951, %v4947
        %v4953 = vmul.f32 %v4881, %v4952
        %v4954 = vpack.c.bf16 %v4908, %v4908
        %v4955 = vpack.c.bf16 %v4923, %v4923
        %v4956 = vpack.c.bf16 %v4938, %v4938
        %v4957 = vpack.c.bf16 %v4953, %v4953
        %4958 = vrot.lane.b32.xlu0 %v4767, 64
        %v4959 = vpop.permute.xlu0 %4958
        %v4961 = vsel %vm522, %v4954, 0
        %v4964 = vsel %vm3359, %v4959, 0
        %4966 = vmatpush.bf16.msra.mxu0 0
        %4967 = vmatpush.bf16.msra.mxu0 0
        %4968 = vmatpush.bf16.msra.mxu0 0
        %4969 = vmatpush.bf16.msra.mxu0 0
        %4970 = vmatpush.bf16.msra.mxu0 0
        %4971 = vmatpush.bf16.msra.mxu0 0
        %4972 = vmatpush.bf16.msra.mxu0 0
        %4973 = vmatpush.bf16.msra.mxu0 %v4964
        %4974 = vmatmul.bf16.gmra.mxu0 %v4961
        %v4975 = vpop.f32.mrf.mxu0
        %v4976 = vadd.f32 0.0, %v4975
        %v4977 = vpop.f32.mrf.mxu0
        %4978 = vdwg.mxu0
        %4979 = vrot.lane.b32.xlu0 %v4767, 56
        %v4980 = vpop.permute.xlu0 %4979
        %v4982 = vsel %vm522, %v4955, 0
        %v4985 = vsel %vm3359, %v4980, 0
        %4987 = vmatpush.bf16.msra.mxu0 0
        %4988 = vmatpush.bf16.msra.mxu0 0
        %4989 = vmatpush.bf16.msra.mxu0 0
        %4990 = vmatpush.bf16.msra.mxu0 0
        %4991 = vmatpush.bf16.msra.mxu0 0
        %4992 = vmatpush.bf16.msra.mxu0 0
        %4993 = vmatpush.bf16.msra.mxu0 0
        %4994 = vmatpush.bf16.msra.mxu0 %v4985
        %4995 = vmatmul.bf16.gmra.mxu0 %v4982
        %v4996 = vpop.f32.mrf.mxu0
        %v4997 = vadd.f32 0.0, %v4996
        %v4998 = vpop.f32.mrf.mxu0
        %4999 = vdwg.mxu0
        %5000 = vrot.lane.b32.xlu0 %v4767, 48
        %v5001 = vpop.permute.xlu0 %5000
        %v5003 = vsel %vm522, %v4956, 0
        %v5006 = vsel %vm3359, %v5001, 0
        %5008 = vmatpush.bf16.msra.mxu0 0
        %5009 = vmatpush.bf16.msra.mxu0 0
        %5010 = vmatpush.bf16.msra.mxu0 0
        %5011 = vmatpush.bf16.msra.mxu0 0
        %5012 = vmatpush.bf16.msra.mxu0 0
        %5013 = vmatpush.bf16.msra.mxu0 0
        %5014 = vmatpush.bf16.msra.mxu0 0
        %5015 = vmatpush.bf16.msra.mxu0 %v5006
        %5016 = vmatmul.bf16.gmra.mxu0 %v5003
        %v5017 = vpop.f32.mrf.mxu0
        %v5018 = vadd.f32 0.0, %v5017
        %v5019 = vpop.f32.mrf.mxu0
        %5020 = vdwg.mxu0
        %5021 = vrot.lane.b32.xlu0 %v4767, 40
        %v5022 = vpop.permute.xlu0 %5021
        %v5024 = vsel %vm522, %v4957, 0
        %v5027 = vsel %vm3359, %v5022, 0
        %5029 = vmatpush.bf16.msra.mxu0 0
        %5030 = vmatpush.bf16.msra.mxu0 0
        %5031 = vmatpush.bf16.msra.mxu0 0
        %5032 = vmatpush.bf16.msra.mxu0 0
        %5033 = vmatpush.bf16.msra.mxu0 0
        %5034 = vmatpush.bf16.msra.mxu0 0
        %5035 = vmatpush.bf16.msra.mxu0 0
        %5036 = vmatpush.bf16.msra.mxu0 %v5027
        %5037 = vmatmul.bf16.gmra.mxu0 %v5024
        %v5038 = vpop.f32.mrf.mxu0
        %v5039 = vadd.f32 0.0, %v5038
        %v5040 = vpop.f32.mrf.mxu0
        %5041 = vdwg.mxu0
        %5043 = vrot.lane.b32.xlu0 %v4997, 8
        %v5044 = vpop.permute.xlu0 %5043
        %5047 = vrot.lane.b32.xlu0 %v5018, 16
        %v5048 = vpop.permute.xlu0 %5047
        %5051 = vrot.lane.b32.xlu0 %v5039, 24
        %v5052 = vpop.permute.xlu0 %5051
        %v5054 = vsel %vm522, %v4976, %v5044
        %v5055 = vsel %vm615, %v5054, %v5048
        %v5056 = vsel %vm944, %v5055, %v5052
        %v5057 = vpack.c.bf16 %v4762, %v4762
        %v5059 = vunpack.c.l.b16 %v5057
        %v5060 = vpack.c.b16 %v5059, %v5059
        %5061 = vrot.lane.b32.xlu0 %v5060, 96
        %v5062 = vpop.permute.xlu0 %5061
        %v5064 = vsel %vm522, %v5057, 0
        %v5067 = vsel %vm522, %v5062, 0
        %5069 = vmatpush.bf16.xpose.msra.mxu0 0
        %5070 = vmatpush.bf16.xpose.msra.mxu0 0
        %5071 = vmatpush.bf16.xpose.msra.mxu0 0
        %5072 = vmatpush.bf16.xpose.msra.mxu0 0
        %5073 = vmatpush.bf16.xpose.msra.mxu0 0
        %5074 = vmatpush.bf16.xpose.msra.mxu0 0
        %5075 = vmatpush.bf16.xpose.msra.mxu0 0
        %5076 = vmatpush.bf16.xpose.msra.mxu0 %v5067
        %5077 = vmatmul.bf16.gmra.mxu0 %v5064
        %v5078 = vpop.f32.mrf.mxu0
        %v5079 = vadd.f32 %v298, %v5078
        %v5080 = vpop.f32.mrf.mxu0
        %5081 = vdwg.mxu0
        %5082 = vrot.lane.b32.xlu0 %v5060, 120
        %v5083 = vpop.permute.xlu0 %5082
        %5084 = vrot.lane.b32.xlu0 %v5060, 88
        %v5085 = vpop.permute.xlu0 %5084
        %v5087 = vsel %vm522, %v5083, 0
        %v5090 = vsel %vm522, %v5085, 0
        %5092 = vmatpush.bf16.xpose.msra.mxu0 0
        %5093 = vmatpush.bf16.xpose.msra.mxu0 0
        %5094 = vmatpush.bf16.xpose.msra.mxu0 0
        %5095 = vmatpush.bf16.xpose.msra.mxu0 0
        %5096 = vmatpush.bf16.xpose.msra.mxu0 0
        %5097 = vmatpush.bf16.xpose.msra.mxu0 0
        %5098 = vmatpush.bf16.xpose.msra.mxu0 0
        %5099 = vmatpush.bf16.xpose.msra.mxu0 %v5090
        %5100 = vmatmul.bf16.gmra.mxu0 %v5087
        %v5101 = vpop.f32.mrf.mxu0
        %v5102 = vadd.f32 %v298, %v5101
        %v5103 = vpop.f32.mrf.mxu0
        %5104 = vdwg.mxu0
        %5105 = vrot.lane.b32.xlu0 %v5060, 112
        %v5106 = vpop.permute.xlu0 %5105
        %5107 = vrot.lane.b32.xlu0 %v5060, 80
        %v5108 = vpop.permute.xlu0 %5107
        %v5110 = vsel %vm522, %v5106, 0
        %v5113 = vsel %vm522, %v5108, 0
        %5115 = vmatpush.bf16.xpose.msra.mxu0 0
        %5116 = vmatpush.bf16.xpose.msra.mxu0 0
        %5117 = vmatpush.bf16.xpose.msra.mxu0 0
        %5118 = vmatpush.bf16.xpose.msra.mxu0 0
        %5119 = vmatpush.bf16.xpose.msra.mxu0 0
        %5120 = vmatpush.bf16.xpose.msra.mxu0 0
        %5121 = vmatpush.bf16.xpose.msra.mxu0 0
        %5122 = vmatpush.bf16.xpose.msra.mxu0 %v5113
        %5123 = vmatmul.bf16.gmra.mxu0 %v5110
        %v5124 = vpop.f32.mrf.mxu0
        %v5125 = vadd.f32 %v298, %v5124
        %v5126 = vpop.f32.mrf.mxu0
        %5127 = vdwg.mxu0
        %5128 = vrot.lane.b32.xlu0 %v5060, 104
        %v5129 = vpop.permute.xlu0 %5128
        %5130 = vrot.lane.b32.xlu0 %v5060, 72
        %v5131 = vpop.permute.xlu0 %5130
        %v5133 = vsel %vm522, %v5129, 0
        %v5136 = vsel %vm522, %v5131, 0
        %5138 = vmatpush.bf16.xpose.msra.mxu0 0
        %5139 = vmatpush.bf16.xpose.msra.mxu0 0
        %5140 = vmatpush.bf16.xpose.msra.mxu0 0
        %5141 = vmatpush.bf16.xpose.msra.mxu0 0
        %5142 = vmatpush.bf16.xpose.msra.mxu0 0
        %5143 = vmatpush.bf16.xpose.msra.mxu0 0
        %5144 = vmatpush.bf16.xpose.msra.mxu0 0
        %5145 = vmatpush.bf16.xpose.msra.mxu0 %v5136
        %5146 = vmatmul.bf16.gmra.mxu0 %v5133
        %v5147 = vpop.f32.mrf.mxu0
        %v5148 = vadd.f32 %v298, %v5147
        %v5149 = vpop.f32.mrf.mxu0
        %5150 = vdwg.mxu0
        %v5151 = vsel %vm522, %v5079, -inf
        %5152 = vmax.xlane.f32.xlu0 %v5151
        %v5153 = vpop.xlane.xlu0 %5152
        %v5154 = vsel %vm522, %v5102, -inf
        %5155 = vmax.xlane.f32.xlu0 %v5154
        %v5156 = vpop.xlane.xlu0 %5155
        %v5157 = vsel %vm522, %v5125, -inf
        %5158 = vmax.xlane.f32.xlu0 %v5157
        %v5159 = vpop.xlane.xlu0 %5158
        %v5160 = vsel %vm522, %v5148, -inf
        %5161 = vmax.xlane.f32.xlu0 %v5160
        %v5162 = vpop.xlane.xlu0 %5161
        %v5163 = vsub.f32 %v5079, %v5153
        %v5164 = vsub.f32 %v5102, %v5156
        %v5165 = vsub.f32 %v5125, %v5159
        %v5166 = vsub.f32 %v5148, %v5162
        %v5167 = vmul.f32 %v5163, 1.442695
        %v5168 = vpow.pop %v5167
        %v5169 = vmul.f32 %v5164, 1.442695
        %v5170 = vpow.pop %v5169
        %v5171 = vmul.f32 %v5165, 1.442695
        %v5172 = vpow.pop %v5171
        %v5173 = vmul.f32 %v5166, 1.442695
        %v5174 = vpow.pop %v5173
        %v5175 = vsel %vm522, %v5168, 0.0
        %5176 = vadd.xlane.f32.xlu0 %v5175
        %v5177 = vpop.xlane.xlu0 %5176
        %v5178 = vsel %vm522, %v5170, 0.0
        %5179 = vadd.xlane.f32.xlu0 %v5178
        %v5180 = vpop.xlane.xlu0 %5179
        %v5181 = vsel %vm522, %v5172, 0.0
        %5182 = vadd.xlane.f32.xlu0 %v5181
        %v5183 = vpop.xlane.xlu0 %5182
        %v5184 = vsel %vm522, %v5174, 0.0
        %5185 = vadd.xlane.f32.xlu0 %v5184
        %v5186 = vpop.xlane.xlu0 %5185
        %v5187 = vrcp.pop %v5177
        %v5188 = vmul.f32 %v5177, %v5187
        %v5189 = vsub.f32 1.0, %v5188
        %v5190 = vmul.f32 %v5187, %v5189
        %v5191 = vadd.f32 %v5187, %v5190
        %vm5192 = vweird.f32 %v5177
        %vm5193 = vweird.f32 %v5187
        %vm5194 = vmor %vm5192, %vm5193
        %v5195 = vsel %vm5194, %v5187, %v5191
        %v5196 = vand.u32 2147483647, %v5177
        %vm5197 = vcmp.eq.f32.partialorder %v5196, 8.507059e+37
        %v5198 = vand.u32 %v5177, 2147483648
        %v5199 = vor.u32 1.1754944e-38, %v5198
        %v5200 = vsel %vm5197, %v5199, %v5195
        %v5201 = vmul.f32 %v5168, %v5200
        %v5202 = vrcp.pop %v5180
        %v5203 = vmul.f32 %v5180, %v5202
        %v5204 = vsub.f32 1.0, %v5203
        %v5205 = vmul.f32 %v5202, %v5204
        %v5206 = vadd.f32 %v5202, %v5205
        %vm5207 = vweird.f32 %v5180
        %vm5208 = vweird.f32 %v5202
        %vm5209 = vmor %vm5207, %vm5208
        %v5210 = vsel %vm5209, %v5202, %v5206
        %v5211 = vand.u32 2147483647, %v5180
        %vm5212 = vcmp.eq.f32.partialorder %v5211, 8.507059e+37
        %v5213 = vand.u32 %v5180, 2147483648
        %v5214 = vor.u32 1.1754944e-38, %v5213
        %v5215 = vsel %vm5212, %v5214, %v5210
        %v5216 = vmul.f32 %v5170, %v5215
        %v5217 = vrcp.pop %v5183
        %v5218 = vmul.f32 %v5183, %v5217
        %v5219 = vsub.f32 1.0, %v5218
        %v5220 = vmul.f32 %v5217, %v5219
        %v5221 = vadd.f32 %v5217, %v5220
        %vm5222 = vweird.f32 %v5183
        %vm5223 = vweird.f32 %v5217
        %vm5224 = vmor %vm5222, %vm5223
        %v5225 = vsel %vm5224, %v5217, %v5221
        %v5226 = vand.u32 2147483647, %v5183
        %vm5227 = vcmp.eq.f32.partialorder %v5226, 8.507059e+37
        %v5228 = vand.u32 %v5183, 2147483648
        %v5229 = vor.u32 1.1754944e-38, %v5228
        %v5230 = vsel %vm5227, %v5229, %v5225
        %v5231 = vmul.f32 %v5172, %v5230
        %v5232 = vrcp.pop %v5186
        %v5233 = vmul.f32 %v5186, %v5232
        %v5234 = vsub.f32 1.0, %v5233
        %v5235 = vmul.f32 %v5232, %v5234
        %v5236 = vadd.f32 %v5232, %v5235
        %vm5237 = vweird.f32 %v5186
        %vm5238 = vweird.f32 %v5232
        %vm5239 = vmor %vm5237, %vm5238
        %v5240 = vsel %vm5239, %v5232, %v5236
        %v5241 = vand.u32 2147483647, %v5186
        %vm5242 = vcmp.eq.f32.partialorder %v5241, 8.507059e+37
        %v5243 = vand.u32 %v5186, 2147483648
        %v5244 = vor.u32 1.1754944e-38, %v5243
        %v5245 = vsel %vm5242, %v5244, %v5240
        %v5246 = vmul.f32 %v5174, %v5245
        %v5247 = vpack.c.bf16 %v5201, %v5201
        %v5248 = vpack.c.bf16 %v5216, %v5216
        %v5249 = vpack.c.bf16 %v5231, %v5231
        %v5250 = vpack.c.bf16 %v5246, %v5246
        %5251 = vrot.lane.b32.xlu0 %v5060, 64
        %v5252 = vpop.permute.xlu0 %5251
        %v5254 = vsel %vm522, %v5247, 0
        %v5257 = vsel %vm3359, %v5252, 0
        %5259 = vmatpush.bf16.msra.mxu0 0
        %5260 = vmatpush.bf16.msra.mxu0 0
        %5261 = vmatpush.bf16.msra.mxu0 0
        %5262 = vmatpush.bf16.msra.mxu0 0
        %5263 = vmatpush.bf16.msra.mxu0 0
        %5264 = vmatpush.bf16.msra.mxu0 0
        %5265 = vmatpush.bf16.msra.mxu0 0
        %5266 = vmatpush.bf16.msra.mxu0 %v5257
        %5267 = vmatmul.bf16.gmra.mxu0 %v5254
        %v5268 = vpop.f32.mrf.mxu0
        %v5269 = vadd.f32 0.0, %v5268
        %v5270 = vpop.f32.mrf.mxu0
        %5271 = vdwg.mxu0
        %5272 = vrot.lane.b32.xlu0 %v5060, 56
        %v5273 = vpop.permute.xlu0 %5272
        %v5275 = vsel %vm522, %v5248, 0
        %v5278 = vsel %vm3359, %v5273, 0
        %5280 = vmatpush.bf16.msra.mxu0 0
        %5281 = vmatpush.bf16.msra.mxu0 0
        %5282 = vmatpush.bf16.msra.mxu0 0
        %5283 = vmatpush.bf16.msra.mxu0 0
        %5284 = vmatpush.bf16.msra.mxu0 0
        %5285 = vmatpush.bf16.msra.mxu0 0
        %5286 = vmatpush.bf16.msra.mxu0 0
        %5287 = vmatpush.bf16.msra.mxu0 %v5278
        %5288 = vmatmul.bf16.gmra.mxu0 %v5275
        %v5289 = vpop.f32.mrf.mxu0
        %v5290 = vadd.f32 0.0, %v5289
        %v5291 = vpop.f32.mrf.mxu0
        %5292 = vdwg.mxu0
        %5293 = vrot.lane.b32.xlu0 %v5060, 48
        %v5294 = vpop.permute.xlu0 %5293
        %v5296 = vsel %vm522, %v5249, 0
        %v5299 = vsel %vm3359, %v5294, 0
        %5301 = vmatpush.bf16.msra.mxu0 0
        %5302 = vmatpush.bf16.msra.mxu0 0
        %5303 = vmatpush.bf16.msra.mxu0 0
        %5304 = vmatpush.bf16.msra.mxu0 0
        %5305 = vmatpush.bf16.msra.mxu0 0
        %5306 = vmatpush.bf16.msra.mxu0 0
        %5307 = vmatpush.bf16.msra.mxu0 0
        %5308 = vmatpush.bf16.msra.mxu0 %v5299
        %5309 = vmatmul.bf16.gmra.mxu0 %v5296
        %v5310 = vpop.f32.mrf.mxu0
        %v5311 = vadd.f32 0.0, %v5310
        %v5312 = vpop.f32.mrf.mxu0
        %5313 = vdwg.mxu0
        %5314 = vrot.lane.b32.xlu0 %v5060, 40
        %v5315 = vpop.permute.xlu0 %5314
        %v5317 = vsel %vm522, %v5250, 0
        %v5320 = vsel %vm3359, %v5315, 0
        %5322 = vmatpush.bf16.msra.mxu0 0
        %5323 = vmatpush.bf16.msra.mxu0 0
        %5324 = vmatpush.bf16.msra.mxu0 0
        %5325 = vmatpush.bf16.msra.mxu0 0
        %5326 = vmatpush.bf16.msra.mxu0 0
        %5327 = vmatpush.bf16.msra.mxu0 0
        %5328 = vmatpush.bf16.msra.mxu0 0
        %5329 = vmatpush.bf16.msra.mxu0 %v5320
        %5330 = vmatmul.bf16.gmra.mxu0 %v5317
        %v5331 = vpop.f32.mrf.mxu0
        %v5332 = vadd.f32 0.0, %v5331
        %v5333 = vpop.f32.mrf.mxu0
        %5334 = vdwg.mxu0
        %5336 = vrot.lane.b32.xlu0 %v5290, 8
        %v5337 = vpop.permute.xlu0 %5336
        %5340 = vrot.lane.b32.xlu0 %v5311, 16
        %v5341 = vpop.permute.xlu0 %5340
        %5344 = vrot.lane.b32.xlu0 %v5332, 24
        %v5345 = vpop.permute.xlu0 %5344
        %v5347 = vsel %vm522, %v5269, %v5337
        %v5348 = vsel %vm615, %v5347, %v5341
        %v5349 = vsel %vm944, %v5348, %v5345
        %v5350 = vld [vmem:[#allocation4 + $0x150] sm:$0xf]
        %v5351 = vld [vmem:[#allocation4 + $0x154] sm:$0xf]
        %v5352 = vld [vmem:[#allocation4 + $0x158] sm:$0xf]
        %v5353 = vld [vmem:[#allocation4 + $0x15c] sm:$0xf]
        %v5354 = vpack.c.bf16 %v5349, %v5056
        %v5355 = vld [vmem:[#allocation6 + $0xd8] sm:$0x1]
        %v5356 = vperm.slane %v5355, 0
        %v5361 = vunpack.c.l.b16 %v5350
        %v5362 = vunpack.c.l.b16 %v5351
        %v5363 = vunpack.c.l.b16 %v5352
        %v5364 = vunpack.c.l.b16 %v5353
        %v5365 = vpack.c.b16 %v5362, %v5361
        %v5366 = vpack.c.b16 %v5364, %v5363
        %v5370 = vsel %vm485, %v5354, 0
        %5372 = vmatpush.bf16.msra.mxu0 0
        %5373 = vmatpush.bf16.msra.mxu0 0
        %5374 = vmatpush.bf16.msra.mxu0 0
        %5375 = vmatpush.bf16.msra.mxu0 0
        %5376 = vmatpush.bf16.msra.mxu0 0
        %5377 = vmatpush.bf16.msra.mxu0 0
        %5378 = vmatpush.bf16.msra.mxu0 %v5366
        %5379 = vmatpush.bf16.msra.mxu0 %v5365
        %5380 = vmatmul.bf16.gmra.mxu0 %v5370
        %v5381 = vpop.f32.mrf.mxu0
        %v5382 = vadd.f32 %v5356, %v5381
        %v5383 = vpop.f32.mrf.mxu0
        %v5384 = vadd.f32 %v5356, %v5383
        %5385 = vdwg.mxu0
        %v5386 = vadd.f32 %v4724, %v5382
        %v5387 = vadd.f32 %v4725, %v5384
        %v5388 = vsel %vm485, %v5386, 0.0
        %5389 = vadd.xlane.f32.xlu0 %v5388
        %v5390 = vpop.xlane.xlu0 %5389
        %v5391 = vsel %vm485, %v5387, 0.0
        %5392 = vadd.xlane.f32.xlu0 %v5391
        %v5393 = vpop.xlane.xlu0 %5392
        %v5394 = vmul.f32 %v5390, %v1447
        %v5395 = vmul.f32 %v5393, %v1447
        %v5396 = vsub.f32 %v5386, %v5394
        %v5397 = vsub.f32 %v5387, %v5395
        %v5398 = vmul.f32 %v5396, %v5396
        %v5399 = vmul.f32 %v5397, %v5397
        %v5400 = vsel %vm485, %v5398, 0.0
        %5401 = vadd.xlane.f32.xlu0 %v5400
        %v5402 = vpop.xlane.xlu0 %5401
        %v5403 = vsel %vm485, %v5399, 0.0
        %5404 = vadd.xlane.f32.xlu0 %v5403
        %v5405 = vpop.xlane.xlu0 %5404
        %v5406 = vmul.f32 %v5402, %v1447
        %v5407 = vmul.f32 %v5405, %v1447
        %v5408 = vadd.f32 %v5406, 1e-05
        %v5409 = vadd.f32 %v5407, 1e-05
        %v5410 = vrsqrt.pop %v5408
        %v5411 = vmul.f32 %v5410, %v5408
        %v5412 = vmul.f32 %v5411, %v5410
        %v5413 = vmul.f32 0.5, %v5412
        %v5414 = vsub.f32 1.5, %v5413
        %v5415 = vmul.f32 %v5410, %v5414
        %vm5416 = vweird.f32 %v5408
        %vm5417 = vweird.f32 %v5410
        %vm5418 = vmor %vm5416, %vm5417
        %v5419 = vsel %vm5418, %v5410, %v5415
        %v5420 = vrsqrt.pop %v5409
        %v5421 = vmul.f32 %v5420, %v5409
        %v5422 = vmul.f32 %v5421, %v5420
        %v5423 = vmul.f32 0.5, %v5422
        %v5424 = vsub.f32 1.5, %v5423
        %v5425 = vmul.f32 %v5420, %v5424
        %vm5426 = vweird.f32 %v5409
        %vm5427 = vweird.f32 %v5420
        %vm5428 = vmor %vm5426, %vm5427
        %v5429 = vsel %vm5428, %v5420, %v5425
        %v5430 = vmul.f32 %v5396, %v5419
        %v5431 = vmul.f32 %v5397, %v5429
        %v5432 = vperm.slane %v4726, 0
        %v5433 = vmul.f32 %v5430, %v5432
        %v5434 = vmul.f32 %v5431, %v5432
        %v5435 = vperm.slane %v4727, 0
        %v5436 = vadd.f32 %v5433, %v5435
        %v5437 = vadd.f32 %v5434, %v5435
        %v5438 = vld [vmem:[#allocation4 + $0x160] sm:$0xf]
        %v5439 = vld [vmem:[#allocation4 + $0x164] sm:$0xf]
        %v5440 = vld [vmem:[#allocation4 + $0x168] sm:$0xf]
        %v5441 = vld [vmem:[#allocation4 + $0x16c] sm:$0xf]
        %v5442 = vpack.c.bf16 %v5437, %v5436
        %v5443 = vld [vmem:[#allocation6 + $0xe0] sm:$0x1]
        %v5444 = vperm.slane %v5443, 0
        %v5449 = vunpack.c.l.b16 %v5438
        %v5450 = vunpack.c.l.b16 %v5439
        %v5451 = vunpack.c.l.b16 %v5440
        %v5452 = vunpack.c.l.b16 %v5441
        %v5453 = vpack.c.b16 %v5450, %v5449
        %v5454 = vpack.c.b16 %v5452, %v5451
        %v5458 = vsel %vm485, %v5442, 0
        %5460 = vmatpush.bf16.msra.mxu0 0
        %5461 = vmatpush.bf16.msra.mxu0 0
        %5462 = vmatpush.bf16.msra.mxu0 0
        %5463 = vmatpush.bf16.msra.mxu0 0
        %5464 = vmatpush.bf16.msra.mxu0 0
        %5465 = vmatpush.bf16.msra.mxu0 0
        %5466 = vmatpush.bf16.msra.mxu0 %v5454
        %5467 = vmatpush.bf16.msra.mxu0 %v5453
        %5468 = vmatmul.bf16.gmra.mxu0 %v5458
        %v5469 = vpop.f32.mrf.mxu0
        %v5470 = vadd.f32 %v5444, %v5469
        %v5471 = vpop.f32.mrf.mxu0
        %v5472 = vadd.f32 %v5444, %v5471
        %5473 = vdwg.mxu0
        %v5474 = vld [vmem:[#allocation4 + $0x170] sm:$0xf]
        %v5475 = vld [vmem:[#allocation4 + $0x174] sm:$0xf]
        %v5476 = vld [vmem:[#allocation4 + $0x178] sm:$0xf]
        %v5477 = vld [vmem:[#allocation4 + $0x17c] sm:$0xf]
        %v5478 = vld [vmem:[#allocation6 + $0xe8] sm:$0x1]
        %v5479 = vperm.slane %v5478, 0
        %v5484 = vunpack.c.l.b16 %v5474
        %v5485 = vunpack.c.l.b16 %v5475
        %v5486 = vunpack.c.l.b16 %v5476
        %v5487 = vunpack.c.l.b16 %v5477
        %v5488 = vpack.c.b16 %v5485, %v5484
        %v5489 = vpack.c.b16 %v5487, %v5486
        %5492 = vmatpush.bf16.msra.mxu0 0
        %5493 = vmatpush.bf16.msra.mxu0 0
        %5494 = vmatpush.bf16.msra.mxu0 0
        %5495 = vmatpush.bf16.msra.mxu0 0
        %5496 = vmatpush.bf16.msra.mxu0 0
        %5497 = vmatpush.bf16.msra.mxu0 0
        %5498 = vmatpush.bf16.msra.mxu0 %v5489
        %5499 = vmatpush.bf16.msra.mxu0 %v5488
        %5500 = vmatmul.bf16.gmra.mxu0 %v3892
        %v5501 = vpop.f32.mrf.mxu0
        %v5502 = vadd.f32 %v5479, %v5501
        %v5503 = vpop.f32.mrf.mxu0
        %v5504 = vadd.f32 %v5479, %v5503
        %5505 = vmatmul.bf16.gmra.mxu0 %v3895
        %v5506 = vpop.f32.mrf.mxu0
        %v5507 = vadd.f32 %v5479, %v5506
        %v5508 = vpop.f32.mrf.mxu0
        %v5509 = vadd.f32 %v5479, %v5508
        %5510 = vdwg.mxu0
        %v5511 = vpack.c.bf16 %v5470, %v5470
        %v5512 = vpack.c.bf16 %v5502, %v5502
        %v5513 = vpack.c.bf16 %v5504, %v5504
        %v5516 = vunpack.c.l.b16 %v5512
        %v5517 = vunpack.c.l.b16 %v5513
        %v5518 = vpack.c.b16 %v5517, %v5516
        %v5520 = vsel %vm522, %v5511, 0
        %v5523 = vsel %vm522, %v5518, 0
        %5525 = vmatpush.bf16.xpose.msra.mxu0 0
        %5526 = vmatpush.bf16.xpose.msra.mxu0 0
        %5527 = vmatpush.bf16.xpose.msra.mxu0 0
        %5528 = vmatpush.bf16.xpose.msra.mxu0 0
        %5529 = vmatpush.bf16.xpose.msra.mxu0 0
        %5530 = vmatpush.bf16.xpose.msra.mxu0 0
        %5531 = vmatpush.bf16.xpose.msra.mxu0 0
        %5532 = vmatpush.bf16.xpose.msra.mxu0 %v5523
        %5533 = vmatmul.bf16.gmra.mxu0 %v5520
        %v5534 = vpop.f32.mrf.mxu0
        %v5535 = vadd.f32 %v3120, %v5534
        %v5536 = vpop.f32.mrf.mxu0
        %5537 = vdwg.mxu0
        %v5539 = vunpack.c.l.b16 %v5511
        %v5540 = vpack.c.b16 %v5539, %v5539
        %5541 = vrot.lane.b32.xlu0 %v5540, 120
        %v5542 = vpop.permute.xlu0 %5541
        %5543 = vrot.lane.b32.xlu0 %v5518, 120
        %v5544 = vpop.permute.xlu0 %5543
        %v5546 = vsel %vm522, %v5542, 0
        %v5549 = vsel %vm522, %v5544, 0
        %5551 = vmatpush.bf16.xpose.msra.mxu0 0
        %5552 = vmatpush.bf16.xpose.msra.mxu0 0
        %5553 = vmatpush.bf16.xpose.msra.mxu0 0
        %5554 = vmatpush.bf16.xpose.msra.mxu0 0
        %5555 = vmatpush.bf16.xpose.msra.mxu0 0
        %5556 = vmatpush.bf16.xpose.msra.mxu0 0
        %5557 = vmatpush.bf16.xpose.msra.mxu0 0
        %5558 = vmatpush.bf16.xpose.msra.mxu0 %v5549
        %5559 = vmatmul.bf16.gmra.mxu0 %v5546
        %v5560 = vpop.f32.mrf.mxu0
        %v5561 = vadd.f32 %v3120, %v5560
        %v5562 = vpop.f32.mrf.mxu0
        %5563 = vdwg.mxu0
        %5564 = vrot.lane.b32.xlu0 %v5540, 112
        %v5565 = vpop.permute.xlu0 %5564
        %5566 = vrot.lane.b32.xlu0 %v5518, 112
        %v5567 = vpop.permute.xlu0 %5566
        %v5569 = vsel %vm522, %v5565, 0
        %v5572 = vsel %vm522, %v5567, 0
        %5574 = vmatpush.bf16.xpose.msra.mxu0 0
        %5575 = vmatpush.bf16.xpose.msra.mxu0 0
        %5576 = vmatpush.bf16.xpose.msra.mxu0 0
        %5577 = vmatpush.bf16.xpose.msra.mxu0 0
        %5578 = vmatpush.bf16.xpose.msra.mxu0 0
        %5579 = vmatpush.bf16.xpose.msra.mxu0 0
        %5580 = vmatpush.bf16.xpose.msra.mxu0 0
        %5581 = vmatpush.bf16.xpose.msra.mxu0 %v5572
        %5582 = vmatmul.bf16.gmra.mxu0 %v5569
        %v5583 = vpop.f32.mrf.mxu0
        %v5584 = vadd.f32 %v3120, %v5583
        %v5585 = vpop.f32.mrf.mxu0
        %5586 = vdwg.mxu0
        %5587 = vrot.lane.b32.xlu0 %v5540, 104
        %v5588 = vpop.permute.xlu0 %5587
        %5589 = vrot.lane.b32.xlu0 %v5518, 104
        %v5590 = vpop.permute.xlu0 %5589
        %v5592 = vsel %vm522, %v5588, 0
        %v5595 = vsel %vm522, %v5590, 0
        %5597 = vmatpush.bf16.xpose.msra.mxu0 0
        %5598 = vmatpush.bf16.xpose.msra.mxu0 0
        %5599 = vmatpush.bf16.xpose.msra.mxu0 0
        %5600 = vmatpush.bf16.xpose.msra.mxu0 0
        %5601 = vmatpush.bf16.xpose.msra.mxu0 0
        %5602 = vmatpush.bf16.xpose.msra.mxu0 0
        %5603 = vmatpush.bf16.xpose.msra.mxu0 0
        %5604 = vmatpush.bf16.xpose.msra.mxu0 %v5595
        %5605 = vmatmul.bf16.gmra.mxu0 %v5592
        %v5606 = vpop.f32.mrf.mxu0
        %v5607 = vadd.f32 %v3120, %v5606
        %v5608 = vpop.f32.mrf.mxu0
        %5609 = vdwg.mxu0
        %v5610 = vsel %vm615, %v5535, -inf
        %5611 = vmax.xlane.f32.xlu0 %v5610
        %v5612 = vpop.xlane.xlu0 %5611
        %v5613 = vsel %vm615, %v5561, -inf
        %5614 = vmax.xlane.f32.xlu0 %v5613
        %v5615 = vpop.xlane.xlu0 %5614
        %v5616 = vsel %vm615, %v5584, -inf
        %5617 = vmax.xlane.f32.xlu0 %v5616
        %v5618 = vpop.xlane.xlu0 %5617
        %v5619 = vsel %vm615, %v5607, -inf
        %5620 = vmax.xlane.f32.xlu0 %v5619
        %v5621 = vpop.xlane.xlu0 %5620
        %v5622 = vsub.f32 %v5535, %v5612
        %v5623 = vsub.f32 %v5561, %v5615
        %v5624 = vsub.f32 %v5584, %v5618
        %v5625 = vsub.f32 %v5607, %v5621
        %v5626 = vmul.f32 %v5622, 1.442695
        %v5627 = vpow.pop %v5626
        %v5628 = vmul.f32 %v5623, 1.442695
        %v5629 = vpow.pop %v5628
        %v5630 = vmul.f32 %v5624, 1.442695
        %v5631 = vpow.pop %v5630
        %v5632 = vmul.f32 %v5625, 1.442695
        %v5633 = vpow.pop %v5632
        %v5634 = vsel %vm615, %v5627, 0.0
        %5635 = vadd.xlane.f32.xlu0 %v5634
        %v5636 = vpop.xlane.xlu0 %5635
        %v5637 = vsel %vm615, %v5629, 0.0
        %5638 = vadd.xlane.f32.xlu0 %v5637
        %v5639 = vpop.xlane.xlu0 %5638
        %v5640 = vsel %vm615, %v5631, 0.0
        %5641 = vadd.xlane.f32.xlu0 %v5640
        %v5642 = vpop.xlane.xlu0 %5641
        %v5643 = vsel %vm615, %v5633, 0.0
        %5644 = vadd.xlane.f32.xlu0 %v5643
        %v5645 = vpop.xlane.xlu0 %5644
        %v5646 = vrcp.pop %v5636
        %v5647 = vmul.f32 %v5636, %v5646
        %v5648 = vsub.f32 1.0, %v5647
        %v5649 = vmul.f32 %v5646, %v5648
        %v5650 = vadd.f32 %v5646, %v5649
        %vm5651 = vweird.f32 %v5636
        %vm5652 = vweird.f32 %v5646
        %vm5653 = vmor %vm5651, %vm5652
        %v5654 = vsel %vm5653, %v5646, %v5650
        %v5655 = vand.u32 2147483647, %v5636
        %vm5656 = vcmp.eq.f32.partialorder %v5655, 8.507059e+37
        %v5657 = vand.u32 %v5636, 2147483648
        %v5658 = vor.u32 1.1754944e-38, %v5657
        %v5659 = vsel %vm5656, %v5658, %v5654
        %v5660 = vmul.f32 %v5627, %v5659
        %v5661 = vrcp.pop %v5639
        %v5662 = vmul.f32 %v5639, %v5661
        %v5663 = vsub.f32 1.0, %v5662
        %v5664 = vmul.f32 %v5661, %v5663
        %v5665 = vadd.f32 %v5661, %v5664
        %vm5666 = vweird.f32 %v5639
        %vm5667 = vweird.f32 %v5661
        %vm5668 = vmor %vm5666, %vm5667
        %v5669 = vsel %vm5668, %v5661, %v5665
        %v5670 = vand.u32 2147483647, %v5639
        %vm5671 = vcmp.eq.f32.partialorder %v5670, 8.507059e+37
        %v5672 = vand.u32 %v5639, 2147483648
        %v5673 = vor.u32 1.1754944e-38, %v5672
        %v5674 = vsel %vm5671, %v5673, %v5669
        %v5675 = vmul.f32 %v5629, %v5674
        %v5676 = vrcp.pop %v5642
        %v5677 = vmul.f32 %v5642, %v5676
        %v5678 = vsub.f32 1.0, %v5677
        %v5679 = vmul.f32 %v5676, %v5678
        %v5680 = vadd.f32 %v5676, %v5679
        %vm5681 = vweird.f32 %v5642
        %vm5682 = vweird.f32 %v5676
        %vm5683 = vmor %vm5681, %vm5682
        %v5684 = vsel %vm5683, %v5676, %v5680
        %v5685 = vand.u32 2147483647, %v5642
        %vm5686 = vcmp.eq.f32.partialorder %v5685, 8.507059e+37
        %v5687 = vand.u32 %v5642, 2147483648
        %v5688 = vor.u32 1.1754944e-38, %v5687
        %v5689 = vsel %vm5686, %v5688, %v5684
        %v5690 = vmul.f32 %v5631, %v5689
        %v5691 = vrcp.pop %v5645
        %v5692 = vmul.f32 %v5645, %v5691
        %v5693 = vsub.f32 1.0, %v5692
        %v5694 = vmul.f32 %v5691, %v5693
        %v5695 = vadd.f32 %v5691, %v5694
        %vm5696 = vweird.f32 %v5645
        %vm5697 = vweird.f32 %v5691
        %vm5698 = vmor %vm5696, %vm5697
        %v5699 = vsel %vm5698, %v5691, %v5695
        %v5700 = vand.u32 2147483647, %v5645
        %vm5701 = vcmp.eq.f32.partialorder %v5700, 8.507059e+37
        %v5702 = vand.u32 %v5645, 2147483648
        %v5703 = vor.u32 1.1754944e-38, %v5702
        %v5704 = vsel %vm5701, %v5703, %v5699
        %v5705 = vmul.f32 %v5633, %v5704
        %v5706 = vpack.c.bf16 %v5660, %v5660
        %v5707 = vpack.c.bf16 %v5675, %v5675
        %v5708 = vpack.c.bf16 %v5690, %v5690
        %v5709 = vpack.c.bf16 %v5705, %v5705
        %5710 = vrot.lane.b32.xlu0 %v5518, 96
        %v5711 = vpop.permute.xlu0 %5710
        %v5714 = vsel %vm615, %v5706, 0
        %5716 = vmatpush.bf16.msra.mxu0 0
        %5717 = vmatpush.bf16.msra.mxu0 0
        %5718 = vmatpush.bf16.msra.mxu0 0
        %5719 = vmatpush.bf16.msra.mxu0 0
        %5720 = vmatpush.bf16.msra.mxu0 0
        %5721 = vmatpush.bf16.msra.mxu0 0
        %5722 = vmatpush.bf16.msra.mxu0 0
        %5723 = vmatpush.bf16.msra.mxu0 %v5711
        %5724 = vmatmul.bf16.gmra.mxu0 %v5714
        %v5725 = vpop.f32.mrf.mxu0
        %v5726 = vadd.f32 0.0, %v5725
        %v5727 = vpop.f32.mrf.mxu0
        %5728 = vdwg.mxu0
        %5729 = vrot.lane.b32.xlu0 %v5518, 88
        %v5730 = vpop.permute.xlu0 %5729
        %v5733 = vsel %vm615, %v5707, 0
        %5735 = vmatpush.bf16.msra.mxu0 0
        %5736 = vmatpush.bf16.msra.mxu0 0
        %5737 = vmatpush.bf16.msra.mxu0 0
        %5738 = vmatpush.bf16.msra.mxu0 0
        %5739 = vmatpush.bf16.msra.mxu0 0
        %5740 = vmatpush.bf16.msra.mxu0 0
        %5741 = vmatpush.bf16.msra.mxu0 0
        %5742 = vmatpush.bf16.msra.mxu0 %v5730
        %5743 = vmatmul.bf16.gmra.mxu0 %v5733
        %v5744 = vpop.f32.mrf.mxu0
        %v5745 = vadd.f32 0.0, %v5744
        %v5746 = vpop.f32.mrf.mxu0
        %5747 = vdwg.mxu0
        %5748 = vrot.lane.b32.xlu0 %v5518, 80
        %v5749 = vpop.permute.xlu0 %5748
        %v5752 = vsel %vm615, %v5708, 0
        %5754 = vmatpush.bf16.msra.mxu0 0
        %5755 = vmatpush.bf16.msra.mxu0 0
        %5756 = vmatpush.bf16.msra.mxu0 0
        %5757 = vmatpush.bf16.msra.mxu0 0
        %5758 = vmatpush.bf16.msra.mxu0 0
        %5759 = vmatpush.bf16.msra.mxu0 0
        %5760 = vmatpush.bf16.msra.mxu0 0
        %5761 = vmatpush.bf16.msra.mxu0 %v5749
        %5762 = vmatmul.bf16.gmra.mxu0 %v5752
        %v5763 = vpop.f32.mrf.mxu0
        %v5764 = vadd.f32 0.0, %v5763
        %v5765 = vpop.f32.mrf.mxu0
        %5766 = vdwg.mxu0
        %5767 = vrot.lane.b32.xlu0 %v5518, 72
        %v5768 = vpop.permute.xlu0 %5767
        %v5771 = vsel %vm615, %v5709, 0
        %5773 = vmatpush.bf16.msra.mxu0 0
        %5774 = vmatpush.bf16.msra.mxu0 0
        %5775 = vmatpush.bf16.msra.mxu0 0
        %5776 = vmatpush.bf16.msra.mxu0 0
        %5777 = vmatpush.bf16.msra.mxu0 0
        %5778 = vmatpush.bf16.msra.mxu0 0
        %5779 = vmatpush.bf16.msra.mxu0 0
        %5780 = vmatpush.bf16.msra.mxu0 %v5768
        %5781 = vmatmul.bf16.gmra.mxu0 %v5771
        %v5782 = vpop.f32.mrf.mxu0
        %v5783 = vadd.f32 0.0, %v5782
        %v5784 = vpop.f32.mrf.mxu0
        %5785 = vdwg.mxu0
        %5787 = vrot.lane.b32.xlu0 %v5745, 8
        %v5788 = vpop.permute.xlu0 %5787
        %5791 = vrot.lane.b32.xlu0 %v5764, 16
        %v5792 = vpop.permute.xlu0 %5791
        %5795 = vrot.lane.b32.xlu0 %v5783, 24
        %v5796 = vpop.permute.xlu0 %5795
        %v5798 = vsel %vm522, %v5726, %v5788
        %v5799 = vsel %vm615, %v5798, %v5792
        %v5800 = vsel %vm944, %v5799, %v5796
        %v5801 = vpack.c.bf16 %v5472, %v5472
        %v5802 = vpack.c.bf16 %v5507, %v5507
        %v5803 = vpack.c.bf16 %v5509, %v5509
        %v5806 = vunpack.c.l.b16 %v5802
        %v5807 = vunpack.c.l.b16 %v5803
        %v5808 = vpack.c.b16 %v5807, %v5806
        %v5810 = vsel %vm522, %v5801, 0
        %v5813 = vsel %vm522, %v5808, 0
        %5815 = vmatpush.bf16.xpose.msra.mxu0 0
        %5816 = vmatpush.bf16.xpose.msra.mxu0 0
        %5817 = vmatpush.bf16.xpose.msra.mxu0 0
        %5818 = vmatpush.bf16.xpose.msra.mxu0 0
        %5819 = vmatpush.bf16.xpose.msra.mxu0 0
        %5820 = vmatpush.bf16.xpose.msra.mxu0 0
        %5821 = vmatpush.bf16.xpose.msra.mxu0 0
        %5822 = vmatpush.bf16.xpose.msra.mxu0 %v5813
        %5823 = vmatmul.bf16.gmra.mxu0 %v5810
        %v5824 = vpop.f32.mrf.mxu0
        %v5825 = vadd.f32 %v3121, %v5824
        %v5826 = vpop.f32.mrf.mxu0
        %5827 = vdwg.mxu0
        %v5829 = vunpack.c.l.b16 %v5801
        %v5830 = vpack.c.b16 %v5829, %v5829
        %5831 = vrot.lane.b32.xlu0 %v5830, 120
        %v5832 = vpop.permute.xlu0 %5831
        %5833 = vrot.lane.b32.xlu0 %v5808, 120
        %v5834 = vpop.permute.xlu0 %5833
        %v5836 = vsel %vm522, %v5832, 0
        %v5839 = vsel %vm522, %v5834, 0
        %5841 = vmatpush.bf16.xpose.msra.mxu0 0
        %5842 = vmatpush.bf16.xpose.msra.mxu0 0
        %5843 = vmatpush.bf16.xpose.msra.mxu0 0
        %5844 = vmatpush.bf16.xpose.msra.mxu0 0
        %5845 = vmatpush.bf16.xpose.msra.mxu0 0
        %5846 = vmatpush.bf16.xpose.msra.mxu0 0
        %5847 = vmatpush.bf16.xpose.msra.mxu0 0
        %5848 = vmatpush.bf16.xpose.msra.mxu0 %v5839
        %5849 = vmatmul.bf16.gmra.mxu0 %v5836
        %v5850 = vpop.f32.mrf.mxu0
        %v5851 = vadd.f32 %v3121, %v5850
        %v5852 = vpop.f32.mrf.mxu0
        %5853 = vdwg.mxu0
        %5854 = vrot.lane.b32.xlu0 %v5830, 112
        %v5855 = vpop.permute.xlu0 %5854
        %5856 = vrot.lane.b32.xlu0 %v5808, 112
        %v5857 = vpop.permute.xlu0 %5856
        %v5859 = vsel %vm522, %v5855, 0
        %v5862 = vsel %vm522, %v5857, 0
        %5864 = vmatpush.bf16.xpose.msra.mxu0 0
        %5865 = vmatpush.bf16.xpose.msra.mxu0 0
        %5866 = vmatpush.bf16.xpose.msra.mxu0 0
        %5867 = vmatpush.bf16.xpose.msra.mxu0 0
        %5868 = vmatpush.bf16.xpose.msra.mxu0 0
        %5869 = vmatpush.bf16.xpose.msra.mxu0 0
        %5870 = vmatpush.bf16.xpose.msra.mxu0 0
        %5871 = vmatpush.bf16.xpose.msra.mxu0 %v5862
        %5872 = vmatmul.bf16.gmra.mxu0 %v5859
        %v5873 = vpop.f32.mrf.mxu0
        %v5874 = vadd.f32 %v3121, %v5873
        %v5875 = vpop.f32.mrf.mxu0
        %5876 = vdwg.mxu0
        %5877 = vrot.lane.b32.xlu0 %v5830, 104
        %v5878 = vpop.permute.xlu0 %5877
        %5879 = vrot.lane.b32.xlu0 %v5808, 104
        %v5880 = vpop.permute.xlu0 %5879
        %v5882 = vsel %vm522, %v5878, 0
        %v5885 = vsel %vm522, %v5880, 0
        %5887 = vmatpush.bf16.xpose.msra.mxu0 0
        %5888 = vmatpush.bf16.xpose.msra.mxu0 0
        %5889 = vmatpush.bf16.xpose.msra.mxu0 0
        %5890 = vmatpush.bf16.xpose.msra.mxu0 0
        %5891 = vmatpush.bf16.xpose.msra.mxu0 0
        %5892 = vmatpush.bf16.xpose.msra.mxu0 0
        %5893 = vmatpush.bf16.xpose.msra.mxu0 0
        %5894 = vmatpush.bf16.xpose.msra.mxu0 %v5885
        %5895 = vmatmul.bf16.gmra.mxu0 %v5882
        %v5896 = vpop.f32.mrf.mxu0
        %v5897 = vadd.f32 %v3121, %v5896
        %v5898 = vpop.f32.mrf.mxu0
        %5899 = vdwg.mxu0
        %v5900 = vsel %vm615, %v5825, -inf
        %5901 = vmax.xlane.f32.xlu0 %v5900
        %v5902 = vpop.xlane.xlu0 %5901
        %v5903 = vsel %vm615, %v5851, -inf
        %5904 = vmax.xlane.f32.xlu0 %v5903
        %v5905 = vpop.xlane.xlu0 %5904
        %v5906 = vsel %vm615, %v5874, -inf
        %5907 = vmax.xlane.f32.xlu0 %v5906
        %v5908 = vpop.xlane.xlu0 %5907
        %v5909 = vsel %vm615, %v5897, -inf
        %5910 = vmax.xlane.f32.xlu0 %v5909
        %v5911 = vpop.xlane.xlu0 %5910
        %v5912 = vsub.f32 %v5825, %v5902
        %v5913 = vsub.f32 %v5851, %v5905
        %v5914 = vsub.f32 %v5874, %v5908
        %v5915 = vsub.f32 %v5897, %v5911
        %v5916 = vmul.f32 %v5912, 1.442695
        %v5917 = vpow.pop %v5916
        %v5918 = vmul.f32 %v5913, 1.442695
        %v5919 = vpow.pop %v5918
        %v5920 = vmul.f32 %v5914, 1.442695
        %v5921 = vpow.pop %v5920
        %v5922 = vmul.f32 %v5915, 1.442695
        %v5923 = vpow.pop %v5922
        %v5924 = vsel %vm615, %v5917, 0.0
        %5925 = vadd.xlane.f32.xlu0 %v5924
        %v5926 = vpop.xlane.xlu0 %5925
        %v5927 = vsel %vm615, %v5919, 0.0
        %5928 = vadd.xlane.f32.xlu0 %v5927
        %v5929 = vpop.xlane.xlu0 %5928
        %v5930 = vsel %vm615, %v5921, 0.0
        %5931 = vadd.xlane.f32.xlu0 %v5930
        %v5932 = vpop.xlane.xlu0 %5931
        %v5933 = vsel %vm615, %v5923, 0.0
        %5934 = vadd.xlane.f32.xlu0 %v5933
        %v5935 = vpop.xlane.xlu0 %5934
        %v5936 = vrcp.pop %v5926
        %v5937 = vmul.f32 %v5926, %v5936
        %v5938 = vsub.f32 1.0, %v5937
        %v5939 = vmul.f32 %v5936, %v5938
        %v5940 = vadd.f32 %v5936, %v5939
        %vm5941 = vweird.f32 %v5926
        %vm5942 = vweird.f32 %v5936
        %vm5943 = vmor %vm5941, %vm5942
        %v5944 = vsel %vm5943, %v5936, %v5940
        %v5945 = vand.u32 2147483647, %v5926
        %vm5946 = vcmp.eq.f32.partialorder %v5945, 8.507059e+37
        %v5947 = vand.u32 %v5926, 2147483648
        %v5948 = vor.u32 1.1754944e-38, %v5947
        %v5949 = vsel %vm5946, %v5948, %v5944
        %v5950 = vmul.f32 %v5917, %v5949
        %v5951 = vrcp.pop %v5929
        %v5952 = vmul.f32 %v5929, %v5951
        %v5953 = vsub.f32 1.0, %v5952
        %v5954 = vmul.f32 %v5951, %v5953
        %v5955 = vadd.f32 %v5951, %v5954
        %vm5956 = vweird.f32 %v5929
        %vm5957 = vweird.f32 %v5951
        %vm5958 = vmor %vm5956, %vm5957
        %v5959 = vsel %vm5958, %v5951, %v5955
        %v5960 = vand.u32 2147483647, %v5929
        %vm5961 = vcmp.eq.f32.partialorder %v5960, 8.507059e+37
        %v5962 = vand.u32 %v5929, 2147483648
        %v5963 = vor.u32 1.1754944e-38, %v5962
        %v5964 = vsel %vm5961, %v5963, %v5959
        %v5965 = vmul.f32 %v5919, %v5964
        %v5966 = vrcp.pop %v5932
        %v5967 = vmul.f32 %v5932, %v5966
        %v5968 = vsub.f32 1.0, %v5967
        %v5969 = vmul.f32 %v5966, %v5968
        %v5970 = vadd.f32 %v5966, %v5969
        %vm5971 = vweird.f32 %v5932
        %vm5972 = vweird.f32 %v5966
        %vm5973 = vmor %vm5971, %vm5972
        %v5974 = vsel %vm5973, %v5966, %v5970
        %v5975 = vand.u32 2147483647, %v5932
        %vm5976 = vcmp.eq.f32.partialorder %v5975, 8.507059e+37
        %v5977 = vand.u32 %v5932, 2147483648
        %v5978 = vor.u32 1.1754944e-38, %v5977
        %v5979 = vsel %vm5976, %v5978, %v5974
        %v5980 = vmul.f32 %v5921, %v5979
        %v5981 = vrcp.pop %v5935
        %v5982 = vmul.f32 %v5935, %v5981
        %v5983 = vsub.f32 1.0, %v5982
        %v5984 = vmul.f32 %v5981, %v5983
        %v5985 = vadd.f32 %v5981, %v5984
        %vm5986 = vweird.f32 %v5935
        %vm5987 = vweird.f32 %v5981
        %vm5988 = vmor %vm5986, %vm5987
        %v5989 = vsel %vm5988, %v5981, %v5985
        %v5990 = vand.u32 2147483647, %v5935
        %vm5991 = vcmp.eq.f32.partialorder %v5990, 8.507059e+37
        %v5992 = vand.u32 %v5935, 2147483648
        %v5993 = vor.u32 1.1754944e-38, %v5992
        %v5994 = vsel %vm5991, %v5993, %v5989
        %v5995 = vmul.f32 %v5923, %v5994
        %v5996 = vpack.c.bf16 %v5950, %v5950
        %v5997 = vpack.c.bf16 %v5965, %v5965
        %v5998 = vpack.c.bf16 %v5980, %v5980
        %v5999 = vpack.c.bf16 %v5995, %v5995
        %6000 = vrot.lane.b32.xlu0 %v5808, 96
        %v6001 = vpop.permute.xlu0 %6000
        %v6004 = vsel %vm615, %v5996, 0
        %6006 = vmatpush.bf16.msra.mxu0 0
        %6007 = vmatpush.bf16.msra.mxu0 0
        %6008 = vmatpush.bf16.msra.mxu0 0
        %6009 = vmatpush.bf16.msra.mxu0 0
        %6010 = vmatpush.bf16.msra.mxu0 0
        %6011 = vmatpush.bf16.msra.mxu0 0
        %6012 = vmatpush.bf16.msra.mxu0 0
        %6013 = vmatpush.bf16.msra.mxu0 %v6001
        %6014 = vmatmul.bf16.gmra.mxu0 %v6004
        %v6015 = vpop.f32.mrf.mxu0
        %v6016 = vadd.f32 0.0, %v6015
        %v6017 = vpop.f32.mrf.mxu0
        %6018 = vdwg.mxu0
        %6019 = vrot.lane.b32.xlu0 %v5808, 88
        %v6020 = vpop.permute.xlu0 %6019
        %v6023 = vsel %vm615, %v5997, 0
        %6025 = vmatpush.bf16.msra.mxu0 0
        %6026 = vmatpush.bf16.msra.mxu0 0
        %6027 = vmatpush.bf16.msra.mxu0 0
        %6028 = vmatpush.bf16.msra.mxu0 0
        %6029 = vmatpush.bf16.msra.mxu0 0
        %6030 = vmatpush.bf16.msra.mxu0 0
        %6031 = vmatpush.bf16.msra.mxu0 0
        %6032 = vmatpush.bf16.msra.mxu0 %v6020
        %6033 = vmatmul.bf16.gmra.mxu0 %v6023
        %v6034 = vpop.f32.mrf.mxu0
        %v6035 = vadd.f32 0.0, %v6034
        %v6036 = vpop.f32.mrf.mxu0
        %6037 = vdwg.mxu0
        %6038 = vrot.lane.b32.xlu0 %v5808, 80
        %v6039 = vpop.permute.xlu0 %6038
        %v6042 = vsel %vm615, %v5998, 0
        %6044 = vmatpush.bf16.msra.mxu0 0
        %6045 = vmatpush.bf16.msra.mxu0 0
        %6046 = vmatpush.bf16.msra.mxu0 0
        %6047 = vmatpush.bf16.msra.mxu0 0
        %6048 = vmatpush.bf16.msra.mxu0 0
        %6049 = vmatpush.bf16.msra.mxu0 0
        %6050 = vmatpush.bf16.msra.mxu0 0
        %6051 = vmatpush.bf16.msra.mxu0 %v6039
        %6052 = vmatmul.bf16.gmra.mxu0 %v6042
        %v6053 = vpop.f32.mrf.mxu0
        %v6054 = vadd.f32 0.0, %v6053
        %v6055 = vpop.f32.mrf.mxu0
        %6056 = vdwg.mxu0
        %6057 = vrot.lane.b32.xlu0 %v5808, 72
        %v6058 = vpop.permute.xlu0 %6057
        %v6061 = vsel %vm615, %v5999, 0
        %6063 = vmatpush.bf16.msra.mxu0 0
        %6064 = vmatpush.bf16.msra.mxu0 0
        %6065 = vmatpush.bf16.msra.mxu0 0
        %6066 = vmatpush.bf16.msra.mxu0 0
        %6067 = vmatpush.bf16.msra.mxu0 0
        %6068 = vmatpush.bf16.msra.mxu0 0
        %6069 = vmatpush.bf16.msra.mxu0 0
        %6070 = vmatpush.bf16.msra.mxu0 %v6058
        %6071 = vmatmul.bf16.gmra.mxu0 %v6061
        %v6072 = vpop.f32.mrf.mxu0
        %v6073 = vadd.f32 0.0, %v6072
        %v6074 = vpop.f32.mrf.mxu0
        %6075 = vdwg.mxu0
        %6077 = vrot.lane.b32.xlu0 %v6035, 8
        %v6078 = vpop.permute.xlu0 %6077
        %6081 = vrot.lane.b32.xlu0 %v6054, 16
        %v6082 = vpop.permute.xlu0 %6081
        %6085 = vrot.lane.b32.xlu0 %v6073, 24
        %v6086 = vpop.permute.xlu0 %6085
        %v6088 = vsel %vm522, %v6016, %v6078
        %v6089 = vsel %vm615, %v6088, %v6082
        %v6090 = vsel %vm944, %v6089, %v6086
        %v6091 = vld [vmem:[#allocation4 + $0x180] sm:$0xf]
        %v6092 = vld [vmem:[#allocation4 + $0x184] sm:$0xf]
        %v6093 = vld [vmem:[#allocation4 + $0x188] sm:$0xf]
        %v6094 = vld [vmem:[#allocation4 + $0x18c] sm:$0xf]
        %v6095 = vpack.c.bf16 %v6090, %v5800
        %v6096 = vld [vmem:[#allocation6 + $0xf0] sm:$0x1]
        %v6097 = vperm.slane %v6096, 0
        %v6102 = vunpack.c.l.b16 %v6091
        %v6103 = vunpack.c.l.b16 %v6092
        %v6104 = vunpack.c.l.b16 %v6093
        %v6105 = vunpack.c.l.b16 %v6094
        %v6106 = vpack.c.b16 %v6103, %v6102
        %v6107 = vpack.c.b16 %v6105, %v6104
        %v6111 = vsel %vm485, %v6095, 0
        %6113 = vmatpush.bf16.msra.mxu0 0
        %6114 = vmatpush.bf16.msra.mxu0 0
        %6115 = vmatpush.bf16.msra.mxu0 0
        %6116 = vmatpush.bf16.msra.mxu0 0
        %6117 = vmatpush.bf16.msra.mxu0 0
        %6118 = vmatpush.bf16.msra.mxu0 0
        %6119 = vmatpush.bf16.msra.mxu0 %v6107
        %6120 = vmatpush.bf16.msra.mxu0 %v6106
        %6121 = vmatmul.bf16.gmra.mxu0 %v6111
        %v6122 = vpop.f32.mrf.mxu0
        %v6123 = vadd.f32 %v6097, %v6122
        %v6124 = vpop.f32.mrf.mxu0
        %v6125 = vadd.f32 %v6097, %v6124
        %6126 = vdwg.mxu0
        %v6127 = vadd.f32 %v5436, %v6123
        %v6128 = vadd.f32 %v5437, %v6125
        %v6129 = vsel %vm485, %v6127, 0.0
        %6130 = vadd.xlane.f32.xlu0 %v6129
        %v6131 = vpop.xlane.xlu0 %6130
        %v6132 = vsel %vm485, %v6128, 0.0
        %6133 = vadd.xlane.f32.xlu0 %v6132
        %v6134 = vpop.xlane.xlu0 %6133
        %v6135 = vmul.f32 %v6131, %v1447
        %v6136 = vmul.f32 %v6134, %v1447
        %v6137 = vsub.f32 %v6127, %v6135
        %v6138 = vsub.f32 %v6128, %v6136
        %v6139 = vmul.f32 %v6137, %v6137
        %v6140 = vmul.f32 %v6138, %v6138
        %v6141 = vsel %vm485, %v6139, 0.0
        %6142 = vadd.xlane.f32.xlu0 %v6141
        %v6143 = vpop.xlane.xlu0 %6142
        %v6144 = vsel %vm485, %v6140, 0.0
        %6145 = vadd.xlane.f32.xlu0 %v6144
        %v6146 = vpop.xlane.xlu0 %6145
        %v6147 = vmul.f32 %v6143, %v1447
        %v6148 = vmul.f32 %v6146, %v1447
        %v6149 = vadd.f32 %v6147, 1e-05
        %v6150 = vadd.f32 %v6148, 1e-05
        %v6151 = vrsqrt.pop %v6149
        %v6152 = vmul.f32 %v6151, %v6149
        %v6153 = vmul.f32 %v6152, %v6151
        %v6154 = vmul.f32 0.5, %v6153
        %v6155 = vsub.f32 1.5, %v6154
        %v6156 = vmul.f32 %v6151, %v6155
        %vm6157 = vweird.f32 %v6149
        %vm6158 = vweird.f32 %v6151
        %vm6159 = vmor %vm6157, %vm6158
        %v6160 = vsel %vm6159, %v6151, %v6156
        %v6161 = vrsqrt.pop %v6150
        %v6162 = vmul.f32 %v6161, %v6150
        %v6163 = vmul.f32 %v6162, %v6161
        %v6164 = vmul.f32 0.5, %v6163
        %v6165 = vsub.f32 1.5, %v6164
        %v6166 = vmul.f32 %v6161, %v6165
        %vm6167 = vweird.f32 %v6150
        %vm6168 = vweird.f32 %v6161
        %vm6169 = vmor %vm6167, %vm6168
        %v6170 = vsel %vm6169, %v6161, %v6166
        %v6171 = vmul.f32 %v6137, %v6160
        %v6172 = vmul.f32 %v6138, %v6170
        %v6173 = vperm.slane %v4726, 1
        %v6174 = vmul.f32 %v6171, %v6173
        %v6175 = vmul.f32 %v6172, %v6173
        %v6176 = vperm.slane %v4727, 1
        %v6177 = vadd.f32 %v6174, %v6176
        %v6178 = vadd.f32 %v6175, %v6176
        %v6179 = vld [vmem:[#allocation4 + $0x190] sm:$0xf]
        %v6180 = vld [vmem:[#allocation4 + $0x194] sm:$0xf]
        %v6181 = vld [vmem:[#allocation4 + $0x198] sm:$0xf]
        %v6182 = vld [vmem:[#allocation4 + $0x19c] sm:$0xf]
        %v6183 = vpack.c.bf16 %v6178, %v6177
        %v6184 = vld [vmem:[#allocation6 + $0xf8] sm:$0x1]
        %v6185 = vperm.slane %v6184, 0
        %v6190 = vunpack.c.l.b16 %v6179
        %v6191 = vunpack.c.l.b16 %v6180
        %v6192 = vunpack.c.l.b16 %v6181
        %v6193 = vunpack.c.l.b16 %v6182
        %v6194 = vpack.c.b16 %v6191, %v6190
        %v6195 = vpack.c.b16 %v6193, %v6192
        %v6199 = vsel %vm485, %v6183, 0
        %6201 = vmatpush.bf16.msra.mxu0 0
        %6202 = vmatpush.bf16.msra.mxu0 0
        %6203 = vmatpush.bf16.msra.mxu0 0
        %6204 = vmatpush.bf16.msra.mxu0 0
        %6205 = vmatpush.bf16.msra.mxu0 0
        %6206 = vmatpush.bf16.msra.mxu0 0
        %6207 = vmatpush.bf16.msra.mxu0 %v6195
        %6208 = vmatpush.bf16.msra.mxu0 %v6194
        %6209 = vmatmul.bf16.gmra.mxu0 %v6199
        %v6210 = vpop.f32.mrf.mxu0
        %v6211 = vadd.f32 %v6185, %v6210
        %v6212 = vpop.f32.mrf.mxu0
        %v6213 = vadd.f32 %v6185, %v6212
        %6214 = vdwg.mxu0
        %v6215 = vmax.f32 %v6211, 0.0
        %v6216 = vmax.f32 %v6213, 0.0
        %v6217 = vld [vmem:[#allocation4 + $0x1a0] sm:$0xf]
        %v6218 = vld [vmem:[#allocation4 + $0x1a4] sm:$0xf]
        %v6219 = vld [vmem:[#allocation4 + $0x1a8] sm:$0xf]
        %v6220 = vld [vmem:[#allocation4 + $0x1ac] sm:$0xf]
        %v6221 = vld [vmem:[#allocation4 + $0x1b0] sm:$0xf]
        %v6222 = vld [vmem:[#allocation4 + $0x1b4] sm:$0xf]
        %v6223 = vld [vmem:[#allocation4 + $0x1b8] sm:$0xf]
        %v6224 = vld [vmem:[#allocation4 + $0x1bc] sm:$0xf]
        %v6225 = vpack.c.bf16 %v6216, %v6215
        %v6226 = vld [vmem:[#allocation6 + $0x100] sm:$0x1]
        %v6227 = vperm.slane %v6226, 0
        %v6236 = vunpack.c.l.b16 %v6217
        %v6237 = vunpack.c.l.b16 %v6218
        %v6238 = vunpack.c.l.b16 %v6219
        %v6239 = vunpack.c.l.b16 %v6220
        %v6240 = vunpack.c.l.b16 %v6221
        %v6241 = vunpack.c.l.b16 %v6222
        %v6242 = vunpack.c.l.b16 %v6223
        %v6243 = vunpack.c.l.b16 %v6224
        %v6244 = vpack.c.b16 %v6237, %v6236
        %v6245 = vpack.c.b16 %v6239, %v6238
        %v6246 = vpack.c.b16 %v6241, %v6240
        %v6247 = vpack.c.b16 %v6243, %v6242
        %v6253 = vsel %vm1619, %v6225, 0
        %6255 = vmatpush.bf16.msra.mxu0 0
        %6256 = vmatpush.bf16.msra.mxu0 0
        %6257 = vmatpush.bf16.msra.mxu0 0
        %6258 = vmatpush.bf16.msra.mxu0 0
        %6259 = vmatpush.bf16.msra.mxu0 %v6247
        %6260 = vmatpush.bf16.msra.mxu0 %v6246
        %6261 = vmatpush.bf16.msra.mxu0 %v6245
        %6262 = vmatpush.bf16.msra.mxu0 %v6244
        %6263 = vmatmul.bf16.gmra.mxu0 %v6253
        %v6264 = vpop.f32.mrf.mxu0
        %v6265 = vadd.f32 %v6227, %v6264
        %v6266 = vpop.f32.mrf.mxu0
        %v6267 = vadd.f32 %v6227, %v6266
        %6268 = vdwg.mxu0
        %v6269 = vadd.f32 %v6177, %v6265
        %v6270 = vadd.f32 %v6178, %v6267
        %v6271 = vsel %vm485, %v6269, 0.0
        %6272 = vadd.xlane.f32.xlu0 %v6271
        %v6273 = vpop.xlane.xlu0 %6272
        %v6274 = vsel %vm485, %v6270, 0.0
        %6275 = vadd.xlane.f32.xlu0 %v6274
        %v6276 = vpop.xlane.xlu0 %6275
        %v6277 = vmul.f32 %v6273, %v1447
        %v6278 = vmul.f32 %v6276, %v1447
        %v6279 = vsub.f32 %v6269, %v6277
        %v6280 = vsub.f32 %v6270, %v6278
        %v6281 = vmul.f32 %v6279, %v6279
        %v6282 = vmul.f32 %v6280, %v6280
        %v6283 = vsel %vm485, %v6281, 0.0
        %6284 = vadd.xlane.f32.xlu0 %v6283
        %v6285 = vpop.xlane.xlu0 %6284
        %v6286 = vsel %vm485, %v6282, 0.0
        %6287 = vadd.xlane.f32.xlu0 %v6286
        %v6288 = vpop.xlane.xlu0 %6287
        %v6289 = vmul.f32 %v6285, %v1447
        %v6290 = vmul.f32 %v6288, %v1447
        %v6291 = vadd.f32 %v6289, 1e-05
        %v6292 = vadd.f32 %v6290, 1e-05
        %v6293 = vrsqrt.pop %v6291
        %v6294 = vmul.f32 %v6293, %v6291
        %v6295 = vmul.f32 %v6294, %v6293
        %v6296 = vmul.f32 0.5, %v6295
        %v6297 = vsub.f32 1.5, %v6296
        %v6298 = vmul.f32 %v6293, %v6297
        %vm6299 = vweird.f32 %v6291
        %vm6300 = vweird.f32 %v6293
        %vm6301 = vmor %vm6299, %vm6300
        %v6302 = vsel %vm6301, %v6293, %v6298
        %v6303 = vrsqrt.pop %v6292
        %v6304 = vmul.f32 %v6303, %v6292
        %v6305 = vmul.f32 %v6304, %v6303
        %v6306 = vmul.f32 0.5, %v6305
        %v6307 = vsub.f32 1.5, %v6306
        %v6308 = vmul.f32 %v6303, %v6307
        %vm6309 = vweird.f32 %v6292
        %vm6310 = vweird.f32 %v6303
        %vm6311 = vmor %vm6309, %vm6310
        %v6312 = vsel %vm6311, %v6303, %v6308
        %v6313 = vmul.f32 %v6279, %v6302
        %v6314 = vmul.f32 %v6280, %v6312
        %v6315 = vperm.slane %v4726, 2
        %v6316 = vmul.f32 %v6313, %v6315
        %v6317 = vmul.f32 %v6314, %v6315
        %v6318 = vperm.slane %v4727, 2
        %v6319 = vadd.f32 %v6316, %v6318
        %v6320 = vadd.f32 %v6317, %v6318
        %v6321 = vld [vmem:[#allocation6 + $0x118] sm:$0x1]
        %v6322 = vld [vmem:[#allocation6 + $0x120] sm:$0x1]
        %v6323 = vsel %vm485, %v6319, 0.0
        %6324 = vadd.xlane.f32.xlu0 %v6323
        %v6325 = vpop.xlane.xlu0 %6324
        %v6326 = vsel %vm485, %v6320, 0.0
        %6327 = vadd.xlane.f32.xlu0 %v6326
        %v6328 = vpop.xlane.xlu0 %6327
        %v6329 = vmul.f32 %v6325, %v1447
        %v6330 = vmul.f32 %v6328, %v1447
        %v6331 = vsub.f32 %v6319, %v6329
        %v6332 = vsub.f32 %v6320, %v6330
        %v6333 = vmul.f32 %v6331, %v6331
        %v6334 = vmul.f32 %v6332, %v6332
        %v6335 = vsel %vm485, %v6333, 0.0
        %6336 = vadd.xlane.f32.xlu0 %v6335
        %v6337 = vpop.xlane.xlu0 %6336
        %v6338 = vsel %vm485, %v6334, 0.0
        %6339 = vadd.xlane.f32.xlu0 %v6338
        %v6340 = vpop.xlane.xlu0 %6339
        %v6341 = vmul.f32 %v6337, %v1447
        %v6342 = vmul.f32 %v6340, %v1447
        %v6343 = vadd.f32 %v6341, 1e-05
        %v6344 = vadd.f32 %v6342, 1e-05
        %v6345 = vrsqrt.pop %v6343
        %v6346 = vmul.f32 %v6345, %v6343
        %v6347 = vmul.f32 %v6346, %v6345
        %v6348 = vmul.f32 0.5, %v6347
        %v6349 = vsub.f32 1.5, %v6348
        %v6350 = vmul.f32 %v6345, %v6349
        %vm6351 = vweird.f32 %v6343
        %vm6352 = vweird.f32 %v6345
        %vm6353 = vmor %vm6351, %vm6352
        %v6354 = vsel %vm6353, %v6345, %v6350
        %v6355 = vrsqrt.pop %v6344
        %v6356 = vmul.f32 %v6355, %v6344
        %v6357 = vmul.f32 %v6356, %v6355
        %v6358 = vmul.f32 0.5, %v6357
        %v6359 = vsub.f32 1.5, %v6358
        %v6360 = vmul.f32 %v6355, %v6359
        %vm6361 = vweird.f32 %v6344
        %vm6362 = vweird.f32 %v6355
        %vm6363 = vmor %vm6361, %vm6362
        %v6364 = vsel %vm6363, %v6355, %v6360
        %v6365 = vmul.f32 %v6331, %v6354
        %v6366 = vmul.f32 %v6332, %v6364
        %v6367 = vperm.slane %v6321, 0
        %v6368 = vmul.f32 %v6365, %v6367
        %v6369 = vmul.f32 %v6366, %v6367
        %v6370 = vperm.slane %v6322, 0
        %v6371 = vadd.f32 %v6368, %v6370
        %v6372 = vadd.f32 %v6369, %v6370
        %v6373 = vld [vmem:[#allocation4 + $0x10] sm:$0xf]
        %v6374 = vld [vmem:[#allocation4 + $0x14] sm:$0xf]
        %v6375 = vld [vmem:[#allocation4 + $0x18] sm:$0xf]
        %v6376 = vld [vmem:[#allocation4 + $0x1c] sm:$0xf]
        %v6377 = vpack.c.bf16 %v6372, %v6371
        %v6378 = vld [vmem:[#allocation6 + $0x10] sm:$0x1]
        %v6379 = vperm.slane %v6378, 0
        %v6384 = vunpack.c.l.b16 %v6373
        %v6385 = vunpack.c.l.b16 %v6374
        %v6386 = vunpack.c.l.b16 %v6375
        %v6387 = vunpack.c.l.b16 %v6376
        %v6388 = vpack.c.b16 %v6385, %v6384
        %v6389 = vpack.c.b16 %v6387, %v6386
        %v6393 = vsel %vm485, %v6377, 0
        %6395 = vmatpush.bf16.msra.mxu0 0
        %6396 = vmatpush.bf16.msra.mxu0 0
        %6397 = vmatpush.bf16.msra.mxu0 0
        %6398 = vmatpush.bf16.msra.mxu0 0
        %6399 = vmatpush.bf16.msra.mxu0 0
        %6400 = vmatpush.bf16.msra.mxu0 0
        %6401 = vmatpush.bf16.msra.mxu0 %v6389
        %6402 = vmatpush.bf16.msra.mxu0 %v6388
        %6403 = vmatmul.bf16.gmra.mxu0 %v6393
        %v6404 = vpop.f32.mrf.mxu0
        %v6405 = vadd.f32 %v6379, %v6404
        %v6406 = vpop.f32.mrf.mxu0
        %v6407 = vadd.f32 %v6379, %v6406
        %6408 = vdwg.mxu0
        %6409 = vst [vmem:[%s294] sm:$0xff] %v6405
        %s6410 = scalar_lea.vmem %s294, 8
        %6411 = vst [vmem:[%s6410] sm:$0xff] %v6407
        %s6412 = smul.u32 2, %s27
        %p6413 = scmp.lt.s32.totalorder %s6412, 3
        %s6414 = scalar_select %p6413, %s6412, 3
        %s6415 = smul.addr %s6414, 8
        %s6416 = scalar_lea.vmem %s6, %s6415
        // Predicated region
        $region49: #{person_transformer_forward.1} parent=39 // pred_check
          %p6417 = pneg %p160
        $region50: #{person_transformer_forward.1} parent=39 // pred_check_branch
          %6419 = sbr.rel (%p6417) target = $region52
        $region51: #{person_transformer_forward.1} parent=39 // pred_region
          %s6420 = smul.u32 2, %s27
        $region52: #{person_transformer_forward.1} parent=39 // pred_fallthru
          _
      $region40: #{person_transformer_forward.1} parent=5 // pred_fallthru
        _
      %p6421 = scmp.le.s32.totalorder 2, %s22
      // Predicated region
      $region53: #{person_transformer_forward.1} parent=5 // pred_check
        %p6422 = pneg %p6421
      $region54: #{person_transformer_forward.1} parent=5 // pred_check_branch
        %6424 = sbr.rel (%p6422) target = $region56
      $region55: #{person_transformer_forward.1} parent=5 // pred_region
        %s6425 = ssub.s32 %s22, 2
        // Predicated region
        $region57: #{person_transformer_forward.1} parent=55 // pred_check
          %p6426 = pneg %p166
        $region58: #{person_transformer_forward.1} parent=55 // pred_check_branch
          %6428 = sbr.rel (%p6426) target = $region60
        $region59: #{person_transformer_forward.1} parent=55 // pred_region
          %s6429 = smul.u32 2, %s28
          %p6430 = scmp.lt.s32.totalorder %s6429, 3
          %s6431 = scalar_select %p6430, %s6429, 3
          %s6432 = smul.addr %s6431, 8
          %s6433 = scalar_lea.vmem %s6, %s6432
        $region60: #{person_transformer_forward.1} parent=55 // pred_fallthru
          _
      $region56: #{person_transformer_forward.1} parent=5 // pred_fallthru
        _
    $region6: #{person_transformer_forward.1} parent=1 // loop_footer
      %s26 = sadd.s32 1, %s22
    $region7: #{person_transformer_forward.1} parent=1 // loop_footer_branch
      %21 = sbr.rel target = $region3
    $region8: #{person_transformer_forward.1} parent=1 // loop_exit
      _
    %6434 = vsyncpa [#allocation5], 1
    %s6435 = scalar_lea.sflag [#allocation5], 1
    %6436 = vsyncpa %s6435, 1
    %6437 = vsyncpa [#allocation7], 1

</llo_original>
